<compile_context>
chip_gen: v7x
topology: tpu7x:2x2x1
jax: 0.10.0
libtpu: 0.0.40
codegen_flags: <defaults>
</compile_context>

<pallas_src>
import functools

import jax
import jax.numpy as jnp
from jax.experimental import pallas as pl
from jax.experimental.pallas import tpu as pltpu

F16_MIN = -65504.0  # torch.finfo(torch.float16).min

# lax.dot_general dimension numbers (same convention as the splash-attention
# TPU kernels): NN = plain, NT = rhs transposed, TN = lhs transposed.
NN_DIMS = (((1,), (0,)), ((), ()))
NT_DIMS = (((1,), (1,)), ((), ()))
TN_DIMS = (((0,), (0,)), ((), ()))


def _scam_kernel(x_ref, tf_ref, re_ref,
                 wl1_ref, wr1_ref, wl2_ref, wr2_ref,
                 bl1_ref, br1_ref, bl2_ref, br2_ref,
                 beta1_ref, gamma1_ref, beta3_ref, gamma3_ref,
                 out_ref, *, th, scale):
    """Processes TH height rows for one stereo batch element.

    x_ref / tf_ref / re_ref / out_ref: (2, c, TH, w)  [0]=left, [1]=right
    wl1/wr1/wl2/wr2: (c, c) 1x1-conv weights (out, in), coord part folded out
    bl1/br1: (TH, c, 1) per-h coord-conv bias tables; bl2/br2: (c, 1)
    beta1/gamma1/beta3/gamma3: (c, 1)
    """
    f32 = jnp.float32

    # Hoisted loads / shared constants (built once per grid step).
    wl1 = wl1_ref[...]
    wr1 = wr1_ref[...]
    wl2 = wl2_ref[...]
    wr2 = wr2_ref[...]
    bl2 = bl2_ref[...]
    br2 = br2_ref[...]
    beta1 = beta1_ref[...]
    gamma1 = gamma1_ref[...]
    beta3 = beta3_ref[...]
    gamma3 = gamma3_ref[...]

    w = x_ref.shape[-1]
    row = jax.lax.broadcasted_iota(jnp.int32, (w, w), 0)
    col = jax.lax.broadcasted_iota(jnp.int32, (w, w), 1)
    keep = col <= row  # both torch masked_fill's hit the strict upper triangle

    for t in range(th):  # static unroll over the TH height rows in this block
        xl = x_ref[0, :, t, :]        # (c, w)
        xr = x_ref[1, :, t, :]
        trl = tf_ref[0, :, t, :]
        trr = tf_ref[1, :, t, :]
        resl = re_ref[0, :, t, :]
        resr = re_ref[1, :, t, :]
        bl1 = bl1_ref[t]              # (c, 1) coordconv bias for this h row
        br1 = br1_ref[t]

        # Q = l_proj1(x_left) + beta1 * tr_feat_l  (kept as (c, w))
        q = jnp.dot(wl1, xl, preferred_element_type=f32) + bl1 + beta1 * trl
        # S = r_proj1(x_right) + beta1 * tr_feat_r
        s = jnp.dot(wr1, xr, preferred_element_type=f32) + br1 + beta1 * trr

        # score[p, q] = sum_c Q[c, p] * S[c, q]   (== Q_orig @ S_orig^T)
        score = jax.lax.dot_general(q, s, TN_DIMS,
                                    preferred_element_type=f32) * scale
        score = jnp.where(keep, score, F16_MIN)

        # M_right_to_left: row softmax of the masked score.
        m_r = jnp.max(score, axis=-1, keepdims=True)
        e_r = jnp.exp(score - m_r)
        a_r2l = e_r * pl.reciprocal(jnp.sum(e_r, axis=-1, keepdims=True),
                                    approx=True)
        # M_left_to_right: softmax of score^T == column softmax of score
        # (no (w,w) transpose materialized).
        m_c = jnp.max(score, axis=0, keepdims=True)
        e_c = jnp.exp(score - m_c)
        a_l2r = e_c * pl.reciprocal(jnp.sum(e_c, axis=0, keepdims=True),
                                    approx=True)

        # buffer_R = r_proj2(x_right) + gamma1 * res_enc_r ; buffer_L analog
        buf_R = jnp.dot(wr2, xr, preferred_element_type=f32) + br2 + gamma1 * resr
        buf_L = jnp.dot(wl2, xl, preferred_element_type=f32) + bl2 + gamma1 * resl

        # buf_l[c, p] = sum_q a_r2l[p, q] * buf_R[c, q]
        buf_l = jax.lax.dot_general(buf_R, a_r2l, NT_DIMS,
                                    preferred_element_type=f32)
        # buf_r[c, i] = sum_j a_l2r[j, i] * buf_L[c, j]
        buf_r = jnp.dot(buf_L, a_l2r, preferred_element_type=f32)

        out_ref[0, :, t, :] = (xl + beta3 * buf_l).astype(out_ref.dtype)
        out_ref[1, :, t, :] = (xr + gamma3 * buf_r).astype(out_ref.dtype)


def _pick_row_block(h):
    """Rows per grid step: must divide h and be == h or a multiple of 8."""
    if h <= 16:
        return h
    for th in (32, 16, 8):
        if h % th == 0:
            return th
    return h


def scam_pallas(x, res_enc, tr_feat, params):
    """x, res_enc, tr_feat: (2b, c, h, w) NCHW (PyTorch convention)."""
    c = params["c"]
    two_b, c_in, h, w = x.shape
    assert c_in == c
    b = two_b // 2
    scale = c ** (-0.5)
    th = _pick_row_block(h)
    dt = x.dtype

    # Free reshapes: left half -> index 0, right half -> index 1.
    x5 = x.reshape(2, b, c, h, w)
    tf5 = tr_feat.reshape(2, b, c, h, w)
    re5 = res_enc.reshape(2, b, c, h, w)

    # AddCoords(with_r=True) channels depend only on the h index, so the
    # whole CoordConv bias folds into a tiny (h, c, 1) table per side.
    yy = (jnp.arange(h, dtype=jnp.float32) / (h - 1)) * 2.0 - 1.0
    rr = jnp.abs(yy - 0.5)
    wl1, bl1 = params["wl1"], params["bl1"]     # (c, c+2), (c,)
    wr1, br1 = params["wr1"], params["br1"]
    bias_l = (yy[:, None] * wl1[:, c][None, :]
              + rr[:, None] * wl1[:, c + 1][None, :] + bl1[None, :])[..., None]
    bias_r = (yy[:, None] * wr1[:, c][None, :]
              + rr[:, None] * wr1[:, c + 1][None, :] + br1[None, :])[..., None]

    colv = lambda v: v.reshape(c, 1).astype(jnp.float32)

    feat_spec = pl.BlockSpec((2, None, c, th, w), lambda i, j: (0, i, 0, j, 0))
    wmat_spec = pl.BlockSpec((c, c), lambda i, j: (0, 0))
    bias_spec = pl.BlockSpec((th, c, 1), lambda i, j: (j, 0, 0))
    cvec_spec = pl.BlockSpec((c, 1), lambda i, j: (0, 0))

    kernel = functools.partial(_scam_kernel, th=th, scale=scale)

    out5 = pl.pallas_call(
        kernel,
        grid=(b, h // th),
        in_specs=[feat_spec, feat_spec, feat_spec,
                  wmat_spec, wmat_spec, wmat_spec, wmat_spec,
                  bias_spec, bias_spec, cvec_spec, cvec_spec,
                  cvec_spec, cvec_spec, cvec_spec, cvec_spec],
        out_specs=feat_spec,
        out_shape=jax.ShapeDtypeStruct((2, b, c, h, w), dt),
        compiler_params=pltpu.CompilerParams(
            dimension_semantics=("parallel", "parallel")),
    )(x5, tf5, re5,
      wl1[:, :c], wr1[:, :c], params["wl2"], params["wr2"],
      bias_l, bias_r, colv(params["bl2"]), colv(params["br2"]),
      colv(params["beta1"]), colv(params["gamma1"]),
      colv(params["beta3"]), colv(params["gamma3"]))

    # Free reshape; rows [0:b] = out_L, [b:2b] = out_R (== torch.cat order).
    return out5.reshape(two_b, c, h, w)


def scam_ref(x, res_enc, tr_feat, params):
    """Pure-JAX reference mirroring the PyTorch forward (NCHW)."""
    c = params["c"]
    xl, xr = jnp.split(x, 2, axis=0)
    resl, resr = jnp.split(res_enc, 2, axis=0)
    trl, trr = jnp.split(tr_feat, 2, axis=0)
    b, _, h, w = xl.shape
    scale = c ** (-0.5)

    yy = (jnp.arange(h, dtype=jnp.float32) / (h - 1)) * 2.0 - 1.0
    xx_ch = jnp.broadcast_to(yy[None, None, :, None], (b, 1, h, w))
    rr_ch = jnp.abs(xx_ch - 0.5)

    def coordconv(inp, wgt, bias):      # wgt: (c_out, c_in+2), bias: (c_out,)
        aug = jnp.concatenate([inp, xx_ch, rr_ch], axis=1)
        return jnp.einsum('oi,bihw->bohw', wgt, aug) + bias[None, :, None, None]

    def conv1x1(inp, wgt, bias):
        return jnp.einsum('oi,bihw->bohw', wgt, inp) + bias[None, :, None, None]

    bc = lambda v: v[None, :, None, None]
    beta1, gamma1 = bc(params["beta1"]), bc(params["gamma1"])
    beta3, gamma3 = bc(params["beta3"]), bc(params["gamma3"])

    Q = (coordconv(xl, params["wl1"], params["bl1"]) + beta1 * trl
         ).transpose(0, 2, 3, 1).reshape(b * h, w, c)
    S = (coordconv(xr, params["wr1"], params["br1"]) + beta1 * trr
         ).transpose(0, 2, 3, 1).reshape(b * h, w, c)

    score = jnp.einsum('npc,nqc->npq', Q, S) * scale
    row = jnp.arange(w)[:, None]
    col = jnp.arange(w)[None, :]
    # Both torch masked assignments (score and its transposed *view*) hit the
    # strict upper triangle of the same storage.
    score = jnp.where((col <= row)[None], score, F16_MIN)
    score_t = jnp.transpose(score, (0, 2, 1))

    M_r2l = jax.nn.softmax(score, axis=-1)
    M_l2r = jax.nn.softmax(score_t, axis=-1)

    buf_R = (conv1x1(xr, params["wr2"], params["br2"]) + gamma1 * resr
             ).transpose(0, 2, 3, 1).reshape(b * h, w, c)
    buf_L = (conv1x1(xl, params["wl2"], params["bl2"]) + gamma1 * resl
             ).transpose(0, 2, 3, 1).reshape(b * h, w, c)

    buf_l = jnp.einsum('npq,nqc->npc', M_r2l, buf_R
                       ).reshape(b, h, w, c).transpose(0, 3, 1, 2)
    buf_r = jnp.einsum('npq,nqc->npc', M_l2r, buf_L
                       ).reshape(b, h, w, c).transpose(0, 3, 1, 2)

    out_L = xl + beta3 * buf_l
    out_R = xr + gamma3 * buf_r
    return jnp.concatenate([out_L, out_R], axis=0)


if __name__ == "__main__":
    key = jax.random.PRNGKey(0)
    keys = jax.random.split(key, 16)

    # total batch = 4 -> b=2 per stereo side; c=4 channels; h=8; w=16
    B2, C, H, W = 4, 4, 8, 16
    x = jax.random.normal(keys[0], (B2, C, H, W), jnp.float32)
    res_enc = jax.random.normal(keys[1], (B2, C, H, W), jnp.float32)
    tr_feat = jax.random.normal(keys[2], (B2, C, H, W), jnp.float32)

    def init(k, shape, s=0.1):
        return s * jax.random.normal(k, shape, jnp.float32)

    params = {
        "c": C,
        # 1x1 conv weights stored as (c_out, c_in); biases as (c,).
        "wl1": init(keys[3], (C, C + 2)),
        "bl1": init(keys[4], (C,)),
        "wr1": init(keys[5], (C, C + 2)),
        "br1": init(keys[6], (C,)),
        "wl2": init(keys[7], (C, C)),
        "bl2": init(keys[8], (C,)),
        "wr2": init(keys[9], (C, C)),
        "br2": init(keys[10], (C,)),
        # nn.Parameter zeros in __init__; use small nonzero values so the
        # full attention path is exercised (synthetic weights, no checkpoint).
        "beta1": init(keys[11], (C,)),
        "gamma1": init(keys[12], (C,)),
        "beta3": init(keys[13], (C,)),
        "gamma3": init(keys[14], (C,)),
    }

    out = scam_pallas(x, res_enc, tr_feat, params)
    out = jax.block_until_ready(out)

    ref = scam_ref(x, res_enc, tr_feat, params)
    assert out.shape == x.shape, (out.shape, x.shape)
    max_err = float(jnp.max(jnp.abs(out - ref)))
    # Tolerance slightly relaxed for the approx (EUP) softmax reciprocal.
    assert jnp.allclose(out, ref, atol=1e-3, rtol=1e-3), max_err

    print("KERNEL_OK")
</pallas_src>

<mosaic_0001>
module attributes {stable_mosaic.version = 11 : i64} {
  func.func @_scam_kernel(%arg0: i32, %arg1: i32, %arg2: memref<2x1x4x8x16xf32, #tpu.memory_space<vmem>>, %arg3: memref<2x1x4x8x16xf32, #tpu.memory_space<vmem>>, %arg4: memref<2x1x4x8x16xf32, #tpu.memory_space<vmem>>, %arg5: memref<4x4xf32, #tpu.memory_space<vmem>>, %arg6: memref<4x4xf32, #tpu.memory_space<vmem>>, %arg7: memref<4x4xf32, #tpu.memory_space<vmem>>, %arg8: memref<4x4xf32, #tpu.memory_space<vmem>>, %arg9: memref<8x4x1xf32, #tpu.memory_space<vmem>>, %arg10: memref<8x4x1xf32, #tpu.memory_space<vmem>>, %arg11: memref<4x1xf32, #tpu.memory_space<vmem>>, %arg12: memref<4x1xf32, #tpu.memory_space<vmem>>, %arg13: memref<4x1xf32, #tpu.memory_space<vmem>>, %arg14: memref<4x1xf32, #tpu.memory_space<vmem>>, %arg15: memref<4x1xf32, #tpu.memory_space<vmem>>, %arg16: memref<4x1xf32, #tpu.memory_space<vmem>>, %arg17: memref<2x1x4x8x16xf32, #tpu.memory_space<vmem>>) attributes {dimension_semantics = [#tpu.dimension_semantics<parallel>, #tpu.dimension_semantics<parallel>], iteration_bounds = array<i64: 2, 1>, scalar_prefetch = 0 : i64, scratch_operands = 0 : i64, tpu.core_type = #tpu.core_type<tc>, window_params = [{transform_indices = @transform_0, window_bounds = array<i64: 2, 1, 4, 8, 16>}, {transform_indices = @transform_1, window_bounds = array<i64: 2, 1, 4, 8, 16>}, {transform_indices = @transform_2, window_bounds = array<i64: 2, 1, 4, 8, 16>}, {pipeline_mode = #tpu.pipeline_mode<synchronous>, transform_indices = @transform_3, window_bounds = array<i64: 4, 4>}, {pipeline_mode = #tpu.pipeline_mode<synchronous>, transform_indices = @transform_4, window_bounds = array<i64: 4, 4>}, {pipeline_mode = #tpu.pipeline_mode<synchronous>, transform_indices = @transform_5, window_bounds = array<i64: 4, 4>}, {pipeline_mode = #tpu.pipeline_mode<synchronous>, transform_indices = @transform_6, window_bounds = array<i64: 4, 4>}, {transform_indices = @transform_7, window_bounds = array<i64: 8, 4, 1>}, {transform_indices = @transform_8, window_bounds = array<i64: 8, 4, 1>}, {pipeline_mode = #tpu.pipeline_mode<synchronous>, transform_indices = @transform_9, window_bounds = array<i64: 4, 1>}, {pipeline_mode = #tpu.pipeline_mode<synchronous>, transform_indices = @transform_10, window_bounds = array<i64: 4, 1>}, {pipeline_mode = #tpu.pipeline_mode<synchronous>, transform_indices = @transform_11, window_bounds = array<i64: 4, 1>}, {pipeline_mode = #tpu.pipeline_mode<synchronous>, transform_indices = @transform_12, window_bounds = array<i64: 4, 1>}, {pipeline_mode = #tpu.pipeline_mode<synchronous>, transform_indices = @transform_13, window_bounds = array<i64: 4, 1>}, {pipeline_mode = #tpu.pipeline_mode<synchronous>, transform_indices = @transform_14, window_bounds = array<i64: 4, 1>}, {transform_indices = @transform_15, window_bounds = array<i64: 2, 1, 4, 8, 16>}]} {
    %c0 = arith.constant 0 : index
    %c0_0 = arith.constant 0 : index
    %0 = vector.load %arg5[%c0, %c0_0] : memref<4x4xf32, #tpu.memory_space<vmem>>, vector<4x4xf32>
    %c0_1 = arith.constant 0 : index
    %c0_2 = arith.constant 0 : index
    %1 = vector.load %arg6[%c0_1, %c0_2] : memref<4x4xf32, #tpu.memory_space<vmem>>, vector<4x4xf32>
    %c0_3 = arith.constant 0 : index
    %c0_4 = arith.constant 0 : index
    %2 = vector.load %arg7[%c0_3, %c0_4] : memref<4x4xf32, #tpu.memory_space<vmem>>, vector<4x4xf32>
    %c0_5 = arith.constant 0 : index
    %c0_6 = arith.constant 0 : index
    %3 = vector.load %arg8[%c0_5, %c0_6] : memref<4x4xf32, #tpu.memory_space<vmem>>, vector<4x4xf32>
    %c0_7 = arith.constant 0 : index
    %c0_8 = arith.constant 0 : index
    %4 = vector.load %arg11[%c0_7, %c0_8] : memref<4x1xf32, #tpu.memory_space<vmem>>, vector<4x1xf32>
    %c0_9 = arith.constant 0 : index
    %c0_10 = arith.constant 0 : index
    %5 = vector.load %arg12[%c0_9, %c0_10] : memref<4x1xf32, #tpu.memory_space<vmem>>, vector<4x1xf32>
    %c0_11 = arith.constant 0 : index
    %c0_12 = arith.constant 0 : index
    %6 = vector.load %arg13[%c0_11, %c0_12] : memref<4x1xf32, #tpu.memory_space<vmem>>, vector<4x1xf32>
    %c0_13 = arith.constant 0 : index
    %c0_14 = arith.constant 0 : index
    %7 = vector.load %arg14[%c0_13, %c0_14] : memref<4x1xf32, #tpu.memory_space<vmem>>, vector<4x1xf32>
    %c0_15 = arith.constant 0 : index
    %c0_16 = arith.constant 0 : index
    %8 = vector.load %arg15[%c0_15, %c0_16] : memref<4x1xf32, #tpu.memory_space<vmem>>, vector<4x1xf32>
    %c0_17 = arith.constant 0 : index
    %c0_18 = arith.constant 0 : index
    %9 = vector.load %arg16[%c0_17, %c0_18] : memref<4x1xf32, #tpu.memory_space<vmem>>, vector<4x1xf32>
    %10 = tpu.iota {dimensions = array<i32: 0>} : vector<16x16xi32>
    %11 = tpu.iota {dimensions = array<i32: 1>} : vector<16x16xi32>
    %12 = arith.cmpi sle, %11, %10 : vector<16x16xi32>
    %c0_19 = arith.constant 0 : index
    %c0_20 = arith.constant 0 : index
    %c0_21 = arith.constant 0 : index
    %c0_22 = arith.constant 0 : index
    %c0_23 = arith.constant 0 : index
    %13 = vector.load %arg2[%c0_19, %c0_20, %c0_21, %c0_22, %c0_23] : memref<2x1x4x8x16xf32, #tpu.memory_space<vmem>>, vector<1x1x4x1x16xf32>
    %14 = vector.shape_cast %13 : vector<1x1x4x1x16xf32> to vector<4x16xf32>
    %c1 = arith.constant 1 : index
    %c0_24 = arith.constant 0 : index
    %c0_25 = arith.constant 0 : index
    %c0_26 = arith.constant 0 : index
    %c0_27 = arith.constant 0 : index
    %15 = vector.load %arg2[%c1, %c0_24, %c0_25, %c0_26, %c0_27] : memref<2x1x4x8x16xf32, #tpu.memory_space<vmem>>, vector<1x1x4x1x16xf32>
    %16 = vector.shape_cast %15 : vector<1x1x4x1x16xf32> to vector<4x16xf32>
    %c0_28 = arith.constant 0 : index
    %c0_29 = arith.constant 0 : index
    %c0_30 = arith.constant 0 : index
    %c0_31 = arith.constant 0 : index
    %c0_32 = arith.constant 0 : index
    %17 = vector.load %arg3[%c0_28, %c0_29, %c0_30, %c0_31, %c0_32] : memref<2x1x4x8x16xf32, #tpu.memory_space<vmem>>, vector<1x1x4x1x16xf32>
    %18 = vector.shape_cast %17 : vector<1x1x4x1x16xf32> to vector<4x16xf32>
    %c1_33 = arith.constant 1 : index
    %c0_34 = arith.constant 0 : index
    %c0_35 = arith.constant 0 : index
    %c0_36 = arith.constant 0 : index
    %c0_37 = arith.constant 0 : index
    %19 = vector.load %arg3[%c1_33, %c0_34, %c0_35, %c0_36, %c0_37] : memref<2x1x4x8x16xf32, #tpu.memory_space<vmem>>, vector<1x1x4x1x16xf32>
    %20 = vector.shape_cast %19 : vector<1x1x4x1x16xf32> to vector<4x16xf32>
    %c0_38 = arith.constant 0 : index
    %c0_39 = arith.constant 0 : index
    %c0_40 = arith.constant 0 : index
    %c0_41 = arith.constant 0 : index
    %c0_42 = arith.constant 0 : index
    %21 = vector.load %arg4[%c0_38, %c0_39, %c0_40, %c0_41, %c0_42] : memref<2x1x4x8x16xf32, #tpu.memory_space<vmem>>, vector<1x1x4x1x16xf32>
    %22 = vector.shape_cast %21 : vector<1x1x4x1x16xf32> to vector<4x16xf32>
    %c1_43 = arith.constant 1 : index
    %c0_44 = arith.constant 0 : index
    %c0_45 = arith.constant 0 : index
    %c0_46 = arith.constant 0 : index
    %c0_47 = arith.constant 0 : index
    %23 = vector.load %arg4[%c1_43, %c0_44, %c0_45, %c0_46, %c0_47] : memref<2x1x4x8x16xf32, #tpu.memory_space<vmem>>, vector<1x1x4x1x16xf32>
    %24 = vector.shape_cast %23 : vector<1x1x4x1x16xf32> to vector<4x16xf32>
    %c0_48 = arith.constant 0 : index
    %c0_49 = arith.constant 0 : index
    %c0_50 = arith.constant 0 : index
    %25 = vector.load %arg9[%c0_48, %c0_49, %c0_50] : memref<8x4x1xf32, #tpu.memory_space<vmem>>, vector<1x4x1xf32>
    %26 = vector.shape_cast %25 : vector<1x4x1xf32> to vector<4x1xf32>
    %c0_51 = arith.constant 0 : index
    %c0_52 = arith.constant 0 : index
    %c0_53 = arith.constant 0 : index
    %27 = vector.load %arg10[%c0_51, %c0_52, %c0_53] : memref<8x4x1xf32, #tpu.memory_space<vmem>>, vector<1x4x1xf32>
    %28 = vector.shape_cast %27 : vector<1x4x1xf32> to vector<4x1xf32>
    %cst = arith.constant dense<0.000000e+00> : vector<4x16xf32>
    %29 = tpu.matmul %0, %14, %cst {dimension_numbers = #tpu.dot_dimension_numbers<[1], [0], [0], [1], [0, 0, 1, 1], [], []>} : vector<4x4xf32>, vector<4x16xf32>, vector<4x16xf32> -> vector<4x16xf32>
    %30 = vector.broadcast %26 : vector<4x1xf32> to vector<4x16xf32>
    %31 = arith.addf %29, %30 : vector<4x16xf32>
    %32 = vector.broadcast %6 : vector<4x1xf32> to vector<4x16xf32>
    %33 = arith.mulf %32, %18 : vector<4x16xf32>
    %34 = arith.addf %31, %33 : vector<4x16xf32>
    %cst_54 = arith.constant dense<0.000000e+00> : vector<4x16xf32>
    %35 = tpu.matmul %1, %16, %cst_54 {dimension_numbers = #tpu.dot_dimension_numbers<[1], [0], [0], [1], [0, 0, 1, 1], [], []>} : vector<4x4xf32>, vector<4x16xf32>, vector<4x16xf32> -> vector<4x16xf32>
    %36 = vector.broadcast %28 : vector<4x1xf32> to vector<4x16xf32>
    %37 = arith.addf %35, %36 : vector<4x16xf32>
    %38 = vector.broadcast %6 : vector<4x1xf32> to vector<4x16xf32>
    %39 = arith.mulf %38, %20 : vector<4x16xf32>
    %40 = arith.addf %37, %39 : vector<4x16xf32>
    %cst_55 = arith.constant dense<0.000000e+00> : vector<16x16xf32>
    %41 = tpu.matmul %34, %40, %cst_55 {dimension_numbers = #tpu.dot_dimension_numbers<[0], [0], [1], [1], [0, 1, 1, 1], [], []>} : vector<4x16xf32>, vector<4x16xf32>, vector<16x16xf32> -> vector<16x16xf32>
    %cst_56 = arith.constant 5.000000e-01 : f32
    %42 = vector.broadcast %cst_56 : f32 to vector<16x16xf32>
    %43 = arith.mulf %41, %42 : vector<16x16xf32>
    %cst_57 = arith.constant -6.550400e+04 : f32
    %44 = vector.broadcast %cst_57 : f32 to vector<16x16xf32>
    %45 = arith.select %12, %43, %44 : vector<16x16xi1>, vector<16x16xf32>
    %cst_58 = arith.constant dense<0xFF800000> : vector<16xf32>
    %46 = vector.multi_reduction <maximumf>, %45, %cst_58 [1] : vector<16x16xf32> to vector<16xf32>
    %47 = vector.shape_cast %46 : vector<16xf32> to vector<16x1xf32>
    %48 = vector.broadcast %47 : vector<16x1xf32> to vector<16x16xf32>
    %49 = arith.subf %45, %48 : vector<16x16xf32>
    %50 = math.exp %49 : vector<16x16xf32>
    %cst_59 = arith.constant dense<0.000000e+00> : vector<16xf32>
    %51 = vector.multi_reduction <add>, %50, %cst_59 [1] : vector<16x16xf32> to vector<16xf32>
    %52 = vector.shape_cast %51 : vector<16xf32> to vector<16x1xf32>
    %53 = tpu.reciprocal %52 {approx = true} : vector<16x1xf32> -> vector<16x1xf32>
    %54 = vector.broadcast %53 : vector<16x1xf32> to vector<16x16xf32>
    %55 = arith.mulf %50, %54 : vector<16x16xf32>
    %cst_60 = arith.constant dense<0xFF800000> : vector<16xf32>
    %56 = vector.multi_reduction <maximumf>, %45, %cst_60 [0] : vector<16x16xf32> to vector<16xf32>
    %57 = vector.shape_cast %56 : vector<16xf32> to vector<1x16xf32>
    %58 = vector.broadcast %57 : vector<1x16xf32> to vector<16x16xf32>
    %59 = arith.subf %45, %58 : vector<16x16xf32>
    %60 = math.exp %59 : vector<16x16xf32>
    %cst_61 = arith.constant dense<0.000000e+00> : vector<16xf32>
    %61 = vector.multi_reduction <add>, %60, %cst_61 [0] : vector<16x16xf32> to vector<16xf32>
    %62 = vector.shape_cast %61 : vector<16xf32> to vector<1x16xf32>
    %63 = tpu.reciprocal %62 {approx = true} : vector<1x16xf32> -> vector<1x16xf32>
    %64 = vector.broadcast %63 : vector<1x16xf32> to vector<16x16xf32>
    %65 = arith.mulf %60, %64 : vector<16x16xf32>
    %cst_62 = arith.constant dense<0.000000e+00> : vector<4x16xf32>
    %66 = tpu.matmul %3, %16, %cst_62 {dimension_numbers = #tpu.dot_dimension_numbers<[1], [0], [0], [1], [0, 0, 1, 1], [], []>} : vector<4x4xf32>, vector<4x16xf32>, vector<4x16xf32> -> vector<4x16xf32>
    %67 = vector.broadcast %5 : vector<4x1xf32> to vector<4x16xf32>
    %68 = arith.addf %66, %67 : vector<4x16xf32>
    %69 = vector.broadcast %7 : vector<4x1xf32> to vector<4x16xf32>
    %70 = arith.mulf %69, %24 : vector<4x16xf32>
    %71 = arith.addf %68, %70 : vector<4x16xf32>
    %cst_63 = arith.constant dense<0.000000e+00> : vector<4x16xf32>
    %72 = tpu.matmul %2, %14, %cst_63 {dimension_numbers = #tpu.dot_dimension_numbers<[1], [0], [0], [1], [0, 0, 1, 1], [], []>} : vector<4x4xf32>, vector<4x16xf32>, vector<4x16xf32> -> vector<4x16xf32>
    %73 = vector.broadcast %4 : vector<4x1xf32> to vector<4x16xf32>
    %74 = arith.addf %72, %73 : vector<4x16xf32>
    %75 = vector.broadcast %7 : vector<4x1xf32> to vector<4x16xf32>
    %76 = arith.mulf %75, %22 : vector<4x16xf32>
    %77 = arith.addf %74, %76 : vector<4x16xf32>
    %cst_64 = arith.constant dense<0.000000e+00> : vector<4x16xf32>
    %78 = tpu.matmul %71, %55, %cst_64 {dimension_numbers = #tpu.dot_dimension_numbers<[1], [1], [0], [0], [0, 0, 1, 0], [], []>} : vector<4x16xf32>, vector<16x16xf32>, vector<4x16xf32> -> vector<4x16xf32>
    %cst_65 = arith.constant dense<0.000000e+00> : vector<4x16xf32>
    %79 = tpu.matmul %77, %65, %cst_65 {dimension_numbers = #tpu.dot_dimension_numbers<[1], [0], [0], [1], [0, 0, 1, 1], [], []>} : vector<4x16xf32>, vector<16x16xf32>, vector<4x16xf32> -> vector<4x16xf32>
    %80 = vector.broadcast %8 : vector<4x1xf32> to vector<4x16xf32>
    %81 = arith.mulf %80, %78 : vector<4x16xf32>
    %82 = arith.addf %14, %81 : vector<4x16xf32>
    %c0_66 = arith.constant 0 : index
    %c0_67 = arith.constant 0 : index
    %c0_68 = arith.constant 0 : index
    %c0_69 = arith.constant 0 : index
    %c0_70 = arith.constant 0 : index
    %83 = vector.load %arg17[%c0_66, %c0_67, %c0_68, %c0_69, %c0_70] : memref<2x1x4x8x16xf32, #tpu.memory_space<vmem>>, vector<1x1x4x1x16xf32>
    %84 = vector.shape_cast %83 : vector<1x1x4x1x16xf32> to vector<4x16xf32>
    %85 = vector.shape_cast %82 : vector<4x16xf32> to vector<1x1x4x1x16xf32>
    tpu.vector_store %arg17[%c0_66, %c0_67, %c0_68, %c0_69, %c0_70], %85 {strides = array<i32>} : memref<2x1x4x8x16xf32, #tpu.memory_space<vmem>>, vector<1x1x4x1x16xf32>,
    %86 = vector.broadcast %9 : vector<4x1xf32> to vector<4x16xf32>
    %87 = arith.mulf %86, %79 : vector<4x16xf32>
    %88 = arith.addf %16, %87 : vector<4x16xf32>
    %c1_71 = arith.constant 1 : index
    %c0_72 = arith.constant 0 : index
    %c0_73 = arith.constant 0 : index
    %c0_74 = arith.constant 0 : index
    %c0_75 = arith.constant 0 : index
    %89 = vector.load %arg17[%c1_71, %c0_72, %c0_73, %c0_74, %c0_75] : memref<2x1x4x8x16xf32, #tpu.memory_space<vmem>>, vector<1x1x4x1x16xf32>
    %90 = vector.shape_cast %89 : vector<1x1x4x1x16xf32> to vector<4x16xf32>
    %91 = vector.shape_cast %88 : vector<4x16xf32> to vector<1x1x4x1x16xf32>
    tpu.vector_store %arg17[%c1_71, %c0_72, %c0_73, %c0_74, %c0_75], %91 {strides = array<i32>} : memref<2x1x4x8x16xf32, #tpu.memory_space<vmem>>, vector<1x1x4x1x16xf32>,
    %c0_76 = arith.constant 0 : index
    %c0_77 = arith.constant 0 : index
    %c0_78 = arith.constant 0 : index
    %c1_79 = arith.constant 1 : index
    %c0_80 = arith.constant 0 : index
    %92 = vector.load %arg2[%c0_76, %c0_77, %c0_78, %c1_79, %c0_80] : memref<2x1x4x8x16xf32, #tpu.memory_space<vmem>>, vector<1x1x4x1x16xf32>
    %93 = vector.shape_cast %92 : vector<1x1x4x1x16xf32> to vector<4x16xf32>
    %c1_81 = arith.constant 1 : index
    %c0_82 = arith.constant 0 : index
    %c0_83 = arith.constant 0 : index
    %c1_84 = arith.constant 1 : index
    %c0_85 = arith.constant 0 : index
    %94 = vector.load %arg2[%c1_81, %c0_82, %c0_83, %c1_84, %c0_85] : memref<2x1x4x8x16xf32, #tpu.memory_space<vmem>>, vector<1x1x4x1x16xf32>
    %95 = vector.shape_cast %94 : vector<1x1x4x1x16xf32> to vector<4x16xf32>
    %c0_86 = arith.constant 0 : index
    %c0_87 = arith.constant 0 : index
    %c0_88 = arith.constant 0 : index
    %c1_89 = arith.constant 1 : index
    %c0_90 = arith.constant 0 : index
    %96 = vector.load %arg3[%c0_86, %c0_87, %c0_88, %c1_89, %c0_90] : memref<2x1x4x8x16xf32, #tpu.memory_space<vmem>>, vector<1x1x4x1x16xf32>
    %97 = vector.shape_cast %96 : vector<1x1x4x1x16xf32> to vector<4x16xf32>
    %c1_91 = arith.constant 1 : index
    %c0_92 = arith.constant 0 : index
    %c0_93 = arith.constant 0 : index
    %c1_94 = arith.constant 1 : index
    %c0_95 = arith.constant 0 : index
    %98 = vector.load %arg3[%c1_91, %c0_92, %c0_93, %c1_94, %c0_95] : memref<2x1x4x8x16xf32, #tpu.memory_space<vmem>>, vector<1x1x4x1x16xf32>
    %99 = vector.shape_cast %98 : vector<1x1x4x1x16xf32> to vector<4x16xf32>
    %c0_96 = arith.constant 0 : index
    %c0_97 = arith.constant 0 : index
    %c0_98 = arith.constant 0 : index
    %c1_99 = arith.constant 1 : index
    %c0_100 = arith.constant 0 : index
    %100 = vector.load %arg4[%c0_96, %c0_97, %c0_98, %c1_99, %c0_100] : memref<2x1x4x8x16xf32, #tpu.memory_space<vmem>>, vector<1x1x4x1x16xf32>
    %101 = vector.shape_cast %100 : vector<1x1x4x1x16xf32> to vector<4x16xf32>
    %c1_101 = arith.constant 1 : index
    %c0_102 = arith.constant 0 : index
    %c0_103 = arith.constant 0 : index
    %c1_104 = arith.constant 1 : index
    %c0_105 = arith.constant 0 : index
    %102 = vector.load %arg4[%c1_101, %c0_102, %c0_103, %c1_104, %c0_105] : memref<2x1x4x8x16xf32, #tpu.memory_space<vmem>>, vector<1x1x4x1x16xf32>
    %103 = vector.shape_cast %102 : vector<1x1x4x1x16xf32> to vector<4x16xf32>
    %c1_106 = arith.constant 1 : index
    %c0_107 = arith.constant 0 : index
    %c0_108 = arith.constant 0 : index
    %104 = vector.load %arg9[%c1_106, %c0_107, %c0_108] : memref<8x4x1xf32, #tpu.memory_space<vmem>>, vector<1x4x1xf32>
    %105 = vector.shape_cast %104 : vector<1x4x1xf32> to vector<4x1xf32>
    %c1_109 = arith.constant 1 : index
    %c0_110 = arith.constant 0 : index
    %c0_111 = arith.constant 0 : index
    %106 = vector.load %arg10[%c1_109, %c0_110, %c0_111] : memref<8x4x1xf32, #tpu.memory_space<vmem>>, vector<1x4x1xf32>
    %107 = vector.shape_cast %106 : vector<1x4x1xf32> to vector<4x1xf32>
    %cst_112 = arith.constant dense<0.000000e+00> : vector<4x16xf32>
    %108 = tpu.matmul %0, %93, %cst_112 {dimension_numbers = #tpu.dot_dimension_numbers<[1], [0], [0], [1], [0, 0, 1, 1], [], []>} : vector<4x4xf32>, vector<4x16xf32>, vector<4x16xf32> -> vector<4x16xf32>
    %109 = vector.broadcast %105 : vector<4x1xf32> to vector<4x16xf32>
    %110 = arith.addf %108, %109 : vector<4x16xf32>
    %111 = vector.broadcast %6 : vector<4x1xf32> to vector<4x16xf32>
    %112 = arith.mulf %111, %97 : vector<4x16xf32>
    %113 = arith.addf %110, %112 : vector<4x16xf32>
    %cst_113 = arith.constant dense<0.000000e+00> : vector<4x16xf32>
    %114 = tpu.matmul %1, %95, %cst_113 {dimension_numbers = #tpu.dot_dimension_numbers<[1], [0], [0], [1], [0, 0, 1, 1], [], []>} : vector<4x4xf32>, vector<4x16xf32>, vector<4x16xf32> -> vector<4x16xf32>
    %115 = vector.broadcast %107 : vector<4x1xf32> to vector<4x16xf32>
    %116 = arith.addf %114, %115 : vector<4x16xf32>
    %117 = vector.broadcast %6 : vector<4x1xf32> to vector<4x16xf32>
    %118 = arith.mulf %117, %99 : vector<4x16xf32>
    %119 = arith.addf %116, %118 : vector<4x16xf32>
    %cst_114 = arith.constant dense<0.000000e+00> : vector<16x16xf32>
    %120 = tpu.matmul %113, %119, %cst_114 {dimension_numbers = #tpu.dot_dimension_numbers<[0], [0], [1], [1], [0, 1, 1, 1], [], []>} : vector<4x16xf32>, vector<4x16xf32>, vector<16x16xf32> -> vector<16x16xf32>
    %cst_115 = arith.constant 5.000000e-01 : f32
    %121 = vector.broadcast %cst_115 : f32 to vector<16x16xf32>
    %122 = arith.mulf %120, %121 : vector<16x16xf32>
    %cst_116 = arith.constant -6.550400e+04 : f32
    %123 = vector.broadcast %cst_116 : f32 to vector<16x16xf32>
    %124 = arith.select %12, %122, %123 : vector<16x16xi1>, vector<16x16xf32>
    %cst_117 = arith.constant dense<0xFF800000> : vector<16xf32>
    %125 = vector.multi_reduction <maximumf>, %124, %cst_117 [1] : vector<16x16xf32> to vector<16xf32>
    %126 = vector.shape_cast %125 : vector<16xf32> to vector<16x1xf32>
    %127 = vector.broadcast %126 : vector<16x1xf32> to vector<16x16xf32>
    %128 = arith.subf %124, %127 : vector<16x16xf32>
    %129 = math.exp %128 : vector<16x16xf32>
    %cst_118 = arith.constant dense<0.000000e+00> : vector<16xf32>
    %130 = vector.multi_reduction <add>, %129, %cst_118 [1] : vector<16x16xf32> to vector<16xf32>
    %131 = vector.shape_cast %130 : vector<16xf32> to vector<16x1xf32>
    %132 = tpu.reciprocal %131 {approx = true} : vector<16x1xf32> -> vector<16x1xf32>
    %133 = vector.broadcast %132 : vector<16x1xf32> to vector<16x16xf32>
    %134 = arith.mulf %129, %133 : vector<16x16xf32>
    %cst_119 = arith.constant dense<0xFF800000> : vector<16xf32>
    %135 = vector.multi_reduction <maximumf>, %124, %cst_119 [0] : vector<16x16xf32> to vector<16xf32>
    %136 = vector.shape_cast %135 : vector<16xf32> to vector<1x16xf32>
    %137 = vector.broadcast %136 : vector<1x16xf32> to vector<16x16xf32>
    %138 = arith.subf %124, %137 : vector<16x16xf32>
    %139 = math.exp %138 : vector<16x16xf32>
    %cst_120 = arith.constant dense<0.000000e+00> : vector<16xf32>
    %140 = vector.multi_reduction <add>, %139, %cst_120 [0] : vector<16x16xf32> to vector<16xf32>
    %141 = vector.shape_cast %140 : vector<16xf32> to vector<1x16xf32>
    %142 = tpu.reciprocal %141 {approx = true} : vector<1x16xf32> -> vector<1x16xf32>
    %143 = vector.broadcast %142 : vector<1x16xf32> to vector<16x16xf32>
    %144 = arith.mulf %139, %143 : vector<16x16xf32>
    %cst_121 = arith.constant dense<0.000000e+00> : vector<4x16xf32>
    %145 = tpu.matmul %3, %95, %cst_121 {dimension_numbers = #tpu.dot_dimension_numbers<[1], [0], [0], [1], [0, 0, 1, 1], [], []>} : vector<4x4xf32>, vector<4x16xf32>, vector<4x16xf32> -> vector<4x16xf32>
    %146 = vector.broadcast %5 : vector<4x1xf32> to vector<4x16xf32>
    %147 = arith.addf %145, %146 : vector<4x16xf32>
    %148 = vector.broadcast %7 : vector<4x1xf32> to vector<4x16xf32>
    %149 = arith.mulf %148, %103 : vector<4x16xf32>
    %150 = arith.addf %147, %149 : vector<4x16xf32>
    %cst_122 = arith.constant dense<0.000000e+00> : vector<4x16xf32>
    %151 = tpu.matmul %2, %93, %cst_122 {dimension_numbers = #tpu.dot_dimension_numbers<[1], [0], [0], [1], [0, 0, 1, 1], [], []>} : vector<4x4xf32>, vector<4x16xf32>, vector<4x16xf32> -> vector<4x16xf32>
    %152 = vector.broadcast %4 : vector<4x1xf32> to vector<4x16xf32>
    %153 = arith.addf %151, %152 : vector<4x16xf32>
    %154 = vector.broadcast %7 : vector<4x1xf32> to vector<4x16xf32>
    %155 = arith.mulf %154, %101 : vector<4x16xf32>
    %156 = arith.addf %153, %155 : vector<4x16xf32>
    %cst_123 = arith.constant dense<0.000000e+00> : vector<4x16xf32>
    %157 = tpu.matmul %150, %134, %cst_123 {dimension_numbers = #tpu.dot_dimension_numbers<[1], [1], [0], [0], [0, 0, 1, 0], [], []>} : vector<4x16xf32>, vector<16x16xf32>, vector<4x16xf32> -> vector<4x16xf32>
    %cst_124 = arith.constant dense<0.000000e+00> : vector<4x16xf32>
    %158 = tpu.matmul %156, %144, %cst_124 {dimension_numbers = #tpu.dot_dimension_numbers<[1], [0], [0], [1], [0, 0, 1, 1], [], []>} : vector<4x16xf32>, vector<16x16xf32>, vector<4x16xf32> -> vector<4x16xf32>
    %159 = vector.broadcast %8 : vector<4x1xf32> to vector<4x16xf32>
    %160 = arith.mulf %159, %157 : vector<4x16xf32>
    %161 = arith.addf %93, %160 : vector<4x16xf32>
    %c0_125 = arith.constant 0 : index
    %c0_126 = arith.constant 0 : index
    %c0_127 = arith.constant 0 : index
    %c1_128 = arith.constant 1 : index
    %c0_129 = arith.constant 0 : index
    %162 = vector.load %arg17[%c0_125, %c0_126, %c0_127, %c1_128, %c0_129] : memref<2x1x4x8x16xf32, #tpu.memory_space<vmem>>, vector<1x1x4x1x16xf32>
    %163 = vector.shape_cast %162 : vector<1x1x4x1x16xf32> to vector<4x16xf32>
    %164 = vector.shape_cast %161 : vector<4x16xf32> to vector<1x1x4x1x16xf32>
    tpu.vector_store %arg17[%c0_125, %c0_126, %c0_127, %c1_128, %c0_129], %164 {strides = array<i32>} : memref<2x1x4x8x16xf32, #tpu.memory_space<vmem>>, vector<1x1x4x1x16xf32>,
    %165 = vector.broadcast %9 : vector<4x1xf32> to vector<4x16xf32>
    %166 = arith.mulf %165, %158 : vector<4x16xf32>
    %167 = arith.addf %95, %166 : vector<4x16xf32>
    %c1_130 = arith.constant 1 : index
    %c0_131 = arith.constant 0 : index
    %c0_132 = arith.constant 0 : index
    %c1_133 = arith.constant 1 : index
    %c0_134 = arith.constant 0 : index
    %168 = vector.load %arg17[%c1_130, %c0_131, %c0_132, %c1_133, %c0_134] : memref<2x1x4x8x16xf32, #tpu.memory_space<vmem>>, vector<1x1x4x1x16xf32>
    %169 = vector.shape_cast %168 : vector<1x1x4x1x16xf32> to vector<4x16xf32>
    %170 = vector.shape_cast %167 : vector<4x16xf32> to vector<1x1x4x1x16xf32>
    tpu.vector_store %arg17[%c1_130, %c0_131, %c0_132, %c1_133, %c0_134], %170 {strides = array<i32>} : memref<2x1x4x8x16xf32, #tpu.memory_space<vmem>>, vector<1x1x4x1x16xf32>,
    %c0_135 = arith.constant 0 : index
    %c0_136 = arith.constant 0 : index
    %c0_137 = arith.constant 0 : index
    %c2 = arith.constant 2 : index
    %c0_138 = arith.constant 0 : index
    %171 = vector.load %arg2[%c0_135, %c0_136, %c0_137, %c2, %c0_138] : memref<2x1x4x8x16xf32, #tpu.memory_space<vmem>>, vector<1x1x4x1x16xf32>
    %172 = vector.shape_cast %171 : vector<1x1x4x1x16xf32> to vector<4x16xf32>
    %c1_139 = arith.constant 1 : index
    %c0_140 = arith.constant 0 : index
    %c0_141 = arith.constant 0 : index
    %c2_142 = arith.constant 2 : index
    %c0_143 = arith.constant 0 : index
    %173 = vector.load %arg2[%c1_139, %c0_140, %c0_141, %c2_142, %c0_143] : memref<2x1x4x8x16xf32, #tpu.memory_space<vmem>>, vector<1x1x4x1x16xf32>
    %174 = vector.shape_cast %173 : vector<1x1x4x1x16xf32> to vector<4x16xf32>
    %c0_144 = arith.constant 0 : index
    %c0_145 = arith.constant 0 : index
    %c0_146 = arith.constant 0 : index
    %c2_147 = arith.constant 2 : index
    %c0_148 = arith.constant 0 : index
    %175 = vector.load %arg3[%c0_144, %c0_145, %c0_146, %c2_147, %c0_148] : memref<2x1x4x8x16xf32, #tpu.memory_space<vmem>>, vector<1x1x4x1x16xf32>
    %176 = vector.shape_cast %175 : vector<1x1x4x1x16xf32> to vector<4x16xf32>
    %c1_149 = arith.constant 1 : index
    %c0_150 = arith.constant 0 : index
    %c0_151 = arith.constant 0 : index
    %c2_152 = arith.constant 2 : index
    %c0_153 = arith.constant 0 : index
    %177 = vector.load %arg3[%c1_149, %c0_150, %c0_151, %c2_152, %c0_153] : memref<2x1x4x8x16xf32, #tpu.memory_space<vmem>>, vector<1x1x4x1x16xf32>
    %178 = vector.shape_cast %177 : vector<1x1x4x1x16xf32> to vector<4x16xf32>
    %c0_154 = arith.constant 0 : index
    %c0_155 = arith.constant 0 : index
    %c0_156 = arith.constant 0 : index
    %c2_157 = arith.constant 2 : index
    %c0_158 = arith.constant 0 : index
    %179 = vector.load %arg4[%c0_154, %c0_155, %c0_156, %c2_157, %c0_158] : memref<2x1x4x8x16xf32, #tpu.memory_space<vmem>>, vector<1x1x4x1x16xf32>
    %180 = vector.shape_cast %179 : vector<1x1x4x1x16xf32> to vector<4x16xf32>
    %c1_159 = arith.constant 1 : index
    %c0_160 = arith.constant 0 : index
    %c0_161 = arith.constant 0 : index
    %c2_162 = arith.constant 2 : index
    %c0_163 = arith.constant 0 : index
    %181 = vector.load %arg4[%c1_159, %c0_160, %c0_161, %c2_162, %c0_163] : memref<2x1x4x8x16xf32, #tpu.memory_space<vmem>>, vector<1x1x4x1x16xf32>
    %182 = vector.shape_cast %181 : vector<1x1x4x1x16xf32> to vector<4x16xf32>
    %c2_164 = arith.constant 2 : index
    %c0_165 = arith.constant 0 : index
    %c0_166 = arith.constant 0 : index
    %183 = vector.load %arg9[%c2_164, %c0_165, %c0_166] : memref<8x4x1xf32, #tpu.memory_space<vmem>>, vector<1x4x1xf32>
    %184 = vector.shape_cast %183 : vector<1x4x1xf32> to vector<4x1xf32>
    %c2_167 = arith.constant 2 : index
    %c0_168 = arith.constant 0 : index
    %c0_169 = arith.constant 0 : index
    %185 = vector.load %arg10[%c2_167, %c0_168, %c0_169] : memref<8x4x1xf32, #tpu.memory_space<vmem>>, vector<1x4x1xf32>
    %186 = vector.shape_cast %185 : vector<1x4x1xf32> to vector<4x1xf32>
    %cst_170 = arith.constant dense<0.000000e+00> : vector<4x16xf32>
    %187 = tpu.matmul %0, %172, %cst_170 {dimension_numbers = #tpu.dot_dimension_numbers<[1], [0], [0], [1], [0, 0, 1, 1], [], []>} : vector<4x4xf32>, vector<4x16xf32>, vector<4x16xf32> -> vector<4x16xf32>
    %188 = vector.broadcast %184 : vector<4x1xf32> to vector<4x16xf32>
    %189 = arith.addf %187, %188 : vector<4x16xf32>
    %190 = vector.broadcast %6 : vector<4x1xf32> to vector<4x16xf32>
    %191 = arith.mulf %190, %176 : vector<4x16xf32>
    %192 = arith.addf %189, %191 : vector<4x16xf32>
    %cst_171 = arith.constant dense<0.000000e+00> : vector<4x16xf32>
    %193 = tpu.matmul %1, %174, %cst_171 {dimension_numbers = #tpu.dot_dimension_numbers<[1], [0], [0], [1], [0, 0, 1, 1], [], []>} : vector<4x4xf32>, vector<4x16xf32>, vector<4x16xf32> -> vector<4x16xf32>
    %194 = vector.broadcast %186 : vector<4x1xf32> to vector<4x16xf32>
    %195 = arith.addf %193, %194 : vector<4x16xf32>
    %196 = vector.broadcast %6 : vector<4x1xf32> to vector<4x16xf32>
    %197 = arith.mulf %196, %178 : vector<4x16xf32>
    %198 = arith.addf %195, %197 : vector<4x16xf32>
    %cst_172 = arith.constant dense<0.000000e+00> : vector<16x16xf32>
    %199 = tpu.matmul %192, %198, %cst_172 {dimension_numbers = #tpu.dot_dimension_numbers<[0], [0], [1], [1], [0, 1, 1, 1], [], []>} : vector<4x16xf32>, vector<4x16xf32>, vector<16x16xf32> -> vector<16x16xf32>
    %cst_173 = arith.constant 5.000000e-01 : f32
    %200 = vector.broadcast %cst_173 : f32 to vector<16x16xf32>
    %201 = arith.mulf %199, %200 : vector<16x16xf32>
    %cst_174 = arith.constant -6.550400e+04 : f32
    %202 = vector.broadcast %cst_174 : f32 to vector<16x16xf32>
    %203 = arith.select %12, %201, %202 : vector<16x16xi1>, vector<16x16xf32>
    %cst_175 = arith.constant dense<0xFF800000> : vector<16xf32>
    %204 = vector.multi_reduction <maximumf>, %203, %cst_175 [1] : vector<16x16xf32> to vector<16xf32>
    %205 = vector.shape_cast %204 : vector<16xf32> to vector<16x1xf32>
    %206 = vector.broadcast %205 : vector<16x1xf32> to vector<16x16xf32>
    %207 = arith.subf %203, %206 : vector<16x16xf32>
    %208 = math.exp %207 : vector<16x16xf32>
    %cst_176 = arith.constant dense<0.000000e+00> : vector<16xf32>
    %209 = vector.multi_reduction <add>, %208, %cst_176 [1] : vector<16x16xf32> to vector<16xf32>
    %210 = vector.shape_cast %209 : vector<16xf32> to vector<16x1xf32>
    %211 = tpu.reciprocal %210 {approx = true} : vector<16x1xf32> -> vector<16x1xf32>
    %212 = vector.broadcast %211 : vector<16x1xf32> to vector<16x16xf32>
    %213 = arith.mulf %208, %212 : vector<16x16xf32>
    %cst_177 = arith.constant dense<0xFF800000> : vector<16xf32>
    %214 = vector.multi_reduction <maximumf>, %203, %cst_177 [0] : vector<16x16xf32> to vector<16xf32>
    %215 = vector.shape_cast %214 : vector<16xf32> to vector<1x16xf32>
    %216 = vector.broadcast %215 : vector<1x16xf32> to vector<16x16xf32>
    %217 = arith.subf %203, %216 : vector<16x16xf32>
    %218 = math.exp %217 : vector<16x16xf32>
    %cst_178 = arith.constant dense<0.000000e+00> : vector<16xf32>
    %219 = vector.multi_reduction <add>, %218, %cst_178 [0] : vector<16x16xf32> to vector<16xf32>
    %220 = vector.shape_cast %219 : vector<16xf32> to vector<1x16xf32>
    %221 = tpu.reciprocal %220 {approx = true} : vector<1x16xf32> -> vector<1x16xf32>
    %222 = vector.broadcast %221 : vector<1x16xf32> to vector<16x16xf32>
    %223 = arith.mulf %218, %222 : vector<16x16xf32>
    %cst_179 = arith.constant dense<0.000000e+00> : vector<4x16xf32>
    %224 = tpu.matmul %3, %174, %cst_179 {dimension_numbers = #tpu.dot_dimension_numbers<[1], [0], [0], [1], [0, 0, 1, 1], [], []>} : vector<4x4xf32>, vector<4x16xf32>, vector<4x16xf32> -> vector<4x16xf32>
    %225 = vector.broadcast %5 : vector<4x1xf32> to vector<4x16xf32>
    %226 = arith.addf %224, %225 : vector<4x16xf32>
    %227 = vector.broadcast %7 : vector<4x1xf32> to vector<4x16xf32>
    %228 = arith.mulf %227, %182 : vector<4x16xf32>
    %229 = arith.addf %226, %228 : vector<4x16xf32>
    %cst_180 = arith.constant dense<0.000000e+00> : vector<4x16xf32>
    %230 = tpu.matmul %2, %172, %cst_180 {dimension_numbers = #tpu.dot_dimension_numbers<[1], [0], [0], [1], [0, 0, 1, 1], [], []>} : vector<4x4xf32>, vector<4x16xf32>, vector<4x16xf32> -> vector<4x16xf32>
    %231 = vector.broadcast %4 : vector<4x1xf32> to vector<4x16xf32>
    %232 = arith.addf %230, %231 : vector<4x16xf32>
    %233 = vector.broadcast %7 : vector<4x1xf32> to vector<4x16xf32>
    %234 = arith.mulf %233, %180 : vector<4x16xf32>
    %235 = arith.addf %232, %234 : vector<4x16xf32>
    %cst_181 = arith.constant dense<0.000000e+00> : vector<4x16xf32>
    %236 = tpu.matmul %229, %213, %cst_181 {dimension_numbers = #tpu.dot_dimension_numbers<[1], [1], [0], [0], [0, 0, 1, 0], [], []>} : vector<4x16xf32>, vector<16x16xf32>, vector<4x16xf32> -> vector<4x16xf32>
    %cst_182 = arith.constant dense<0.000000e+00> : vector<4x16xf32>
    %237 = tpu.matmul %235, %223, %cst_182 {dimension_numbers = #tpu.dot_dimension_numbers<[1], [0], [0], [1], [0, 0, 1, 1], [], []>} : vector<4x16xf32>, vector<16x16xf32>, vector<4x16xf32> -> vector<4x16xf32>
    %238 = vector.broadcast %8 : vector<4x1xf32> to vector<4x16xf32>
    %239 = arith.mulf %238, %236 : vector<4x16xf32>
    %240 = arith.addf %172, %239 : vector<4x16xf32>
    %c0_183 = arith.constant 0 : index
    %c0_184 = arith.constant 0 : index
    %c0_185 = arith.constant 0 : index
    %c2_186 = arith.constant 2 : index
    %c0_187 = arith.constant 0 : index
    %241 = vector.load %arg17[%c0_183, %c0_184, %c0_185, %c2_186, %c0_187] : memref<2x1x4x8x16xf32, #tpu.memory_space<vmem>>, vector<1x1x4x1x16xf32>
    %242 = vector.shape_cast %241 : vector<1x1x4x1x16xf32> to vector<4x16xf32>
    %243 = vector.shape_cast %240 : vector<4x16xf32> to vector<1x1x4x1x16xf32>
    tpu.vector_store %arg17[%c0_183, %c0_184, %c0_185, %c2_186, %c0_187], %243 {strides = array<i32>} : memref<2x1x4x8x16xf32, #tpu.memory_space<vmem>>, vector<1x1x4x1x16xf32>,
    %244 = vector.broadcast %9 : vector<4x1xf32> to vector<4x16xf32>
    %245 = arith.mulf %244, %237 : vector<4x16xf32>
    %246 = arith.addf %174, %245 : vector<4x16xf32>
    %c1_188 = arith.constant 1 : index
    %c0_189 = arith.constant 0 : index
    %c0_190 = arith.constant 0 : index
    %c2_191 = arith.constant 2 : index
    %c0_192 = arith.constant 0 : index
    %247 = vector.load %arg17[%c1_188, %c0_189, %c0_190, %c2_191, %c0_192] : memref<2x1x4x8x16xf32, #tpu.memory_space<vmem>>, vector<1x1x4x1x16xf32>
    %248 = vector.shape_cast %247 : vector<1x1x4x1x16xf32> to vector<4x16xf32>
    %249 = vector.shape_cast %246 : vector<4x16xf32> to vector<1x1x4x1x16xf32>
    tpu.vector_store %arg17[%c1_188, %c0_189, %c0_190, %c2_191, %c0_192], %249 {strides = array<i32>} : memref<2x1x4x8x16xf32, #tpu.memory_space<vmem>>, vector<1x1x4x1x16xf32>,
    %c0_193 = arith.constant 0 : index
    %c0_194 = arith.constant 0 : index
    %c0_195 = arith.constant 0 : index
    %c3 = arith.constant 3 : index
    %c0_196 = arith.constant 0 : index
    %250 = vector.load %arg2[%c0_193, %c0_194, %c0_195, %c3, %c0_196] : memref<2x1x4x8x16xf32, #tpu.memory_space<vmem>>, vector<1x1x4x1x16xf32>
    %251 = vector.shape_cast %250 : vector<1x1x4x1x16xf32> to vector<4x16xf32>
    %c1_197 = arith.constant 1 : index
    %c0_198 = arith.constant 0 : index
    %c0_199 = arith.constant 0 : index
    %c3_200 = arith.constant 3 : index
    %c0_201 = arith.constant 0 : index
    %252 = vector.load %arg2[%c1_197, %c0_198, %c0_199, %c3_200, %c0_201] : memref<2x1x4x8x16xf32, #tpu.memory_space<vmem>>, vector<1x1x4x1x16xf32>
    %253 = vector.shape_cast %252 : vector<1x1x4x1x16xf32> to vector<4x16xf32>
    %c0_202 = arith.constant 0 : index
    %c0_203 = arith.constant 0 : index
    %c0_204 = arith.constant 0 : index
    %c3_205 = arith.constant 3 : index
    %c0_206 = arith.constant 0 : index
    %254 = vector.load %arg3[%c0_202, %c0_203, %c0_204, %c3_205, %c0_206] : memref<2x1x4x8x16xf32, #tpu.memory_space<vmem>>, vector<1x1x4x1x16xf32>
    %255 = vector.shape_cast %254 : vector<1x1x4x1x16xf32> to vector<4x16xf32>
    %c1_207 = arith.constant 1 : index
    %c0_208 = arith.constant 0 : index
    %c0_209 = arith.constant 0 : index
    %c3_210 = arith.constant 3 : index
    %c0_211 = arith.constant 0 : index
    %256 = vector.load %arg3[%c1_207, %c0_208, %c0_209, %c3_210, %c0_211] : memref<2x1x4x8x16xf32, #tpu.memory_space<vmem>>, vector<1x1x4x1x16xf32>
    %257 = vector.shape_cast %256 : vector<1x1x4x1x16xf32> to vector<4x16xf32>
    %c0_212 = arith.constant 0 : index
    %c0_213 = arith.constant 0 : index
    %c0_214 = arith.constant 0 : index
    %c3_215 = arith.constant 3 : index
    %c0_216 = arith.constant 0 : index
    %258 = vector.load %arg4[%c0_212, %c0_213, %c0_214, %c3_215, %c0_216] : memref<2x1x4x8x16xf32, #tpu.memory_space<vmem>>, vector<1x1x4x1x16xf32>
    %259 = vector.shape_cast %258 : vector<1x1x4x1x16xf32> to vector<4x16xf32>
    %c1_217 = arith.constant 1 : index
    %c0_218 = arith.constant 0 : index
    %c0_219 = arith.constant 0 : index
    %c3_220 = arith.constant 3 : index
    %c0_221 = arith.constant 0 : index
    %260 = vector.load %arg4[%c1_217, %c0_218, %c0_219, %c3_220, %c0_221] : memref<2x1x4x8x16xf32, #tpu.memory_space<vmem>>, vector<1x1x4x1x16xf32>
    %261 = vector.shape_cast %260 : vector<1x1x4x1x16xf32> to vector<4x16xf32>
    %c3_222 = arith.constant 3 : index
    %c0_223 = arith.constant 0 : index
    %c0_224 = arith.constant 0 : index
    %262 = vector.load %arg9[%c3_222, %c0_223, %c0_224] : memref<8x4x1xf32, #tpu.memory_space<vmem>>, vector<1x4x1xf32>
    %263 = vector.shape_cast %262 : vector<1x4x1xf32> to vector<4x1xf32>
    %c3_225 = arith.constant 3 : index
    %c0_226 = arith.constant 0 : index
    %c0_227 = arith.constant 0 : index
    %264 = vector.load %arg10[%c3_225, %c0_226, %c0_227] : memref<8x4x1xf32, #tpu.memory_space<vmem>>, vector<1x4x1xf32>
    %265 = vector.shape_cast %264 : vector<1x4x1xf32> to vector<4x1xf32>
    %cst_228 = arith.constant dense<0.000000e+00> : vector<4x16xf32>
    %266 = tpu.matmul %0, %251, %cst_228 {dimension_numbers = #tpu.dot_dimension_numbers<[1], [0], [0], [1], [0, 0, 1, 1], [], []>} : vector<4x4xf32>, vector<4x16xf32>, vector<4x16xf32> -> vector<4x16xf32>
    %267 = vector.broadcast %263 : vector<4x1xf32> to vector<4x16xf32>
    %268 = arith.addf %266, %267 : vector<4x16xf32>
    %269 = vector.broadcast %6 : vector<4x1xf32> to vector<4x16xf32>
    %270 = arith.mulf %269, %255 : vector<4x16xf32>
    %271 = arith.addf %268, %270 : vector<4x16xf32>
    %cst_229 = arith.constant dense<0.000000e+00> : vector<4x16xf32>
    %272 = tpu.matmul %1, %253, %cst_229 {dimension_numbers = #tpu.dot_dimension_numbers<[1], [0], [0], [1], [0, 0, 1, 1], [], []>} : vector<4x4xf32>, vector<4x16xf32>, vector<4x16xf32> -> vector<4x16xf32>
    %273 = vector.broadcast %265 : vector<4x1xf32> to vector<4x16xf32>
    %274 = arith.addf %272, %273 : vector<4x16xf32>
    %275 = vector.broadcast %6 : vector<4x1xf32> to vector<4x16xf32>
    %276 = arith.mulf %275, %257 : vector<4x16xf32>
    %277 = arith.addf %274, %276 : vector<4x16xf32>
    %cst_230 = arith.constant dense<0.000000e+00> : vector<16x16xf32>
    %278 = tpu.matmul %271, %277, %cst_230 {dimension_numbers = #tpu.dot_dimension_numbers<[0], [0], [1], [1], [0, 1, 1, 1], [], []>} : vector<4x16xf32>, vector<4x16xf32>, vector<16x16xf32> -> vector<16x16xf32>
    %cst_231 = arith.constant 5.000000e-01 : f32
    %279 = vector.broadcast %cst_231 : f32 to vector<16x16xf32>
    %280 = arith.mulf %278, %279 : vector<16x16xf32>
    %cst_232 = arith.constant -6.550400e+04 : f32
    %281 = vector.broadcast %cst_232 : f32 to vector<16x16xf32>
    %282 = arith.select %12, %280, %281 : vector<16x16xi1>, vector<16x16xf32>
    %cst_233 = arith.constant dense<0xFF800000> : vector<16xf32>
    %283 = vector.multi_reduction <maximumf>, %282, %cst_233 [1] : vector<16x16xf32> to vector<16xf32>
    %284 = vector.shape_cast %283 : vector<16xf32> to vector<16x1xf32>
    %285 = vector.broadcast %284 : vector<16x1xf32> to vector<16x16xf32>
    %286 = arith.subf %282, %285 : vector<16x16xf32>
    %287 = math.exp %286 : vector<16x16xf32>
    %cst_234 = arith.constant dense<0.000000e+00> : vector<16xf32>
    %288 = vector.multi_reduction <add>, %287, %cst_234 [1] : vector<16x16xf32> to vector<16xf32>
    %289 = vector.shape_cast %288 : vector<16xf32> to vector<16x1xf32>
    %290 = tpu.reciprocal %289 {approx = true} : vector<16x1xf32> -> vector<16x1xf32>
    %291 = vector.broadcast %290 : vector<16x1xf32> to vector<16x16xf32>
    %292 = arith.mulf %287, %291 : vector<16x16xf32>
    %cst_235 = arith.constant dense<0xFF800000> : vector<16xf32>
    %293 = vector.multi_reduction <maximumf>, %282, %cst_235 [0] : vector<16x16xf32> to vector<16xf32>
    %294 = vector.shape_cast %293 : vector<16xf32> to vector<1x16xf32>
    %295 = vector.broadcast %294 : vector<1x16xf32> to vector<16x16xf32>
    %296 = arith.subf %282, %295 : vector<16x16xf32>
    %297 = math.exp %296 : vector<16x16xf32>
    %cst_236 = arith.constant dense<0.000000e+00> : vector<16xf32>
    %298 = vector.multi_reduction <add>, %297, %cst_236 [0] : vector<16x16xf32> to vector<16xf32>
    %299 = vector.shape_cast %298 : vector<16xf32> to vector<1x16xf32>
    %300 = tpu.reciprocal %299 {approx = true} : vector<1x16xf32> -> vector<1x16xf32>
    %301 = vector.broadcast %300 : vector<1x16xf32> to vector<16x16xf32>
    %302 = arith.mulf %297, %301 : vector<16x16xf32>
    %cst_237 = arith.constant dense<0.000000e+00> : vector<4x16xf32>
    %303 = tpu.matmul %3, %253, %cst_237 {dimension_numbers = #tpu.dot_dimension_numbers<[1], [0], [0], [1], [0, 0, 1, 1], [], []>} : vector<4x4xf32>, vector<4x16xf32>, vector<4x16xf32> -> vector<4x16xf32>
    %304 = vector.broadcast %5 : vector<4x1xf32> to vector<4x16xf32>
    %305 = arith.addf %303, %304 : vector<4x16xf32>
    %306 = vector.broadcast %7 : vector<4x1xf32> to vector<4x16xf32>
    %307 = arith.mulf %306, %261 : vector<4x16xf32>
    %308 = arith.addf %305, %307 : vector<4x16xf32>
    %cst_238 = arith.constant dense<0.000000e+00> : vector<4x16xf32>
    %309 = tpu.matmul %2, %251, %cst_238 {dimension_numbers = #tpu.dot_dimension_numbers<[1], [0], [0], [1], [0, 0, 1, 1], [], []>} : vector<4x4xf32>, vector<4x16xf32>, vector<4x16xf32> -> vector<4x16xf32>
    %310 = vector.broadcast %4 : vector<4x1xf32> to vector<4x16xf32>
    %311 = arith.addf %309, %310 : vector<4x16xf32>
    %312 = vector.broadcast %7 : vector<4x1xf32> to vector<4x16xf32>
    %313 = arith.mulf %312, %259 : vector<4x16xf32>
    %314 = arith.addf %311, %313 : vector<4x16xf32>
    %cst_239 = arith.constant dense<0.000000e+00> : vector<4x16xf32>
    %315 = tpu.matmul %308, %292, %cst_239 {dimension_numbers = #tpu.dot_dimension_numbers<[1], [1], [0], [0], [0, 0, 1, 0], [], []>} : vector<4x16xf32>, vector<16x16xf32>, vector<4x16xf32> -> vector<4x16xf32>
    %cst_240 = arith.constant dense<0.000000e+00> : vector<4x16xf32>
    %316 = tpu.matmul %314, %302, %cst_240 {dimension_numbers = #tpu.dot_dimension_numbers<[1], [0], [0], [1], [0, 0, 1, 1], [], []>} : vector<4x16xf32>, vector<16x16xf32>, vector<4x16xf32> -> vector<4x16xf32>
    %317 = vector.broadcast %8 : vector<4x1xf32> to vector<4x16xf32>
    %318 = arith.mulf %317, %315 : vector<4x16xf32>
    %319 = arith.addf %251, %318 : vector<4x16xf32>
    %c0_241 = arith.constant 0 : index
    %c0_242 = arith.constant 0 : index
    %c0_243 = arith.constant 0 : index
    %c3_244 = arith.constant 3 : index
    %c0_245 = arith.constant 0 : index
    %320 = vector.load %arg17[%c0_241, %c0_242, %c0_243, %c3_244, %c0_245] : memref<2x1x4x8x16xf32, #tpu.memory_space<vmem>>, vector<1x1x4x1x16xf32>
    %321 = vector.shape_cast %320 : vector<1x1x4x1x16xf32> to vector<4x16xf32>
    %322 = vector.shape_cast %319 : vector<4x16xf32> to vector<1x1x4x1x16xf32>
    tpu.vector_store %arg17[%c0_241, %c0_242, %c0_243, %c3_244, %c0_245], %322 {strides = array<i32>} : memref<2x1x4x8x16xf32, #tpu.memory_space<vmem>>, vector<1x1x4x1x16xf32>,
    %323 = vector.broadcast %9 : vector<4x1xf32> to vector<4x16xf32>
    %324 = arith.mulf %323, %316 : vector<4x16xf32>
    %325 = arith.addf %253, %324 : vector<4x16xf32>
    %c1_246 = arith.constant 1 : index
    %c0_247 = arith.constant 0 : index
    %c0_248 = arith.constant 0 : index
    %c3_249 = arith.constant 3 : index
    %c0_250 = arith.constant 0 : index
    %326 = vector.load %arg17[%c1_246, %c0_247, %c0_248, %c3_249, %c0_250] : memref<2x1x4x8x16xf32, #tpu.memory_space<vmem>>, vector<1x1x4x1x16xf32>
    %327 = vector.shape_cast %326 : vector<1x1x4x1x16xf32> to vector<4x16xf32>
    %328 = vector.shape_cast %325 : vector<4x16xf32> to vector<1x1x4x1x16xf32>
    tpu.vector_store %arg17[%c1_246, %c0_247, %c0_248, %c3_249, %c0_250], %328 {strides = array<i32>} : memref<2x1x4x8x16xf32, #tpu.memory_space<vmem>>, vector<1x1x4x1x16xf32>,
    %c0_251 = arith.constant 0 : index
    %c0_252 = arith.constant 0 : index
    %c0_253 = arith.constant 0 : index
    %c4 = arith.constant 4 : index
    %c0_254 = arith.constant 0 : index
    %329 = vector.load %arg2[%c0_251, %c0_252, %c0_253, %c4, %c0_254] : memref<2x1x4x8x16xf32, #tpu.memory_space<vmem>>, vector<1x1x4x1x16xf32>
    %330 = vector.shape_cast %329 : vector<1x1x4x1x16xf32> to vector<4x16xf32>
    %c1_255 = arith.constant 1 : index
    %c0_256 = arith.constant 0 : index
    %c0_257 = arith.constant 0 : index
    %c4_258 = arith.constant 4 : index
    %c0_259 = arith.constant 0 : index
    %331 = vector.load %arg2[%c1_255, %c0_256, %c0_257, %c4_258, %c0_259] : memref<2x1x4x8x16xf32, #tpu.memory_space<vmem>>, vector<1x1x4x1x16xf32>
    %332 = vector.shape_cast %331 : vector<1x1x4x1x16xf32> to vector<4x16xf32>
    %c0_260 = arith.constant 0 : index
    %c0_261 = arith.constant 0 : index
    %c0_262 = arith.constant 0 : index
    %c4_263 = arith.constant 4 : index
    %c0_264 = arith.constant 0 : index
    %333 = vector.load %arg3[%c0_260, %c0_261, %c0_262, %c4_263, %c0_264] : memref<2x1x4x8x16xf32, #tpu.memory_space<vmem>>, vector<1x1x4x1x16xf32>
    %334 = vector.shape_cast %333 : vector<1x1x4x1x16xf32> to vector<4x16xf32>
    %c1_265 = arith.constant 1 : index
    %c0_266 = arith.constant 0 : index
    %c0_267 = arith.constant 0 : index
    %c4_268 = arith.constant 4 : index
    %c0_269 = arith.constant 0 : index
    %335 = vector.load %arg3[%c1_265, %c0_266, %c0_267, %c4_268, %c0_269] : memref<2x1x4x8x16xf32, #tpu.memory_space<vmem>>, vector<1x1x4x1x16xf32>
    %336 = vector.shape_cast %335 : vector<1x1x4x1x16xf32> to vector<4x16xf32>
    %c0_270 = arith.constant 0 : index
    %c0_271 = arith.constant 0 : index
    %c0_272 = arith.constant 0 : index
    %c4_273 = arith.constant 4 : index
    %c0_274 = arith.constant 0 : index
    %337 = vector.load %arg4[%c0_270, %c0_271, %c0_272, %c4_273, %c0_274] : memref<2x1x4x8x16xf32, #tpu.memory_space<vmem>>, vector<1x1x4x1x16xf32>
    %338 = vector.shape_cast %337 : vector<1x1x4x1x16xf32> to vector<4x16xf32>
    %c1_275 = arith.constant 1 : index
    %c0_276 = arith.constant 0 : index
    %c0_277 = arith.constant 0 : index
    %c4_278 = arith.constant 4 : index
    %c0_279 = arith.constant 0 : index
    %339 = vector.load %arg4[%c1_275, %c0_276, %c0_277, %c4_278, %c0_279] : memref<2x1x4x8x16xf32, #tpu.memory_space<vmem>>, vector<1x1x4x1x16xf32>
    %340 = vector.shape_cast %339 : vector<1x1x4x1x16xf32> to vector<4x16xf32>
    %c4_280 = arith.constant 4 : index
    %c0_281 = arith.constant 0 : index
    %c0_282 = arith.constant 0 : index
    %341 = vector.load %arg9[%c4_280, %c0_281, %c0_282] : memref<8x4x1xf32, #tpu.memory_space<vmem>>, vector<1x4x1xf32>
    %342 = vector.shape_cast %341 : vector<1x4x1xf32> to vector<4x1xf32>
    %c4_283 = arith.constant 4 : index
    %c0_284 = arith.constant 0 : index
    %c0_285 = arith.constant 0 : index
    %343 = vector.load %arg10[%c4_283, %c0_284, %c0_285] : memref<8x4x1xf32, #tpu.memory_space<vmem>>, vector<1x4x1xf32>
    %344 = vector.shape_cast %343 : vector<1x4x1xf32> to vector<4x1xf32>
    %cst_286 = arith.constant dense<0.000000e+00> : vector<4x16xf32>
    %345 = tpu.matmul %0, %330, %cst_286 {dimension_numbers = #tpu.dot_dimension_numbers<[1], [0], [0], [1], [0, 0, 1, 1], [], []>} : vector<4x4xf32>, vector<4x16xf32>, vector<4x16xf32> -> vector<4x16xf32>
    %346 = vector.broadcast %342 : vector<4x1xf32> to vector<4x16xf32>
    %347 = arith.addf %345, %346 : vector<4x16xf32>
    %348 = vector.broadcast %6 : vector<4x1xf32> to vector<4x16xf32>
    %349 = arith.mulf %348, %334 : vector<4x16xf32>
    %350 = arith.addf %347, %349 : vector<4x16xf32>
    %cst_287 = arith.constant dense<0.000000e+00> : vector<4x16xf32>
    %351 = tpu.matmul %1, %332, %cst_287 {dimension_numbers = #tpu.dot_dimension_numbers<[1], [0], [0], [1], [0, 0, 1, 1], [], []>} : vector<4x4xf32>, vector<4x16xf32>, vector<4x16xf32> -> vector<4x16xf32>
    %352 = vector.broadcast %344 : vector<4x1xf32> to vector<4x16xf32>
    %353 = arith.addf %351, %352 : vector<4x16xf32>
    %354 = vector.broadcast %6 : vector<4x1xf32> to vector<4x16xf32>
    %355 = arith.mulf %354, %336 : vector<4x16xf32>
    %356 = arith.addf %353, %355 : vector<4x16xf32>
    %cst_288 = arith.constant dense<0.000000e+00> : vector<16x16xf32>
    %357 = tpu.matmul %350, %356, %cst_288 {dimension_numbers = #tpu.dot_dimension_numbers<[0], [0], [1], [1], [0, 1, 1, 1], [], []>} : vector<4x16xf32>, vector<4x16xf32>, vector<16x16xf32> -> vector<16x16xf32>
    %cst_289 = arith.constant 5.000000e-01 : f32
    %358 = vector.broadcast %cst_289 : f32 to vector<16x16xf32>
    %359 = arith.mulf %357, %358 : vector<16x16xf32>
    %cst_290 = arith.constant -6.550400e+04 : f32
    %360 = vector.broadcast %cst_290 : f32 to vector<16x16xf32>
    %361 = arith.select %12, %359, %360 : vector<16x16xi1>, vector<16x16xf32>
    %cst_291 = arith.constant dense<0xFF800000> : vector<16xf32>
    %362 = vector.multi_reduction <maximumf>, %361, %cst_291 [1] : vector<16x16xf32> to vector<16xf32>
    %363 = vector.shape_cast %362 : vector<16xf32> to vector<16x1xf32>
    %364 = vector.broadcast %363 : vector<16x1xf32> to vector<16x16xf32>
    %365 = arith.subf %361, %364 : vector<16x16xf32>
    %366 = math.exp %365 : vector<16x16xf32>
    %cst_292 = arith.constant dense<0.000000e+00> : vector<16xf32>
    %367 = vector.multi_reduction <add>, %366, %cst_292 [1] : vector<16x16xf32> to vector<16xf32>
    %368 = vector.shape_cast %367 : vector<16xf32> to vector<16x1xf32>
    %369 = tpu.reciprocal %368 {approx = true} : vector<16x1xf32> -> vector<16x1xf32>
    %370 = vector.broadcast %369 : vector<16x1xf32> to vector<16x16xf32>
    %371 = arith.mulf %366, %370 : vector<16x16xf32>
    %cst_293 = arith.constant dense<0xFF800000> : vector<16xf32>
    %372 = vector.multi_reduction <maximumf>, %361, %cst_293 [0] : vector<16x16xf32> to vector<16xf32>
    %373 = vector.shape_cast %372 : vector<16xf32> to vector<1x16xf32>
    %374 = vector.broadcast %373 : vector<1x16xf32> to vector<16x16xf32>
    %375 = arith.subf %361, %374 : vector<16x16xf32>
    %376 = math.exp %375 : vector<16x16xf32>
    %cst_294 = arith.constant dense<0.000000e+00> : vector<16xf32>
    %377 = vector.multi_reduction <add>, %376, %cst_294 [0] : vector<16x16xf32> to vector<16xf32>
    %378 = vector.shape_cast %377 : vector<16xf32> to vector<1x16xf32>
    %379 = tpu.reciprocal %378 {approx = true} : vector<1x16xf32> -> vector<1x16xf32>
    %380 = vector.broadcast %379 : vector<1x16xf32> to vector<16x16xf32>
    %381 = arith.mulf %376, %380 : vector<16x16xf32>
    %cst_295 = arith.constant dense<0.000000e+00> : vector<4x16xf32>
    %382 = tpu.matmul %3, %332, %cst_295 {dimension_numbers = #tpu.dot_dimension_numbers<[1], [0], [0], [1], [0, 0, 1, 1], [], []>} : vector<4x4xf32>, vector<4x16xf32>, vector<4x16xf32> -> vector<4x16xf32>
    %383 = vector.broadcast %5 : vector<4x1xf32> to vector<4x16xf32>
    %384 = arith.addf %382, %383 : vector<4x16xf32>
    %385 = vector.broadcast %7 : vector<4x1xf32> to vector<4x16xf32>
    %386 = arith.mulf %385, %340 : vector<4x16xf32>
    %387 = arith.addf %384, %386 : vector<4x16xf32>
    %cst_296 = arith.constant dense<0.000000e+00> : vector<4x16xf32>
    %388 = tpu.matmul %2, %330, %cst_296 {dimension_numbers = #tpu.dot_dimension_numbers<[1], [0], [0], [1], [0, 0, 1, 1], [], []>} : vector<4x4xf32>, vector<4x16xf32>, vector<4x16xf32> -> vector<4x16xf32>
    %389 = vector.broadcast %4 : vector<4x1xf32> to vector<4x16xf32>
    %390 = arith.addf %388, %389 : vector<4x16xf32>
    %391 = vector.broadcast %7 : vector<4x1xf32> to vector<4x16xf32>
    %392 = arith.mulf %391, %338 : vector<4x16xf32>
    %393 = arith.addf %390, %392 : vector<4x16xf32>
    %cst_297 = arith.constant dense<0.000000e+00> : vector<4x16xf32>
    %394 = tpu.matmul %387, %371, %cst_297 {dimension_numbers = #tpu.dot_dimension_numbers<[1], [1], [0], [0], [0, 0, 1, 0], [], []>} : vector<4x16xf32>, vector<16x16xf32>, vector<4x16xf32> -> vector<4x16xf32>
    %cst_298 = arith.constant dense<0.000000e+00> : vector<4x16xf32>
    %395 = tpu.matmul %393, %381, %cst_298 {dimension_numbers = #tpu.dot_dimension_numbers<[1], [0], [0], [1], [0, 0, 1, 1], [], []>} : vector<4x16xf32>, vector<16x16xf32>, vector<4x16xf32> -> vector<4x16xf32>
    %396 = vector.broadcast %8 : vector<4x1xf32> to vector<4x16xf32>
    %397 = arith.mulf %396, %394 : vector<4x16xf32>
    %398 = arith.addf %330, %397 : vector<4x16xf32>
    %c0_299 = arith.constant 0 : index
    %c0_300 = arith.constant 0 : index
    %c0_301 = arith.constant 0 : index
    %c4_302 = arith.constant 4 : index
    %c0_303 = arith.constant 0 : index
    %399 = vector.load %arg17[%c0_299, %c0_300, %c0_301, %c4_302, %c0_303] : memref<2x1x4x8x16xf32, #tpu.memory_space<vmem>>, vector<1x1x4x1x16xf32>
    %400 = vector.shape_cast %399 : vector<1x1x4x1x16xf32> to vector<4x16xf32>
    %401 = vector.shape_cast %398 : vector<4x16xf32> to vector<1x1x4x1x16xf32>
    tpu.vector_store %arg17[%c0_299, %c0_300, %c0_301, %c4_302, %c0_303], %401 {strides = array<i32>} : memref<2x1x4x8x16xf32, #tpu.memory_space<vmem>>, vector<1x1x4x1x16xf32>,
    %402 = vector.broadcast %9 : vector<4x1xf32> to vector<4x16xf32>
    %403 = arith.mulf %402, %395 : vector<4x16xf32>
    %404 = arith.addf %332, %403 : vector<4x16xf32>
    %c1_304 = arith.constant 1 : index
    %c0_305 = arith.constant 0 : index
    %c0_306 = arith.constant 0 : index
    %c4_307 = arith.constant 4 : index
    %c0_308 = arith.constant 0 : index
    %405 = vector.load %arg17[%c1_304, %c0_305, %c0_306, %c4_307, %c0_308] : memref<2x1x4x8x16xf32, #tpu.memory_space<vmem>>, vector<1x1x4x1x16xf32>
    %406 = vector.shape_cast %405 : vector<1x1x4x1x16xf32> to vector<4x16xf32>
    %407 = vector.shape_cast %404 : vector<4x16xf32> to vector<1x1x4x1x16xf32>
    tpu.vector_store %arg17[%c1_304, %c0_305, %c0_306, %c4_307, %c0_308], %407 {strides = array<i32>} : memref<2x1x4x8x16xf32, #tpu.memory_space<vmem>>, vector<1x1x4x1x16xf32>,
    %c0_309 = arith.constant 0 : index
    %c0_310 = arith.constant 0 : index
    %c0_311 = arith.constant 0 : index
    %c5 = arith.constant 5 : index
    %c0_312 = arith.constant 0 : index
    %408 = vector.load %arg2[%c0_309, %c0_310, %c0_311, %c5, %c0_312] : memref<2x1x4x8x16xf32, #tpu.memory_space<vmem>>, vector<1x1x4x1x16xf32>
    %409 = vector.shape_cast %408 : vector<1x1x4x1x16xf32> to vector<4x16xf32>
    %c1_313 = arith.constant 1 : index
    %c0_314 = arith.constant 0 : index
    %c0_315 = arith.constant 0 : index
    %c5_316 = arith.constant 5 : index
    %c0_317 = arith.constant 0 : index
    %410 = vector.load %arg2[%c1_313, %c0_314, %c0_315, %c5_316, %c0_317] : memref<2x1x4x8x16xf32, #tpu.memory_space<vmem>>, vector<1x1x4x1x16xf32>
    %411 = vector.shape_cast %410 : vector<1x1x4x1x16xf32> to vector<4x16xf32>
    %c0_318 = arith.constant 0 : index
    %c0_319 = arith.constant 0 : index
    %c0_320 = arith.constant 0 : index
    %c5_321 = arith.constant 5 : index
    %c0_322 = arith.constant 0 : index
    %412 = vector.load %arg3[%c0_318, %c0_319, %c0_320, %c5_321, %c0_322] : memref<2x1x4x8x16xf32, #tpu.memory_space<vmem>>, vector<1x1x4x1x16xf32>
    %413 = vector.shape_cast %412 : vector<1x1x4x1x16xf32> to vector<4x16xf32>
    %c1_323 = arith.constant 1 : index
    %c0_324 = arith.constant 0 : index
    %c0_325 = arith.constant 0 : index
    %c5_326 = arith.constant 5 : index
    %c0_327 = arith.constant 0 : index
    %414 = vector.load %arg3[%c1_323, %c0_324, %c0_325, %c5_326, %c0_327] : memref<2x1x4x8x16xf32, #tpu.memory_space<vmem>>, vector<1x1x4x1x16xf32>
    %415 = vector.shape_cast %414 : vector<1x1x4x1x16xf32> to vector<4x16xf32>
    %c0_328 = arith.constant 0 : index
    %c0_329 = arith.constant 0 : index
    %c0_330 = arith.constant 0 : index
    %c5_331 = arith.constant 5 : index
    %c0_332 = arith.constant 0 : index
    %416 = vector.load %arg4[%c0_328, %c0_329, %c0_330, %c5_331, %c0_332] : memref<2x1x4x8x16xf32, #tpu.memory_space<vmem>>, vector<1x1x4x1x16xf32>
    %417 = vector.shape_cast %416 : vector<1x1x4x1x16xf32> to vector<4x16xf32>
    %c1_333 = arith.constant 1 : index
    %c0_334 = arith.constant 0 : index
    %c0_335 = arith.constant 0 : index
    %c5_336 = arith.constant 5 : index
    %c0_337 = arith.constant 0 : index
    %418 = vector.load %arg4[%c1_333, %c0_334, %c0_335, %c5_336, %c0_337] : memref<2x1x4x8x16xf32, #tpu.memory_space<vmem>>, vector<1x1x4x1x16xf32>
    %419 = vector.shape_cast %418 : vector<1x1x4x1x16xf32> to vector<4x16xf32>
    %c5_338 = arith.constant 5 : index
    %c0_339 = arith.constant 0 : index
    %c0_340 = arith.constant 0 : index
    %420 = vector.load %arg9[%c5_338, %c0_339, %c0_340] : memref<8x4x1xf32, #tpu.memory_space<vmem>>, vector<1x4x1xf32>
    %421 = vector.shape_cast %420 : vector<1x4x1xf32> to vector<4x1xf32>
    %c5_341 = arith.constant 5 : index
    %c0_342 = arith.constant 0 : index
    %c0_343 = arith.constant 0 : index
    %422 = vector.load %arg10[%c5_341, %c0_342, %c0_343] : memref<8x4x1xf32, #tpu.memory_space<vmem>>, vector<1x4x1xf32>
    %423 = vector.shape_cast %422 : vector<1x4x1xf32> to vector<4x1xf32>
    %cst_344 = arith.constant dense<0.000000e+00> : vector<4x16xf32>
    %424 = tpu.matmul %0, %409, %cst_344 {dimension_numbers = #tpu.dot_dimension_numbers<[1], [0], [0], [1], [0, 0, 1, 1], [], []>} : vector<4x4xf32>, vector<4x16xf32>, vector<4x16xf32> -> vector<4x16xf32>
    %425 = vector.broadcast %421 : vector<4x1xf32> to vector<4x16xf32>
    %426 = arith.addf %424, %425 : vector<4x16xf32>
    %427 = vector.broadcast %6 : vector<4x1xf32> to vector<4x16xf32>
    %428 = arith.mulf %427, %413 : vector<4x16xf32>
    %429 = arith.addf %426, %428 : vector<4x16xf32>
    %cst_345 = arith.constant dense<0.000000e+00> : vector<4x16xf32>
    %430 = tpu.matmul %1, %411, %cst_345 {dimension_numbers = #tpu.dot_dimension_numbers<[1], [0], [0], [1], [0, 0, 1, 1], [], []>} : vector<4x4xf32>, vector<4x16xf32>, vector<4x16xf32> -> vector<4x16xf32>
    %431 = vector.broadcast %423 : vector<4x1xf32> to vector<4x16xf32>
    %432 = arith.addf %430, %431 : vector<4x16xf32>
    %433 = vector.broadcast %6 : vector<4x1xf32> to vector<4x16xf32>
    %434 = arith.mulf %433, %415 : vector<4x16xf32>
    %435 = arith.addf %432, %434 : vector<4x16xf32>
    %cst_346 = arith.constant dense<0.000000e+00> : vector<16x16xf32>
    %436 = tpu.matmul %429, %435, %cst_346 {dimension_numbers = #tpu.dot_dimension_numbers<[0], [0], [1], [1], [0, 1, 1, 1], [], []>} : vector<4x16xf32>, vector<4x16xf32>, vector<16x16xf32> -> vector<16x16xf32>
    %cst_347 = arith.constant 5.000000e-01 : f32
    %437 = vector.broadcast %cst_347 : f32 to vector<16x16xf32>
    %438 = arith.mulf %436, %437 : vector<16x16xf32>
    %cst_348 = arith.constant -6.550400e+04 : f32
    %439 = vector.broadcast %cst_348 : f32 to vector<16x16xf32>
    %440 = arith.select %12, %438, %439 : vector<16x16xi1>, vector<16x16xf32>
    %cst_349 = arith.constant dense<0xFF800000> : vector<16xf32>
    %441 = vector.multi_reduction <maximumf>, %440, %cst_349 [1] : vector<16x16xf32> to vector<16xf32>
    %442 = vector.shape_cast %441 : vector<16xf32> to vector<16x1xf32>
    %443 = vector.broadcast %442 : vector<16x1xf32> to vector<16x16xf32>
    %444 = arith.subf %440, %443 : vector<16x16xf32>
    %445 = math.exp %444 : vector<16x16xf32>
    %cst_350 = arith.constant dense<0.000000e+00> : vector<16xf32>
    %446 = vector.multi_reduction <add>, %445, %cst_350 [1] : vector<16x16xf32> to vector<16xf32>
    %447 = vector.shape_cast %446 : vector<16xf32> to vector<16x1xf32>
    %448 = tpu.reciprocal %447 {approx = true} : vector<16x1xf32> -> vector<16x1xf32>
    %449 = vector.broadcast %448 : vector<16x1xf32> to vector<16x16xf32>
    %450 = arith.mulf %445, %449 : vector<16x16xf32>
    %cst_351 = arith.constant dense<0xFF800000> : vector<16xf32>
    %451 = vector.multi_reduction <maximumf>, %440, %cst_351 [0] : vector<16x16xf32> to vector<16xf32>
    %452 = vector.shape_cast %451 : vector<16xf32> to vector<1x16xf32>
    %453 = vector.broadcast %452 : vector<1x16xf32> to vector<16x16xf32>
    %454 = arith.subf %440, %453 : vector<16x16xf32>
    %455 = math.exp %454 : vector<16x16xf32>
    %cst_352 = arith.constant dense<0.000000e+00> : vector<16xf32>
    %456 = vector.multi_reduction <add>, %455, %cst_352 [0] : vector<16x16xf32> to vector<16xf32>
    %457 = vector.shape_cast %456 : vector<16xf32> to vector<1x16xf32>
    %458 = tpu.reciprocal %457 {approx = true} : vector<1x16xf32> -> vector<1x16xf32>
    %459 = vector.broadcast %458 : vector<1x16xf32> to vector<16x16xf32>
    %460 = arith.mulf %455, %459 : vector<16x16xf32>
    %cst_353 = arith.constant dense<0.000000e+00> : vector<4x16xf32>
    %461 = tpu.matmul %3, %411, %cst_353 {dimension_numbers = #tpu.dot_dimension_numbers<[1], [0], [0], [1], [0, 0, 1, 1], [], []>} : vector<4x4xf32>, vector<4x16xf32>, vector<4x16xf32> -> vector<4x16xf32>
    %462 = vector.broadcast %5 : vector<4x1xf32> to vector<4x16xf32>
    %463 = arith.addf %461, %462 : vector<4x16xf32>
    %464 = vector.broadcast %7 : vector<4x1xf32> to vector<4x16xf32>
    %465 = arith.mulf %464, %419 : vector<4x16xf32>
    %466 = arith.addf %463, %465 : vector<4x16xf32>
    %cst_354 = arith.constant dense<0.000000e+00> : vector<4x16xf32>
    %467 = tpu.matmul %2, %409, %cst_354 {dimension_numbers = #tpu.dot_dimension_numbers<[1], [0], [0], [1], [0, 0, 1, 1], [], []>} : vector<4x4xf32>, vector<4x16xf32>, vector<4x16xf32> -> vector<4x16xf32>
    %468 = vector.broadcast %4 : vector<4x1xf32> to vector<4x16xf32>
    %469 = arith.addf %467, %468 : vector<4x16xf32>
    %470 = vector.broadcast %7 : vector<4x1xf32> to vector<4x16xf32>
    %471 = arith.mulf %470, %417 : vector<4x16xf32>
    %472 = arith.addf %469, %471 : vector<4x16xf32>
    %cst_355 = arith.constant dense<0.000000e+00> : vector<4x16xf32>
    %473 = tpu.matmul %466, %450, %cst_355 {dimension_numbers = #tpu.dot_dimension_numbers<[1], [1], [0], [0], [0, 0, 1, 0], [], []>} : vector<4x16xf32>, vector<16x16xf32>, vector<4x16xf32> -> vector<4x16xf32>
    %cst_356 = arith.constant dense<0.000000e+00> : vector<4x16xf32>
    %474 = tpu.matmul %472, %460, %cst_356 {dimension_numbers = #tpu.dot_dimension_numbers<[1], [0], [0], [1], [0, 0, 1, 1], [], []>} : vector<4x16xf32>, vector<16x16xf32>, vector<4x16xf32> -> vector<4x16xf32>
    %475 = vector.broadcast %8 : vector<4x1xf32> to vector<4x16xf32>
    %476 = arith.mulf %475, %473 : vector<4x16xf32>
    %477 = arith.addf %409, %476 : vector<4x16xf32>
    %c0_357 = arith.constant 0 : index
    %c0_358 = arith.constant 0 : index
    %c0_359 = arith.constant 0 : index
    %c5_360 = arith.constant 5 : index
    %c0_361 = arith.constant 0 : index
    %478 = vector.load %arg17[%c0_357, %c0_358, %c0_359, %c5_360, %c0_361] : memref<2x1x4x8x16xf32, #tpu.memory_space<vmem>>, vector<1x1x4x1x16xf32>
    %479 = vector.shape_cast %478 : vector<1x1x4x1x16xf32> to vector<4x16xf32>
    %480 = vector.shape_cast %477 : vector<4x16xf32> to vector<1x1x4x1x16xf32>
    tpu.vector_store %arg17[%c0_357, %c0_358, %c0_359, %c5_360, %c0_361], %480 {strides = array<i32>} : memref<2x1x4x8x16xf32, #tpu.memory_space<vmem>>, vector<1x1x4x1x16xf32>,
    %481 = vector.broadcast %9 : vector<4x1xf32> to vector<4x16xf32>
    %482 = arith.mulf %481, %474 : vector<4x16xf32>
    %483 = arith.addf %411, %482 : vector<4x16xf32>
    %c1_362 = arith.constant 1 : index
    %c0_363 = arith.constant 0 : index
    %c0_364 = arith.constant 0 : index
    %c5_365 = arith.constant 5 : index
    %c0_366 = arith.constant 0 : index
    %484 = vector.load %arg17[%c1_362, %c0_363, %c0_364, %c5_365, %c0_366] : memref<2x1x4x8x16xf32, #tpu.memory_space<vmem>>, vector<1x1x4x1x16xf32>
    %485 = vector.shape_cast %484 : vector<1x1x4x1x16xf32> to vector<4x16xf32>
    %486 = vector.shape_cast %483 : vector<4x16xf32> to vector<1x1x4x1x16xf32>
    tpu.vector_store %arg17[%c1_362, %c0_363, %c0_364, %c5_365, %c0_366], %486 {strides = array<i32>} : memref<2x1x4x8x16xf32, #tpu.memory_space<vmem>>, vector<1x1x4x1x16xf32>,
    %c0_367 = arith.constant 0 : index
    %c0_368 = arith.constant 0 : index
    %c0_369 = arith.constant 0 : index
    %c6 = arith.constant 6 : index
    %c0_370 = arith.constant 0 : index
    %487 = vector.load %arg2[%c0_367, %c0_368, %c0_369, %c6, %c0_370] : memref<2x1x4x8x16xf32, #tpu.memory_space<vmem>>, vector<1x1x4x1x16xf32>
    %488 = vector.shape_cast %487 : vector<1x1x4x1x16xf32> to vector<4x16xf32>
    %c1_371 = arith.constant 1 : index
    %c0_372 = arith.constant 0 : index
    %c0_373 = arith.constant 0 : index
    %c6_374 = arith.constant 6 : index
    %c0_375 = arith.constant 0 : index
    %489 = vector.load %arg2[%c1_371, %c0_372, %c0_373, %c6_374, %c0_375] : memref<2x1x4x8x16xf32, #tpu.memory_space<vmem>>, vector<1x1x4x1x16xf32>
    %490 = vector.shape_cast %489 : vector<1x1x4x1x16xf32> to vector<4x16xf32>
    %c0_376 = arith.constant 0 : index
    %c0_377 = arith.constant 0 : index
    %c0_378 = arith.constant 0 : index
    %c6_379 = arith.constant 6 : index
    %c0_380 = arith.constant 0 : index
    %491 = vector.load %arg3[%c0_376, %c0_377, %c0_378, %c6_379, %c0_380] : memref<2x1x4x8x16xf32, #tpu.memory_space<vmem>>, vector<1x1x4x1x16xf32>
    %492 = vector.shape_cast %491 : vector<1x1x4x1x16xf32> to vector<4x16xf32>
    %c1_381 = arith.constant 1 : index
    %c0_382 = arith.constant 0 : index
    %c0_383 = arith.constant 0 : index
    %c6_384 = arith.constant 6 : index
    %c0_385 = arith.constant 0 : index
    %493 = vector.load %arg3[%c1_381, %c0_382, %c0_383, %c6_384, %c0_385] : memref<2x1x4x8x16xf32, #tpu.memory_space<vmem>>, vector<1x1x4x1x16xf32>
    %494 = vector.shape_cast %493 : vector<1x1x4x1x16xf32> to vector<4x16xf32>
    %c0_386 = arith.constant 0 : index
    %c0_387 = arith.constant 0 : index
    %c0_388 = arith.constant 0 : index
    %c6_389 = arith.constant 6 : index
    %c0_390 = arith.constant 0 : index
    %495 = vector.load %arg4[%c0_386, %c0_387, %c0_388, %c6_389, %c0_390] : memref<2x1x4x8x16xf32, #tpu.memory_space<vmem>>, vector<1x1x4x1x16xf32>
    %496 = vector.shape_cast %495 : vector<1x1x4x1x16xf32> to vector<4x16xf32>
    %c1_391 = arith.constant 1 : index
    %c0_392 = arith.constant 0 : index
    %c0_393 = arith.constant 0 : index
    %c6_394 = arith.constant 6 : index
    %c0_395 = arith.constant 0 : index
    %497 = vector.load %arg4[%c1_391, %c0_392, %c0_393, %c6_394, %c0_395] : memref<2x1x4x8x16xf32, #tpu.memory_space<vmem>>, vector<1x1x4x1x16xf32>
    %498 = vector.shape_cast %497 : vector<1x1x4x1x16xf32> to vector<4x16xf32>
    %c6_396 = arith.constant 6 : index
    %c0_397 = arith.constant 0 : index
    %c0_398 = arith.constant 0 : index
    %499 = vector.load %arg9[%c6_396, %c0_397, %c0_398] : memref<8x4x1xf32, #tpu.memory_space<vmem>>, vector<1x4x1xf32>
    %500 = vector.shape_cast %499 : vector<1x4x1xf32> to vector<4x1xf32>
    %c6_399 = arith.constant 6 : index
    %c0_400 = arith.constant 0 : index
    %c0_401 = arith.constant 0 : index
    %501 = vector.load %arg10[%c6_399, %c0_400, %c0_401] : memref<8x4x1xf32, #tpu.memory_space<vmem>>, vector<1x4x1xf32>
    %502 = vector.shape_cast %501 : vector<1x4x1xf32> to vector<4x1xf32>
    %cst_402 = arith.constant dense<0.000000e+00> : vector<4x16xf32>
    %503 = tpu.matmul %0, %488, %cst_402 {dimension_numbers = #tpu.dot_dimension_numbers<[1], [0], [0], [1], [0, 0, 1, 1], [], []>} : vector<4x4xf32>, vector<4x16xf32>, vector<4x16xf32> -> vector<4x16xf32>
    %504 = vector.broadcast %500 : vector<4x1xf32> to vector<4x16xf32>
    %505 = arith.addf %503, %504 : vector<4x16xf32>
    %506 = vector.broadcast %6 : vector<4x1xf32> to vector<4x16xf32>
    %507 = arith.mulf %506, %492 : vector<4x16xf32>
    %508 = arith.addf %505, %507 : vector<4x16xf32>
    %cst_403 = arith.constant dense<0.000000e+00> : vector<4x16xf32>
    %509 = tpu.matmul %1, %490, %cst_403 {dimension_numbers = #tpu.dot_dimension_numbers<[1], [0], [0], [1], [0, 0, 1, 1], [], []>} : vector<4x4xf32>, vector<4x16xf32>, vector<4x16xf32> -> vector<4x16xf32>
    %510 = vector.broadcast %502 : vector<4x1xf32> to vector<4x16xf32>
    %511 = arith.addf %509, %510 : vector<4x16xf32>
    %512 = vector.broadcast %6 : vector<4x1xf32> to vector<4x16xf32>
    %513 = arith.mulf %512, %494 : vector<4x16xf32>
    %514 = arith.addf %511, %513 : vector<4x16xf32>
    %cst_404 = arith.constant dense<0.000000e+00> : vector<16x16xf32>
    %515 = tpu.matmul %508, %514, %cst_404 {dimension_numbers = #tpu.dot_dimension_numbers<[0], [0], [1], [1], [0, 1, 1, 1], [], []>} : vector<4x16xf32>, vector<4x16xf32>, vector<16x16xf32> -> vector<16x16xf32>
    %cst_405 = arith.constant 5.000000e-01 : f32
    %516 = vector.broadcast %cst_405 : f32 to vector<16x16xf32>
    %517 = arith.mulf %515, %516 : vector<16x16xf32>
    %cst_406 = arith.constant -6.550400e+04 : f32
    %518 = vector.broadcast %cst_406 : f32 to vector<16x16xf32>
    %519 = arith.select %12, %517, %518 : vector<16x16xi1>, vector<16x16xf32>
    %cst_407 = arith.constant dense<0xFF800000> : vector<16xf32>
    %520 = vector.multi_reduction <maximumf>, %519, %cst_407 [1] : vector<16x16xf32> to vector<16xf32>
    %521 = vector.shape_cast %520 : vector<16xf32> to vector<16x1xf32>
    %522 = vector.broadcast %521 : vector<16x1xf32> to vector<16x16xf32>
    %523 = arith.subf %519, %522 : vector<16x16xf32>
    %524 = math.exp %523 : vector<16x16xf32>
    %cst_408 = arith.constant dense<0.000000e+00> : vector<16xf32>
    %525 = vector.multi_reduction <add>, %524, %cst_408 [1] : vector<16x16xf32> to vector<16xf32>
    %526 = vector.shape_cast %525 : vector<16xf32> to vector<16x1xf32>
    %527 = tpu.reciprocal %526 {approx = true} : vector<16x1xf32> -> vector<16x1xf32>
    %528 = vector.broadcast %527 : vector<16x1xf32> to vector<16x16xf32>
    %529 = arith.mulf %524, %528 : vector<16x16xf32>
    %cst_409 = arith.constant dense<0xFF800000> : vector<16xf32>
    %530 = vector.multi_reduction <maximumf>, %519, %cst_409 [0] : vector<16x16xf32> to vector<16xf32>
    %531 = vector.shape_cast %530 : vector<16xf32> to vector<1x16xf32>
    %532 = vector.broadcast %531 : vector<1x16xf32> to vector<16x16xf32>
    %533 = arith.subf %519, %532 : vector<16x16xf32>
    %534 = math.exp %533 : vector<16x16xf32>
    %cst_410 = arith.constant dense<0.000000e+00> : vector<16xf32>
    %535 = vector.multi_reduction <add>, %534, %cst_410 [0] : vector<16x16xf32> to vector<16xf32>
    %536 = vector.shape_cast %535 : vector<16xf32> to vector<1x16xf32>
    %537 = tpu.reciprocal %536 {approx = true} : vector<1x16xf32> -> vector<1x16xf32>
    %538 = vector.broadcast %537 : vector<1x16xf32> to vector<16x16xf32>
    %539 = arith.mulf %534, %538 : vector<16x16xf32>
    %cst_411 = arith.constant dense<0.000000e+00> : vector<4x16xf32>
    %540 = tpu.matmul %3, %490, %cst_411 {dimension_numbers = #tpu.dot_dimension_numbers<[1], [0], [0], [1], [0, 0, 1, 1], [], []>} : vector<4x4xf32>, vector<4x16xf32>, vector<4x16xf32> -> vector<4x16xf32>
    %541 = vector.broadcast %5 : vector<4x1xf32> to vector<4x16xf32>
    %542 = arith.addf %540, %541 : vector<4x16xf32>
    %543 = vector.broadcast %7 : vector<4x1xf32> to vector<4x16xf32>
    %544 = arith.mulf %543, %498 : vector<4x16xf32>
    %545 = arith.addf %542, %544 : vector<4x16xf32>
    %cst_412 = arith.constant dense<0.000000e+00> : vector<4x16xf32>
    %546 = tpu.matmul %2, %488, %cst_412 {dimension_numbers = #tpu.dot_dimension_numbers<[1], [0], [0], [1], [0, 0, 1, 1], [], []>} : vector<4x4xf32>, vector<4x16xf32>, vector<4x16xf32> -> vector<4x16xf32>
    %547 = vector.broadcast %4 : vector<4x1xf32> to vector<4x16xf32>
    %548 = arith.addf %546, %547 : vector<4x16xf32>
    %549 = vector.broadcast %7 : vector<4x1xf32> to vector<4x16xf32>
    %550 = arith.mulf %549, %496 : vector<4x16xf32>
    %551 = arith.addf %548, %550 : vector<4x16xf32>
    %cst_413 = arith.constant dense<0.000000e+00> : vector<4x16xf32>
    %552 = tpu.matmul %545, %529, %cst_413 {dimension_numbers = #tpu.dot_dimension_numbers<[1], [1], [0], [0], [0, 0, 1, 0], [], []>} : vector<4x16xf32>, vector<16x16xf32>, vector<4x16xf32> -> vector<4x16xf32>
    %cst_414 = arith.constant dense<0.000000e+00> : vector<4x16xf32>
    %553 = tpu.matmul %551, %539, %cst_414 {dimension_numbers = #tpu.dot_dimension_numbers<[1], [0], [0], [1], [0, 0, 1, 1], [], []>} : vector<4x16xf32>, vector<16x16xf32>, vector<4x16xf32> -> vector<4x16xf32>
    %554 = vector.broadcast %8 : vector<4x1xf32> to vector<4x16xf32>
    %555 = arith.mulf %554, %552 : vector<4x16xf32>
    %556 = arith.addf %488, %555 : vector<4x16xf32>
    %c0_415 = arith.constant 0 : index
    %c0_416 = arith.constant 0 : index
    %c0_417 = arith.constant 0 : index
    %c6_418 = arith.constant 6 : index
    %c0_419 = arith.constant 0 : index
    %557 = vector.load %arg17[%c0_415, %c0_416, %c0_417, %c6_418, %c0_419] : memref<2x1x4x8x16xf32, #tpu.memory_space<vmem>>, vector<1x1x4x1x16xf32>
    %558 = vector.shape_cast %557 : vector<1x1x4x1x16xf32> to vector<4x16xf32>
    %559 = vector.shape_cast %556 : vector<4x16xf32> to vector<1x1x4x1x16xf32>
    tpu.vector_store %arg17[%c0_415, %c0_416, %c0_417, %c6_418, %c0_419], %559 {strides = array<i32>} : memref<2x1x4x8x16xf32, #tpu.memory_space<vmem>>, vector<1x1x4x1x16xf32>,
    %560 = vector.broadcast %9 : vector<4x1xf32> to vector<4x16xf32>
    %561 = arith.mulf %560, %553 : vector<4x16xf32>
    %562 = arith.addf %490, %561 : vector<4x16xf32>
    %c1_420 = arith.constant 1 : index
    %c0_421 = arith.constant 0 : index
    %c0_422 = arith.constant 0 : index
    %c6_423 = arith.constant 6 : index
    %c0_424 = arith.constant 0 : index
    %563 = vector.load %arg17[%c1_420, %c0_421, %c0_422, %c6_423, %c0_424] : memref<2x1x4x8x16xf32, #tpu.memory_space<vmem>>, vector<1x1x4x1x16xf32>
    %564 = vector.shape_cast %563 : vector<1x1x4x1x16xf32> to vector<4x16xf32>
    %565 = vector.shape_cast %562 : vector<4x16xf32> to vector<1x1x4x1x16xf32>
    tpu.vector_store %arg17[%c1_420, %c0_421, %c0_422, %c6_423, %c0_424], %565 {strides = array<i32>} : memref<2x1x4x8x16xf32, #tpu.memory_space<vmem>>, vector<1x1x4x1x16xf32>,
    %c0_425 = arith.constant 0 : index
    %c0_426 = arith.constant 0 : index
    %c0_427 = arith.constant 0 : index
    %c7 = arith.constant 7 : index
    %c0_428 = arith.constant 0 : index
    %566 = vector.load %arg2[%c0_425, %c0_426, %c0_427, %c7, %c0_428] : memref<2x1x4x8x16xf32, #tpu.memory_space<vmem>>, vector<1x1x4x1x16xf32>
    %567 = vector.shape_cast %566 : vector<1x1x4x1x16xf32> to vector<4x16xf32>
    %c1_429 = arith.constant 1 : index
    %c0_430 = arith.constant 0 : index
    %c0_431 = arith.constant 0 : index
    %c7_432 = arith.constant 7 : index
    %c0_433 = arith.constant 0 : index
    %568 = vector.load %arg2[%c1_429, %c0_430, %c0_431, %c7_432, %c0_433] : memref<2x1x4x8x16xf32, #tpu.memory_space<vmem>>, vector<1x1x4x1x16xf32>
    %569 = vector.shape_cast %568 : vector<1x1x4x1x16xf32> to vector<4x16xf32>
    %c0_434 = arith.constant 0 : index
    %c0_435 = arith.constant 0 : index
    %c0_436 = arith.constant 0 : index
    %c7_437 = arith.constant 7 : index
    %c0_438 = arith.constant 0 : index
    %570 = vector.load %arg3[%c0_434, %c0_435, %c0_436, %c7_437, %c0_438] : memref<2x1x4x8x16xf32, #tpu.memory_space<vmem>>, vector<1x1x4x1x16xf32>
    %571 = vector.shape_cast %570 : vector<1x1x4x1x16xf32> to vector<4x16xf32>
    %c1_439 = arith.constant 1 : index
    %c0_440 = arith.constant 0 : index
    %c0_441 = arith.constant 0 : index
    %c7_442 = arith.constant 7 : index
    %c0_443 = arith.constant 0 : index
    %572 = vector.load %arg3[%c1_439, %c0_440, %c0_441, %c7_442, %c0_443] : memref<2x1x4x8x16xf32, #tpu.memory_space<vmem>>, vector<1x1x4x1x16xf32>
    %573 = vector.shape_cast %572 : vector<1x1x4x1x16xf32> to vector<4x16xf32>
    %c0_444 = arith.constant 0 : index
    %c0_445 = arith.constant 0 : index
    %c0_446 = arith.constant 0 : index
    %c7_447 = arith.constant 7 : index
    %c0_448 = arith.constant 0 : index
    %574 = vector.load %arg4[%c0_444, %c0_445, %c0_446, %c7_447, %c0_448] : memref<2x1x4x8x16xf32, #tpu.memory_space<vmem>>, vector<1x1x4x1x16xf32>
    %575 = vector.shape_cast %574 : vector<1x1x4x1x16xf32> to vector<4x16xf32>
    %c1_449 = arith.constant 1 : index
    %c0_450 = arith.constant 0 : index
    %c0_451 = arith.constant 0 : index
    %c7_452 = arith.constant 7 : index
    %c0_453 = arith.constant 0 : index
    %576 = vector.load %arg4[%c1_449, %c0_450, %c0_451, %c7_452, %c0_453] : memref<2x1x4x8x16xf32, #tpu.memory_space<vmem>>, vector<1x1x4x1x16xf32>
    %577 = vector.shape_cast %576 : vector<1x1x4x1x16xf32> to vector<4x16xf32>
    %c7_454 = arith.constant 7 : index
    %c0_455 = arith.constant 0 : index
    %c0_456 = arith.constant 0 : index
    %578 = vector.load %arg9[%c7_454, %c0_455, %c0_456] : memref<8x4x1xf32, #tpu.memory_space<vmem>>, vector<1x4x1xf32>
    %579 = vector.shape_cast %578 : vector<1x4x1xf32> to vector<4x1xf32>
    %c7_457 = arith.constant 7 : index
    %c0_458 = arith.constant 0 : index
    %c0_459 = arith.constant 0 : index
    %580 = vector.load %arg10[%c7_457, %c0_458, %c0_459] : memref<8x4x1xf32, #tpu.memory_space<vmem>>, vector<1x4x1xf32>
    %581 = vector.shape_cast %580 : vector<1x4x1xf32> to vector<4x1xf32>
    %cst_460 = arith.constant dense<0.000000e+00> : vector<4x16xf32>
    %582 = tpu.matmul %0, %567, %cst_460 {dimension_numbers = #tpu.dot_dimension_numbers<[1], [0], [0], [1], [0, 0, 1, 1], [], []>} : vector<4x4xf32>, vector<4x16xf32>, vector<4x16xf32> -> vector<4x16xf32>
    %583 = vector.broadcast %579 : vector<4x1xf32> to vector<4x16xf32>
    %584 = arith.addf %582, %583 : vector<4x16xf32>
    %585 = vector.broadcast %6 : vector<4x1xf32> to vector<4x16xf32>
    %586 = arith.mulf %585, %571 : vector<4x16xf32>
    %587 = arith.addf %584, %586 : vector<4x16xf32>
    %cst_461 = arith.constant dense<0.000000e+00> : vector<4x16xf32>
    %588 = tpu.matmul %1, %569, %cst_461 {dimension_numbers = #tpu.dot_dimension_numbers<[1], [0], [0], [1], [0, 0, 1, 1], [], []>} : vector<4x4xf32>, vector<4x16xf32>, vector<4x16xf32> -> vector<4x16xf32>
    %589 = vector.broadcast %581 : vector<4x1xf32> to vector<4x16xf32>
    %590 = arith.addf %588, %589 : vector<4x16xf32>
    %591 = vector.broadcast %6 : vector<4x1xf32> to vector<4x16xf32>
    %592 = arith.mulf %591, %573 : vector<4x16xf32>
    %593 = arith.addf %590, %592 : vector<4x16xf32>
    %cst_462 = arith.constant dense<0.000000e+00> : vector<16x16xf32>
    %594 = tpu.matmul %587, %593, %cst_462 {dimension_numbers = #tpu.dot_dimension_numbers<[0], [0], [1], [1], [0, 1, 1, 1], [], []>} : vector<4x16xf32>, vector<4x16xf32>, vector<16x16xf32> -> vector<16x16xf32>
    %cst_463 = arith.constant 5.000000e-01 : f32
    %595 = vector.broadcast %cst_463 : f32 to vector<16x16xf32>
    %596 = arith.mulf %594, %595 : vector<16x16xf32>
    %cst_464 = arith.constant -6.550400e+04 : f32
    %597 = vector.broadcast %cst_464 : f32 to vector<16x16xf32>
    %598 = arith.select %12, %596, %597 : vector<16x16xi1>, vector<16x16xf32>
    %cst_465 = arith.constant dense<0xFF800000> : vector<16xf32>
    %599 = vector.multi_reduction <maximumf>, %598, %cst_465 [1] : vector<16x16xf32> to vector<16xf32>
    %600 = vector.shape_cast %599 : vector<16xf32> to vector<16x1xf32>
    %601 = vector.broadcast %600 : vector<16x1xf32> to vector<16x16xf32>
    %602 = arith.subf %598, %601 : vector<16x16xf32>
    %603 = math.exp %602 : vector<16x16xf32>
    %cst_466 = arith.constant dense<0.000000e+00> : vector<16xf32>
    %604 = vector.multi_reduction <add>, %603, %cst_466 [1] : vector<16x16xf32> to vector<16xf32>
    %605 = vector.shape_cast %604 : vector<16xf32> to vector<16x1xf32>
    %606 = tpu.reciprocal %605 {approx = true} : vector<16x1xf32> -> vector<16x1xf32>
    %607 = vector.broadcast %606 : vector<16x1xf32> to vector<16x16xf32>
    %608 = arith.mulf %603, %607 : vector<16x16xf32>
    %cst_467 = arith.constant dense<0xFF800000> : vector<16xf32>
    %609 = vector.multi_reduction <maximumf>, %598, %cst_467 [0] : vector<16x16xf32> to vector<16xf32>
    %610 = vector.shape_cast %609 : vector<16xf32> to vector<1x16xf32>
    %611 = vector.broadcast %610 : vector<1x16xf32> to vector<16x16xf32>
    %612 = arith.subf %598, %611 : vector<16x16xf32>
    %613 = math.exp %612 : vector<16x16xf32>
    %cst_468 = arith.constant dense<0.000000e+00> : vector<16xf32>
    %614 = vector.multi_reduction <add>, %613, %cst_468 [0] : vector<16x16xf32> to vector<16xf32>
    %615 = vector.shape_cast %614 : vector<16xf32> to vector<1x16xf32>
    %616 = tpu.reciprocal %615 {approx = true} : vector<1x16xf32> -> vector<1x16xf32>
    %617 = vector.broadcast %616 : vector<1x16xf32> to vector<16x16xf32>
    %618 = arith.mulf %613, %617 : vector<16x16xf32>
    %cst_469 = arith.constant dense<0.000000e+00> : vector<4x16xf32>
    %619 = tpu.matmul %3, %569, %cst_469 {dimension_numbers = #tpu.dot_dimension_numbers<[1], [0], [0], [1], [0, 0, 1, 1], [], []>} : vector<4x4xf32>, vector<4x16xf32>, vector<4x16xf32> -> vector<4x16xf32>
    %620 = vector.broadcast %5 : vector<4x1xf32> to vector<4x16xf32>
    %621 = arith.addf %619, %620 : vector<4x16xf32>
    %622 = vector.broadcast %7 : vector<4x1xf32> to vector<4x16xf32>
    %623 = arith.mulf %622, %577 : vector<4x16xf32>
    %624 = arith.addf %621, %623 : vector<4x16xf32>
    %cst_470 = arith.constant dense<0.000000e+00> : vector<4x16xf32>
    %625 = tpu.matmul %2, %567, %cst_470 {dimension_numbers = #tpu.dot_dimension_numbers<[1], [0], [0], [1], [0, 0, 1, 1], [], []>} : vector<4x4xf32>, vector<4x16xf32>, vector<4x16xf32> -> vector<4x16xf32>
    %626 = vector.broadcast %4 : vector<4x1xf32> to vector<4x16xf32>
    %627 = arith.addf %625, %626 : vector<4x16xf32>
    %628 = vector.broadcast %7 : vector<4x1xf32> to vector<4x16xf32>
    %629 = arith.mulf %628, %575 : vector<4x16xf32>
    %630 = arith.addf %627, %629 : vector<4x16xf32>
    %cst_471 = arith.constant dense<0.000000e+00> : vector<4x16xf32>
    %631 = tpu.matmul %624, %608, %cst_471 {dimension_numbers = #tpu.dot_dimension_numbers<[1], [1], [0], [0], [0, 0, 1, 0], [], []>} : vector<4x16xf32>, vector<16x16xf32>, vector<4x16xf32> -> vector<4x16xf32>
    %cst_472 = arith.constant dense<0.000000e+00> : vector<4x16xf32>
    %632 = tpu.matmul %630, %618, %cst_472 {dimension_numbers = #tpu.dot_dimension_numbers<[1], [0], [0], [1], [0, 0, 1, 1], [], []>} : vector<4x16xf32>, vector<16x16xf32>, vector<4x16xf32> -> vector<4x16xf32>
    %633 = vector.broadcast %8 : vector<4x1xf32> to vector<4x16xf32>
    %634 = arith.mulf %633, %631 : vector<4x16xf32>
    %635 = arith.addf %567, %634 : vector<4x16xf32>
    %c0_473 = arith.constant 0 : index
    %c0_474 = arith.constant 0 : index
    %c0_475 = arith.constant 0 : index
    %c7_476 = arith.constant 7 : index
    %c0_477 = arith.constant 0 : index
    %636 = vector.load %arg17[%c0_473, %c0_474, %c0_475, %c7_476, %c0_477] : memref<2x1x4x8x16xf32, #tpu.memory_space<vmem>>, vector<1x1x4x1x16xf32>
    %637 = vector.shape_cast %636 : vector<1x1x4x1x16xf32> to vector<4x16xf32>
    %638 = vector.shape_cast %635 : vector<4x16xf32> to vector<1x1x4x1x16xf32>
    tpu.vector_store %arg17[%c0_473, %c0_474, %c0_475, %c7_476, %c0_477], %638 {strides = array<i32>} : memref<2x1x4x8x16xf32, #tpu.memory_space<vmem>>, vector<1x1x4x1x16xf32>,
    %639 = vector.broadcast %9 : vector<4x1xf32> to vector<4x16xf32>
    %640 = arith.mulf %639, %632 : vector<4x16xf32>
    %641 = arith.addf %569, %640 : vector<4x16xf32>
    %c1_478 = arith.constant 1 : index
    %c0_479 = arith.constant 0 : index
    %c0_480 = arith.constant 0 : index
    %c7_481 = arith.constant 7 : index
    %c0_482 = arith.constant 0 : index
    %642 = vector.load %arg17[%c1_478, %c0_479, %c0_480, %c7_481, %c0_482] : memref<2x1x4x8x16xf32, #tpu.memory_space<vmem>>, vector<1x1x4x1x16xf32>
    %643 = vector.shape_cast %642 : vector<1x1x4x1x16xf32> to vector<4x16xf32>
    %644 = vector.shape_cast %641 : vector<4x16xf32> to vector<1x1x4x1x16xf32>
    tpu.vector_store %arg17[%c1_478, %c0_479, %c0_480, %c7_481, %c0_482], %644 {strides = array<i32>} : memref<2x1x4x8x16xf32, #tpu.memory_space<vmem>>, vector<1x1x4x1x16xf32>,
    return
  }
  func.func @transform_0(%arg0: i32, %arg1: i32) -> (i32, i32, i32, i32, i32) {
    %c0_i32 = arith.constant 0 : i32
    %c0_i32_0 = arith.constant 0 : i32
    %c0_i32_1 = arith.constant 0 : i32
    %c0_i32_2 = arith.constant 0 : i32
    return %c0_i32, %arg0, %c0_i32_0, %arg1, %c0_i32_1 : i32, i32, i32, i32, i32
  }
  func.func @transform_1(%arg0: i32, %arg1: i32) -> (i32, i32, i32, i32, i32) {
    %c0_i32 = arith.constant 0 : i32
    %c0_i32_0 = arith.constant 0 : i32
    %c0_i32_1 = arith.constant 0 : i32
    %c0_i32_2 = arith.constant 0 : i32
    return %c0_i32, %arg0, %c0_i32_0, %arg1, %c0_i32_1 : i32, i32, i32, i32, i32
  }
  func.func @transform_2(%arg0: i32, %arg1: i32) -> (i32, i32, i32, i32, i32) {
    %c0_i32 = arith.constant 0 : i32
    %c0_i32_0 = arith.constant 0 : i32
    %c0_i32_1 = arith.constant 0 : i32
    %c0_i32_2 = arith.constant 0 : i32
    return %c0_i32, %arg0, %c0_i32_0, %arg1, %c0_i32_1 : i32, i32, i32, i32, i32
  }
  func.func @transform_3(%arg0: i32, %arg1: i32) -> (i32, i32) {
    %c0_i32 = arith.constant 0 : i32
    %c0_i32_0 = arith.constant 0 : i32
    %c0_i32_1 = arith.constant 0 : i32
    return %c0_i32, %c0_i32_0 : i32, i32
  }
  func.func @transform_4(%arg0: i32, %arg1: i32) -> (i32, i32) {
    %c0_i32 = arith.constant 0 : i32
    %c0_i32_0 = arith.constant 0 : i32
    %c0_i32_1 = arith.constant 0 : i32
    return %c0_i32, %c0_i32_0 : i32, i32
  }
  func.func @transform_5(%arg0: i32, %arg1: i32) -> (i32, i32) {
    %c0_i32 = arith.constant 0 : i32
    %c0_i32_0 = arith.constant 0 : i32
    %c0_i32_1 = arith.constant 0 : i32
    return %c0_i32, %c0_i32_0 : i32, i32
  }
  func.func @transform_6(%arg0: i32, %arg1: i32) -> (i32, i32) {
    %c0_i32 = arith.constant 0 : i32
    %c0_i32_0 = arith.constant 0 : i32
    %c0_i32_1 = arith.constant 0 : i32
    return %c0_i32, %c0_i32_0 : i32, i32
  }
  func.func @transform_7(%arg0: i32, %arg1: i32) -> (i32, i32, i32) {
    %c0_i32 = arith.constant 0 : i32
    %c0_i32_0 = arith.constant 0 : i32
    %c0_i32_1 = arith.constant 0 : i32
    return %arg1, %c0_i32, %c0_i32_0 : i32, i32, i32
  }
  func.func @transform_8(%arg0: i32, %arg1: i32) -> (i32, i32, i32) {
    %c0_i32 = arith.constant 0 : i32
    %c0_i32_0 = arith.constant 0 : i32
    %c0_i32_1 = arith.constant 0 : i32
    return %arg1, %c0_i32, %c0_i32_0 : i32, i32, i32
  }
  func.func @transform_9(%arg0: i32, %arg1: i32) -> (i32, i32) {
    %c0_i32 = arith.constant 0 : i32
    %c0_i32_0 = arith.constant 0 : i32
    %c0_i32_1 = arith.constant 0 : i32
    return %c0_i32, %c0_i32_0 : i32, i32
  }
  func.func @transform_10(%arg0: i32, %arg1: i32) -> (i32, i32) {
    %c0_i32 = arith.constant 0 : i32
    %c0_i32_0 = arith.constant 0 : i32
    %c0_i32_1 = arith.constant 0 : i32
    return %c0_i32, %c0_i32_0 : i32, i32
  }
  func.func @transform_11(%arg0: i32, %arg1: i32) -> (i32, i32) {
    %c0_i32 = arith.constant 0 : i32
    %c0_i32_0 = arith.constant 0 : i32
    %c0_i32_1 = arith.constant 0 : i32
    return %c0_i32, %c0_i32_0 : i32, i32
  }
  func.func @transform_12(%arg0: i32, %arg1: i32) -> (i32, i32) {
    %c0_i32 = arith.constant 0 : i32
    %c0_i32_0 = arith.constant 0 : i32
    %c0_i32_1 = arith.constant 0 : i32
    return %c0_i32, %c0_i32_0 : i32, i32
  }
  func.func @transform_13(%arg0: i32, %arg1: i32) -> (i32, i32) {
    %c0_i32 = arith.constant 0 : i32
    %c0_i32_0 = arith.constant 0 : i32
    %c0_i32_1 = arith.constant 0 : i32
    return %c0_i32, %c0_i32_0 : i32, i32
  }
  func.func @transform_14(%arg0: i32, %arg1: i32) -> (i32, i32) {
    %c0_i32 = arith.constant 0 : i32
    %c0_i32_0 = arith.constant 0 : i32
    %c0_i32_1 = arith.constant 0 : i32
    return %c0_i32, %c0_i32_0 : i32, i32
  }
  func.func @transform_15(%arg0: i32, %arg1: i32) -> (i32, i32, i32, i32, i32) {
    %c0_i32 = arith.constant 0 : i32
    %c0_i32_0 = arith.constant 0 : i32
    %c0_i32_1 = arith.constant 0 : i32
    %c0_i32_2 = arith.constant 0 : i32
    return %c0_i32, %arg0, %c0_i32_0, %arg1, %c0_i32_1 : i32, i32, i32, i32, i32
  }
}

</mosaic_0001>

<llo_original>
// kernel: tpu_custom_call.1
$region0: #{tpu_custom_call.1}
  #allocation0 [shape = 'u32[]', space=smem, size = 0x4, offset = 0x4, fixed_abs, tag = 'smem constant byte address 0x4 - core index']
  #allocation1 [shape = 'u32[144,128]{1,0:T(1,128)}', space=vmem, size = 0x12000, scoped, tag = 'internal scratch']
  #allocation9 [shape = 's32[]', space=sflag, size = 0x4, offset = 0, fixed_abs, tag = 'sflag constant byte address 0x0 - dummy sync flag']
  #allocation11 [shape = 's32[]', space=sflag, size = 0x4, offset = 0, fixed_abs, tag = 'sflag constant byte address 0x0 - dummy sync flag']
  #allocation13 [shape = 's32[]', space=sflag, size = 0x4, offset = 0, fixed_abs, tag = 'sflag constant byte address 0x0 - dummy sync flag']
  #allocation15 [shape = 's32[]', space=sflag, size = 0x4, offset = 0, fixed_abs, tag = 'sflag constant byte address 0x0 - dummy sync flag']
  %s0 = inlined_call_operand.hbm [shape: f32[2,2,4,8,16], index: 0, kind: input, shape index: {}]
  %s1 = inlined_call_operand.hbm [shape: f32[2,2,4,8,16], index: 1, kind: input, shape index: {}]
  %s2 = inlined_call_operand.hbm [shape: f32[2,2,4,8,16], index: 2, kind: input, shape index: {}]
  %s3 = inlined_call_operand.vmem [shape: f32[4,4], index: 3, kind: input, shape index: {}]
  %s4 = inlined_call_operand.vmem [shape: f32[4,4], index: 4, kind: input, shape index: {}]
  %s5 = inlined_call_operand.vmem [shape: f32[4,4], index: 5, kind: input, shape index: {}]
  %s6 = inlined_call_operand.vmem [shape: f32[4,4], index: 6, kind: input, shape index: {}]
  %s7 = inlined_call_operand.vmem [shape: f32[8,4,1], index: 7, kind: input, shape index: {}]
  %s8 = inlined_call_operand.vmem [shape: f32[8,4,1], index: 8, kind: input, shape index: {}]
  %s9 = inlined_call_operand.vmem [shape: f32[4,1], index: 9, kind: input, shape index: {}]
  %s10 = inlined_call_operand.vmem [shape: f32[4,1], index: 10, kind: input, shape index: {}]
  %s11 = inlined_call_operand.vmem [shape: f32[4,1], index: 11, kind: input, shape index: {}]
  %s12 = inlined_call_operand.vmem [shape: f32[4,1], index: 12, kind: input, shape index: {}]
  %s13 = inlined_call_operand.vmem [shape: f32[4,1], index: 13, kind: input, shape index: {}]
  %s14 = inlined_call_operand.vmem [shape: f32[4,1], index: 14, kind: input, shape index: {}]
  %s15 = inlined_call_operand.hbm [shape: f32[2,2,4,8,16], index: 15, kind: output, shape index: {}]
  %s16 = sld [smem:[#allocation0]]
  $region105: #{tpu_custom_call.1} parent=0
    _
  %s18 = ssub.s32 1, %s16
  %s19 = scalar_select 0, %s18, %s16
  $region1: #{tpu_custom_call.1} parent=0
    #allocation2 [shape = 'u8[65536]{0}', space=vmem, size = 0x10000, scoped, tag = 'input window, operand 0']
    #allocation3 [shape = 's32[2]{0}', space=sflag, size = 0x8, scoped, tag = 'scoped memory for tpu_custom_call.1']
    #allocation4 [shape = 's32[2]{0}', space=sflag, size = 0x8, scoped, tag = 'scoped memory for tpu_custom_call.1']
    #allocation5 [shape = 'u8[65536]{0}', space=vmem, size = 0x10000, scoped, tag = 'input window, operand 1']
    #allocation6 [shape = 's32[2]{0}', space=sflag, size = 0x8, scoped, tag = 'scoped memory for tpu_custom_call.1']
    #allocation7 [shape = 'u8[65536]{0}', space=vmem, size = 0x10000, scoped, tag = 'input window, operand 2']
    #allocation8 [shape = 'u8[65536]{0}', space=vmem, size = 0x10000, scoped, tag = 'output window, operand 0']
    %20 = vsyncpa [#allocation3], 0
    %s21 = scalar_lea.sflag [#allocation3], 1
    %22 = vsyncpa %s21, 0
    %23 = vsyncpa [#allocation6], 0
    %s24 = scalar_lea.sflag [#allocation6], 1
    %25 = vsyncpa %s24, 0
    %26 = vsyncpa [#allocation4], 0
    %s27 = scalar_lea.sflag [#allocation4], 1
    %28 = vsyncpa %s27, 0
    loop: start=0, step=1, limit=4
    $region2: #{tpu_custom_call.1} parent=1 // loop_pre_header
      _
    $region3: #{tpu_custom_call.1} parent=1 // loop_header
      %s30 = sphi 0, %s34
      %p31 = scmp.ge.s32.totalorder %s30, 4
      %s37 = sphi 0, %s49
      %s38 = sphi 0, %s45
      %s39 = sphi 0, %s37
      %s40 = sphi 0, %s38
      %s41 = sphi 0, %s39
      %s42 = sphi 0, %s40
      %s54 = sphi 0, %s56
      %s57 = sphi 0, %s54
      %s58 = sphi 0, %s57
      %s74 = sphi 0, %s58
      %s82 = sphi 0, %s84
      %s85 = sphi 0, %s82
      %s86 = sphi 0, %s85
      %s102 = sphi 0, %s86
      %s110 = sphi 0, %s112
      %s113 = sphi 0, %s110
      %s114 = sphi 0, %s113
      %s130 = sphi 0, %s114
      %s134 = sphi 0, %s134
      %s136 = sphi 0, %s134
      %s137 = sphi 0, %s136
      %s151 = sphi 0, %s137
      %s155 = sphi 0, %s155
      %s157 = sphi 0, %s155
      %s158 = sphi 0, %s157
      %s172 = sphi 0, %s158
      %s176 = sphi 0, %s176
      %s178 = sphi 0, %s176
      %s179 = sphi 0, %s178
      %s193 = sphi 0, %s179
      %s197 = sphi 0, %s197
      %s199 = sphi 0, %s197
      %s200 = sphi 0, %s199
      %s214 = sphi 0, %s200
      %s220 = sphi 0, %s222
      %s223 = sphi 0, %s220
      %s224 = sphi 0, %s223
      %s240 = sphi 0, %s224
      %s246 = sphi 0, %s248
      %s249 = sphi 0, %s246
      %s250 = sphi 0, %s249
      %s266 = sphi 0, %s250
      %s270 = sphi 0, %s270
      %s272 = sphi 0, %s270
      %s273 = sphi 0, %s272
      %s287 = sphi 0, %s273
      %s291 = sphi 0, %s291
      %s293 = sphi 0, %s291
      %s294 = sphi 0, %s293
      %s308 = sphi 0, %s294
      %s312 = sphi 0, %s312
      %s314 = sphi 0, %s312
      %s315 = sphi 0, %s314
      %s329 = sphi 0, %s315
      %s333 = sphi 0, %s333
      %s335 = sphi 0, %s333
      %s336 = sphi 0, %s335
      %s350 = sphi 0, %s336
      %s354 = sphi 0, %s354
      %s356 = sphi 0, %s354
      %s357 = sphi 0, %s356
      %s371 = sphi 0, %s357
      %s375 = sphi 0, %s375
      %s377 = sphi 0, %s375
      %s378 = sphi 0, %s377
      %s392 = sphi 0, %s378
      %s400 = sphi 0, %s402
      %s403 = sphi 0, %s400
      %s404 = sphi 0, %s403
      %s420 = sphi 0, %s404
    $region4: #{tpu_custom_call.1} parent=1 // loop_header_branch
      %33 = sbr.rel (%p31) target = $region8
    $region5: #{tpu_custom_call.1} parent=1 // loop_body
      %s35 = ssub.s32 %s30, 1
      %s36 = ssub.s32 %s30, 2
      %s43 = sadd.s32 1, %s38
      %p44 = scmp.ge.s32.totalorder %s43, 1
      %s45 = scalar_select %p44, 0, %s43
      %s46 = sadd.s32 1, %s37
      %s47 = scalar_select %p44, %s46, %s37
      %p48 = scmp.ge.s32.totalorder %s47, 2
      %s49 = scalar_select %p48, 0, %s47
      %s50 = ssub.s32 %s37, %s49
      %s51 = ssub.s32 %s38, %s45
      %s52 = sor.u32 %s50, %s51
      %p53 = scmp.eq.s32.totalorder %s52, 0
      %s55 = sadd.s32 %s54, 1
      %s56 = scalar_select %p53, %s54, %s55
      %p59 = pneg %p53
      %p60 = scmp.eq.s32.totalorder %s30, 1
      %p61 = por %p59, %p60
      %p62 = scmp.ne.s32.totalorder %s54, %s57
      %p63 = scmp.eq.s32.totalorder %s30, 0
      %p64 = por %p62, %p63
      %p65 = scmp.ne.s32.totalorder %s54, %s57
      %p66 = scmp.eq.s32.totalorder %s35, 1
      %p67 = por %p65, %p66
      %p68 = scmp.ne.s32.totalorder %s57, %s58
      %p69 = scmp.eq.s32.totalorder %s35, 0
      %p70 = por %p68, %p69
      %p71 = scmp.ne.s32.totalorder %s57, %s58
      %p72 = scmp.eq.s32.totalorder %s36, 1
      %p73 = por %p71, %p72
      %p75 = scmp.ne.s32.totalorder %s58, %s74
      %p76 = scmp.eq.s32.totalorder %s36, 0
      %p77 = por %p75, %p76
      %s78 = ssub.s32 %s37, %s49
      %s79 = ssub.s32 %s38, %s45
      %s80 = sor.u32 %s78, %s79
      %p81 = scmp.eq.s32.totalorder %s80, 0
      %s83 = sadd.s32 %s82, 1
      %s84 = scalar_select %p81, %s82, %s83
      %p87 = pneg %p81
      %p88 = scmp.eq.s32.totalorder %s30, 1
      %p89 = por %p87, %p88
      %p90 = scmp.ne.s32.totalorder %s82, %s85
      %p91 = scmp.eq.s32.totalorder %s30, 0
      %p92 = por %p90, %p91
      %p93 = scmp.ne.s32.totalorder %s82, %s85
      %p94 = scmp.eq.s32.totalorder %s35, 1
      %p95 = por %p93, %p94
      %p96 = scmp.ne.s32.totalorder %s85, %s86
      %p97 = scmp.eq.s32.totalorder %s35, 0
      %p98 = por %p96, %p97
      %p99 = scmp.ne.s32.totalorder %s85, %s86
      %p100 = scmp.eq.s32.totalorder %s36, 1
      %p101 = por %p99, %p100
      %p103 = scmp.ne.s32.totalorder %s86, %s102
      %p104 = scmp.eq.s32.totalorder %s36, 0
      %p105 = por %p103, %p104
      %s106 = ssub.s32 %s37, %s49
      %s107 = ssub.s32 %s38, %s45
      %s108 = sor.u32 %s106, %s107
      %p109 = scmp.eq.s32.totalorder %s108, 0
      %s111 = sadd.s32 %s110, 1
      %s112 = scalar_select %p109, %s110, %s111
      %p115 = pneg %p109
      %p116 = scmp.eq.s32.totalorder %s30, 1
      %p117 = por %p115, %p116
      %p118 = scmp.ne.s32.totalorder %s110, %s113
      %p119 = scmp.eq.s32.totalorder %s30, 0
      %p120 = por %p118, %p119
      %p121 = scmp.ne.s32.totalorder %s110, %s113
      %p122 = scmp.eq.s32.totalorder %s35, 1
      %p123 = por %p121, %p122
      %p124 = scmp.ne.s32.totalorder %s113, %s114
      %p125 = scmp.eq.s32.totalorder %s35, 0
      %p126 = por %p124, %p125
      %p127 = scmp.ne.s32.totalorder %s113, %s114
      %p128 = scmp.eq.s32.totalorder %s36, 1
      %p129 = por %p127, %p128
      %p131 = scmp.ne.s32.totalorder %s114, %s130
      %p132 = scmp.eq.s32.totalorder %s36, 0
      %p133 = por %p131, %p132
      %s135 = sadd.s32 %s134, 1
      %p138 = scmp.eq.s32.totalorder %s30, 1
      %p139 = scmp.ne.s32.totalorder %s134, %s136
      %p140 = scmp.eq.s32.totalorder %s30, 0
      %p141 = por %p139, %p140
      %p142 = scmp.ne.s32.totalorder %s134, %s136
      %p143 = scmp.eq.s32.totalorder %s35, 1
      %p144 = por %p142, %p143
      %p145 = scmp.ne.s32.totalorder %s136, %s137
      %p146 = scmp.eq.s32.totalorder %s35, 0
      %p147 = por %p145, %p146
      %p148 = scmp.ne.s32.totalorder %s136, %s137
      %p149 = scmp.eq.s32.totalorder %s36, 1
      %p150 = por %p148, %p149
      %p152 = scmp.ne.s32.totalorder %s137, %s151
      %p153 = scmp.eq.s32.totalorder %s36, 0
      %p154 = por %p152, %p153
      %s156 = sadd.s32 %s155, 1
      %p159 = scmp.eq.s32.totalorder %s30, 1
      %p160 = scmp.ne.s32.totalorder %s155, %s157
      %p161 = scmp.eq.s32.totalorder %s30, 0
      %p162 = por %p160, %p161
      %p163 = scmp.ne.s32.totalorder %s155, %s157
      %p164 = scmp.eq.s32.totalorder %s35, 1
      %p165 = por %p163, %p164
      %p166 = scmp.ne.s32.totalorder %s157, %s158
      %p167 = scmp.eq.s32.totalorder %s35, 0
      %p168 = por %p166, %p167
      %p169 = scmp.ne.s32.totalorder %s157, %s158
      %p170 = scmp.eq.s32.totalorder %s36, 1
      %p171 = por %p169, %p170
      %p173 = scmp.ne.s32.totalorder %s158, %s172
      %p174 = scmp.eq.s32.totalorder %s36, 0
      %p175 = por %p173, %p174
      %s177 = sadd.s32 %s176, 1
      %p180 = scmp.eq.s32.totalorder %s30, 1
      %p181 = scmp.ne.s32.totalorder %s176, %s178
      %p182 = scmp.eq.s32.totalorder %s30, 0
      %p183 = por %p181, %p182
      %p184 = scmp.ne.s32.totalorder %s176, %s178
      %p185 = scmp.eq.s32.totalorder %s35, 1
      %p186 = por %p184, %p185
      %p187 = scmp.ne.s32.totalorder %s178, %s179
      %p188 = scmp.eq.s32.totalorder %s35, 0
      %p189 = por %p187, %p188
      %p190 = scmp.ne.s32.totalorder %s178, %s179
      %p191 = scmp.eq.s32.totalorder %s36, 1
      %p192 = por %p190, %p191
      %p194 = scmp.ne.s32.totalorder %s179, %s193
      %p195 = scmp.eq.s32.totalorder %s36, 0
      %p196 = por %p194, %p195
      %s198 = sadd.s32 %s197, 1
      %p201 = scmp.eq.s32.totalorder %s30, 1
      %p202 = scmp.ne.s32.totalorder %s197, %s199
      %p203 = scmp.eq.s32.totalorder %s30, 0
      %p204 = por %p202, %p203
      %p205 = scmp.ne.s32.totalorder %s197, %s199
      %p206 = scmp.eq.s32.totalorder %s35, 1
      %p207 = por %p205, %p206
      %p208 = scmp.ne.s32.totalorder %s199, %s200
      %p209 = scmp.eq.s32.totalorder %s35, 0
      %p210 = por %p208, %p209
      %p211 = scmp.ne.s32.totalorder %s199, %s200
      %p212 = scmp.eq.s32.totalorder %s36, 1
      %p213 = por %p211, %p212
      %p215 = scmp.ne.s32.totalorder %s200, %s214
      %p216 = scmp.eq.s32.totalorder %s36, 0
      %p217 = por %p215, %p216
      %s218 = ssub.s32 %s38, %s45
      %p219 = scmp.eq.s32.totalorder %s218, 0
      %s221 = sadd.s32 %s220, 1
      %s222 = scalar_select %p219, %s220, %s221
      %p225 = pneg %p219
      %p226 = scmp.eq.s32.totalorder %s30, 1
      %p227 = por %p225, %p226
      %p228 = scmp.ne.s32.totalorder %s220, %s223
      %p229 = scmp.eq.s32.totalorder %s30, 0
      %p230 = por %p228, %p229
      %p231 = scmp.ne.s32.totalorder %s220, %s223
      %p232 = scmp.eq.s32.totalorder %s35, 1
      %p233 = por %p231, %p232
      %p234 = scmp.ne.s32.totalorder %s223, %s224
      %p235 = scmp.eq.s32.totalorder %s35, 0
      %p236 = por %p234, %p235
      %p237 = scmp.ne.s32.totalorder %s223, %s224
      %p238 = scmp.eq.s32.totalorder %s36, 1
      %p239 = por %p237, %p238
      %p241 = scmp.ne.s32.totalorder %s224, %s240
      %p242 = scmp.eq.s32.totalorder %s36, 0
      %p243 = por %p241, %p242
      %s244 = ssub.s32 %s38, %s45
      %p245 = scmp.eq.s32.totalorder %s244, 0
      %s247 = sadd.s32 %s246, 1
      %s248 = scalar_select %p245, %s246, %s247
      %p251 = pneg %p245
      %p252 = scmp.eq.s32.totalorder %s30, 1
      %p253 = por %p251, %p252
      %p254 = scmp.ne.s32.totalorder %s246, %s249
      %p255 = scmp.eq.s32.totalorder %s30, 0
      %p256 = por %p254, %p255
      %p257 = scmp.ne.s32.totalorder %s246, %s249
      %p258 = scmp.eq.s32.totalorder %s35, 1
      %p259 = por %p257, %p258
      %p260 = scmp.ne.s32.totalorder %s249, %s250
      %p261 = scmp.eq.s32.totalorder %s35, 0
      %p262 = por %p260, %p261
      %p263 = scmp.ne.s32.totalorder %s249, %s250
      %p264 = scmp.eq.s32.totalorder %s36, 1
      %p265 = por %p263, %p264
      %p267 = scmp.ne.s32.totalorder %s250, %s266
      %p268 = scmp.eq.s32.totalorder %s36, 0
      %p269 = por %p267, %p268
      %s271 = sadd.s32 %s270, 1
      %p274 = scmp.eq.s32.totalorder %s30, 1
      %p275 = scmp.ne.s32.totalorder %s270, %s272
      %p276 = scmp.eq.s32.totalorder %s30, 0
      %p277 = por %p275, %p276
      %p278 = scmp.ne.s32.totalorder %s270, %s272
      %p279 = scmp.eq.s32.totalorder %s35, 1
      %p280 = por %p278, %p279
      %p281 = scmp.ne.s32.totalorder %s272, %s273
      %p282 = scmp.eq.s32.totalorder %s35, 0
      %p283 = por %p281, %p282
      %p284 = scmp.ne.s32.totalorder %s272, %s273
      %p285 = scmp.eq.s32.totalorder %s36, 1
      %p286 = por %p284, %p285
      %p288 = scmp.ne.s32.totalorder %s273, %s287
      %p289 = scmp.eq.s32.totalorder %s36, 0
      %p290 = por %p288, %p289
      %s292 = sadd.s32 %s291, 1
      %p295 = scmp.eq.s32.totalorder %s30, 1
      %p296 = scmp.ne.s32.totalorder %s291, %s293
      %p297 = scmp.eq.s32.totalorder %s30, 0
      %p298 = por %p296, %p297
      %p299 = scmp.ne.s32.totalorder %s291, %s293
      %p300 = scmp.eq.s32.totalorder %s35, 1
      %p301 = por %p299, %p300
      %p302 = scmp.ne.s32.totalorder %s293, %s294
      %p303 = scmp.eq.s32.totalorder %s35, 0
      %p304 = por %p302, %p303
      %p305 = scmp.ne.s32.totalorder %s293, %s294
      %p306 = scmp.eq.s32.totalorder %s36, 1
      %p307 = por %p305, %p306
      %p309 = scmp.ne.s32.totalorder %s294, %s308
      %p310 = scmp.eq.s32.totalorder %s36, 0
      %p311 = por %p309, %p310
      %s313 = sadd.s32 %s312, 1
      %p316 = scmp.eq.s32.totalorder %s30, 1
      %p317 = scmp.ne.s32.totalorder %s312, %s314
      %p318 = scmp.eq.s32.totalorder %s30, 0
      %p319 = por %p317, %p318
      %p320 = scmp.ne.s32.totalorder %s312, %s314
      %p321 = scmp.eq.s32.totalorder %s35, 1
      %p322 = por %p320, %p321
      %p323 = scmp.ne.s32.totalorder %s314, %s315
      %p324 = scmp.eq.s32.totalorder %s35, 0
      %p325 = por %p323, %p324
      %p326 = scmp.ne.s32.totalorder %s314, %s315
      %p327 = scmp.eq.s32.totalorder %s36, 1
      %p328 = por %p326, %p327
      %p330 = scmp.ne.s32.totalorder %s315, %s329
      %p331 = scmp.eq.s32.totalorder %s36, 0
      %p332 = por %p330, %p331
      %s334 = sadd.s32 %s333, 1
      %p337 = scmp.eq.s32.totalorder %s30, 1
      %p338 = scmp.ne.s32.totalorder %s333, %s335
      %p339 = scmp.eq.s32.totalorder %s30, 0
      %p340 = por %p338, %p339
      %p341 = scmp.ne.s32.totalorder %s333, %s335
      %p342 = scmp.eq.s32.totalorder %s35, 1
      %p343 = por %p341, %p342
      %p344 = scmp.ne.s32.totalorder %s335, %s336
      %p345 = scmp.eq.s32.totalorder %s35, 0
      %p346 = por %p344, %p345
      %p347 = scmp.ne.s32.totalorder %s335, %s336
      %p348 = scmp.eq.s32.totalorder %s36, 1
      %p349 = por %p347, %p348
      %p351 = scmp.ne.s32.totalorder %s336, %s350
      %p352 = scmp.eq.s32.totalorder %s36, 0
      %p353 = por %p351, %p352
      %s355 = sadd.s32 %s354, 1
      %p358 = scmp.eq.s32.totalorder %s30, 1
      %p359 = scmp.ne.s32.totalorder %s354, %s356
      %p360 = scmp.eq.s32.totalorder %s30, 0
      %p361 = por %p359, %p360
      %p362 = scmp.ne.s32.totalorder %s354, %s356
      %p363 = scmp.eq.s32.totalorder %s35, 1
      %p364 = por %p362, %p363
      %p365 = scmp.ne.s32.totalorder %s356, %s357
      %p366 = scmp.eq.s32.totalorder %s35, 0
      %p367 = por %p365, %p366
      %p368 = scmp.ne.s32.totalorder %s356, %s357
      %p369 = scmp.eq.s32.totalorder %s36, 1
      %p370 = por %p368, %p369
      %p372 = scmp.ne.s32.totalorder %s357, %s371
      %p373 = scmp.eq.s32.totalorder %s36, 0
      %p374 = por %p372, %p373
      %s376 = sadd.s32 %s375, 1
      %p379 = scmp.eq.s32.totalorder %s30, 1
      %p380 = scmp.ne.s32.totalorder %s375, %s377
      %p381 = scmp.eq.s32.totalorder %s30, 0
      %p382 = por %p380, %p381
      %p383 = scmp.ne.s32.totalorder %s375, %s377
      %p384 = scmp.eq.s32.totalorder %s35, 1
      %p385 = por %p383, %p384
      %p386 = scmp.ne.s32.totalorder %s377, %s378
      %p387 = scmp.eq.s32.totalorder %s35, 0
      %p388 = por %p386, %p387
      %p389 = scmp.ne.s32.totalorder %s377, %s378
      %p390 = scmp.eq.s32.totalorder %s36, 1
      %p391 = por %p389, %p390
      %p393 = scmp.ne.s32.totalorder %s378, %s392
      %p394 = scmp.eq.s32.totalorder %s36, 0
      %p395 = por %p393, %p394
      %s396 = ssub.s32 %s37, %s49
      %s397 = ssub.s32 %s38, %s45
      %s398 = sor.u32 %s396, %s397
      %p399 = scmp.eq.s32.totalorder %s398, 0
      %s401 = sadd.s32 %s400, 1
      %s402 = scalar_select %p399, %s400, %s401
      %p405 = pneg %p399
      %p406 = scmp.eq.s32.totalorder %s30, 1
      %p407 = por %p405, %p406
      %p408 = scmp.ne.s32.totalorder %s400, %s403
      %p409 = scmp.eq.s32.totalorder %s30, 0
      %p410 = por %p408, %p409
      %p411 = scmp.ne.s32.totalorder %s400, %s403
      %p412 = scmp.eq.s32.totalorder %s35, 1
      %p413 = por %p411, %p412
      %p414 = scmp.ne.s32.totalorder %s403, %s404
      %p415 = scmp.eq.s32.totalorder %s35, 0
      %p416 = por %p414, %p415
      %p417 = scmp.ne.s32.totalorder %s403, %s404
      %p418 = scmp.eq.s32.totalorder %s36, 1
      %p419 = por %p417, %p418
      %p421 = scmp.ne.s32.totalorder %s404, %s420
      %p422 = scmp.eq.s32.totalorder %s36, 0
      %p423 = por %p421, %p422
      %p424 = scmp.le.s32.totalorder 1, %s30
      %p425 = scmp.lt.s32.totalorder %s30, 3
      %p426 = pnand %p424, %p425
      %p427 = pneg %p426
      // Predicated region
      $region9: #{tpu_custom_call.1} parent=5 // pred_check
        _
      $region10: #{tpu_custom_call.1} parent=5 // pred_check_branch
        %429 = sbr.rel (%p426) target = $region12
      $region11: #{tpu_custom_call.1} parent=5 // pred_region
        %s430 = ssub.s32 %s30, 1
        // Predicated region
        $region13: #{tpu_custom_call.1} parent=11 // pred_check
          %p431 = pneg %p147
        $region14: #{tpu_custom_call.1} parent=11 // pred_check_branch
          %433 = sbr.rel (%p431) target = $region16
        $region15: #{tpu_custom_call.1} parent=11 // pred_region
          _
        $region16: #{tpu_custom_call.1} parent=11 // pred_fallthru
          _
        // Predicated region
        $region17: #{tpu_custom_call.1} parent=11 // pred_check
          %p434 = pneg %p168
        $region18: #{tpu_custom_call.1} parent=11 // pred_check_branch
          %436 = sbr.rel (%p434) target = $region20
        $region19: #{tpu_custom_call.1} parent=11 // pred_region
          _
        $region20: #{tpu_custom_call.1} parent=11 // pred_fallthru
          _
        // Predicated region
        $region21: #{tpu_custom_call.1} parent=11 // pred_check
          %p437 = pneg %p189
        $region22: #{tpu_custom_call.1} parent=11 // pred_check_branch
          %439 = sbr.rel (%p437) target = $region24
        $region23: #{tpu_custom_call.1} parent=11 // pred_region
          _
        $region24: #{tpu_custom_call.1} parent=11 // pred_fallthru
          _
        // Predicated region
        $region25: #{tpu_custom_call.1} parent=11 // pred_check
          %p440 = pneg %p210
        $region26: #{tpu_custom_call.1} parent=11 // pred_check_branch
          %442 = sbr.rel (%p440) target = $region28
        $region27: #{tpu_custom_call.1} parent=11 // pred_region
          _
        $region28: #{tpu_custom_call.1} parent=11 // pred_fallthru
          _
        // Predicated region
        $region29: #{tpu_custom_call.1} parent=11 // pred_check
          %p443 = pneg %p236
        $region30: #{tpu_custom_call.1} parent=11 // pred_check_branch
          %445 = sbr.rel (%p443) target = $region32
        $region31: #{tpu_custom_call.1} parent=11 // pred_region
          %s446 = smul.u32 8, %s40
          %p447 = scmp.lt.s32.totalorder %s446, 7
          %s448 = scalar_select %p447, %s446, 7
          %s449 = smul.addr %s448, 4
          %s450 = scalar_lea.vmem %s7, %s449
          %s451 = smul.u32 8, %s40
        $region32: #{tpu_custom_call.1} parent=11 // pred_fallthru
          _
        // Predicated region
        $region33: #{tpu_custom_call.1} parent=11 // pred_check
          %p452 = pneg %p262
        $region34: #{tpu_custom_call.1} parent=11 // pred_check_branch
          %454 = sbr.rel (%p452) target = $region36
        $region35: #{tpu_custom_call.1} parent=11 // pred_region
          %s455 = smul.u32 8, %s40
          %p456 = scmp.lt.s32.totalorder %s455, 7
          %s457 = scalar_select %p456, %s455, 7
          %s458 = smul.addr %s457, 4
          %s459 = scalar_lea.vmem %s8, %s458
          %s460 = smul.u32 8, %s40
        $region36: #{tpu_custom_call.1} parent=11 // pred_fallthru
          _
        // Predicated region
        $region37: #{tpu_custom_call.1} parent=11 // pred_check
          %p461 = pneg %p283
        $region38: #{tpu_custom_call.1} parent=11 // pred_check_branch
          %463 = sbr.rel (%p461) target = $region40
        $region39: #{tpu_custom_call.1} parent=11 // pred_region
          _
        $region40: #{tpu_custom_call.1} parent=11 // pred_fallthru
          _
        // Predicated region
        $region41: #{tpu_custom_call.1} parent=11 // pred_check
          %p464 = pneg %p304
        $region42: #{tpu_custom_call.1} parent=11 // pred_check_branch
          %466 = sbr.rel (%p464) target = $region44
        $region43: #{tpu_custom_call.1} parent=11 // pred_region
          _
        $region44: #{tpu_custom_call.1} parent=11 // pred_fallthru
          _
        // Predicated region
        $region45: #{tpu_custom_call.1} parent=11 // pred_check
          %p467 = pneg %p325
        $region46: #{tpu_custom_call.1} parent=11 // pred_check_branch
          %469 = sbr.rel (%p467) target = $region48
        $region47: #{tpu_custom_call.1} parent=11 // pred_region
          _
        $region48: #{tpu_custom_call.1} parent=11 // pred_fallthru
          _
        // Predicated region
        $region49: #{tpu_custom_call.1} parent=11 // pred_check
          %p470 = pneg %p346
        $region50: #{tpu_custom_call.1} parent=11 // pred_check_branch
          %472 = sbr.rel (%p470) target = $region52
        $region51: #{tpu_custom_call.1} parent=11 // pred_region
          _
        $region52: #{tpu_custom_call.1} parent=11 // pred_fallthru
          _
        // Predicated region
        $region53: #{tpu_custom_call.1} parent=11 // pred_check
          %p473 = pneg %p367
        $region54: #{tpu_custom_call.1} parent=11 // pred_check_branch
          %475 = sbr.rel (%p473) target = $region56
        $region55: #{tpu_custom_call.1} parent=11 // pred_region
          _
        $region56: #{tpu_custom_call.1} parent=11 // pred_fallthru
          _
        // Predicated region
        $region57: #{tpu_custom_call.1} parent=11 // pred_check
          %p476 = pneg %p388
        $region58: #{tpu_custom_call.1} parent=11 // pred_check_branch
          %478 = sbr.rel (%p476) target = $region60
        $region59: #{tpu_custom_call.1} parent=11 // pred_region
          _
        $region60: #{tpu_custom_call.1} parent=11 // pred_fallthru
          _
      $region12: #{tpu_custom_call.1} parent=5 // pred_fallthru
        _
      %p479 = scmp.lt.s32.totalorder %s30, 2
      // Predicated region
      $region61: #{tpu_custom_call.1} parent=5 // pred_check
        %p480 = pneg %p479
      $region62: #{tpu_custom_call.1} parent=5 // pred_check_branch
        %482 = sbr.rel (%p480) target = $region64
      $region63: #{tpu_custom_call.1} parent=5 // pred_region
        // Predicated region
        $region65: #{tpu_custom_call.1} parent=63 // pred_check
          %p483 = pneg %p64
        $region66: #{tpu_custom_call.1} parent=63 // pred_check_branch
          %485 = sbr.rel (%p483) target = $region68
        $region67: #{tpu_custom_call.1} parent=63 // pred_region
          #allocation10 [shape = 'u32[6]{0}', space=smem, size = 0x18, scoped, tag = 'DMA stride descriptor']
          %s486 = sand.u32 %s54, 1
          %s487 = scalar_lea.sflag [#allocation3], %s486
          %s488 = sand.u32 %s54, 1
          %s489 = smul.addr %s488, 64
          %s490 = scalar_lea.vmem [#allocation2], %s489
          %s492 = ssub.s32 1024, 1024
          %493 = vsyncadd %s487, %s492
          %s494 = smul.addr %s37, 4
          %s495 = sadd.s32 %s38, %s494
          %s496 = smul.addr %s495, 128
          %s497 = scalar_lea.hbm %s0, %s496
          %s499 = sshll.u32 1, 14
          %s500 = sxor.u32 4294967295, %s499
          %s502 = sld [smem:[#allocation0]]
          %s503 = sadd.s32 2, %s502
          %s505 = sshll.u32 7, 26
          %s506 = sxor.u32 4294967295, %s505
          %s507 = sand.u32 0, %s506
          %s508 = sshll.u32 %s503, 26
          %s509 = sor.u32 %s507, %s508
          %s510 = sshll.u32 %s490, 4
          %s511 = int_to_ptr.vmem [resolvable:$true] %s510
          %517 = sst [smem:[#allocation10]] 1024
          %s518 = scalar_lea.smem [#allocation10], 1
          %519 = sst [smem:[%s518]] 512
          %s520 = scalar_lea.smem [#allocation10], 2
          %521 = sst [smem:[%s520]] 4
          %s522 = scalar_lea.smem [#allocation10], 3
          %523 = sst [smem:[%s522]] 128
          %s524 = scalar_lea.smem [#allocation10], 4
          %525 = sst [smem:[%s524]] 128
          %s526 = scalar_lea.smem [#allocation10], 5
          %527 = sst [smem:[%s526]] 8
          %529 = dma.general %s497, 1024, %s511, %s487, [#allocation9], [#allocation10], %s509, 0
        $region68: #{tpu_custom_call.1} parent=63 // pred_fallthru
          _
        // Predicated region
        $region69: #{tpu_custom_call.1} parent=63 // pred_check
          %p530 = pneg %p92
        $region70: #{tpu_custom_call.1} parent=63 // pred_check_branch
          %532 = sbr.rel (%p530) target = $region72
        $region71: #{tpu_custom_call.1} parent=63 // pred_region
          #allocation12 [shape = 'u32[6]{0}', space=smem, size = 0x18, scoped, tag = 'DMA stride descriptor']
          %s533 = sand.u32 %s30, 1
          %s534 = scalar_lea.sflag [#allocation6], %s533
          %s535 = sand.u32 %s82, 1
          %s536 = smul.addr %s535, 64
          %s537 = scalar_lea.vmem [#allocation5], %s536
          %s539 = ssub.s32 1024, 1024
          %540 = vsyncadd %s534, %s539
          %s541 = smul.addr %s37, 4
          %s542 = sadd.s32 %s38, %s541
          %s543 = smul.addr %s542, 128
          %s544 = scalar_lea.hbm %s1, %s543
          %s546 = sshll.u32 1, 14
          %s547 = sxor.u32 4294967295, %s546
          %s549 = sld [smem:[#allocation0]]
          %s550 = sadd.s32 2, %s549
          %s552 = sshll.u32 7, 26
          %s553 = sxor.u32 4294967295, %s552
          %s554 = sand.u32 0, %s553
          %s555 = sshll.u32 %s550, 26
          %s556 = sor.u32 %s554, %s555
          %s557 = sshll.u32 %s537, 4
          %s558 = int_to_ptr.vmem [resolvable:$true] %s557
          %564 = sst [smem:[#allocation12]] 1024
          %s565 = scalar_lea.smem [#allocation12], 1
          %566 = sst [smem:[%s565]] 512
          %s567 = scalar_lea.smem [#allocation12], 2
          %568 = sst [smem:[%s567]] 4
          %s569 = scalar_lea.smem [#allocation12], 3
          %570 = sst [smem:[%s569]] 128
          %s571 = scalar_lea.smem [#allocation12], 4
          %572 = sst [smem:[%s571]] 128
          %s573 = scalar_lea.smem [#allocation12], 5
          %574 = sst [smem:[%s573]] 8
          %576 = dma.general %s544, 1024, %s558, %s534, [#allocation11], [#allocation12], %s556, 0
        $region72: #{tpu_custom_call.1} parent=63 // pred_fallthru
          _
        // Predicated region
        $region73: #{tpu_custom_call.1} parent=63 // pred_check
          %p577 = pneg %p120
        $region74: #{tpu_custom_call.1} parent=63 // pred_check_branch
          %579 = sbr.rel (%p577) target = $region76
        $region75: #{tpu_custom_call.1} parent=63 // pred_region
          #allocation14 [shape = 'u32[6]{0}', space=smem, size = 0x18, scoped, tag = 'DMA stride descriptor']
          %s580 = sand.u32 %s30, 1
          %s581 = scalar_lea.sflag [#allocation6], %s580
          %s582 = sand.u32 %s110, 1
          %s583 = smul.addr %s582, 64
          %s584 = scalar_lea.vmem [#allocation7], %s583
          %s586 = ssub.s32 1024, 1024
          %587 = vsyncadd %s581, %s586
          %s588 = smul.addr %s37, 4
          %s589 = sadd.s32 %s38, %s588
          %s590 = smul.addr %s589, 128
          %s591 = scalar_lea.hbm %s2, %s590
          %s593 = sshll.u32 1, 14
          %s594 = sxor.u32 4294967295, %s593
          %s596 = sld [smem:[#allocation0]]
          %s597 = sadd.s32 2, %s596
          %s599 = sshll.u32 7, 26
          %s600 = sxor.u32 4294967295, %s599
          %s601 = sand.u32 0, %s600
          %s602 = sshll.u32 %s597, 26
          %s603 = sor.u32 %s601, %s602
          %s604 = sshll.u32 %s584, 4
          %s605 = int_to_ptr.vmem [resolvable:$true] %s604
          %611 = sst [smem:[#allocation14]] 1024
          %s612 = scalar_lea.smem [#allocation14], 1
          %613 = sst [smem:[%s612]] 512
          %s614 = scalar_lea.smem [#allocation14], 2
          %615 = sst [smem:[%s614]] 4
          %s616 = scalar_lea.smem [#allocation14], 3
          %617 = sst [smem:[%s616]] 128
          %s618 = scalar_lea.smem [#allocation14], 4
          %619 = sst [smem:[%s618]] 128
          %s620 = scalar_lea.smem [#allocation14], 5
          %621 = sst [smem:[%s620]] 8
          %623 = dma.general %s591, 1024, %s605, %s581, [#allocation13], [#allocation14], %s603, 0
        $region76: #{tpu_custom_call.1} parent=63 // pred_fallthru
          _
      $region64: #{tpu_custom_call.1} parent=5 // pred_fallthru
        _
      %p624 = scmp.le.s32.totalorder 1, %s30
      %p625 = scmp.lt.s32.totalorder %s30, 3
      %p626 = pnand %p624, %p625
      %p627 = pneg %p626
      // Predicated region
      $region77: #{tpu_custom_call.1} parent=5 // pred_check
        _
      $region78: #{tpu_custom_call.1} parent=5 // pred_check_branch
        %629 = sbr.rel (%p626) target = $region80
      $region79: #{tpu_custom_call.1} parent=5 // pred_region
        %s630 = ssub.s32 %s30, 1
        %s631 = sand.u32 %s57, 1
        %s632 = scalar_lea.sflag [#allocation3], %s631
        %s633 = sand.u32 %s57, 1
        %s634 = smul.addr %s633, 64
        %s635 = scalar_lea.vmem [#allocation2], %s634
        // Predicated region
        $region81: #{tpu_custom_call.1} parent=79 // pred_check
          %p636 = pneg %p70
        $region82: #{tpu_custom_call.1} parent=79 // pred_check_branch
          %638 = sbr.rel (%p636) target = $region84
        $region83: #{tpu_custom_call.1} parent=79 // pred_region
          %639 = dma.done %s632, 1024
        $region84: #{tpu_custom_call.1} parent=79 // pred_fallthru
          _
        %s640 = sand.u32 %s35, 1
        %s641 = scalar_lea.sflag [#allocation6], %s640
        %s642 = sand.u32 %s85, 1
        %s643 = smul.addr %s642, 64
        %s644 = scalar_lea.vmem [#allocation5], %s643
        // Predicated region
        $region85: #{tpu_custom_call.1} parent=79 // pred_check
          %p645 = pneg %p98
        $region86: #{tpu_custom_call.1} parent=79 // pred_check_branch
          %647 = sbr.rel (%p645) target = $region88
        $region87: #{tpu_custom_call.1} parent=79 // pred_region
          %648 = dma.done %s641, 1024
        $region88: #{tpu_custom_call.1} parent=79 // pred_fallthru
          _
        %s649 = sand.u32 %s35, 1
        %s650 = scalar_lea.sflag [#allocation6], %s649
        %s651 = sand.u32 %s113, 1
        %s652 = smul.addr %s651, 64
        %s653 = scalar_lea.vmem [#allocation7], %s652
        // Predicated region
        $region89: #{tpu_custom_call.1} parent=79 // pred_check
          %p654 = pneg %p126
        $region90: #{tpu_custom_call.1} parent=79 // pred_check_branch
          %656 = sbr.rel (%p654) target = $region92
        $region91: #{tpu_custom_call.1} parent=79 // pred_region
          %657 = dma.done %s650, 1024
        $region92: #{tpu_custom_call.1} parent=79 // pred_fallthru
          _
        %s658 = sand.u32 %s57, 1
        %s659 = scalar_lea.sflag [#allocation3], %s658
        %s660 = sand.u32 %s57, 1
        %s661 = smul.addr %s660, 64
        %s662 = scalar_lea.vmem [#allocation2], %s661
        %p663 = pneg %p70
        %p664 = pneg %p67
        %s665 = sand.u32 %s35, 1
        %s666 = scalar_lea.sflag [#allocation6], %s665
        %s667 = sand.u32 %s85, 1
        %s668 = smul.addr %s667, 64
        %s669 = scalar_lea.vmem [#allocation5], %s668
        %p670 = pneg %p98
        %p671 = pneg %p95
        %s672 = sand.u32 %s35, 1
        %s673 = scalar_lea.sflag [#allocation6], %s672
        %s674 = sand.u32 %s113, 1
        %s675 = smul.addr %s674, 64
        %s676 = scalar_lea.vmem [#allocation7], %s675
        %p677 = pneg %p126
        %p678 = pneg %p123
        %p679 = pneg %p147
        %p680 = pneg %p144
        %p681 = pneg %p168
        %p682 = pneg %p165
        %p683 = pneg %p189
        %p684 = pneg %p186
        %p685 = pneg %p210
        %p686 = pneg %p207
        %s687 = smul.u32 8, %s40
        %p688 = scmp.lt.s32.totalorder %s687, 7
        %s689 = scalar_select %p688, %s687, 7
        %s690 = smul.addr %s689, 4
        %s691 = scalar_lea.vmem %s7, %s690
        %p692 = pneg %p236
        %p693 = pneg %p233
        %s694 = smul.u32 8, %s40
        %p695 = scmp.lt.s32.totalorder %s694, 7
        %s696 = scalar_select %p695, %s694, 7
        %s697 = smul.addr %s696, 4
        %s698 = scalar_lea.vmem %s8, %s697
        %p699 = pneg %p262
        %p700 = pneg %p259
        %p701 = pneg %p283
        %p702 = pneg %p280
        %p703 = pneg %p304
        %p704 = pneg %p301
        %p705 = pneg %p325
        %p706 = pneg %p322
        %p707 = pneg %p346
        %p708 = pneg %p343
        %p709 = pneg %p367
        %p710 = pneg %p364
        %p711 = pneg %p388
        %p712 = pneg %p385
        %p713 = pneg %p416
        %p714 = pneg %p413
        %s715 = sand.u32 %s403, 1
        %s716 = scalar_lea.sflag [#allocation4], %s715
        %s717 = sand.u32 %s403, 1
        %s718 = smul.addr %s717, 64
        %s719 = scalar_lea.vmem [#allocation8], %s718
        %s720 = smul.u32 8, %s40
        %p721 = scmp.lt.s32.totalorder %s720, 7
        %s722 = scalar_select %p721, %s720, 7
        %s723 = smul.addr %s722, 4
        %s724 = scalar_lea.vmem %s7, %s723
        %s725 = smul.u32 8, %s40
        %s726 = smul.u32 8, %s40
        %p727 = scmp.lt.s32.totalorder %s726, 7
        %s728 = scalar_select %p727, %s726, 7
        %s729 = smul.addr %s728, 4
        %s730 = scalar_lea.vmem %s8, %s729
        %s731 = smul.u32 8, %s40
        %v732 = vld [vmem:[%s3] sm:$0xf]
        %v733 = vld [vmem:[%s4] sm:$0xf]
        %v734 = vld [vmem:[%s5] sm:$0xf]
        %v735 = vld [vmem:[%s6] sm:$0xf]
        %v736 = vld [vmem:[%s9] sm:$0xf]
        %v737 = vld [vmem:[%s10] sm:$0xf]
        %v738 = vld [vmem:[%s11] sm:$0xf]
        %v739 = vld [vmem:[%s12] sm:$0xf]
        %v740 = vld [vmem:[%s13] sm:$0xf]
        %v741 = vld [vmem:[%s14] sm:$0xf]
        %v742 = vlaneseq
        %v743 = vshrl.u32 %v742, 7
        %v744 = vadd.s32 %v743, 8
        %v745 = vlaneseq
        %v746 = vand.u32 %v745, 127
        %vm747 = vcmp.le.s32.totalorder %v746, %v743
        %vm748 = vcmp.le.s32.totalorder %v746, %v744
        %v749 = vld [vmem:[%s635] sm:$0x1]
        %v750 = vld [vmem:[%s635 + $0x8] sm:$0x1]
        %v751 = vld [vmem:[%s635 + $0x10] sm:$0x1]
        %v752 = vld [vmem:[%s635 + $0x18] sm:$0x1]
        %s753 = scalar_lea.vmem %s635, 32 [#allocation2]
        %v754 = vld [vmem:[%s753] sm:$0x1]
        %v755 = vld [vmem:[%s753 + $0x8] sm:$0x1]
        %v756 = vld [vmem:[%s753 + $0x10] sm:$0x1]
        %v757 = vld [vmem:[%s753 + $0x18] sm:$0x1]
        %v758 = vld [vmem:[%s644] sm:$0x1]
        %v759 = vld [vmem:[%s644 + $0x8] sm:$0x1]
        %v760 = vld [vmem:[%s644 + $0x10] sm:$0x1]
        %v761 = vld [vmem:[%s644 + $0x18] sm:$0x1]
        %s762 = scalar_lea.vmem %s644, 32 [#allocation5]
        %v763 = vld [vmem:[%s762] sm:$0x1]
        %v764 = vld [vmem:[%s762 + $0x8] sm:$0x1]
        %v765 = vld [vmem:[%s762 + $0x10] sm:$0x1]
        %v766 = vld [vmem:[%s762 + $0x18] sm:$0x1]
        %v767 = vld [vmem:[%s653] sm:$0x1]
        %v768 = vld [vmem:[%s653 + $0x8] sm:$0x1]
        %v769 = vld [vmem:[%s653 + $0x10] sm:$0x1]
        %v770 = vld [vmem:[%s653 + $0x18] sm:$0x1]
        %s771 = scalar_lea.vmem %s653, 32 [#allocation7]
        %v772 = vld [vmem:[%s771] sm:$0x1]
        %v773 = vld [vmem:[%s771 + $0x8] sm:$0x1]
        %v774 = vld [vmem:[%s771 + $0x10] sm:$0x1]
        %v775 = vld [vmem:[%s771 + $0x18] sm:$0x1]
        %v776 = vld [vmem:[%s724] sm:$0xf]
        %v777 = vld [vmem:[%s730] sm:$0xf]
        %779 = vset.pattern.permute.xlu0 0
        %780 = vperm.xlu0 %779, %v776
        %v781 = vpop.permute.xlu0 %780
        %v787 = vrot.slane %v750, 7
        %vm788 = vcmask 1041409
        %v789 = vsel %vm788, %v787, %v749
        %v790 = vrot.slane %v751, 6
        %vm791 = vcmask 1042434
        %v792 = vsel %vm791, %v790, %v789
        %v793 = vrot.slane %v752, 5
        %vm794 = vcmask 1043459
        %v795 = vsel %vm794, %v793, %v792
        %vm796 = vcmask 31744
        %v798 = vsel %vm796, %v732, 0
        %vm800 = vcmask 1043456
        %v801 = vsel %vm800, %v795, 0
        %803 = vmatprep.subr.mxu0 0.0
        %804 = vmatpush1.msra.mxu0 %v801
        %805 = vmatprep.subr.mxu0 0.0
        %806 = vmatpush1.msra.mxu0 0.0
        %807 = vmatprep.subr.mxu0 0.0
        %808 = vmatpush1.msra.mxu0 0.0
        %809 = vmatprep.subr.mxu0 0.0
        %810 = vmatpush1.msra.mxu0 0.0
        %811 = vmatprep.subr.mxu0 0.0
        %812 = vmatpush1.msra.mxu0 0.0
        %813 = vmatprep.subr.mxu0 0.0
        %814 = vmatpush1.msra.mxu0 0.0
        %815 = vmatprep.subr.mxu0 0.0
        %816 = vmatpush1.msra.mxu0 0.0
        %817 = vmatprep.subr.mxu0 0.0
        %818 = vmatpush1.msra.mxu0 0.0
        %819 = vmatprep.subr.mxu0 0.0
        %820 = vmatpush1.msra.mxu0 0.0
        %821 = vmatprep.subr.mxu0 0.0
        %822 = vmatpush1.msra.mxu0 0.0
        %823 = vmatprep.subr.mxu0 0.0
        %824 = vmatpush1.msra.mxu0 0.0
        %825 = vmatprep.subr.mxu0 0.0
        %826 = vmatpush1.msra.mxu0 0.0
        %827 = vmatprep.subr.mxu0 0.0
        %828 = vmatpush1.msra.mxu0 0.0
        %829 = vmatprep.subr.mxu0 0.0
        %830 = vmatpush1.msra.mxu0 0.0
        %831 = vmatprep.subr.mxu0 0.0
        %832 = vmatpush1.msra.mxu0 0.0
        %833 = vmatprep.subr.mxu0 0.0
        %834 = vmatpush1.msra.mxu0 0.0
        %835 = vmatprep.subr.mxu0 0.0
        %836 = vmatpush1.msra.mxu0 0.0
        %837 = vmatprep.subr.mxu0 0.0
        %838 = vmatpush1.msra.mxu0 0.0
        %839 = vmatprep.subr.mxu0 0.0
        %840 = vmatpush1.msra.mxu0 0.0
        %841 = vmatprep.subr.mxu0 0.0
        %842 = vmatpush1.msra.mxu0 0.0
        %843 = vmatprep.subr.mxu0 0.0
        %844 = vmatpush1.msra.mxu0 0.0
        %845 = vmatprep.subr.mxu0 0.0
        %846 = vmatpush1.msra.mxu0 0.0
        %847 = vmatprep.subr.mxu0 0.0
        %848 = vmatpush1.msra.mxu0 0.0
        %849 = vmatprep.subr.mxu0 0.0
        %850 = vmatpush1.msra.mxu0 0.0
        %851 = vmatprep.subr.mxu0 0.0
        %852 = vmatpush1.msra.mxu0 0.0
        %853 = vmatprep.subr.mxu0 0.0
        %854 = vmatpush1.msra.mxu0 0.0
        %855 = vmatprep.subr.mxu0 0.0
        %856 = vmatpush1.msra.mxu0 0.0
        %857 = vmatprep.subr.mxu0 0.0
        %858 = vmatpush1.msra.mxu0 0.0
        %859 = vmatprep.subr.mxu0 0.0
        %860 = vmatpush1.msra.mxu0 0.0
        %861 = vmatprep.subr.mxu0 0.0
        %862 = vmatpush1.msra.mxu0 0.0
        %863 = vmatprep.subr.mxu0 0.0
        %864 = vmatpush1.msra.mxu0 0.0
        %865 = vmatprep.subr.mxu0 0.0
        %866 = vmatpush1.msra.mxu0 0.0
        %867 = vmatprep.mubr.f32.mxu0 0.0
        %868 = vmatmul.mubr.f32.gmra.mrb[0].mxu0 %v798
        %v869 = vpop.f32.mrb[0].mxu0
        %v870 = vadd.f32 %v781, %v869
        %v871 = vpop.f32.mrb[0].mxu0
        %872 = vdwg.mxu0
        %874 = vset.pattern.permute.xlu0 0
        %875 = vperm.xlu0 %874, %v738
        %v876 = vpop.permute.xlu0 %875
        %v882 = vrot.slane %v759, 7
        %v883 = vsel %vm788, %v882, %v758
        %v884 = vrot.slane %v760, 6
        %v885 = vsel %vm791, %v884, %v883
        %v886 = vrot.slane %v761, 5
        %v887 = vsel %vm794, %v886, %v885
        %v889 = vmul.f32 %v876, %v887
        %v890 = vadd.f32 %v870, %v889
        %892 = vset.pattern.permute.xlu0 0
        %893 = vperm.xlu0 %892, %v777
        %v894 = vpop.permute.xlu0 %893
        %v900 = vrot.slane %v755, 7
        %v901 = vsel %vm788, %v900, %v754
        %v902 = vrot.slane %v756, 6
        %v903 = vsel %vm791, %v902, %v901
        %v904 = vrot.slane %v757, 5
        %v905 = vsel %vm794, %v904, %v903
        %v907 = vsel %vm796, %v733, 0
        %v909 = vsel %vm800, %v905, 0
        %911 = vmatprep.subr.mxu0 0.0
        %912 = vmatpush1.msra.mxu0 %v909
        %913 = vmatprep.subr.mxu0 0.0
        %914 = vmatpush1.msra.mxu0 0.0
        %915 = vmatprep.subr.mxu0 0.0
        %916 = vmatpush1.msra.mxu0 0.0
        %917 = vmatprep.subr.mxu0 0.0
        %918 = vmatpush1.msra.mxu0 0.0
        %919 = vmatprep.subr.mxu0 0.0
        %920 = vmatpush1.msra.mxu0 0.0
        %921 = vmatprep.subr.mxu0 0.0
        %922 = vmatpush1.msra.mxu0 0.0
        %923 = vmatprep.subr.mxu0 0.0
        %924 = vmatpush1.msra.mxu0 0.0
        %925 = vmatprep.subr.mxu0 0.0
        %926 = vmatpush1.msra.mxu0 0.0
        %927 = vmatprep.subr.mxu0 0.0
        %928 = vmatpush1.msra.mxu0 0.0
        %929 = vmatprep.subr.mxu0 0.0
        %930 = vmatpush1.msra.mxu0 0.0
        %931 = vmatprep.subr.mxu0 0.0
        %932 = vmatpush1.msra.mxu0 0.0
        %933 = vmatprep.subr.mxu0 0.0
        %934 = vmatpush1.msra.mxu0 0.0
        %935 = vmatprep.subr.mxu0 0.0
        %936 = vmatpush1.msra.mxu0 0.0
        %937 = vmatprep.subr.mxu0 0.0
        %938 = vmatpush1.msra.mxu0 0.0
        %939 = vmatprep.subr.mxu0 0.0
        %940 = vmatpush1.msra.mxu0 0.0
        %941 = vmatprep.subr.mxu0 0.0
        %942 = vmatpush1.msra.mxu0 0.0
        %943 = vmatprep.subr.mxu0 0.0
        %944 = vmatpush1.msra.mxu0 0.0
        %945 = vmatprep.subr.mxu0 0.0
        %946 = vmatpush1.msra.mxu0 0.0
        %947 = vmatprep.subr.mxu0 0.0
        %948 = vmatpush1.msra.mxu0 0.0
        %949 = vmatprep.subr.mxu0 0.0
        %950 = vmatpush1.msra.mxu0 0.0
        %951 = vmatprep.subr.mxu0 0.0
        %952 = vmatpush1.msra.mxu0 0.0
        %953 = vmatprep.subr.mxu0 0.0
        %954 = vmatpush1.msra.mxu0 0.0
        %955 = vmatprep.subr.mxu0 0.0
        %956 = vmatpush1.msra.mxu0 0.0
        %957 = vmatprep.subr.mxu0 0.0
        %958 = vmatpush1.msra.mxu0 0.0
        %959 = vmatprep.subr.mxu0 0.0
        %960 = vmatpush1.msra.mxu0 0.0
        %961 = vmatprep.subr.mxu0 0.0
        %962 = vmatpush1.msra.mxu0 0.0
        %963 = vmatprep.subr.mxu0 0.0
        %964 = vmatpush1.msra.mxu0 0.0
        %965 = vmatprep.subr.mxu0 0.0
        %966 = vmatpush1.msra.mxu0 0.0
        %967 = vmatprep.subr.mxu0 0.0
        %968 = vmatpush1.msra.mxu0 0.0
        %969 = vmatprep.subr.mxu0 0.0
        %970 = vmatpush1.msra.mxu0 0.0
        %971 = vmatprep.subr.mxu0 0.0
        %972 = vmatpush1.msra.mxu0 0.0
        %973 = vmatprep.subr.mxu0 0.0
        %974 = vmatpush1.msra.mxu0 0.0
        %975 = vmatprep.mubr.f32.mxu0 0.0
        %976 = vmatmul.mubr.f32.gmra.mrb[0].mxu0 %v907
        %v977 = vpop.f32.mrb[0].mxu0
        %v978 = vadd.f32 %v894, %v977
        %v979 = vpop.f32.mrb[0].mxu0
        %980 = vdwg.mxu0
        %v985 = vrot.slane %v764, 7
        %v986 = vsel %vm788, %v985, %v763
        %v987 = vrot.slane %v765, 6
        %v988 = vsel %vm791, %v987, %v986
        %v989 = vrot.slane %v766, 5
        %v990 = vsel %vm794, %v989, %v988
        %v992 = vmul.f32 %v876, %v990
        %v993 = vadd.f32 %v978, %v992
        %994 = vxpose.xlu0.b32.start [1/16] %v890, 128
        %995 = vxpose.xlu0.b32.cont [2/16] 0.0, 128
        %996 = vxpose.xlu0.b32.cont [3/16] 0.0, 128
        %997 = vxpose.xlu0.b32.cont [4/16] 0.0, 128
        %998 = vxpose.xlu0.b32.cont [5/16] 0.0, 128
        %999 = vxpose.xlu0.b32.cont [6/16] 0.0, 128
        %1000 = vxpose.xlu0.b32.cont [7/16] 0.0, 128
        %1001 = vxpose.xlu0.b32.cont [8/16] 0.0, 128
        %1002 = vxpose.xlu0.b32.cont [9/16] 0.0, 128
        %1003 = vxpose.xlu0.b32.cont [10/16] 0.0, 128
        %1004 = vxpose.xlu0.b32.cont [11/16] 0.0, 128
        %1005 = vxpose.xlu0.b32.cont [12/16] 0.0, 128
        %1006 = vxpose.xlu0.b32.cont [13/16] 0.0, 128
        %1007 = vxpose.xlu0.b32.cont [14/16] 0.0, 128
        %1008 = vxpose.xlu0.b32.cont [15/16] 0.0, 128
        %1009 = vxpose.xlu0.b32.end [16/16] 0.0, 128
        %v1010 = vpop.trf.xlu0
        %v1011 = vpop.trf.xlu0
        %v1012 = vpop.trf.xlu0
        %v1013 = vpop.trf.xlu0
        %v1014 = vpop.trf.xlu0
        %v1015 = vpop.trf.xlu0
        %v1016 = vpop.trf.xlu0
        %v1017 = vpop.trf.xlu0
        %v1018 = vpop.trf.xlu0
        %v1019 = vpop.trf.xlu0
        %v1020 = vpop.trf.xlu0
        %v1021 = vpop.trf.xlu0
        %v1022 = vpop.trf.xlu0
        %v1023 = vpop.trf.xlu0
        %v1024 = vpop.trf.xlu0
        %v1025 = vpop.trf.xlu0
        %v1027 = vsel %vm796, %v1010, 0
        %v1030 = vsel %vm796, %v1011, 0
        %v1033 = vsel %vm800, %v993, 0
        %1035 = vmatprep.subr.mxu0 0.0
        %1036 = vmatpush1.msra.mxu0 %v1033
        %1037 = vmatprep.subr.mxu0 0.0
        %1038 = vmatpush1.msra.mxu0 0.0
        %1039 = vmatprep.subr.mxu0 0.0
        %1040 = vmatpush1.msra.mxu0 0.0
        %1041 = vmatprep.subr.mxu0 0.0
        %1042 = vmatpush1.msra.mxu0 0.0
        %1043 = vmatprep.subr.mxu0 0.0
        %1044 = vmatpush1.msra.mxu0 0.0
        %1045 = vmatprep.subr.mxu0 0.0
        %1046 = vmatpush1.msra.mxu0 0.0
        %1047 = vmatprep.subr.mxu0 0.0
        %1048 = vmatpush1.msra.mxu0 0.0
        %1049 = vmatprep.subr.mxu0 0.0
        %1050 = vmatpush1.msra.mxu0 0.0
        %1051 = vmatprep.subr.mxu0 0.0
        %1052 = vmatpush1.msra.mxu0 0.0
        %1053 = vmatprep.subr.mxu0 0.0
        %1054 = vmatpush1.msra.mxu0 0.0
        %1055 = vmatprep.subr.mxu0 0.0
        %1056 = vmatpush1.msra.mxu0 0.0
        %1057 = vmatprep.subr.mxu0 0.0
        %1058 = vmatpush1.msra.mxu0 0.0
        %1059 = vmatprep.subr.mxu0 0.0
        %1060 = vmatpush1.msra.mxu0 0.0
        %1061 = vmatprep.subr.mxu0 0.0
        %1062 = vmatpush1.msra.mxu0 0.0
        %1063 = vmatprep.subr.mxu0 0.0
        %1064 = vmatpush1.msra.mxu0 0.0
        %1065 = vmatprep.subr.mxu0 0.0
        %1066 = vmatpush1.msra.mxu0 0.0
        %1067 = vmatprep.subr.mxu0 0.0
        %1068 = vmatpush1.msra.mxu0 0.0
        %1069 = vmatprep.subr.mxu0 0.0
        %1070 = vmatpush1.msra.mxu0 0.0
        %1071 = vmatprep.subr.mxu0 0.0
        %1072 = vmatpush1.msra.mxu0 0.0
        %1073 = vmatprep.subr.mxu0 0.0
        %1074 = vmatpush1.msra.mxu0 0.0
        %1075 = vmatprep.subr.mxu0 0.0
        %1076 = vmatpush1.msra.mxu0 0.0
        %1077 = vmatprep.subr.mxu0 0.0
        %1078 = vmatpush1.msra.mxu0 0.0
        %1079 = vmatprep.subr.mxu0 0.0
        %1080 = vmatpush1.msra.mxu0 0.0
        %1081 = vmatprep.subr.mxu0 0.0
        %1082 = vmatpush1.msra.mxu0 0.0
        %1083 = vmatprep.subr.mxu0 0.0
        %1084 = vmatpush1.msra.mxu0 0.0
        %1085 = vmatprep.subr.mxu0 0.0
        %1086 = vmatpush1.msra.mxu0 0.0
        %1087 = vmatprep.subr.mxu0 0.0
        %1088 = vmatpush1.msra.mxu0 0.0
        %1089 = vmatprep.subr.mxu0 0.0
        %1090 = vmatpush1.msra.mxu0 0.0
        %1091 = vmatprep.subr.mxu0 0.0
        %1092 = vmatpush1.msra.mxu0 0.0
        %1093 = vmatprep.subr.mxu0 0.0
        %1094 = vmatpush1.msra.mxu0 0.0
        %1095 = vmatprep.subr.mxu0 0.0
        %1096 = vmatpush1.msra.mxu0 0.0
        %1097 = vmatprep.subr.mxu0 0.0
        %1098 = vmatpush1.msra.mxu0 0.0
        %1099 = vmatprep.mubr.f32.mxu0 0.0
        %1100 = vmatmul.mubr.f32.gmra.mrb[0].mxu0 %v1027
        %v1101 = vpop.f32.mrb[0].mxu0
        %v1102 = vadd.f32 0.0, %v1101
        %v1103 = vpop.f32.mrb[0].mxu0
        %1104 = vmatprep.mubr.f32.mxu0 0.0
        %1105 = vmatmul.mubr.f32.gmra.mrb[0].mxu0 %v1030
        %v1106 = vpop.f32.mrb[0].mxu0
        %v1107 = vadd.f32 0.0, %v1106
        %v1108 = vpop.f32.mrb[0].mxu0
        %1109 = vdwg.mxu0
        %v1110 = vmul.f32 %v1102, 0.5
        %v1111 = vmul.f32 %v1107, 0.5
        %v1112 = vsel %vm747, %v1110, -65504.0
        %v1113 = vsel %vm748, %v1111, -65504.0
        %vm1114 = vcmask 130048
        %v1115 = vsel %vm1114, %v1112, -inf
        %1116 = vmax.xlane.f32.xlu0 %v1115
        %v1117 = vpop.xlane.xlu0 %1116
        %v1118 = vsel %vm1114, %v1113, -inf
        %1119 = vmax.xlane.f32.xlu0 %v1118
        %v1120 = vpop.xlane.xlu0 %1119
        %v1121 = vsub.f32 %v1112, %v1117
        %v1122 = vsub.f32 %v1113, %v1120
        %v1123 = vmul.f32 %v1121, 1.442695
        %v1124 = vpow.pop %v1123
        %v1125 = vmul.f32 %v1122, 1.442695
        %v1126 = vpow.pop %v1125
        %v1127 = vsel %vm1114, %v1124, 0.0
        %1128 = vadd.xlane.f32.xlu0 %v1127
        %v1129 = vpop.xlane.xlu0 %1128
        %v1130 = vsel %vm1114, %v1126, 0.0
        %1131 = vadd.xlane.f32.xlu0 %v1130
        %v1132 = vpop.xlane.xlu0 %1131
        %v1133 = vrcp.pop %v1129
        %v1134 = vrcp.pop %v1132
        %v1135 = vmul.f32 %v1124, %v1133
        %v1136 = vmul.f32 %v1126, %v1134
        %v1137 = vmax.f32 %v1115, %v1118
        %v1138 = vrot.slane %v1137, 4
        %v1139 = vmax.f32 %v1137, %v1138
        %v1140 = vrot.slane %v1139, 2
        %v1141 = vmax.f32 %v1139, %v1140
        %v1142 = vrot.slane %v1141, 1
        %v1143 = vmax.f32 %v1141, %v1142
        %v1144 = vsub.f32 %v1112, %v1143
        %v1145 = vsub.f32 %v1113, %v1143
        %v1146 = vmul.f32 %v1144, 1.442695
        %v1147 = vpow.pop %v1146
        %v1148 = vmul.f32 %v1145, 1.442695
        %v1149 = vpow.pop %v1148
        %v1150 = vsel %vm1114, %v1147, 0.0
        %v1151 = vsel %vm1114, %v1149, 0.0
        %v1152 = vadd.f32 %v1150, %v1151
        %v1153 = vrot.slane %v1152, 4
        %v1154 = vadd.f32 %v1152, %v1153
        %v1155 = vrot.slane %v1154, 2
        %v1156 = vadd.f32 %v1154, %v1155
        %v1157 = vrot.slane %v1156, 1
        %v1158 = vadd.f32 %v1156, %v1157
        %v1159 = vrcp.pop %v1158
        %v1160 = vmul.f32 %v1147, %v1159
        %v1161 = vmul.f32 %v1149, %v1159
        %1163 = vset.pattern.permute.xlu0 0
        %1164 = vperm.xlu0 %1163, %v737
        %v1165 = vpop.permute.xlu0 %1164
        %v1168 = vsel %vm796, %v735, 0
        %1170 = vmatprep.subr.mxu0 0.0
        %1171 = vmatpush1.msra.mxu0 %v909
        %1172 = vmatprep.subr.mxu0 0.0
        %1173 = vmatpush1.msra.mxu0 0.0
        %1174 = vmatprep.subr.mxu0 0.0
        %1175 = vmatpush1.msra.mxu0 0.0
        %1176 = vmatprep.subr.mxu0 0.0
        %1177 = vmatpush1.msra.mxu0 0.0
        %1178 = vmatprep.subr.mxu0 0.0
        %1179 = vmatpush1.msra.mxu0 0.0
        %1180 = vmatprep.subr.mxu0 0.0
        %1181 = vmatpush1.msra.mxu0 0.0
        %1182 = vmatprep.subr.mxu0 0.0
        %1183 = vmatpush1.msra.mxu0 0.0
        %1184 = vmatprep.subr.mxu0 0.0
        %1185 = vmatpush1.msra.mxu0 0.0
        %1186 = vmatprep.subr.mxu0 0.0
        %1187 = vmatpush1.msra.mxu0 0.0
        %1188 = vmatprep.subr.mxu0 0.0
        %1189 = vmatpush1.msra.mxu0 0.0
        %1190 = vmatprep.subr.mxu0 0.0
        %1191 = vmatpush1.msra.mxu0 0.0
        %1192 = vmatprep.subr.mxu0 0.0
        %1193 = vmatpush1.msra.mxu0 0.0
        %1194 = vmatprep.subr.mxu0 0.0
        %1195 = vmatpush1.msra.mxu0 0.0
        %1196 = vmatprep.subr.mxu0 0.0
        %1197 = vmatpush1.msra.mxu0 0.0
        %1198 = vmatprep.subr.mxu0 0.0
        %1199 = vmatpush1.msra.mxu0 0.0
        %1200 = vmatprep.subr.mxu0 0.0
        %1201 = vmatpush1.msra.mxu0 0.0
        %1202 = vmatprep.subr.mxu0 0.0
        %1203 = vmatpush1.msra.mxu0 0.0
        %1204 = vmatprep.subr.mxu0 0.0
        %1205 = vmatpush1.msra.mxu0 0.0
        %1206 = vmatprep.subr.mxu0 0.0
        %1207 = vmatpush1.msra.mxu0 0.0
        %1208 = vmatprep.subr.mxu0 0.0
        %1209 = vmatpush1.msra.mxu0 0.0
        %1210 = vmatprep.subr.mxu0 0.0
        %1211 = vmatpush1.msra.mxu0 0.0
        %1212 = vmatprep.subr.mxu0 0.0
        %1213 = vmatpush1.msra.mxu0 0.0
        %1214 = vmatprep.subr.mxu0 0.0
        %1215 = vmatpush1.msra.mxu0 0.0
        %1216 = vmatprep.subr.mxu0 0.0
        %1217 = vmatpush1.msra.mxu0 0.0
        %1218 = vmatprep.subr.mxu0 0.0
        %1219 = vmatpush1.msra.mxu0 0.0
        %1220 = vmatprep.subr.mxu0 0.0
        %1221 = vmatpush1.msra.mxu0 0.0
        %1222 = vmatprep.subr.mxu0 0.0
        %1223 = vmatpush1.msra.mxu0 0.0
        %1224 = vmatprep.subr.mxu0 0.0
        %1225 = vmatpush1.msra.mxu0 0.0
        %1226 = vmatprep.subr.mxu0 0.0
        %1227 = vmatpush1.msra.mxu0 0.0
        %1228 = vmatprep.subr.mxu0 0.0
        %1229 = vmatpush1.msra.mxu0 0.0
        %1230 = vmatprep.subr.mxu0 0.0
        %1231 = vmatpush1.msra.mxu0 0.0
        %1232 = vmatprep.subr.mxu0 0.0
        %1233 = vmatpush1.msra.mxu0 0.0
        %1234 = vmatprep.mubr.f32.mxu0 0.0
        %1235 = vmatmul.mubr.f32.gmra.mrb[0].mxu0 %v1168
        %v1236 = vpop.f32.mrb[0].mxu0
        %v1237 = vadd.f32 %v1165, %v1236
        %v1238 = vpop.f32.mrb[0].mxu0
        %1239 = vdwg.mxu0
        %1241 = vset.pattern.permute.xlu0 0
        %1242 = vperm.xlu0 %1241, %v739
        %v1243 = vpop.permute.xlu0 %1242
        %v1249 = vrot.slane %v773, 7
        %v1250 = vsel %vm788, %v1249, %v772
        %v1251 = vrot.slane %v774, 6
        %v1252 = vsel %vm791, %v1251, %v1250
        %v1253 = vrot.slane %v775, 5
        %v1254 = vsel %vm794, %v1253, %v1252
        %v1256 = vmul.f32 %v1243, %v1254
        %v1257 = vadd.f32 %v1237, %v1256
        %1259 = vset.pattern.permute.xlu0 0
        %1260 = vperm.xlu0 %1259, %v736
        %v1261 = vpop.permute.xlu0 %1260
        %v1264 = vsel %vm796, %v734, 0
        %1266 = vmatprep.subr.mxu0 0.0
        %1267 = vmatpush1.msra.mxu0 %v801
        %1268 = vmatprep.subr.mxu0 0.0
        %1269 = vmatpush1.msra.mxu0 0.0
        %1270 = vmatprep.subr.mxu0 0.0
        %1271 = vmatpush1.msra.mxu0 0.0
        %1272 = vmatprep.subr.mxu0 0.0
        %1273 = vmatpush1.msra.mxu0 0.0
        %1274 = vmatprep.subr.mxu0 0.0
        %1275 = vmatpush1.msra.mxu0 0.0
        %1276 = vmatprep.subr.mxu0 0.0
        %1277 = vmatpush1.msra.mxu0 0.0
        %1278 = vmatprep.subr.mxu0 0.0
        %1279 = vmatpush1.msra.mxu0 0.0
        %1280 = vmatprep.subr.mxu0 0.0
        %1281 = vmatpush1.msra.mxu0 0.0
        %1282 = vmatprep.subr.mxu0 0.0
        %1283 = vmatpush1.msra.mxu0 0.0
        %1284 = vmatprep.subr.mxu0 0.0
        %1285 = vmatpush1.msra.mxu0 0.0
        %1286 = vmatprep.subr.mxu0 0.0
        %1287 = vmatpush1.msra.mxu0 0.0
        %1288 = vmatprep.subr.mxu0 0.0
        %1289 = vmatpush1.msra.mxu0 0.0
        %1290 = vmatprep.subr.mxu0 0.0
        %1291 = vmatpush1.msra.mxu0 0.0
        %1292 = vmatprep.subr.mxu0 0.0
        %1293 = vmatpush1.msra.mxu0 0.0
        %1294 = vmatprep.subr.mxu0 0.0
        %1295 = vmatpush1.msra.mxu0 0.0
        %1296 = vmatprep.subr.mxu0 0.0
        %1297 = vmatpush1.msra.mxu0 0.0
        %1298 = vmatprep.subr.mxu0 0.0
        %1299 = vmatpush1.msra.mxu0 0.0
        %1300 = vmatprep.subr.mxu0 0.0
        %1301 = vmatpush1.msra.mxu0 0.0
        %1302 = vmatprep.subr.mxu0 0.0
        %1303 = vmatpush1.msra.mxu0 0.0
        %1304 = vmatprep.subr.mxu0 0.0
        %1305 = vmatpush1.msra.mxu0 0.0
        %1306 = vmatprep.subr.mxu0 0.0
        %1307 = vmatpush1.msra.mxu0 0.0
        %1308 = vmatprep.subr.mxu0 0.0
        %1309 = vmatpush1.msra.mxu0 0.0
        %1310 = vmatprep.subr.mxu0 0.0
        %1311 = vmatpush1.msra.mxu0 0.0
        %1312 = vmatprep.subr.mxu0 0.0
        %1313 = vmatpush1.msra.mxu0 0.0
        %1314 = vmatprep.subr.mxu0 0.0
        %1315 = vmatpush1.msra.mxu0 0.0
        %1316 = vmatprep.subr.mxu0 0.0
        %1317 = vmatpush1.msra.mxu0 0.0
        %1318 = vmatprep.subr.mxu0 0.0
        %1319 = vmatpush1.msra.mxu0 0.0
        %1320 = vmatprep.subr.mxu0 0.0
        %1321 = vmatpush1.msra.mxu0 0.0
        %1322 = vmatprep.subr.mxu0 0.0
        %1323 = vmatpush1.msra.mxu0 0.0
        %1324 = vmatprep.subr.mxu0 0.0
        %1325 = vmatpush1.msra.mxu0 0.0
        %1326 = vmatprep.subr.mxu0 0.0
        %1327 = vmatpush1.msra.mxu0 0.0
        %1328 = vmatprep.subr.mxu0 0.0
        %1329 = vmatpush1.msra.mxu0 0.0
        %1330 = vmatprep.mubr.f32.mxu0 0.0
        %1331 = vmatmul.mubr.f32.gmra.mrb[0].mxu0 %v1264
        %v1332 = vpop.f32.mrb[0].mxu0
        %v1333 = vadd.f32 %v1261, %v1332
        %v1334 = vpop.f32.mrb[0].mxu0
        %1335 = vdwg.mxu0
        %v1340 = vrot.slane %v768, 7
        %v1341 = vsel %vm788, %v1340, %v767
        %v1342 = vrot.slane %v769, 6
        %v1343 = vsel %vm791, %v1342, %v1341
        %v1344 = vrot.slane %v770, 5
        %v1345 = vsel %vm794, %v1344, %v1343
        %v1347 = vmul.f32 %v1243, %v1345
        %v1348 = vadd.f32 %v1333, %v1347
        %v1350 = vsel %vm1114, %v1257, 0
        %v1353 = vsel %vm1114, %v1135, 0
        %v1356 = vsel %vm1114, %v1136, 0
        %1358 = vmatprep.subr.mxu0 0.0
        %1359 = vmatpush1.xpose.msra.mxu0 %v1353
        %1360 = vmatprep.subr.mxu0 0.0
        %1361 = vmatpush1.xpose.msra.mxu0 %v1356
        %1362 = vmatprep.subr.mxu0 0.0
        %1363 = vmatpush1.xpose.msra.mxu0 0.0
        %1364 = vmatprep.subr.mxu0 0.0
        %1365 = vmatpush1.xpose.msra.mxu0 0.0
        %1366 = vmatprep.subr.mxu0 0.0
        %1367 = vmatpush1.xpose.msra.mxu0 0.0
        %1368 = vmatprep.subr.mxu0 0.0
        %1369 = vmatpush1.xpose.msra.mxu0 0.0
        %1370 = vmatprep.subr.mxu0 0.0
        %1371 = vmatpush1.xpose.msra.mxu0 0.0
        %1372 = vmatprep.subr.mxu0 0.0
        %1373 = vmatpush1.xpose.msra.mxu0 0.0
        %1374 = vmatprep.subr.mxu0 0.0
        %1375 = vmatpush1.xpose.msra.mxu0 0.0
        %1376 = vmatprep.subr.mxu0 0.0
        %1377 = vmatpush1.xpose.msra.mxu0 0.0
        %1378 = vmatprep.subr.mxu0 0.0
        %1379 = vmatpush1.xpose.msra.mxu0 0.0
        %1380 = vmatprep.subr.mxu0 0.0
        %1381 = vmatpush1.xpose.msra.mxu0 0.0
        %1382 = vmatprep.subr.mxu0 0.0
        %1383 = vmatpush1.xpose.msra.mxu0 0.0
        %1384 = vmatprep.subr.mxu0 0.0
        %1385 = vmatpush1.xpose.msra.mxu0 0.0
        %1386 = vmatprep.subr.mxu0 0.0
        %1387 = vmatpush1.xpose.msra.mxu0 0.0
        %1388 = vmatprep.subr.mxu0 0.0
        %1389 = vmatpush1.xpose.msra.mxu0 0.0
        %1390 = vmatprep.subr.mxu0 0.0
        %1391 = vmatpush1.xpose.msra.mxu0 0.0
        %1392 = vmatprep.subr.mxu0 0.0
        %1393 = vmatpush1.xpose.msra.mxu0 0.0
        %1394 = vmatprep.subr.mxu0 0.0
        %1395 = vmatpush1.xpose.msra.mxu0 0.0
        %1396 = vmatprep.subr.mxu0 0.0
        %1397 = vmatpush1.xpose.msra.mxu0 0.0
        %1398 = vmatprep.subr.mxu0 0.0
        %1399 = vmatpush1.xpose.msra.mxu0 0.0
        %1400 = vmatprep.subr.mxu0 0.0
        %1401 = vmatpush1.xpose.msra.mxu0 0.0
        %1402 = vmatprep.subr.mxu0 0.0
        %1403 = vmatpush1.xpose.msra.mxu0 0.0
        %1404 = vmatprep.subr.mxu0 0.0
        %1405 = vmatpush1.xpose.msra.mxu0 0.0
        %1406 = vmatprep.subr.mxu0 0.0
        %1407 = vmatpush1.xpose.msra.mxu0 0.0
        %1408 = vmatprep.subr.mxu0 0.0
        %1409 = vmatpush1.xpose.msra.mxu0 0.0
        %1410 = vmatprep.subr.mxu0 0.0
        %1411 = vmatpush1.xpose.msra.mxu0 0.0
        %1412 = vmatprep.subr.mxu0 0.0
        %1413 = vmatpush1.xpose.msra.mxu0 0.0
        %1414 = vmatprep.subr.mxu0 0.0
        %1415 = vmatpush1.xpose.msra.mxu0 0.0
        %1416 = vmatprep.subr.mxu0 0.0
        %1417 = vmatpush1.xpose.msra.mxu0 0.0
        %1418 = vmatprep.subr.mxu0 0.0
        %1419 = vmatpush1.xpose.msra.mxu0 0.0
        %1420 = vmatprep.subr.mxu0 0.0
        %1421 = vmatpush1.xpose.msra.mxu0 0.0
        %1422 = vmatprep.mubr.f32.mxu0 0.0
        %1423 = vmatmul.mubr.f32.gmra.mrb[0].mxu0 %v1350
        %v1424 = vpop.f32.mrb[0].mxu0
        %v1425 = vadd.f32 0.0, %v1424
        %v1426 = vpop.f32.mrb[0].mxu0
        %1427 = vdwg.mxu0
        %v1429 = vsel %vm1114, %v1348, 0
        %1431 = vmatprep.subr.mxu0 0.0
        %1432 = vmatpush1.msra.mxu0 %v1160
        %1433 = vmatprep.subr.mxu0 0.0
        %1434 = vmatpush1.msra.mxu0 %v1161
        %1435 = vmatprep.subr.mxu0 0.0
        %1436 = vmatpush1.msra.mxu0 0.0
        %1437 = vmatprep.subr.mxu0 0.0
        %1438 = vmatpush1.msra.mxu0 0.0
        %1439 = vmatprep.subr.mxu0 0.0
        %1440 = vmatpush1.msra.mxu0 0.0
        %1441 = vmatprep.subr.mxu0 0.0
        %1442 = vmatpush1.msra.mxu0 0.0
        %1443 = vmatprep.subr.mxu0 0.0
        %1444 = vmatpush1.msra.mxu0 0.0
        %1445 = vmatprep.subr.mxu0 0.0
        %1446 = vmatpush1.msra.mxu0 0.0
        %1447 = vmatprep.subr.mxu0 0.0
        %1448 = vmatpush1.msra.mxu0 0.0
        %1449 = vmatprep.subr.mxu0 0.0
        %1450 = vmatpush1.msra.mxu0 0.0
        %1451 = vmatprep.subr.mxu0 0.0
        %1452 = vmatpush1.msra.mxu0 0.0
        %1453 = vmatprep.subr.mxu0 0.0
        %1454 = vmatpush1.msra.mxu0 0.0
        %1455 = vmatprep.subr.mxu0 0.0
        %1456 = vmatpush1.msra.mxu0 0.0
        %1457 = vmatprep.subr.mxu0 0.0
        %1458 = vmatpush1.msra.mxu0 0.0
        %1459 = vmatprep.subr.mxu0 0.0
        %1460 = vmatpush1.msra.mxu0 0.0
        %1461 = vmatprep.subr.mxu0 0.0
        %1462 = vmatpush1.msra.mxu0 0.0
        %1463 = vmatprep.subr.mxu0 0.0
        %1464 = vmatpush1.msra.mxu0 0.0
        %1465 = vmatprep.subr.mxu0 0.0
        %1466 = vmatpush1.msra.mxu0 0.0
        %1467 = vmatprep.subr.mxu0 0.0
        %1468 = vmatpush1.msra.mxu0 0.0
        %1469 = vmatprep.subr.mxu0 0.0
        %1470 = vmatpush1.msra.mxu0 0.0
        %1471 = vmatprep.subr.mxu0 0.0
        %1472 = vmatpush1.msra.mxu0 0.0
        %1473 = vmatprep.subr.mxu0 0.0
        %1474 = vmatpush1.msra.mxu0 0.0
        %1475 = vmatprep.subr.mxu0 0.0
        %1476 = vmatpush1.msra.mxu0 0.0
        %1477 = vmatprep.subr.mxu0 0.0
        %1478 = vmatpush1.msra.mxu0 0.0
        %1479 = vmatprep.subr.mxu0 0.0
        %1480 = vmatpush1.msra.mxu0 0.0
        %1481 = vmatprep.subr.mxu0 0.0
        %1482 = vmatpush1.msra.mxu0 0.0
        %1483 = vmatprep.subr.mxu0 0.0
        %1484 = vmatpush1.msra.mxu0 0.0
        %1485 = vmatprep.subr.mxu0 0.0
        %1486 = vmatpush1.msra.mxu0 0.0
        %1487 = vmatprep.subr.mxu0 0.0
        %1488 = vmatpush1.msra.mxu0 0.0
        %1489 = vmatprep.subr.mxu0 0.0
        %1490 = vmatpush1.msra.mxu0 0.0
        %1491 = vmatprep.subr.mxu0 0.0
        %1492 = vmatpush1.msra.mxu0 0.0
        %1493 = vmatprep.subr.mxu0 0.0
        %1494 = vmatpush1.msra.mxu0 0.0
        %1495 = vmatprep.mubr.f32.mxu0 0.0
        %1496 = vmatmul.mubr.f32.gmra.mrb[0].mxu0 %v1429
        %v1497 = vpop.f32.mrb[0].mxu0
        %v1498 = vadd.f32 0.0, %v1497
        %v1499 = vpop.f32.mrb[0].mxu0
        %1500 = vdwg.mxu0
        %1502 = vset.pattern.permute.xlu0 0
        %1503 = vperm.xlu0 %1502, %v740
        %v1504 = vpop.permute.xlu0 %1503
        %v1506 = vmul.f32 %v1504, %v1425
        %v1508 = vrot.slane %v1506, 1
        %v1509 = vrot.slane %v1506, 2
        %v1510 = vrot.slane %v1506, 3
        %v1515 = vadd.f32 %v749, %v1506
        %v1516 = vadd.f32 %v750, %v1508
        %v1517 = vadd.f32 %v751, %v1509
        %v1518 = vadd.f32 %v752, %v1510
        %vm1519 = vcmask 122880
        %1520 = vst.msk [vmem:[%s719] sm:$0x1] %vm1519, %v1515
        %1521 = vst.msk [vmem:[%s719 + $0x8] sm:$0x1] %vm1519, %v1516
        %1522 = vst.msk [vmem:[%s719 + $0x10] sm:$0x1] %vm1519, %v1517
        %1523 = vst.msk [vmem:[%s719 + $0x18] sm:$0x1] %vm1519, %v1518
        %1525 = vset.pattern.permute.xlu0 0
        %1526 = vperm.xlu0 %1525, %v741
        %v1527 = vpop.permute.xlu0 %1526
        %v1529 = vmul.f32 %v1527, %v1498
        %v1531 = vrot.slane %v1529, 1
        %v1532 = vrot.slane %v1529, 2
        %v1533 = vrot.slane %v1529, 3
        %v1538 = vadd.f32 %v754, %v1529
        %v1539 = vadd.f32 %v755, %v1531
        %v1540 = vadd.f32 %v756, %v1532
        %v1541 = vadd.f32 %v757, %v1533
        %s1542 = scalar_lea.vmem %s719, 32 [#allocation8]
        %1543 = vst.msk [vmem:[%s1542] sm:$0x1] %vm1519, %v1538
        %1544 = vst.msk [vmem:[%s1542 + $0x8] sm:$0x1] %vm1519, %v1539
        %1545 = vst.msk [vmem:[%s1542 + $0x10] sm:$0x1] %vm1519, %v1540
        %1546 = vst.msk [vmem:[%s1542 + $0x18] sm:$0x1] %vm1519, %v1541
        %v1547 = vld [vmem:[%s635 + $0x1] sm:$0x1]
        %v1548 = vld [vmem:[%s635 + $0x9] sm:$0x1]
        %v1549 = vld [vmem:[%s635 + $0x11] sm:$0x1]
        %v1550 = vld [vmem:[%s635 + $0x19] sm:$0x1]
        %v1551 = vld [vmem:[%s753 + $0x1] sm:$0x1]
        %v1552 = vld [vmem:[%s753 + $0x9] sm:$0x1]
        %v1553 = vld [vmem:[%s753 + $0x11] sm:$0x1]
        %v1554 = vld [vmem:[%s753 + $0x19] sm:$0x1]
        %v1555 = vld [vmem:[%s644 + $0x1] sm:$0x1]
        %v1556 = vld [vmem:[%s644 + $0x9] sm:$0x1]
        %v1557 = vld [vmem:[%s644 + $0x11] sm:$0x1]
        %v1558 = vld [vmem:[%s644 + $0x19] sm:$0x1]
        %v1559 = vld [vmem:[%s762 + $0x1] sm:$0x1]
        %v1560 = vld [vmem:[%s762 + $0x9] sm:$0x1]
        %v1561 = vld [vmem:[%s762 + $0x11] sm:$0x1]
        %v1562 = vld [vmem:[%s762 + $0x19] sm:$0x1]
        %v1563 = vld [vmem:[%s653 + $0x1] sm:$0x1]
        %v1564 = vld [vmem:[%s653 + $0x9] sm:$0x1]
        %v1565 = vld [vmem:[%s653 + $0x11] sm:$0x1]
        %v1566 = vld [vmem:[%s653 + $0x19] sm:$0x1]
        %v1567 = vld [vmem:[%s771 + $0x1] sm:$0x1]
        %v1568 = vld [vmem:[%s771 + $0x9] sm:$0x1]
        %v1569 = vld [vmem:[%s771 + $0x11] sm:$0x1]
        %v1570 = vld [vmem:[%s771 + $0x19] sm:$0x1]
        %s1571 = scalar_lea.vmem %s724, 4
        %v1572 = vld [vmem:[%s1571] sm:$0xf]
        %s1573 = scalar_lea.vmem %s730, 4
        %v1574 = vld [vmem:[%s1573] sm:$0xf]
        %1576 = vset.pattern.permute.xlu0 0
        %1577 = vperm.xlu0 %1576, %v1572
        %v1578 = vpop.permute.xlu0 %1577
        %v1584 = vrot.slane %v1548, 7
        %v1585 = vsel %vm788, %v1584, %v1547
        %v1586 = vrot.slane %v1549, 6
        %v1587 = vsel %vm791, %v1586, %v1585
        %v1588 = vrot.slane %v1550, 5
        %v1589 = vsel %vm794, %v1588, %v1587
        %v1590 = vsel %vm800, %v1589, 0
        %1592 = vmatprep.subr.mxu0 0.0
        %1593 = vmatpush1.msra.mxu0 %v1590
        %1594 = vmatprep.subr.mxu0 0.0
        %1595 = vmatpush1.msra.mxu0 0.0
        %1596 = vmatprep.subr.mxu0 0.0
        %1597 = vmatpush1.msra.mxu0 0.0
        %1598 = vmatprep.subr.mxu0 0.0
        %1599 = vmatpush1.msra.mxu0 0.0
        %1600 = vmatprep.subr.mxu0 0.0
        %1601 = vmatpush1.msra.mxu0 0.0
        %1602 = vmatprep.subr.mxu0 0.0
        %1603 = vmatpush1.msra.mxu0 0.0
        %1604 = vmatprep.subr.mxu0 0.0
        %1605 = vmatpush1.msra.mxu0 0.0
        %1606 = vmatprep.subr.mxu0 0.0
        %1607 = vmatpush1.msra.mxu0 0.0
        %1608 = vmatprep.subr.mxu0 0.0
        %1609 = vmatpush1.msra.mxu0 0.0
        %1610 = vmatprep.subr.mxu0 0.0
        %1611 = vmatpush1.msra.mxu0 0.0
        %1612 = vmatprep.subr.mxu0 0.0
        %1613 = vmatpush1.msra.mxu0 0.0
        %1614 = vmatprep.subr.mxu0 0.0
        %1615 = vmatpush1.msra.mxu0 0.0
        %1616 = vmatprep.subr.mxu0 0.0
        %1617 = vmatpush1.msra.mxu0 0.0
        %1618 = vmatprep.subr.mxu0 0.0
        %1619 = vmatpush1.msra.mxu0 0.0
        %1620 = vmatprep.subr.mxu0 0.0
        %1621 = vmatpush1.msra.mxu0 0.0
        %1622 = vmatprep.subr.mxu0 0.0
        %1623 = vmatpush1.msra.mxu0 0.0
        %1624 = vmatprep.subr.mxu0 0.0
        %1625 = vmatpush1.msra.mxu0 0.0
        %1626 = vmatprep.subr.mxu0 0.0
        %1627 = vmatpush1.msra.mxu0 0.0
        %1628 = vmatprep.subr.mxu0 0.0
        %1629 = vmatpush1.msra.mxu0 0.0
        %1630 = vmatprep.subr.mxu0 0.0
        %1631 = vmatpush1.msra.mxu0 0.0
        %1632 = vmatprep.subr.mxu0 0.0
        %1633 = vmatpush1.msra.mxu0 0.0
        %1634 = vmatprep.subr.mxu0 0.0
        %1635 = vmatpush1.msra.mxu0 0.0
        %1636 = vmatprep.subr.mxu0 0.0
        %1637 = vmatpush1.msra.mxu0 0.0
        %1638 = vmatprep.subr.mxu0 0.0
        %1639 = vmatpush1.msra.mxu0 0.0
        %1640 = vmatprep.subr.mxu0 0.0
        %1641 = vmatpush1.msra.mxu0 0.0
        %1642 = vmatprep.subr.mxu0 0.0
        %1643 = vmatpush1.msra.mxu0 0.0
        %1644 = vmatprep.subr.mxu0 0.0
        %1645 = vmatpush1.msra.mxu0 0.0
        %1646 = vmatprep.subr.mxu0 0.0
        %1647 = vmatpush1.msra.mxu0 0.0
        %1648 = vmatprep.subr.mxu0 0.0
        %1649 = vmatpush1.msra.mxu0 0.0
        %1650 = vmatprep.subr.mxu0 0.0
        %1651 = vmatpush1.msra.mxu0 0.0
        %1652 = vmatprep.subr.mxu0 0.0
        %1653 = vmatpush1.msra.mxu0 0.0
        %1654 = vmatprep.subr.mxu0 0.0
        %1655 = vmatpush1.msra.mxu0 0.0
        %1656 = vmatprep.mubr.f32.mxu0 0.0
        %1657 = vmatmul.mubr.f32.gmra.mrb[0].mxu0 %v798
        %v1658 = vpop.f32.mrb[0].mxu0
        %v1659 = vadd.f32 %v1578, %v1658
        %v1660 = vpop.f32.mrb[0].mxu0
        %1661 = vdwg.mxu0
        %v1666 = vrot.slane %v1556, 7
        %v1667 = vsel %vm788, %v1666, %v1555
        %v1668 = vrot.slane %v1557, 6
        %v1669 = vsel %vm791, %v1668, %v1667
        %v1670 = vrot.slane %v1558, 5
        %v1671 = vsel %vm794, %v1670, %v1669
        %v1673 = vmul.f32 %v876, %v1671
        %v1674 = vadd.f32 %v1659, %v1673
        %1676 = vset.pattern.permute.xlu0 0
        %1677 = vperm.xlu0 %1676, %v1574
        %v1678 = vpop.permute.xlu0 %1677
        %v1684 = vrot.slane %v1552, 7
        %v1685 = vsel %vm788, %v1684, %v1551
        %v1686 = vrot.slane %v1553, 6
        %v1687 = vsel %vm791, %v1686, %v1685
        %v1688 = vrot.slane %v1554, 5
        %v1689 = vsel %vm794, %v1688, %v1687
        %v1690 = vsel %vm800, %v1689, 0
        %1692 = vmatprep.subr.mxu0 0.0
        %1693 = vmatpush1.msra.mxu0 %v1690
        %1694 = vmatprep.subr.mxu0 0.0
        %1695 = vmatpush1.msra.mxu0 0.0
        %1696 = vmatprep.subr.mxu0 0.0
        %1697 = vmatpush1.msra.mxu0 0.0
        %1698 = vmatprep.subr.mxu0 0.0
        %1699 = vmatpush1.msra.mxu0 0.0
        %1700 = vmatprep.subr.mxu0 0.0
        %1701 = vmatpush1.msra.mxu0 0.0
        %1702 = vmatprep.subr.mxu0 0.0
        %1703 = vmatpush1.msra.mxu0 0.0
        %1704 = vmatprep.subr.mxu0 0.0
        %1705 = vmatpush1.msra.mxu0 0.0
        %1706 = vmatprep.subr.mxu0 0.0
        %1707 = vmatpush1.msra.mxu0 0.0
        %1708 = vmatprep.subr.mxu0 0.0
        %1709 = vmatpush1.msra.mxu0 0.0
        %1710 = vmatprep.subr.mxu0 0.0
        %1711 = vmatpush1.msra.mxu0 0.0
        %1712 = vmatprep.subr.mxu0 0.0
        %1713 = vmatpush1.msra.mxu0 0.0
        %1714 = vmatprep.subr.mxu0 0.0
        %1715 = vmatpush1.msra.mxu0 0.0
        %1716 = vmatprep.subr.mxu0 0.0
        %1717 = vmatpush1.msra.mxu0 0.0
        %1718 = vmatprep.subr.mxu0 0.0
        %1719 = vmatpush1.msra.mxu0 0.0
        %1720 = vmatprep.subr.mxu0 0.0
        %1721 = vmatpush1.msra.mxu0 0.0
        %1722 = vmatprep.subr.mxu0 0.0
        %1723 = vmatpush1.msra.mxu0 0.0
        %1724 = vmatprep.subr.mxu0 0.0
        %1725 = vmatpush1.msra.mxu0 0.0
        %1726 = vmatprep.subr.mxu0 0.0
        %1727 = vmatpush1.msra.mxu0 0.0
        %1728 = vmatprep.subr.mxu0 0.0
        %1729 = vmatpush1.msra.mxu0 0.0
        %1730 = vmatprep.subr.mxu0 0.0
        %1731 = vmatpush1.msra.mxu0 0.0
        %1732 = vmatprep.subr.mxu0 0.0
        %1733 = vmatpush1.msra.mxu0 0.0
        %1734 = vmatprep.subr.mxu0 0.0
        %1735 = vmatpush1.msra.mxu0 0.0
        %1736 = vmatprep.subr.mxu0 0.0
        %1737 = vmatpush1.msra.mxu0 0.0
        %1738 = vmatprep.subr.mxu0 0.0
        %1739 = vmatpush1.msra.mxu0 0.0
        %1740 = vmatprep.subr.mxu0 0.0
        %1741 = vmatpush1.msra.mxu0 0.0
        %1742 = vmatprep.subr.mxu0 0.0
        %1743 = vmatpush1.msra.mxu0 0.0
        %1744 = vmatprep.subr.mxu0 0.0
        %1745 = vmatpush1.msra.mxu0 0.0
        %1746 = vmatprep.subr.mxu0 0.0
        %1747 = vmatpush1.msra.mxu0 0.0
        %1748 = vmatprep.subr.mxu0 0.0
        %1749 = vmatpush1.msra.mxu0 0.0
        %1750 = vmatprep.subr.mxu0 0.0
        %1751 = vmatpush1.msra.mxu0 0.0
        %1752 = vmatprep.subr.mxu0 0.0
        %1753 = vmatpush1.msra.mxu0 0.0
        %1754 = vmatprep.subr.mxu0 0.0
        %1755 = vmatpush1.msra.mxu0 0.0
        %1756 = vmatprep.mubr.f32.mxu0 0.0
        %1757 = vmatmul.mubr.f32.gmra.mrb[0].mxu0 %v907
        %v1758 = vpop.f32.mrb[0].mxu0
        %v1759 = vadd.f32 %v1678, %v1758
        %v1760 = vpop.f32.mrb[0].mxu0
        %1761 = vdwg.mxu0
        %v1766 = vrot.slane %v1560, 7
        %v1767 = vsel %vm788, %v1766, %v1559
        %v1768 = vrot.slane %v1561, 6
        %v1769 = vsel %vm791, %v1768, %v1767
        %v1770 = vrot.slane %v1562, 5
        %v1771 = vsel %vm794, %v1770, %v1769
        %v1773 = vmul.f32 %v876, %v1771
        %v1774 = vadd.f32 %v1759, %v1773
        %1775 = vxpose.xlu0.b32.start [1/16] %v1674, 128
        %1776 = vxpose.xlu0.b32.cont [2/16] 0.0, 128
        %1777 = vxpose.xlu0.b32.cont [3/16] 0.0, 128
        %1778 = vxpose.xlu0.b32.cont [4/16] 0.0, 128
        %1779 = vxpose.xlu0.b32.cont [5/16] 0.0, 128
        %1780 = vxpose.xlu0.b32.cont [6/16] 0.0, 128
        %1781 = vxpose.xlu0.b32.cont [7/16] 0.0, 128
        %1782 = vxpose.xlu0.b32.cont [8/16] 0.0, 128
        %1783 = vxpose.xlu0.b32.cont [9/16] 0.0, 128
        %1784 = vxpose.xlu0.b32.cont [10/16] 0.0, 128
        %1785 = vxpose.xlu0.b32.cont [11/16] 0.0, 128
        %1786 = vxpose.xlu0.b32.cont [12/16] 0.0, 128
        %1787 = vxpose.xlu0.b32.cont [13/16] 0.0, 128
        %1788 = vxpose.xlu0.b32.cont [14/16] 0.0, 128
        %1789 = vxpose.xlu0.b32.cont [15/16] 0.0, 128
        %1790 = vxpose.xlu0.b32.end [16/16] 0.0, 128
        %v1791 = vpop.trf.xlu0
        %v1792 = vpop.trf.xlu0
        %v1793 = vpop.trf.xlu0
        %v1794 = vpop.trf.xlu0
        %v1795 = vpop.trf.xlu0
        %v1796 = vpop.trf.xlu0
        %v1797 = vpop.trf.xlu0
        %v1798 = vpop.trf.xlu0
        %v1799 = vpop.trf.xlu0
        %v1800 = vpop.trf.xlu0
        %v1801 = vpop.trf.xlu0
        %v1802 = vpop.trf.xlu0
        %v1803 = vpop.trf.xlu0
        %v1804 = vpop.trf.xlu0
        %v1805 = vpop.trf.xlu0
        %v1806 = vpop.trf.xlu0
        %v1808 = vsel %vm796, %v1791, 0
        %v1811 = vsel %vm796, %v1792, 0
        %v1814 = vsel %vm800, %v1774, 0
        %1816 = vmatprep.subr.mxu0 0.0
        %1817 = vmatpush1.msra.mxu0 %v1814
        %1818 = vmatprep.subr.mxu0 0.0
        %1819 = vmatpush1.msra.mxu0 0.0
        %1820 = vmatprep.subr.mxu0 0.0
        %1821 = vmatpush1.msra.mxu0 0.0
        %1822 = vmatprep.subr.mxu0 0.0
        %1823 = vmatpush1.msra.mxu0 0.0
        %1824 = vmatprep.subr.mxu0 0.0
        %1825 = vmatpush1.msra.mxu0 0.0
        %1826 = vmatprep.subr.mxu0 0.0
        %1827 = vmatpush1.msra.mxu0 0.0
        %1828 = vmatprep.subr.mxu0 0.0
        %1829 = vmatpush1.msra.mxu0 0.0
        %1830 = vmatprep.subr.mxu0 0.0
        %1831 = vmatpush1.msra.mxu0 0.0
        %1832 = vmatprep.subr.mxu0 0.0
        %1833 = vmatpush1.msra.mxu0 0.0
        %1834 = vmatprep.subr.mxu0 0.0
        %1835 = vmatpush1.msra.mxu0 0.0
        %1836 = vmatprep.subr.mxu0 0.0
        %1837 = vmatpush1.msra.mxu0 0.0
        %1838 = vmatprep.subr.mxu0 0.0
        %1839 = vmatpush1.msra.mxu0 0.0
        %1840 = vmatprep.subr.mxu0 0.0
        %1841 = vmatpush1.msra.mxu0 0.0
        %1842 = vmatprep.subr.mxu0 0.0
        %1843 = vmatpush1.msra.mxu0 0.0
        %1844 = vmatprep.subr.mxu0 0.0
        %1845 = vmatpush1.msra.mxu0 0.0
        %1846 = vmatprep.subr.mxu0 0.0
        %1847 = vmatpush1.msra.mxu0 0.0
        %1848 = vmatprep.subr.mxu0 0.0
        %1849 = vmatpush1.msra.mxu0 0.0
        %1850 = vmatprep.subr.mxu0 0.0
        %1851 = vmatpush1.msra.mxu0 0.0
        %1852 = vmatprep.subr.mxu0 0.0
        %1853 = vmatpush1.msra.mxu0 0.0
        %1854 = vmatprep.subr.mxu0 0.0
        %1855 = vmatpush1.msra.mxu0 0.0
        %1856 = vmatprep.subr.mxu0 0.0
        %1857 = vmatpush1.msra.mxu0 0.0
        %1858 = vmatprep.subr.mxu0 0.0
        %1859 = vmatpush1.msra.mxu0 0.0
        %1860 = vmatprep.subr.mxu0 0.0
        %1861 = vmatpush1.msra.mxu0 0.0
        %1862 = vmatprep.subr.mxu0 0.0
        %1863 = vmatpush1.msra.mxu0 0.0
        %1864 = vmatprep.subr.mxu0 0.0
        %1865 = vmatpush1.msra.mxu0 0.0
        %1866 = vmatprep.subr.mxu0 0.0
        %1867 = vmatpush1.msra.mxu0 0.0
        %1868 = vmatprep.subr.mxu0 0.0
        %1869 = vmatpush1.msra.mxu0 0.0
        %1870 = vmatprep.subr.mxu0 0.0
        %1871 = vmatpush1.msra.mxu0 0.0
        %1872 = vmatprep.subr.mxu0 0.0
        %1873 = vmatpush1.msra.mxu0 0.0
        %1874 = vmatprep.subr.mxu0 0.0
        %1875 = vmatpush1.msra.mxu0 0.0
        %1876 = vmatprep.subr.mxu0 0.0
        %1877 = vmatpush1.msra.mxu0 0.0
        %1878 = vmatprep.subr.mxu0 0.0
        %1879 = vmatpush1.msra.mxu0 0.0
        %1880 = vmatprep.mubr.f32.mxu0 0.0
        %1881 = vmatmul.mubr.f32.gmra.mrb[0].mxu0 %v1808
        %v1882 = vpop.f32.mrb[0].mxu0
        %v1883 = vadd.f32 0.0, %v1882
        %v1884 = vpop.f32.mrb[0].mxu0
        %1885 = vmatprep.mubr.f32.mxu0 0.0
        %1886 = vmatmul.mubr.f32.gmra.mrb[0].mxu0 %v1811
        %v1887 = vpop.f32.mrb[0].mxu0
        %v1888 = vadd.f32 0.0, %v1887
        %v1889 = vpop.f32.mrb[0].mxu0
        %1890 = vdwg.mxu0
        %v1891 = vmul.f32 %v1883, 0.5
        %v1892 = vmul.f32 %v1888, 0.5
        %v1893 = vsel %vm747, %v1891, -65504.0
        %v1894 = vsel %vm748, %v1892, -65504.0
        %v1895 = vsel %vm1114, %v1893, -inf
        %1896 = vmax.xlane.f32.xlu0 %v1895
        %v1897 = vpop.xlane.xlu0 %1896
        %v1898 = vsel %vm1114, %v1894, -inf
        %1899 = vmax.xlane.f32.xlu0 %v1898
        %v1900 = vpop.xlane.xlu0 %1899
        %v1901 = vsub.f32 %v1893, %v1897
        %v1902 = vsub.f32 %v1894, %v1900
        %v1903 = vmul.f32 %v1901, 1.442695
        %v1904 = vpow.pop %v1903
        %v1905 = vmul.f32 %v1902, 1.442695
        %v1906 = vpow.pop %v1905
        %v1907 = vsel %vm1114, %v1904, 0.0
        %1908 = vadd.xlane.f32.xlu0 %v1907
        %v1909 = vpop.xlane.xlu0 %1908
        %v1910 = vsel %vm1114, %v1906, 0.0
        %1911 = vadd.xlane.f32.xlu0 %v1910
        %v1912 = vpop.xlane.xlu0 %1911
        %v1913 = vrcp.pop %v1909
        %v1914 = vrcp.pop %v1912
        %v1915 = vmul.f32 %v1904, %v1913
        %v1916 = vmul.f32 %v1906, %v1914
        %v1917 = vmax.f32 %v1895, %v1898
        %v1918 = vrot.slane %v1917, 4
        %v1919 = vmax.f32 %v1917, %v1918
        %v1920 = vrot.slane %v1919, 2
        %v1921 = vmax.f32 %v1919, %v1920
        %v1922 = vrot.slane %v1921, 1
        %v1923 = vmax.f32 %v1921, %v1922
        %v1924 = vsub.f32 %v1893, %v1923
        %v1925 = vsub.f32 %v1894, %v1923
        %v1926 = vmul.f32 %v1924, 1.442695
        %v1927 = vpow.pop %v1926
        %v1928 = vmul.f32 %v1925, 1.442695
        %v1929 = vpow.pop %v1928
        %v1930 = vsel %vm1114, %v1927, 0.0
        %v1931 = vsel %vm1114, %v1929, 0.0
        %v1932 = vadd.f32 %v1930, %v1931
        %v1933 = vrot.slane %v1932, 4
        %v1934 = vadd.f32 %v1932, %v1933
        %v1935 = vrot.slane %v1934, 2
        %v1936 = vadd.f32 %v1934, %v1935
        %v1937 = vrot.slane %v1936, 1
        %v1938 = vadd.f32 %v1936, %v1937
        %v1939 = vrcp.pop %v1938
        %v1940 = vmul.f32 %v1927, %v1939
        %v1941 = vmul.f32 %v1929, %v1939
        %1942 = vmatprep.subr.mxu0 0.0
        %1943 = vmatpush1.msra.mxu0 %v1690
        %1944 = vmatprep.subr.mxu0 0.0
        %1945 = vmatpush1.msra.mxu0 0.0
        %1946 = vmatprep.subr.mxu0 0.0
        %1947 = vmatpush1.msra.mxu0 0.0
        %1948 = vmatprep.subr.mxu0 0.0
        %1949 = vmatpush1.msra.mxu0 0.0
        %1950 = vmatprep.subr.mxu0 0.0
        %1951 = vmatpush1.msra.mxu0 0.0
        %1952 = vmatprep.subr.mxu0 0.0
        %1953 = vmatpush1.msra.mxu0 0.0
        %1954 = vmatprep.subr.mxu0 0.0
        %1955 = vmatpush1.msra.mxu0 0.0
        %1956 = vmatprep.subr.mxu0 0.0
        %1957 = vmatpush1.msra.mxu0 0.0
        %1958 = vmatprep.subr.mxu0 0.0
        %1959 = vmatpush1.msra.mxu0 0.0
        %1960 = vmatprep.subr.mxu0 0.0
        %1961 = vmatpush1.msra.mxu0 0.0
        %1962 = vmatprep.subr.mxu0 0.0
        %1963 = vmatpush1.msra.mxu0 0.0
        %1964 = vmatprep.subr.mxu0 0.0
        %1965 = vmatpush1.msra.mxu0 0.0
        %1966 = vmatprep.subr.mxu0 0.0
        %1967 = vmatpush1.msra.mxu0 0.0
        %1968 = vmatprep.subr.mxu0 0.0
        %1969 = vmatpush1.msra.mxu0 0.0
        %1970 = vmatprep.subr.mxu0 0.0
        %1971 = vmatpush1.msra.mxu0 0.0
        %1972 = vmatprep.subr.mxu0 0.0
        %1973 = vmatpush1.msra.mxu0 0.0
        %1974 = vmatprep.subr.mxu0 0.0
        %1975 = vmatpush1.msra.mxu0 0.0
        %1976 = vmatprep.subr.mxu0 0.0
        %1977 = vmatpush1.msra.mxu0 0.0
        %1978 = vmatprep.subr.mxu0 0.0
        %1979 = vmatpush1.msra.mxu0 0.0
        %1980 = vmatprep.subr.mxu0 0.0
        %1981 = vmatpush1.msra.mxu0 0.0
        %1982 = vmatprep.subr.mxu0 0.0
        %1983 = vmatpush1.msra.mxu0 0.0
        %1984 = vmatprep.subr.mxu0 0.0
        %1985 = vmatpush1.msra.mxu0 0.0
        %1986 = vmatprep.subr.mxu0 0.0
        %1987 = vmatpush1.msra.mxu0 0.0
        %1988 = vmatprep.subr.mxu0 0.0
        %1989 = vmatpush1.msra.mxu0 0.0
        %1990 = vmatprep.subr.mxu0 0.0
        %1991 = vmatpush1.msra.mxu0 0.0
        %1992 = vmatprep.subr.mxu0 0.0
        %1993 = vmatpush1.msra.mxu0 0.0
        %1994 = vmatprep.subr.mxu0 0.0
        %1995 = vmatpush1.msra.mxu0 0.0
        %1996 = vmatprep.subr.mxu0 0.0
        %1997 = vmatpush1.msra.mxu0 0.0
        %1998 = vmatprep.subr.mxu0 0.0
        %1999 = vmatpush1.msra.mxu0 0.0
        %2000 = vmatprep.subr.mxu0 0.0
        %2001 = vmatpush1.msra.mxu0 0.0
        %2002 = vmatprep.subr.mxu0 0.0
        %2003 = vmatpush1.msra.mxu0 0.0
        %2004 = vmatprep.subr.mxu0 0.0
        %2005 = vmatpush1.msra.mxu0 0.0
        %2006 = vmatprep.mubr.f32.mxu0 0.0
        %2007 = vmatmul.mubr.f32.gmra.mrb[0].mxu0 %v1168
        %v2008 = vpop.f32.mrb[0].mxu0
        %v2009 = vadd.f32 %v1165, %v2008
        %v2010 = vpop.f32.mrb[0].mxu0
        %2011 = vdwg.mxu0
        %v2016 = vrot.slane %v1568, 7
        %v2017 = vsel %vm788, %v2016, %v1567
        %v2018 = vrot.slane %v1569, 6
        %v2019 = vsel %vm791, %v2018, %v2017
        %v2020 = vrot.slane %v1570, 5
        %v2021 = vsel %vm794, %v2020, %v2019
        %v2023 = vmul.f32 %v1243, %v2021
        %v2024 = vadd.f32 %v2009, %v2023
        %2025 = vmatprep.subr.mxu0 0.0
        %2026 = vmatpush1.msra.mxu0 %v1590
        %2027 = vmatprep.subr.mxu0 0.0
        %2028 = vmatpush1.msra.mxu0 0.0
        %2029 = vmatprep.subr.mxu0 0.0
        %2030 = vmatpush1.msra.mxu0 0.0
        %2031 = vmatprep.subr.mxu0 0.0
        %2032 = vmatpush1.msra.mxu0 0.0
        %2033 = vmatprep.subr.mxu0 0.0
        %2034 = vmatpush1.msra.mxu0 0.0
        %2035 = vmatprep.subr.mxu0 0.0
        %2036 = vmatpush1.msra.mxu0 0.0
        %2037 = vmatprep.subr.mxu0 0.0
        %2038 = vmatpush1.msra.mxu0 0.0
        %2039 = vmatprep.subr.mxu0 0.0
        %2040 = vmatpush1.msra.mxu0 0.0
        %2041 = vmatprep.subr.mxu0 0.0
        %2042 = vmatpush1.msra.mxu0 0.0
        %2043 = vmatprep.subr.mxu0 0.0
        %2044 = vmatpush1.msra.mxu0 0.0
        %2045 = vmatprep.subr.mxu0 0.0
        %2046 = vmatpush1.msra.mxu0 0.0
        %2047 = vmatprep.subr.mxu0 0.0
        %2048 = vmatpush1.msra.mxu0 0.0
        %2049 = vmatprep.subr.mxu0 0.0
        %2050 = vmatpush1.msra.mxu0 0.0
        %2051 = vmatprep.subr.mxu0 0.0
        %2052 = vmatpush1.msra.mxu0 0.0
        %2053 = vmatprep.subr.mxu0 0.0
        %2054 = vmatpush1.msra.mxu0 0.0
        %2055 = vmatprep.subr.mxu0 0.0
        %2056 = vmatpush1.msra.mxu0 0.0
        %2057 = vmatprep.subr.mxu0 0.0
        %2058 = vmatpush1.msra.mxu0 0.0
        %2059 = vmatprep.subr.mxu0 0.0
        %2060 = vmatpush1.msra.mxu0 0.0
        %2061 = vmatprep.subr.mxu0 0.0
        %2062 = vmatpush1.msra.mxu0 0.0
        %2063 = vmatprep.subr.mxu0 0.0
        %2064 = vmatpush1.msra.mxu0 0.0
        %2065 = vmatprep.subr.mxu0 0.0
        %2066 = vmatpush1.msra.mxu0 0.0
        %2067 = vmatprep.subr.mxu0 0.0
        %2068 = vmatpush1.msra.mxu0 0.0
        %2069 = vmatprep.subr.mxu0 0.0
        %2070 = vmatpush1.msra.mxu0 0.0
        %2071 = vmatprep.subr.mxu0 0.0
        %2072 = vmatpush1.msra.mxu0 0.0
        %2073 = vmatprep.subr.mxu0 0.0
        %2074 = vmatpush1.msra.mxu0 0.0
        %2075 = vmatprep.subr.mxu0 0.0
        %2076 = vmatpush1.msra.mxu0 0.0
        %2077 = vmatprep.subr.mxu0 0.0
        %2078 = vmatpush1.msra.mxu0 0.0
        %2079 = vmatprep.subr.mxu0 0.0
        %2080 = vmatpush1.msra.mxu0 0.0
        %2081 = vmatprep.subr.mxu0 0.0
        %2082 = vmatpush1.msra.mxu0 0.0
        %2083 = vmatprep.subr.mxu0 0.0
        %2084 = vmatpush1.msra.mxu0 0.0
        %2085 = vmatprep.subr.mxu0 0.0
        %2086 = vmatpush1.msra.mxu0 0.0
        %2087 = vmatprep.subr.mxu0 0.0
        %2088 = vmatpush1.msra.mxu0 0.0
        %2089 = vmatprep.mubr.f32.mxu0 0.0
        %2090 = vmatmul.mubr.f32.gmra.mrb[0].mxu0 %v1264
        %v2091 = vpop.f32.mrb[0].mxu0
        %v2092 = vadd.f32 %v1261, %v2091
        %v2093 = vpop.f32.mrb[0].mxu0
        %2094 = vdwg.mxu0
        %v2099 = vrot.slane %v1564, 7
        %v2100 = vsel %vm788, %v2099, %v1563
        %v2101 = vrot.slane %v1565, 6
        %v2102 = vsel %vm791, %v2101, %v2100
        %v2103 = vrot.slane %v1566, 5
        %v2104 = vsel %vm794, %v2103, %v2102
        %v2106 = vmul.f32 %v1243, %v2104
        %v2107 = vadd.f32 %v2092, %v2106
        %v2109 = vsel %vm1114, %v2024, 0
        %v2112 = vsel %vm1114, %v1915, 0
        %v2115 = vsel %vm1114, %v1916, 0
        %2117 = vmatprep.subr.mxu0 0.0
        %2118 = vmatpush1.xpose.msra.mxu0 %v2112
        %2119 = vmatprep.subr.mxu0 0.0
        %2120 = vmatpush1.xpose.msra.mxu0 %v2115
        %2121 = vmatprep.subr.mxu0 0.0
        %2122 = vmatpush1.xpose.msra.mxu0 0.0
        %2123 = vmatprep.subr.mxu0 0.0
        %2124 = vmatpush1.xpose.msra.mxu0 0.0
        %2125 = vmatprep.subr.mxu0 0.0
        %2126 = vmatpush1.xpose.msra.mxu0 0.0
        %2127 = vmatprep.subr.mxu0 0.0
        %2128 = vmatpush1.xpose.msra.mxu0 0.0
        %2129 = vmatprep.subr.mxu0 0.0
        %2130 = vmatpush1.xpose.msra.mxu0 0.0
        %2131 = vmatprep.subr.mxu0 0.0
        %2132 = vmatpush1.xpose.msra.mxu0 0.0
        %2133 = vmatprep.subr.mxu0 0.0
        %2134 = vmatpush1.xpose.msra.mxu0 0.0
        %2135 = vmatprep.subr.mxu0 0.0
        %2136 = vmatpush1.xpose.msra.mxu0 0.0
        %2137 = vmatprep.subr.mxu0 0.0
        %2138 = vmatpush1.xpose.msra.mxu0 0.0
        %2139 = vmatprep.subr.mxu0 0.0
        %2140 = vmatpush1.xpose.msra.mxu0 0.0
        %2141 = vmatprep.subr.mxu0 0.0
        %2142 = vmatpush1.xpose.msra.mxu0 0.0
        %2143 = vmatprep.subr.mxu0 0.0
        %2144 = vmatpush1.xpose.msra.mxu0 0.0
        %2145 = vmatprep.subr.mxu0 0.0
        %2146 = vmatpush1.xpose.msra.mxu0 0.0
        %2147 = vmatprep.subr.mxu0 0.0
        %2148 = vmatpush1.xpose.msra.mxu0 0.0
        %2149 = vmatprep.subr.mxu0 0.0
        %2150 = vmatpush1.xpose.msra.mxu0 0.0
        %2151 = vmatprep.subr.mxu0 0.0
        %2152 = vmatpush1.xpose.msra.mxu0 0.0
        %2153 = vmatprep.subr.mxu0 0.0
        %2154 = vmatpush1.xpose.msra.mxu0 0.0
        %2155 = vmatprep.subr.mxu0 0.0
        %2156 = vmatpush1.xpose.msra.mxu0 0.0
        %2157 = vmatprep.subr.mxu0 0.0
        %2158 = vmatpush1.xpose.msra.mxu0 0.0
        %2159 = vmatprep.subr.mxu0 0.0
        %2160 = vmatpush1.xpose.msra.mxu0 0.0
        %2161 = vmatprep.subr.mxu0 0.0
        %2162 = vmatpush1.xpose.msra.mxu0 0.0
        %2163 = vmatprep.subr.mxu0 0.0
        %2164 = vmatpush1.xpose.msra.mxu0 0.0
        %2165 = vmatprep.subr.mxu0 0.0
        %2166 = vmatpush1.xpose.msra.mxu0 0.0
        %2167 = vmatprep.subr.mxu0 0.0
        %2168 = vmatpush1.xpose.msra.mxu0 0.0
        %2169 = vmatprep.subr.mxu0 0.0
        %2170 = vmatpush1.xpose.msra.mxu0 0.0
        %2171 = vmatprep.subr.mxu0 0.0
        %2172 = vmatpush1.xpose.msra.mxu0 0.0
        %2173 = vmatprep.subr.mxu0 0.0
        %2174 = vmatpush1.xpose.msra.mxu0 0.0
        %2175 = vmatprep.subr.mxu0 0.0
        %2176 = vmatpush1.xpose.msra.mxu0 0.0
        %2177 = vmatprep.subr.mxu0 0.0
        %2178 = vmatpush1.xpose.msra.mxu0 0.0
        %2179 = vmatprep.subr.mxu0 0.0
        %2180 = vmatpush1.xpose.msra.mxu0 0.0
        %2181 = vmatprep.mubr.f32.mxu0 0.0
        %2182 = vmatmul.mubr.f32.gmra.mrb[0].mxu0 %v2109
        %v2183 = vpop.f32.mrb[0].mxu0
        %v2184 = vadd.f32 0.0, %v2183
        %v2185 = vpop.f32.mrb[0].mxu0
        %2186 = vdwg.mxu0
        %v2188 = vsel %vm1114, %v2107, 0
        %2190 = vmatprep.subr.mxu0 0.0
        %2191 = vmatpush1.msra.mxu0 %v1940
        %2192 = vmatprep.subr.mxu0 0.0
        %2193 = vmatpush1.msra.mxu0 %v1941
        %2194 = vmatprep.subr.mxu0 0.0
        %2195 = vmatpush1.msra.mxu0 0.0
        %2196 = vmatprep.subr.mxu0 0.0
        %2197 = vmatpush1.msra.mxu0 0.0
        %2198 = vmatprep.subr.mxu0 0.0
        %2199 = vmatpush1.msra.mxu0 0.0
        %2200 = vmatprep.subr.mxu0 0.0
        %2201 = vmatpush1.msra.mxu0 0.0
        %2202 = vmatprep.subr.mxu0 0.0
        %2203 = vmatpush1.msra.mxu0 0.0
        %2204 = vmatprep.subr.mxu0 0.0
        %2205 = vmatpush1.msra.mxu0 0.0
        %2206 = vmatprep.subr.mxu0 0.0
        %2207 = vmatpush1.msra.mxu0 0.0
        %2208 = vmatprep.subr.mxu0 0.0
        %2209 = vmatpush1.msra.mxu0 0.0
        %2210 = vmatprep.subr.mxu0 0.0
        %2211 = vmatpush1.msra.mxu0 0.0
        %2212 = vmatprep.subr.mxu0 0.0
        %2213 = vmatpush1.msra.mxu0 0.0
        %2214 = vmatprep.subr.mxu0 0.0
        %2215 = vmatpush1.msra.mxu0 0.0
        %2216 = vmatprep.subr.mxu0 0.0
        %2217 = vmatpush1.msra.mxu0 0.0
        %2218 = vmatprep.subr.mxu0 0.0
        %2219 = vmatpush1.msra.mxu0 0.0
        %2220 = vmatprep.subr.mxu0 0.0
        %2221 = vmatpush1.msra.mxu0 0.0
        %2222 = vmatprep.subr.mxu0 0.0
        %2223 = vmatpush1.msra.mxu0 0.0
        %2224 = vmatprep.subr.mxu0 0.0
        %2225 = vmatpush1.msra.mxu0 0.0
        %2226 = vmatprep.subr.mxu0 0.0
        %2227 = vmatpush1.msra.mxu0 0.0
        %2228 = vmatprep.subr.mxu0 0.0
        %2229 = vmatpush1.msra.mxu0 0.0
        %2230 = vmatprep.subr.mxu0 0.0
        %2231 = vmatpush1.msra.mxu0 0.0
        %2232 = vmatprep.subr.mxu0 0.0
        %2233 = vmatpush1.msra.mxu0 0.0
        %2234 = vmatprep.subr.mxu0 0.0
        %2235 = vmatpush1.msra.mxu0 0.0
        %2236 = vmatprep.subr.mxu0 0.0
        %2237 = vmatpush1.msra.mxu0 0.0
        %2238 = vmatprep.subr.mxu0 0.0
        %2239 = vmatpush1.msra.mxu0 0.0
        %2240 = vmatprep.subr.mxu0 0.0
        %2241 = vmatpush1.msra.mxu0 0.0
        %2242 = vmatprep.subr.mxu0 0.0
        %2243 = vmatpush1.msra.mxu0 0.0
        %2244 = vmatprep.subr.mxu0 0.0
        %2245 = vmatpush1.msra.mxu0 0.0
        %2246 = vmatprep.subr.mxu0 0.0
        %2247 = vmatpush1.msra.mxu0 0.0
        %2248 = vmatprep.subr.mxu0 0.0
        %2249 = vmatpush1.msra.mxu0 0.0
        %2250 = vmatprep.subr.mxu0 0.0
        %2251 = vmatpush1.msra.mxu0 0.0
        %2252 = vmatprep.subr.mxu0 0.0
        %2253 = vmatpush1.msra.mxu0 0.0
        %2254 = vmatprep.mubr.f32.mxu0 0.0
        %2255 = vmatmul.mubr.f32.gmra.mrb[0].mxu0 %v2188
        %v2256 = vpop.f32.mrb[0].mxu0
        %v2257 = vadd.f32 0.0, %v2256
        %v2258 = vpop.f32.mrb[0].mxu0
        %2259 = vdwg.mxu0
        %v2260 = vmul.f32 %v1504, %v2184
        %v2262 = vrot.slane %v2260, 1
        %v2263 = vrot.slane %v2260, 2
        %v2264 = vrot.slane %v2260, 3
        %v2269 = vadd.f32 %v1547, %v2260
        %v2270 = vadd.f32 %v1548, %v2262
        %v2271 = vadd.f32 %v1549, %v2263
        %v2272 = vadd.f32 %v1550, %v2264
        %2273 = vst.msk [vmem:[%s719 + $0x1] sm:$0x1] %vm1519, %v2269
        %2274 = vst.msk [vmem:[%s719 + $0x9] sm:$0x1] %vm1519, %v2270
        %2275 = vst.msk [vmem:[%s719 + $0x11] sm:$0x1] %vm1519, %v2271
        %2276 = vst.msk [vmem:[%s719 + $0x19] sm:$0x1] %vm1519, %v2272
        %v2277 = vmul.f32 %v1527, %v2257
        %v2279 = vrot.slane %v2277, 1
        %v2280 = vrot.slane %v2277, 2
        %v2281 = vrot.slane %v2277, 3
        %v2286 = vadd.f32 %v1551, %v2277
        %v2287 = vadd.f32 %v1552, %v2279
        %v2288 = vadd.f32 %v1553, %v2280
        %v2289 = vadd.f32 %v1554, %v2281
        %2290 = vst.msk [vmem:[%s1542 + $0x1] sm:$0x1] %vm1519, %v2286
        %2291 = vst.msk [vmem:[%s1542 + $0x9] sm:$0x1] %vm1519, %v2287
        %2292 = vst.msk [vmem:[%s1542 + $0x11] sm:$0x1] %vm1519, %v2288
        %2293 = vst.msk [vmem:[%s1542 + $0x19] sm:$0x1] %vm1519, %v2289
        %v2294 = vld [vmem:[%s635 + $0x2] sm:$0x1]
        %v2295 = vld [vmem:[%s635 + $0xa] sm:$0x1]
        %v2296 = vld [vmem:[%s635 + $0x12] sm:$0x1]
        %v2297 = vld [vmem:[%s635 + $0x1a] sm:$0x1]
        %v2298 = vld [vmem:[%s753 + $0x2] sm:$0x1]
        %v2299 = vld [vmem:[%s753 + $0xa] sm:$0x1]
        %v2300 = vld [vmem:[%s753 + $0x12] sm:$0x1]
        %v2301 = vld [vmem:[%s753 + $0x1a] sm:$0x1]
        %v2302 = vld [vmem:[%s644 + $0x2] sm:$0x1]
        %v2303 = vld [vmem:[%s644 + $0xa] sm:$0x1]
        %v2304 = vld [vmem:[%s644 + $0x12] sm:$0x1]
        %v2305 = vld [vmem:[%s644 + $0x1a] sm:$0x1]
        %v2306 = vld [vmem:[%s762 + $0x2] sm:$0x1]
        %v2307 = vld [vmem:[%s762 + $0xa] sm:$0x1]
        %v2308 = vld [vmem:[%s762 + $0x12] sm:$0x1]
        %v2309 = vld [vmem:[%s762 + $0x1a] sm:$0x1]
        %v2310 = vld [vmem:[%s653 + $0x2] sm:$0x1]
        %v2311 = vld [vmem:[%s653 + $0xa] sm:$0x1]
        %v2312 = vld [vmem:[%s653 + $0x12] sm:$0x1]
        %v2313 = vld [vmem:[%s653 + $0x1a] sm:$0x1]
        %v2314 = vld [vmem:[%s771 + $0x2] sm:$0x1]
        %v2315 = vld [vmem:[%s771 + $0xa] sm:$0x1]
        %v2316 = vld [vmem:[%s771 + $0x12] sm:$0x1]
        %v2317 = vld [vmem:[%s771 + $0x1a] sm:$0x1]
        %s2318 = scalar_lea.vmem %s724, 8
        %v2319 = vld [vmem:[%s2318] sm:$0xf]
        %s2320 = scalar_lea.vmem %s730, 8
        %v2321 = vld [vmem:[%s2320] sm:$0xf]
        %2323 = vset.pattern.permute.xlu0 0
        %2324 = vperm.xlu0 %2323, %v2319
        %v2325 = vpop.permute.xlu0 %2324
        %v2331 = vrot.slane %v2295, 7
        %v2332 = vsel %vm788, %v2331, %v2294
        %v2333 = vrot.slane %v2296, 6
        %v2334 = vsel %vm791, %v2333, %v2332
        %v2335 = vrot.slane %v2297, 5
        %v2336 = vsel %vm794, %v2335, %v2334
        %v2337 = vsel %vm800, %v2336, 0
        %2339 = vmatprep.subr.mxu0 0.0
        %2340 = vmatpush1.msra.mxu0 %v2337
        %2341 = vmatprep.subr.mxu0 0.0
        %2342 = vmatpush1.msra.mxu0 0.0
        %2343 = vmatprep.subr.mxu0 0.0
        %2344 = vmatpush1.msra.mxu0 0.0
        %2345 = vmatprep.subr.mxu0 0.0
        %2346 = vmatpush1.msra.mxu0 0.0
        %2347 = vmatprep.subr.mxu0 0.0
        %2348 = vmatpush1.msra.mxu0 0.0
        %2349 = vmatprep.subr.mxu0 0.0
        %2350 = vmatpush1.msra.mxu0 0.0
        %2351 = vmatprep.subr.mxu0 0.0
        %2352 = vmatpush1.msra.mxu0 0.0
        %2353 = vmatprep.subr.mxu0 0.0
        %2354 = vmatpush1.msra.mxu0 0.0
        %2355 = vmatprep.subr.mxu0 0.0
        %2356 = vmatpush1.msra.mxu0 0.0
        %2357 = vmatprep.subr.mxu0 0.0
        %2358 = vmatpush1.msra.mxu0 0.0
        %2359 = vmatprep.subr.mxu0 0.0
        %2360 = vmatpush1.msra.mxu0 0.0
        %2361 = vmatprep.subr.mxu0 0.0
        %2362 = vmatpush1.msra.mxu0 0.0
        %2363 = vmatprep.subr.mxu0 0.0
        %2364 = vmatpush1.msra.mxu0 0.0
        %2365 = vmatprep.subr.mxu0 0.0
        %2366 = vmatpush1.msra.mxu0 0.0
        %2367 = vmatprep.subr.mxu0 0.0
        %2368 = vmatpush1.msra.mxu0 0.0
        %2369 = vmatprep.subr.mxu0 0.0
        %2370 = vmatpush1.msra.mxu0 0.0
        %2371 = vmatprep.subr.mxu0 0.0
        %2372 = vmatpush1.msra.mxu0 0.0
        %2373 = vmatprep.subr.mxu0 0.0
        %2374 = vmatpush1.msra.mxu0 0.0
        %2375 = vmatprep.subr.mxu0 0.0
        %2376 = vmatpush1.msra.mxu0 0.0
        %2377 = vmatprep.subr.mxu0 0.0
        %2378 = vmatpush1.msra.mxu0 0.0
        %2379 = vmatprep.subr.mxu0 0.0
        %2380 = vmatpush1.msra.mxu0 0.0
        %2381 = vmatprep.subr.mxu0 0.0
        %2382 = vmatpush1.msra.mxu0 0.0
        %2383 = vmatprep.subr.mxu0 0.0
        %2384 = vmatpush1.msra.mxu0 0.0
        %2385 = vmatprep.subr.mxu0 0.0
        %2386 = vmatpush1.msra.mxu0 0.0
        %2387 = vmatprep.subr.mxu0 0.0
        %2388 = vmatpush1.msra.mxu0 0.0
        %2389 = vmatprep.subr.mxu0 0.0
        %2390 = vmatpush1.msra.mxu0 0.0
        %2391 = vmatprep.subr.mxu0 0.0
        %2392 = vmatpush1.msra.mxu0 0.0
        %2393 = vmatprep.subr.mxu0 0.0
        %2394 = vmatpush1.msra.mxu0 0.0
        %2395 = vmatprep.subr.mxu0 0.0
        %2396 = vmatpush1.msra.mxu0 0.0
        %2397 = vmatprep.subr.mxu0 0.0
        %2398 = vmatpush1.msra.mxu0 0.0
        %2399 = vmatprep.subr.mxu0 0.0
        %2400 = vmatpush1.msra.mxu0 0.0
        %2401 = vmatprep.subr.mxu0 0.0
        %2402 = vmatpush1.msra.mxu0 0.0
        %2403 = vmatprep.mubr.f32.mxu0 0.0
        %2404 = vmatmul.mubr.f32.gmra.mrb[0].mxu0 %v798
        %v2405 = vpop.f32.mrb[0].mxu0
        %v2406 = vadd.f32 %v2325, %v2405
        %v2407 = vpop.f32.mrb[0].mxu0
        %2408 = vdwg.mxu0
        %v2413 = vrot.slane %v2303, 7
        %v2414 = vsel %vm788, %v2413, %v2302
        %v2415 = vrot.slane %v2304, 6
        %v2416 = vsel %vm791, %v2415, %v2414
        %v2417 = vrot.slane %v2305, 5
        %v2418 = vsel %vm794, %v2417, %v2416
        %v2420 = vmul.f32 %v876, %v2418
        %v2421 = vadd.f32 %v2406, %v2420
        %2423 = vset.pattern.permute.xlu0 0
        %2424 = vperm.xlu0 %2423, %v2321
        %v2425 = vpop.permute.xlu0 %2424
        %v2431 = vrot.slane %v2299, 7
        %v2432 = vsel %vm788, %v2431, %v2298
        %v2433 = vrot.slane %v2300, 6
        %v2434 = vsel %vm791, %v2433, %v2432
        %v2435 = vrot.slane %v2301, 5
        %v2436 = vsel %vm794, %v2435, %v2434
        %v2437 = vsel %vm800, %v2436, 0
        %2439 = vmatprep.subr.mxu0 0.0
        %2440 = vmatpush1.msra.mxu0 %v2437
        %2441 = vmatprep.subr.mxu0 0.0
        %2442 = vmatpush1.msra.mxu0 0.0
        %2443 = vmatprep.subr.mxu0 0.0
        %2444 = vmatpush1.msra.mxu0 0.0
        %2445 = vmatprep.subr.mxu0 0.0
        %2446 = vmatpush1.msra.mxu0 0.0
        %2447 = vmatprep.subr.mxu0 0.0
        %2448 = vmatpush1.msra.mxu0 0.0
        %2449 = vmatprep.subr.mxu0 0.0
        %2450 = vmatpush1.msra.mxu0 0.0
        %2451 = vmatprep.subr.mxu0 0.0
        %2452 = vmatpush1.msra.mxu0 0.0
        %2453 = vmatprep.subr.mxu0 0.0
        %2454 = vmatpush1.msra.mxu0 0.0
        %2455 = vmatprep.subr.mxu0 0.0
        %2456 = vmatpush1.msra.mxu0 0.0
        %2457 = vmatprep.subr.mxu0 0.0
        %2458 = vmatpush1.msra.mxu0 0.0
        %2459 = vmatprep.subr.mxu0 0.0
        %2460 = vmatpush1.msra.mxu0 0.0
        %2461 = vmatprep.subr.mxu0 0.0
        %2462 = vmatpush1.msra.mxu0 0.0
        %2463 = vmatprep.subr.mxu0 0.0
        %2464 = vmatpush1.msra.mxu0 0.0
        %2465 = vmatprep.subr.mxu0 0.0
        %2466 = vmatpush1.msra.mxu0 0.0
        %2467 = vmatprep.subr.mxu0 0.0
        %2468 = vmatpush1.msra.mxu0 0.0
        %2469 = vmatprep.subr.mxu0 0.0
        %2470 = vmatpush1.msra.mxu0 0.0
        %2471 = vmatprep.subr.mxu0 0.0
        %2472 = vmatpush1.msra.mxu0 0.0
        %2473 = vmatprep.subr.mxu0 0.0
        %2474 = vmatpush1.msra.mxu0 0.0
        %2475 = vmatprep.subr.mxu0 0.0
        %2476 = vmatpush1.msra.mxu0 0.0
        %2477 = vmatprep.subr.mxu0 0.0
        %2478 = vmatpush1.msra.mxu0 0.0
        %2479 = vmatprep.subr.mxu0 0.0
        %2480 = vmatpush1.msra.mxu0 0.0
        %2481 = vmatprep.subr.mxu0 0.0
        %2482 = vmatpush1.msra.mxu0 0.0
        %2483 = vmatprep.subr.mxu0 0.0
        %2484 = vmatpush1.msra.mxu0 0.0
        %2485 = vmatprep.subr.mxu0 0.0
        %2486 = vmatpush1.msra.mxu0 0.0
        %2487 = vmatprep.subr.mxu0 0.0
        %2488 = vmatpush1.msra.mxu0 0.0
        %2489 = vmatprep.subr.mxu0 0.0
        %2490 = vmatpush1.msra.mxu0 0.0
        %2491 = vmatprep.subr.mxu0 0.0
        %2492 = vmatpush1.msra.mxu0 0.0
        %2493 = vmatprep.subr.mxu0 0.0
        %2494 = vmatpush1.msra.mxu0 0.0
        %2495 = vmatprep.subr.mxu0 0.0
        %2496 = vmatpush1.msra.mxu0 0.0
        %2497 = vmatprep.subr.mxu0 0.0
        %2498 = vmatpush1.msra.mxu0 0.0
        %2499 = vmatprep.subr.mxu0 0.0
        %2500 = vmatpush1.msra.mxu0 0.0
        %2501 = vmatprep.subr.mxu0 0.0
        %2502 = vmatpush1.msra.mxu0 0.0
        %2503 = vmatprep.mubr.f32.mxu0 0.0
        %2504 = vmatmul.mubr.f32.gmra.mrb[0].mxu0 %v907
        %v2505 = vpop.f32.mrb[0].mxu0
        %v2506 = vadd.f32 %v2425, %v2505
        %v2507 = vpop.f32.mrb[0].mxu0
        %2508 = vdwg.mxu0
        %v2513 = vrot.slane %v2307, 7
        %v2514 = vsel %vm788, %v2513, %v2306
        %v2515 = vrot.slane %v2308, 6
        %v2516 = vsel %vm791, %v2515, %v2514
        %v2517 = vrot.slane %v2309, 5
        %v2518 = vsel %vm794, %v2517, %v2516
        %v2520 = vmul.f32 %v876, %v2518
        %v2521 = vadd.f32 %v2506, %v2520
        %2522 = vxpose.xlu0.b32.start [1/16] %v2421, 128
        %2523 = vxpose.xlu0.b32.cont [2/16] 0.0, 128
        %2524 = vxpose.xlu0.b32.cont [3/16] 0.0, 128
        %2525 = vxpose.xlu0.b32.cont [4/16] 0.0, 128
        %2526 = vxpose.xlu0.b32.cont [5/16] 0.0, 128
        %2527 = vxpose.xlu0.b32.cont [6/16] 0.0, 128
        %2528 = vxpose.xlu0.b32.cont [7/16] 0.0, 128
        %2529 = vxpose.xlu0.b32.cont [8/16] 0.0, 128
        %2530 = vxpose.xlu0.b32.cont [9/16] 0.0, 128
        %2531 = vxpose.xlu0.b32.cont [10/16] 0.0, 128
        %2532 = vxpose.xlu0.b32.cont [11/16] 0.0, 128
        %2533 = vxpose.xlu0.b32.cont [12/16] 0.0, 128
        %2534 = vxpose.xlu0.b32.cont [13/16] 0.0, 128
        %2535 = vxpose.xlu0.b32.cont [14/16] 0.0, 128
        %2536 = vxpose.xlu0.b32.cont [15/16] 0.0, 128
        %2537 = vxpose.xlu0.b32.end [16/16] 0.0, 128
        %v2538 = vpop.trf.xlu0
        %v2539 = vpop.trf.xlu0
        %v2540 = vpop.trf.xlu0
        %v2541 = vpop.trf.xlu0
        %v2542 = vpop.trf.xlu0
        %v2543 = vpop.trf.xlu0
        %v2544 = vpop.trf.xlu0
        %v2545 = vpop.trf.xlu0
        %v2546 = vpop.trf.xlu0
        %v2547 = vpop.trf.xlu0
        %v2548 = vpop.trf.xlu0
        %v2549 = vpop.trf.xlu0
        %v2550 = vpop.trf.xlu0
        %v2551 = vpop.trf.xlu0
        %v2552 = vpop.trf.xlu0
        %v2553 = vpop.trf.xlu0
        %v2555 = vsel %vm796, %v2538, 0
        %v2558 = vsel %vm796, %v2539, 0
        %v2561 = vsel %vm800, %v2521, 0
        %2563 = vmatprep.subr.mxu0 0.0
        %2564 = vmatpush1.msra.mxu0 %v2561
        %2565 = vmatprep.subr.mxu0 0.0
        %2566 = vmatpush1.msra.mxu0 0.0
        %2567 = vmatprep.subr.mxu0 0.0
        %2568 = vmatpush1.msra.mxu0 0.0
        %2569 = vmatprep.subr.mxu0 0.0
        %2570 = vmatpush1.msra.mxu0 0.0
        %2571 = vmatprep.subr.mxu0 0.0
        %2572 = vmatpush1.msra.mxu0 0.0
        %2573 = vmatprep.subr.mxu0 0.0
        %2574 = vmatpush1.msra.mxu0 0.0
        %2575 = vmatprep.subr.mxu0 0.0
        %2576 = vmatpush1.msra.mxu0 0.0
        %2577 = vmatprep.subr.mxu0 0.0
        %2578 = vmatpush1.msra.mxu0 0.0
        %2579 = vmatprep.subr.mxu0 0.0
        %2580 = vmatpush1.msra.mxu0 0.0
        %2581 = vmatprep.subr.mxu0 0.0
        %2582 = vmatpush1.msra.mxu0 0.0
        %2583 = vmatprep.subr.mxu0 0.0
        %2584 = vmatpush1.msra.mxu0 0.0
        %2585 = vmatprep.subr.mxu0 0.0
        %2586 = vmatpush1.msra.mxu0 0.0
        %2587 = vmatprep.subr.mxu0 0.0
        %2588 = vmatpush1.msra.mxu0 0.0
        %2589 = vmatprep.subr.mxu0 0.0
        %2590 = vmatpush1.msra.mxu0 0.0
        %2591 = vmatprep.subr.mxu0 0.0
        %2592 = vmatpush1.msra.mxu0 0.0
        %2593 = vmatprep.subr.mxu0 0.0
        %2594 = vmatpush1.msra.mxu0 0.0
        %2595 = vmatprep.subr.mxu0 0.0
        %2596 = vmatpush1.msra.mxu0 0.0
        %2597 = vmatprep.subr.mxu0 0.0
        %2598 = vmatpush1.msra.mxu0 0.0
        %2599 = vmatprep.subr.mxu0 0.0
        %2600 = vmatpush1.msra.mxu0 0.0
        %2601 = vmatprep.subr.mxu0 0.0
        %2602 = vmatpush1.msra.mxu0 0.0
        %2603 = vmatprep.subr.mxu0 0.0
        %2604 = vmatpush1.msra.mxu0 0.0
        %2605 = vmatprep.subr.mxu0 0.0
        %2606 = vmatpush1.msra.mxu0 0.0
        %2607 = vmatprep.subr.mxu0 0.0
        %2608 = vmatpush1.msra.mxu0 0.0
        %2609 = vmatprep.subr.mxu0 0.0
        %2610 = vmatpush1.msra.mxu0 0.0
        %2611 = vmatprep.subr.mxu0 0.0
        %2612 = vmatpush1.msra.mxu0 0.0
        %2613 = vmatprep.subr.mxu0 0.0
        %2614 = vmatpush1.msra.mxu0 0.0
        %2615 = vmatprep.subr.mxu0 0.0
        %2616 = vmatpush1.msra.mxu0 0.0
        %2617 = vmatprep.subr.mxu0 0.0
        %2618 = vmatpush1.msra.mxu0 0.0
        %2619 = vmatprep.subr.mxu0 0.0
        %2620 = vmatpush1.msra.mxu0 0.0
        %2621 = vmatprep.subr.mxu0 0.0
        %2622 = vmatpush1.msra.mxu0 0.0
        %2623 = vmatprep.subr.mxu0 0.0
        %2624 = vmatpush1.msra.mxu0 0.0
        %2625 = vmatprep.subr.mxu0 0.0
        %2626 = vmatpush1.msra.mxu0 0.0
        %2627 = vmatprep.mubr.f32.mxu0 0.0
        %2628 = vmatmul.mubr.f32.gmra.mrb[0].mxu0 %v2555
        %v2629 = vpop.f32.mrb[0].mxu0
        %v2630 = vadd.f32 0.0, %v2629
        %v2631 = vpop.f32.mrb[0].mxu0
        %2632 = vmatprep.mubr.f32.mxu0 0.0
        %2633 = vmatmul.mubr.f32.gmra.mrb[0].mxu0 %v2558
        %v2634 = vpop.f32.mrb[0].mxu0
        %v2635 = vadd.f32 0.0, %v2634
        %v2636 = vpop.f32.mrb[0].mxu0
        %2637 = vdwg.mxu0
        %v2638 = vmul.f32 %v2630, 0.5
        %v2639 = vmul.f32 %v2635, 0.5
        %v2640 = vsel %vm747, %v2638, -65504.0
        %v2641 = vsel %vm748, %v2639, -65504.0
        %v2642 = vsel %vm1114, %v2640, -inf
        %2643 = vmax.xlane.f32.xlu0 %v2642
        %v2644 = vpop.xlane.xlu0 %2643
        %v2645 = vsel %vm1114, %v2641, -inf
        %2646 = vmax.xlane.f32.xlu0 %v2645
        %v2647 = vpop.xlane.xlu0 %2646
        %v2648 = vsub.f32 %v2640, %v2644
        %v2649 = vsub.f32 %v2641, %v2647
        %v2650 = vmul.f32 %v2648, 1.442695
        %v2651 = vpow.pop %v2650
        %v2652 = vmul.f32 %v2649, 1.442695
        %v2653 = vpow.pop %v2652
        %v2654 = vsel %vm1114, %v2651, 0.0
        %2655 = vadd.xlane.f32.xlu0 %v2654
        %v2656 = vpop.xlane.xlu0 %2655
        %v2657 = vsel %vm1114, %v2653, 0.0
        %2658 = vadd.xlane.f32.xlu0 %v2657
        %v2659 = vpop.xlane.xlu0 %2658
        %v2660 = vrcp.pop %v2656
        %v2661 = vrcp.pop %v2659
        %v2662 = vmul.f32 %v2651, %v2660
        %v2663 = vmul.f32 %v2653, %v2661
        %v2664 = vmax.f32 %v2642, %v2645
        %v2665 = vrot.slane %v2664, 4
        %v2666 = vmax.f32 %v2664, %v2665
        %v2667 = vrot.slane %v2666, 2
        %v2668 = vmax.f32 %v2666, %v2667
        %v2669 = vrot.slane %v2668, 1
        %v2670 = vmax.f32 %v2668, %v2669
        %v2671 = vsub.f32 %v2640, %v2670
        %v2672 = vsub.f32 %v2641, %v2670
        %v2673 = vmul.f32 %v2671, 1.442695
        %v2674 = vpow.pop %v2673
        %v2675 = vmul.f32 %v2672, 1.442695
        %v2676 = vpow.pop %v2675
        %v2677 = vsel %vm1114, %v2674, 0.0
        %v2678 = vsel %vm1114, %v2676, 0.0
        %v2679 = vadd.f32 %v2677, %v2678
        %v2680 = vrot.slane %v2679, 4
        %v2681 = vadd.f32 %v2679, %v2680
        %v2682 = vrot.slane %v2681, 2
        %v2683 = vadd.f32 %v2681, %v2682
        %v2684 = vrot.slane %v2683, 1
        %v2685 = vadd.f32 %v2683, %v2684
        %v2686 = vrcp.pop %v2685
        %v2687 = vmul.f32 %v2674, %v2686
        %v2688 = vmul.f32 %v2676, %v2686
        %2689 = vmatprep.subr.mxu0 0.0
        %2690 = vmatpush1.msra.mxu0 %v2437
        %2691 = vmatprep.subr.mxu0 0.0
        %2692 = vmatpush1.msra.mxu0 0.0
        %2693 = vmatprep.subr.mxu0 0.0
        %2694 = vmatpush1.msra.mxu0 0.0
        %2695 = vmatprep.subr.mxu0 0.0
        %2696 = vmatpush1.msra.mxu0 0.0
        %2697 = vmatprep.subr.mxu0 0.0
        %2698 = vmatpush1.msra.mxu0 0.0
        %2699 = vmatprep.subr.mxu0 0.0
        %2700 = vmatpush1.msra.mxu0 0.0
        %2701 = vmatprep.subr.mxu0 0.0
        %2702 = vmatpush1.msra.mxu0 0.0
        %2703 = vmatprep.subr.mxu0 0.0
        %2704 = vmatpush1.msra.mxu0 0.0
        %2705 = vmatprep.subr.mxu0 0.0
        %2706 = vmatpush1.msra.mxu0 0.0
        %2707 = vmatprep.subr.mxu0 0.0
        %2708 = vmatpush1.msra.mxu0 0.0
        %2709 = vmatprep.subr.mxu0 0.0
        %2710 = vmatpush1.msra.mxu0 0.0
        %2711 = vmatprep.subr.mxu0 0.0
        %2712 = vmatpush1.msra.mxu0 0.0
        %2713 = vmatprep.subr.mxu0 0.0
        %2714 = vmatpush1.msra.mxu0 0.0
        %2715 = vmatprep.subr.mxu0 0.0
        %2716 = vmatpush1.msra.mxu0 0.0
        %2717 = vmatprep.subr.mxu0 0.0
        %2718 = vmatpush1.msra.mxu0 0.0
        %2719 = vmatprep.subr.mxu0 0.0
        %2720 = vmatpush1.msra.mxu0 0.0
        %2721 = vmatprep.subr.mxu0 0.0
        %2722 = vmatpush1.msra.mxu0 0.0
        %2723 = vmatprep.subr.mxu0 0.0
        %2724 = vmatpush1.msra.mxu0 0.0
        %2725 = vmatprep.subr.mxu0 0.0
        %2726 = vmatpush1.msra.mxu0 0.0
        %2727 = vmatprep.subr.mxu0 0.0
        %2728 = vmatpush1.msra.mxu0 0.0
        %2729 = vmatprep.subr.mxu0 0.0
        %2730 = vmatpush1.msra.mxu0 0.0
        %2731 = vmatprep.subr.mxu0 0.0
        %2732 = vmatpush1.msra.mxu0 0.0
        %2733 = vmatprep.subr.mxu0 0.0
        %2734 = vmatpush1.msra.mxu0 0.0
        %2735 = vmatprep.subr.mxu0 0.0
        %2736 = vmatpush1.msra.mxu0 0.0
        %2737 = vmatprep.subr.mxu0 0.0
        %2738 = vmatpush1.msra.mxu0 0.0
        %2739 = vmatprep.subr.mxu0 0.0
        %2740 = vmatpush1.msra.mxu0 0.0
        %2741 = vmatprep.subr.mxu0 0.0
        %2742 = vmatpush1.msra.mxu0 0.0
        %2743 = vmatprep.subr.mxu0 0.0
        %2744 = vmatpush1.msra.mxu0 0.0
        %2745 = vmatprep.subr.mxu0 0.0
        %2746 = vmatpush1.msra.mxu0 0.0
        %2747 = vmatprep.subr.mxu0 0.0
        %2748 = vmatpush1.msra.mxu0 0.0
        %2749 = vmatprep.subr.mxu0 0.0
        %2750 = vmatpush1.msra.mxu0 0.0
        %2751 = vmatprep.subr.mxu0 0.0
        %2752 = vmatpush1.msra.mxu0 0.0
        %2753 = vmatprep.mubr.f32.mxu0 0.0
        %2754 = vmatmul.mubr.f32.gmra.mrb[0].mxu0 %v1168
        %v2755 = vpop.f32.mrb[0].mxu0
        %v2756 = vadd.f32 %v1165, %v2755
        %v2757 = vpop.f32.mrb[0].mxu0
        %2758 = vdwg.mxu0
        %v2763 = vrot.slane %v2315, 7
        %v2764 = vsel %vm788, %v2763, %v2314
        %v2765 = vrot.slane %v2316, 6
        %v2766 = vsel %vm791, %v2765, %v2764
        %v2767 = vrot.slane %v2317, 5
        %v2768 = vsel %vm794, %v2767, %v2766
        %v2770 = vmul.f32 %v1243, %v2768
        %v2771 = vadd.f32 %v2756, %v2770
        %2772 = vmatprep.subr.mxu0 0.0
        %2773 = vmatpush1.msra.mxu0 %v2337
        %2774 = vmatprep.subr.mxu0 0.0
        %2775 = vmatpush1.msra.mxu0 0.0
        %2776 = vmatprep.subr.mxu0 0.0
        %2777 = vmatpush1.msra.mxu0 0.0
        %2778 = vmatprep.subr.mxu0 0.0
        %2779 = vmatpush1.msra.mxu0 0.0
        %2780 = vmatprep.subr.mxu0 0.0
        %2781 = vmatpush1.msra.mxu0 0.0
        %2782 = vmatprep.subr.mxu0 0.0
        %2783 = vmatpush1.msra.mxu0 0.0
        %2784 = vmatprep.subr.mxu0 0.0
        %2785 = vmatpush1.msra.mxu0 0.0
        %2786 = vmatprep.subr.mxu0 0.0
        %2787 = vmatpush1.msra.mxu0 0.0
        %2788 = vmatprep.subr.mxu0 0.0
        %2789 = vmatpush1.msra.mxu0 0.0
        %2790 = vmatprep.subr.mxu0 0.0
        %2791 = vmatpush1.msra.mxu0 0.0
        %2792 = vmatprep.subr.mxu0 0.0
        %2793 = vmatpush1.msra.mxu0 0.0
        %2794 = vmatprep.subr.mxu0 0.0
        %2795 = vmatpush1.msra.mxu0 0.0
        %2796 = vmatprep.subr.mxu0 0.0
        %2797 = vmatpush1.msra.mxu0 0.0
        %2798 = vmatprep.subr.mxu0 0.0
        %2799 = vmatpush1.msra.mxu0 0.0
        %2800 = vmatprep.subr.mxu0 0.0
        %2801 = vmatpush1.msra.mxu0 0.0
        %2802 = vmatprep.subr.mxu0 0.0
        %2803 = vmatpush1.msra.mxu0 0.0
        %2804 = vmatprep.subr.mxu0 0.0
        %2805 = vmatpush1.msra.mxu0 0.0
        %2806 = vmatprep.subr.mxu0 0.0
        %2807 = vmatpush1.msra.mxu0 0.0
        %2808 = vmatprep.subr.mxu0 0.0
        %2809 = vmatpush1.msra.mxu0 0.0
        %2810 = vmatprep.subr.mxu0 0.0
        %2811 = vmatpush1.msra.mxu0 0.0
        %2812 = vmatprep.subr.mxu0 0.0
        %2813 = vmatpush1.msra.mxu0 0.0
        %2814 = vmatprep.subr.mxu0 0.0
        %2815 = vmatpush1.msra.mxu0 0.0
        %2816 = vmatprep.subr.mxu0 0.0
        %2817 = vmatpush1.msra.mxu0 0.0
        %2818 = vmatprep.subr.mxu0 0.0
        %2819 = vmatpush1.msra.mxu0 0.0
        %2820 = vmatprep.subr.mxu0 0.0
        %2821 = vmatpush1.msra.mxu0 0.0
        %2822 = vmatprep.subr.mxu0 0.0
        %2823 = vmatpush1.msra.mxu0 0.0
        %2824 = vmatprep.subr.mxu0 0.0
        %2825 = vmatpush1.msra.mxu0 0.0
        %2826 = vmatprep.subr.mxu0 0.0
        %2827 = vmatpush1.msra.mxu0 0.0
        %2828 = vmatprep.subr.mxu0 0.0
        %2829 = vmatpush1.msra.mxu0 0.0
        %2830 = vmatprep.subr.mxu0 0.0
        %2831 = vmatpush1.msra.mxu0 0.0
        %2832 = vmatprep.subr.mxu0 0.0
        %2833 = vmatpush1.msra.mxu0 0.0
        %2834 = vmatprep.subr.mxu0 0.0
        %2835 = vmatpush1.msra.mxu0 0.0
        %2836 = vmatprep.mubr.f32.mxu0 0.0
        %2837 = vmatmul.mubr.f32.gmra.mrb[0].mxu0 %v1264
        %v2838 = vpop.f32.mrb[0].mxu0
        %v2839 = vadd.f32 %v1261, %v2838
        %v2840 = vpop.f32.mrb[0].mxu0
        %2841 = vdwg.mxu0
        %v2846 = vrot.slane %v2311, 7
        %v2847 = vsel %vm788, %v2846, %v2310
        %v2848 = vrot.slane %v2312, 6
        %v2849 = vsel %vm791, %v2848, %v2847
        %v2850 = vrot.slane %v2313, 5
        %v2851 = vsel %vm794, %v2850, %v2849
        %v2853 = vmul.f32 %v1243, %v2851
        %v2854 = vadd.f32 %v2839, %v2853
        %v2856 = vsel %vm1114, %v2771, 0
        %v2859 = vsel %vm1114, %v2662, 0
        %v2862 = vsel %vm1114, %v2663, 0
        %2864 = vmatprep.subr.mxu0 0.0
        %2865 = vmatpush1.xpose.msra.mxu0 %v2859
        %2866 = vmatprep.subr.mxu0 0.0
        %2867 = vmatpush1.xpose.msra.mxu0 %v2862
        %2868 = vmatprep.subr.mxu0 0.0
        %2869 = vmatpush1.xpose.msra.mxu0 0.0
        %2870 = vmatprep.subr.mxu0 0.0
        %2871 = vmatpush1.xpose.msra.mxu0 0.0
        %2872 = vmatprep.subr.mxu0 0.0
        %2873 = vmatpush1.xpose.msra.mxu0 0.0
        %2874 = vmatprep.subr.mxu0 0.0
        %2875 = vmatpush1.xpose.msra.mxu0 0.0
        %2876 = vmatprep.subr.mxu0 0.0
        %2877 = vmatpush1.xpose.msra.mxu0 0.0
        %2878 = vmatprep.subr.mxu0 0.0
        %2879 = vmatpush1.xpose.msra.mxu0 0.0
        %2880 = vmatprep.subr.mxu0 0.0
        %2881 = vmatpush1.xpose.msra.mxu0 0.0
        %2882 = vmatprep.subr.mxu0 0.0
        %2883 = vmatpush1.xpose.msra.mxu0 0.0
        %2884 = vmatprep.subr.mxu0 0.0
        %2885 = vmatpush1.xpose.msra.mxu0 0.0
        %2886 = vmatprep.subr.mxu0 0.0
        %2887 = vmatpush1.xpose.msra.mxu0 0.0
        %2888 = vmatprep.subr.mxu0 0.0
        %2889 = vmatpush1.xpose.msra.mxu0 0.0
        %2890 = vmatprep.subr.mxu0 0.0
        %2891 = vmatpush1.xpose.msra.mxu0 0.0
        %2892 = vmatprep.subr.mxu0 0.0
        %2893 = vmatpush1.xpose.msra.mxu0 0.0
        %2894 = vmatprep.subr.mxu0 0.0
        %2895 = vmatpush1.xpose.msra.mxu0 0.0
        %2896 = vmatprep.subr.mxu0 0.0
        %2897 = vmatpush1.xpose.msra.mxu0 0.0
        %2898 = vmatprep.subr.mxu0 0.0
        %2899 = vmatpush1.xpose.msra.mxu0 0.0
        %2900 = vmatprep.subr.mxu0 0.0
        %2901 = vmatpush1.xpose.msra.mxu0 0.0
        %2902 = vmatprep.subr.mxu0 0.0
        %2903 = vmatpush1.xpose.msra.mxu0 0.0
        %2904 = vmatprep.subr.mxu0 0.0
        %2905 = vmatpush1.xpose.msra.mxu0 0.0
        %2906 = vmatprep.subr.mxu0 0.0
        %2907 = vmatpush1.xpose.msra.mxu0 0.0
        %2908 = vmatprep.subr.mxu0 0.0
        %2909 = vmatpush1.xpose.msra.mxu0 0.0
        %2910 = vmatprep.subr.mxu0 0.0
        %2911 = vmatpush1.xpose.msra.mxu0 0.0
        %2912 = vmatprep.subr.mxu0 0.0
        %2913 = vmatpush1.xpose.msra.mxu0 0.0
        %2914 = vmatprep.subr.mxu0 0.0
        %2915 = vmatpush1.xpose.msra.mxu0 0.0
        %2916 = vmatprep.subr.mxu0 0.0
        %2917 = vmatpush1.xpose.msra.mxu0 0.0
        %2918 = vmatprep.subr.mxu0 0.0
        %2919 = vmatpush1.xpose.msra.mxu0 0.0
        %2920 = vmatprep.subr.mxu0 0.0
        %2921 = vmatpush1.xpose.msra.mxu0 0.0
        %2922 = vmatprep.subr.mxu0 0.0
        %2923 = vmatpush1.xpose.msra.mxu0 0.0
        %2924 = vmatprep.subr.mxu0 0.0
        %2925 = vmatpush1.xpose.msra.mxu0 0.0
        %2926 = vmatprep.subr.mxu0 0.0
        %2927 = vmatpush1.xpose.msra.mxu0 0.0
        %2928 = vmatprep.mubr.f32.mxu0 0.0
        %2929 = vmatmul.mubr.f32.gmra.mrb[0].mxu0 %v2856
        %v2930 = vpop.f32.mrb[0].mxu0
        %v2931 = vadd.f32 0.0, %v2930
        %v2932 = vpop.f32.mrb[0].mxu0
        %2933 = vdwg.mxu0
        %v2935 = vsel %vm1114, %v2854, 0
        %2937 = vmatprep.subr.mxu0 0.0
        %2938 = vmatpush1.msra.mxu0 %v2687
        %2939 = vmatprep.subr.mxu0 0.0
        %2940 = vmatpush1.msra.mxu0 %v2688
        %2941 = vmatprep.subr.mxu0 0.0
        %2942 = vmatpush1.msra.mxu0 0.0
        %2943 = vmatprep.subr.mxu0 0.0
        %2944 = vmatpush1.msra.mxu0 0.0
        %2945 = vmatprep.subr.mxu0 0.0
        %2946 = vmatpush1.msra.mxu0 0.0
        %2947 = vmatprep.subr.mxu0 0.0
        %2948 = vmatpush1.msra.mxu0 0.0
        %2949 = vmatprep.subr.mxu0 0.0
        %2950 = vmatpush1.msra.mxu0 0.0
        %2951 = vmatprep.subr.mxu0 0.0
        %2952 = vmatpush1.msra.mxu0 0.0
        %2953 = vmatprep.subr.mxu0 0.0
        %2954 = vmatpush1.msra.mxu0 0.0
        %2955 = vmatprep.subr.mxu0 0.0
        %2956 = vmatpush1.msra.mxu0 0.0
        %2957 = vmatprep.subr.mxu0 0.0
        %2958 = vmatpush1.msra.mxu0 0.0
        %2959 = vmatprep.subr.mxu0 0.0
        %2960 = vmatpush1.msra.mxu0 0.0
        %2961 = vmatprep.subr.mxu0 0.0
        %2962 = vmatpush1.msra.mxu0 0.0
        %2963 = vmatprep.subr.mxu0 0.0
        %2964 = vmatpush1.msra.mxu0 0.0
        %2965 = vmatprep.subr.mxu0 0.0
        %2966 = vmatpush1.msra.mxu0 0.0
        %2967 = vmatprep.subr.mxu0 0.0
        %2968 = vmatpush1.msra.mxu0 0.0
        %2969 = vmatprep.subr.mxu0 0.0
        %2970 = vmatpush1.msra.mxu0 0.0
        %2971 = vmatprep.subr.mxu0 0.0
        %2972 = vmatpush1.msra.mxu0 0.0
        %2973 = vmatprep.subr.mxu0 0.0
        %2974 = vmatpush1.msra.mxu0 0.0
        %2975 = vmatprep.subr.mxu0 0.0
        %2976 = vmatpush1.msra.mxu0 0.0
        %2977 = vmatprep.subr.mxu0 0.0
        %2978 = vmatpush1.msra.mxu0 0.0
        %2979 = vmatprep.subr.mxu0 0.0
        %2980 = vmatpush1.msra.mxu0 0.0
        %2981 = vmatprep.subr.mxu0 0.0
        %2982 = vmatpush1.msra.mxu0 0.0
        %2983 = vmatprep.subr.mxu0 0.0
        %2984 = vmatpush1.msra.mxu0 0.0
        %2985 = vmatprep.subr.mxu0 0.0
        %2986 = vmatpush1.msra.mxu0 0.0
        %2987 = vmatprep.subr.mxu0 0.0
        %2988 = vmatpush1.msra.mxu0 0.0
        %2989 = vmatprep.subr.mxu0 0.0
        %2990 = vmatpush1.msra.mxu0 0.0
        %2991 = vmatprep.subr.mxu0 0.0
        %2992 = vmatpush1.msra.mxu0 0.0
        %2993 = vmatprep.subr.mxu0 0.0
        %2994 = vmatpush1.msra.mxu0 0.0
        %2995 = vmatprep.subr.mxu0 0.0
        %2996 = vmatpush1.msra.mxu0 0.0
        %2997 = vmatprep.subr.mxu0 0.0
        %2998 = vmatpush1.msra.mxu0 0.0
        %2999 = vmatprep.subr.mxu0 0.0
        %3000 = vmatpush1.msra.mxu0 0.0
        %3001 = vmatprep.mubr.f32.mxu0 0.0
        %3002 = vmatmul.mubr.f32.gmra.mrb[0].mxu0 %v2935
        %v3003 = vpop.f32.mrb[0].mxu0
        %v3004 = vadd.f32 0.0, %v3003
        %v3005 = vpop.f32.mrb[0].mxu0
        %3006 = vdwg.mxu0
        %v3007 = vmul.f32 %v1504, %v2931
        %v3009 = vrot.slane %v3007, 1
        %v3010 = vrot.slane %v3007, 2
        %v3011 = vrot.slane %v3007, 3
        %v3016 = vadd.f32 %v2294, %v3007
        %v3017 = vadd.f32 %v2295, %v3009
        %v3018 = vadd.f32 %v2296, %v3010
        %v3019 = vadd.f32 %v2297, %v3011
        %3020 = vst.msk [vmem:[%s719 + $0x2] sm:$0x1] %vm1519, %v3016
        %3021 = vst.msk [vmem:[%s719 + $0xa] sm:$0x1] %vm1519, %v3017
        %3022 = vst.msk [vmem:[%s719 + $0x12] sm:$0x1] %vm1519, %v3018
        %3023 = vst.msk [vmem:[%s719 + $0x1a] sm:$0x1] %vm1519, %v3019
        %v3024 = vmul.f32 %v1527, %v3004
        %v3026 = vrot.slane %v3024, 1
        %v3027 = vrot.slane %v3024, 2
        %v3028 = vrot.slane %v3024, 3
        %v3033 = vadd.f32 %v2298, %v3024
        %v3034 = vadd.f32 %v2299, %v3026
        %v3035 = vadd.f32 %v2300, %v3027
        %v3036 = vadd.f32 %v2301, %v3028
        %3037 = vst.msk [vmem:[%s1542 + $0x2] sm:$0x1] %vm1519, %v3033
        %3038 = vst.msk [vmem:[%s1542 + $0xa] sm:$0x1] %vm1519, %v3034
        %3039 = vst.msk [vmem:[%s1542 + $0x12] sm:$0x1] %vm1519, %v3035
        %3040 = vst.msk [vmem:[%s1542 + $0x1a] sm:$0x1] %vm1519, %v3036
        %v3041 = vld [vmem:[%s635 + $0x3] sm:$0x1]
        %v3042 = vld [vmem:[%s635 + $0xb] sm:$0x1]
        %v3043 = vld [vmem:[%s635 + $0x13] sm:$0x1]
        %v3044 = vld [vmem:[%s635 + $0x1b] sm:$0x1]
        %v3045 = vld [vmem:[%s753 + $0x3] sm:$0x1]
        %v3046 = vld [vmem:[%s753 + $0xb] sm:$0x1]
        %v3047 = vld [vmem:[%s753 + $0x13] sm:$0x1]
        %v3048 = vld [vmem:[%s753 + $0x1b] sm:$0x1]
        %v3049 = vld [vmem:[%s644 + $0x3] sm:$0x1]
        %v3050 = vld [vmem:[%s644 + $0xb] sm:$0x1]
        %v3051 = vld [vmem:[%s644 + $0x13] sm:$0x1]
        %v3052 = vld [vmem:[%s644 + $0x1b] sm:$0x1]
        %v3053 = vld [vmem:[%s762 + $0x3] sm:$0x1]
        %v3054 = vld [vmem:[%s762 + $0xb] sm:$0x1]
        %v3055 = vld [vmem:[%s762 + $0x13] sm:$0x1]
        %v3056 = vld [vmem:[%s762 + $0x1b] sm:$0x1]
        %v3057 = vld [vmem:[%s653 + $0x3] sm:$0x1]
        %v3058 = vld [vmem:[%s653 + $0xb] sm:$0x1]
        %v3059 = vld [vmem:[%s653 + $0x13] sm:$0x1]
        %v3060 = vld [vmem:[%s653 + $0x1b] sm:$0x1]
        %v3061 = vld [vmem:[%s771 + $0x3] sm:$0x1]
        %v3062 = vld [vmem:[%s771 + $0xb] sm:$0x1]
        %v3063 = vld [vmem:[%s771 + $0x13] sm:$0x1]
        %v3064 = vld [vmem:[%s771 + $0x1b] sm:$0x1]
        %s3065 = scalar_lea.vmem %s724, 12
        %v3066 = vld [vmem:[%s3065] sm:$0xf]
        %s3067 = scalar_lea.vmem %s730, 12
        %v3068 = vld [vmem:[%s3067] sm:$0xf]
        %3070 = vset.pattern.permute.xlu0 0
        %3071 = vperm.xlu0 %3070, %v3066
        %v3072 = vpop.permute.xlu0 %3071
        %v3078 = vrot.slane %v3042, 7
        %v3079 = vsel %vm788, %v3078, %v3041
        %v3080 = vrot.slane %v3043, 6
        %v3081 = vsel %vm791, %v3080, %v3079
        %v3082 = vrot.slane %v3044, 5
        %v3083 = vsel %vm794, %v3082, %v3081
        %v3084 = vsel %vm800, %v3083, 0
        %3086 = vmatprep.subr.mxu0 0.0
        %3087 = vmatpush1.msra.mxu0 %v3084
        %3088 = vmatprep.subr.mxu0 0.0
        %3089 = vmatpush1.msra.mxu0 0.0
        %3090 = vmatprep.subr.mxu0 0.0
        %3091 = vmatpush1.msra.mxu0 0.0
        %3092 = vmatprep.subr.mxu0 0.0
        %3093 = vmatpush1.msra.mxu0 0.0
        %3094 = vmatprep.subr.mxu0 0.0
        %3095 = vmatpush1.msra.mxu0 0.0
        %3096 = vmatprep.subr.mxu0 0.0
        %3097 = vmatpush1.msra.mxu0 0.0
        %3098 = vmatprep.subr.mxu0 0.0
        %3099 = vmatpush1.msra.mxu0 0.0
        %3100 = vmatprep.subr.mxu0 0.0
        %3101 = vmatpush1.msra.mxu0 0.0
        %3102 = vmatprep.subr.mxu0 0.0
        %3103 = vmatpush1.msra.mxu0 0.0
        %3104 = vmatprep.subr.mxu0 0.0
        %3105 = vmatpush1.msra.mxu0 0.0
        %3106 = vmatprep.subr.mxu0 0.0
        %3107 = vmatpush1.msra.mxu0 0.0
        %3108 = vmatprep.subr.mxu0 0.0
        %3109 = vmatpush1.msra.mxu0 0.0
        %3110 = vmatprep.subr.mxu0 0.0
        %3111 = vmatpush1.msra.mxu0 0.0
        %3112 = vmatprep.subr.mxu0 0.0
        %3113 = vmatpush1.msra.mxu0 0.0
        %3114 = vmatprep.subr.mxu0 0.0
        %3115 = vmatpush1.msra.mxu0 0.0
        %3116 = vmatprep.subr.mxu0 0.0
        %3117 = vmatpush1.msra.mxu0 0.0
        %3118 = vmatprep.subr.mxu0 0.0
        %3119 = vmatpush1.msra.mxu0 0.0
        %3120 = vmatprep.subr.mxu0 0.0
        %3121 = vmatpush1.msra.mxu0 0.0
        %3122 = vmatprep.subr.mxu0 0.0
        %3123 = vmatpush1.msra.mxu0 0.0
        %3124 = vmatprep.subr.mxu0 0.0
        %3125 = vmatpush1.msra.mxu0 0.0
        %3126 = vmatprep.subr.mxu0 0.0
        %3127 = vmatpush1.msra.mxu0 0.0
        %3128 = vmatprep.subr.mxu0 0.0
        %3129 = vmatpush1.msra.mxu0 0.0
        %3130 = vmatprep.subr.mxu0 0.0
        %3131 = vmatpush1.msra.mxu0 0.0
        %3132 = vmatprep.subr.mxu0 0.0
        %3133 = vmatpush1.msra.mxu0 0.0
        %3134 = vmatprep.subr.mxu0 0.0
        %3135 = vmatpush1.msra.mxu0 0.0
        %3136 = vmatprep.subr.mxu0 0.0
        %3137 = vmatpush1.msra.mxu0 0.0
        %3138 = vmatprep.subr.mxu0 0.0
        %3139 = vmatpush1.msra.mxu0 0.0
        %3140 = vmatprep.subr.mxu0 0.0
        %3141 = vmatpush1.msra.mxu0 0.0
        %3142 = vmatprep.subr.mxu0 0.0
        %3143 = vmatpush1.msra.mxu0 0.0
        %3144 = vmatprep.subr.mxu0 0.0
        %3145 = vmatpush1.msra.mxu0 0.0
        %3146 = vmatprep.subr.mxu0 0.0
        %3147 = vmatpush1.msra.mxu0 0.0
        %3148 = vmatprep.subr.mxu0 0.0
        %3149 = vmatpush1.msra.mxu0 0.0
        %3150 = vmatprep.mubr.f32.mxu0 0.0
        %3151 = vmatmul.mubr.f32.gmra.mrb[0].mxu0 %v798
        %v3152 = vpop.f32.mrb[0].mxu0
        %v3153 = vadd.f32 %v3072, %v3152
        %v3154 = vpop.f32.mrb[0].mxu0
        %3155 = vdwg.mxu0
        %v3160 = vrot.slane %v3050, 7
        %v3161 = vsel %vm788, %v3160, %v3049
        %v3162 = vrot.slane %v3051, 6
        %v3163 = vsel %vm791, %v3162, %v3161
        %v3164 = vrot.slane %v3052, 5
        %v3165 = vsel %vm794, %v3164, %v3163
        %v3167 = vmul.f32 %v876, %v3165
        %v3168 = vadd.f32 %v3153, %v3167
        %3170 = vset.pattern.permute.xlu0 0
        %3171 = vperm.xlu0 %3170, %v3068
        %v3172 = vpop.permute.xlu0 %3171
        %v3178 = vrot.slane %v3046, 7
        %v3179 = vsel %vm788, %v3178, %v3045
        %v3180 = vrot.slane %v3047, 6
        %v3181 = vsel %vm791, %v3180, %v3179
        %v3182 = vrot.slane %v3048, 5
        %v3183 = vsel %vm794, %v3182, %v3181
        %v3184 = vsel %vm800, %v3183, 0
        %3186 = vmatprep.subr.mxu0 0.0
        %3187 = vmatpush1.msra.mxu0 %v3184
        %3188 = vmatprep.subr.mxu0 0.0
        %3189 = vmatpush1.msra.mxu0 0.0
        %3190 = vmatprep.subr.mxu0 0.0
        %3191 = vmatpush1.msra.mxu0 0.0
        %3192 = vmatprep.subr.mxu0 0.0
        %3193 = vmatpush1.msra.mxu0 0.0
        %3194 = vmatprep.subr.mxu0 0.0
        %3195 = vmatpush1.msra.mxu0 0.0
        %3196 = vmatprep.subr.mxu0 0.0
        %3197 = vmatpush1.msra.mxu0 0.0
        %3198 = vmatprep.subr.mxu0 0.0
        %3199 = vmatpush1.msra.mxu0 0.0
        %3200 = vmatprep.subr.mxu0 0.0
        %3201 = vmatpush1.msra.mxu0 0.0
        %3202 = vmatprep.subr.mxu0 0.0
        %3203 = vmatpush1.msra.mxu0 0.0
        %3204 = vmatprep.subr.mxu0 0.0
        %3205 = vmatpush1.msra.mxu0 0.0
        %3206 = vmatprep.subr.mxu0 0.0
        %3207 = vmatpush1.msra.mxu0 0.0
        %3208 = vmatprep.subr.mxu0 0.0
        %3209 = vmatpush1.msra.mxu0 0.0
        %3210 = vmatprep.subr.mxu0 0.0
        %3211 = vmatpush1.msra.mxu0 0.0
        %3212 = vmatprep.subr.mxu0 0.0
        %3213 = vmatpush1.msra.mxu0 0.0
        %3214 = vmatprep.subr.mxu0 0.0
        %3215 = vmatpush1.msra.mxu0 0.0
        %3216 = vmatprep.subr.mxu0 0.0
        %3217 = vmatpush1.msra.mxu0 0.0
        %3218 = vmatprep.subr.mxu0 0.0
        %3219 = vmatpush1.msra.mxu0 0.0
        %3220 = vmatprep.subr.mxu0 0.0
        %3221 = vmatpush1.msra.mxu0 0.0
        %3222 = vmatprep.subr.mxu0 0.0
        %3223 = vmatpush1.msra.mxu0 0.0
        %3224 = vmatprep.subr.mxu0 0.0
        %3225 = vmatpush1.msra.mxu0 0.0
        %3226 = vmatprep.subr.mxu0 0.0
        %3227 = vmatpush1.msra.mxu0 0.0
        %3228 = vmatprep.subr.mxu0 0.0
        %3229 = vmatpush1.msra.mxu0 0.0
        %3230 = vmatprep.subr.mxu0 0.0
        %3231 = vmatpush1.msra.mxu0 0.0
        %3232 = vmatprep.subr.mxu0 0.0
        %3233 = vmatpush1.msra.mxu0 0.0
        %3234 = vmatprep.subr.mxu0 0.0
        %3235 = vmatpush1.msra.mxu0 0.0
        %3236 = vmatprep.subr.mxu0 0.0
        %3237 = vmatpush1.msra.mxu0 0.0
        %3238 = vmatprep.subr.mxu0 0.0
        %3239 = vmatpush1.msra.mxu0 0.0
        %3240 = vmatprep.subr.mxu0 0.0
        %3241 = vmatpush1.msra.mxu0 0.0
        %3242 = vmatprep.subr.mxu0 0.0
        %3243 = vmatpush1.msra.mxu0 0.0
        %3244 = vmatprep.subr.mxu0 0.0
        %3245 = vmatpush1.msra.mxu0 0.0
        %3246 = vmatprep.subr.mxu0 0.0
        %3247 = vmatpush1.msra.mxu0 0.0
        %3248 = vmatprep.subr.mxu0 0.0
        %3249 = vmatpush1.msra.mxu0 0.0
        %3250 = vmatprep.mubr.f32.mxu0 0.0
        %3251 = vmatmul.mubr.f32.gmra.mrb[0].mxu0 %v907
        %v3252 = vpop.f32.mrb[0].mxu0
        %v3253 = vadd.f32 %v3172, %v3252
        %v3254 = vpop.f32.mrb[0].mxu0
        %3255 = vdwg.mxu0
        %v3260 = vrot.slane %v3054, 7
        %v3261 = vsel %vm788, %v3260, %v3053
        %v3262 = vrot.slane %v3055, 6
        %v3263 = vsel %vm791, %v3262, %v3261
        %v3264 = vrot.slane %v3056, 5
        %v3265 = vsel %vm794, %v3264, %v3263
        %v3267 = vmul.f32 %v876, %v3265
        %v3268 = vadd.f32 %v3253, %v3267
        %3269 = vxpose.xlu0.b32.start [1/16] %v3168, 128
        %3270 = vxpose.xlu0.b32.cont [2/16] 0.0, 128
        %3271 = vxpose.xlu0.b32.cont [3/16] 0.0, 128
        %3272 = vxpose.xlu0.b32.cont [4/16] 0.0, 128
        %3273 = vxpose.xlu0.b32.cont [5/16] 0.0, 128
        %3274 = vxpose.xlu0.b32.cont [6/16] 0.0, 128
        %3275 = vxpose.xlu0.b32.cont [7/16] 0.0, 128
        %3276 = vxpose.xlu0.b32.cont [8/16] 0.0, 128
        %3277 = vxpose.xlu0.b32.cont [9/16] 0.0, 128
        %3278 = vxpose.xlu0.b32.cont [10/16] 0.0, 128
        %3279 = vxpose.xlu0.b32.cont [11/16] 0.0, 128
        %3280 = vxpose.xlu0.b32.cont [12/16] 0.0, 128
        %3281 = vxpose.xlu0.b32.cont [13/16] 0.0, 128
        %3282 = vxpose.xlu0.b32.cont [14/16] 0.0, 128
        %3283 = vxpose.xlu0.b32.cont [15/16] 0.0, 128
        %3284 = vxpose.xlu0.b32.end [16/16] 0.0, 128
        %v3285 = vpop.trf.xlu0
        %v3286 = vpop.trf.xlu0
        %v3287 = vpop.trf.xlu0
        %v3288 = vpop.trf.xlu0
        %v3289 = vpop.trf.xlu0
        %v3290 = vpop.trf.xlu0
        %v3291 = vpop.trf.xlu0
        %v3292 = vpop.trf.xlu0
        %v3293 = vpop.trf.xlu0
        %v3294 = vpop.trf.xlu0
        %v3295 = vpop.trf.xlu0
        %v3296 = vpop.trf.xlu0
        %v3297 = vpop.trf.xlu0
        %v3298 = vpop.trf.xlu0
        %v3299 = vpop.trf.xlu0
        %v3300 = vpop.trf.xlu0
        %v3302 = vsel %vm796, %v3285, 0
        %v3305 = vsel %vm796, %v3286, 0
        %v3308 = vsel %vm800, %v3268, 0
        %3310 = vmatprep.subr.mxu0 0.0
        %3311 = vmatpush1.msra.mxu0 %v3308
        %3312 = vmatprep.subr.mxu0 0.0
        %3313 = vmatpush1.msra.mxu0 0.0
        %3314 = vmatprep.subr.mxu0 0.0
        %3315 = vmatpush1.msra.mxu0 0.0
        %3316 = vmatprep.subr.mxu0 0.0
        %3317 = vmatpush1.msra.mxu0 0.0
        %3318 = vmatprep.subr.mxu0 0.0
        %3319 = vmatpush1.msra.mxu0 0.0
        %3320 = vmatprep.subr.mxu0 0.0
        %3321 = vmatpush1.msra.mxu0 0.0
        %3322 = vmatprep.subr.mxu0 0.0
        %3323 = vmatpush1.msra.mxu0 0.0
        %3324 = vmatprep.subr.mxu0 0.0
        %3325 = vmatpush1.msra.mxu0 0.0
        %3326 = vmatprep.subr.mxu0 0.0
        %3327 = vmatpush1.msra.mxu0 0.0
        %3328 = vmatprep.subr.mxu0 0.0
        %3329 = vmatpush1.msra.mxu0 0.0
        %3330 = vmatprep.subr.mxu0 0.0
        %3331 = vmatpush1.msra.mxu0 0.0
        %3332 = vmatprep.subr.mxu0 0.0
        %3333 = vmatpush1.msra.mxu0 0.0
        %3334 = vmatprep.subr.mxu0 0.0
        %3335 = vmatpush1.msra.mxu0 0.0
        %3336 = vmatprep.subr.mxu0 0.0
        %3337 = vmatpush1.msra.mxu0 0.0
        %3338 = vmatprep.subr.mxu0 0.0
        %3339 = vmatpush1.msra.mxu0 0.0
        %3340 = vmatprep.subr.mxu0 0.0
        %3341 = vmatpush1.msra.mxu0 0.0
        %3342 = vmatprep.subr.mxu0 0.0
        %3343 = vmatpush1.msra.mxu0 0.0
        %3344 = vmatprep.subr.mxu0 0.0
        %3345 = vmatpush1.msra.mxu0 0.0
        %3346 = vmatprep.subr.mxu0 0.0
        %3347 = vmatpush1.msra.mxu0 0.0
        %3348 = vmatprep.subr.mxu0 0.0
        %3349 = vmatpush1.msra.mxu0 0.0
        %3350 = vmatprep.subr.mxu0 0.0
        %3351 = vmatpush1.msra.mxu0 0.0
        %3352 = vmatprep.subr.mxu0 0.0
        %3353 = vmatpush1.msra.mxu0 0.0
        %3354 = vmatprep.subr.mxu0 0.0
        %3355 = vmatpush1.msra.mxu0 0.0
        %3356 = vmatprep.subr.mxu0 0.0
        %3357 = vmatpush1.msra.mxu0 0.0
        %3358 = vmatprep.subr.mxu0 0.0
        %3359 = vmatpush1.msra.mxu0 0.0
        %3360 = vmatprep.subr.mxu0 0.0
        %3361 = vmatpush1.msra.mxu0 0.0
        %3362 = vmatprep.subr.mxu0 0.0
        %3363 = vmatpush1.msra.mxu0 0.0
        %3364 = vmatprep.subr.mxu0 0.0
        %3365 = vmatpush1.msra.mxu0 0.0
        %3366 = vmatprep.subr.mxu0 0.0
        %3367 = vmatpush1.msra.mxu0 0.0
        %3368 = vmatprep.subr.mxu0 0.0
        %3369 = vmatpush1.msra.mxu0 0.0
        %3370 = vmatprep.subr.mxu0 0.0
        %3371 = vmatpush1.msra.mxu0 0.0
        %3372 = vmatprep.subr.mxu0 0.0
        %3373 = vmatpush1.msra.mxu0 0.0
        %3374 = vmatprep.mubr.f32.mxu0 0.0
        %3375 = vmatmul.mubr.f32.gmra.mrb[0].mxu0 %v3302
        %v3376 = vpop.f32.mrb[0].mxu0
        %v3377 = vadd.f32 0.0, %v3376
        %v3378 = vpop.f32.mrb[0].mxu0
        %3379 = vmatprep.mubr.f32.mxu0 0.0
        %3380 = vmatmul.mubr.f32.gmra.mrb[0].mxu0 %v3305
        %v3381 = vpop.f32.mrb[0].mxu0
        %v3382 = vadd.f32 0.0, %v3381
        %v3383 = vpop.f32.mrb[0].mxu0
        %3384 = vdwg.mxu0
        %v3385 = vmul.f32 %v3377, 0.5
        %v3386 = vmul.f32 %v3382, 0.5
        %v3387 = vsel %vm747, %v3385, -65504.0
        %v3388 = vsel %vm748, %v3386, -65504.0
        %v3389 = vsel %vm1114, %v3387, -inf
        %3390 = vmax.xlane.f32.xlu0 %v3389
        %v3391 = vpop.xlane.xlu0 %3390
        %v3392 = vsel %vm1114, %v3388, -inf
        %3393 = vmax.xlane.f32.xlu0 %v3392
        %v3394 = vpop.xlane.xlu0 %3393
        %v3395 = vsub.f32 %v3387, %v3391
        %v3396 = vsub.f32 %v3388, %v3394
        %v3397 = vmul.f32 %v3395, 1.442695
        %v3398 = vpow.pop %v3397
        %v3399 = vmul.f32 %v3396, 1.442695
        %v3400 = vpow.pop %v3399
        %v3401 = vsel %vm1114, %v3398, 0.0
        %3402 = vadd.xlane.f32.xlu0 %v3401
        %v3403 = vpop.xlane.xlu0 %3402
        %v3404 = vsel %vm1114, %v3400, 0.0
        %3405 = vadd.xlane.f32.xlu0 %v3404
        %v3406 = vpop.xlane.xlu0 %3405
        %v3407 = vrcp.pop %v3403
        %v3408 = vrcp.pop %v3406
        %v3409 = vmul.f32 %v3398, %v3407
        %v3410 = vmul.f32 %v3400, %v3408
        %v3411 = vmax.f32 %v3389, %v3392
        %v3412 = vrot.slane %v3411, 4
        %v3413 = vmax.f32 %v3411, %v3412
        %v3414 = vrot.slane %v3413, 2
        %v3415 = vmax.f32 %v3413, %v3414
        %v3416 = vrot.slane %v3415, 1
        %v3417 = vmax.f32 %v3415, %v3416
        %v3418 = vsub.f32 %v3387, %v3417
        %v3419 = vsub.f32 %v3388, %v3417
        %v3420 = vmul.f32 %v3418, 1.442695
        %v3421 = vpow.pop %v3420
        %v3422 = vmul.f32 %v3419, 1.442695
        %v3423 = vpow.pop %v3422
        %v3424 = vsel %vm1114, %v3421, 0.0
        %v3425 = vsel %vm1114, %v3423, 0.0
        %v3426 = vadd.f32 %v3424, %v3425
        %v3427 = vrot.slane %v3426, 4
        %v3428 = vadd.f32 %v3426, %v3427
        %v3429 = vrot.slane %v3428, 2
        %v3430 = vadd.f32 %v3428, %v3429
        %v3431 = vrot.slane %v3430, 1
        %v3432 = vadd.f32 %v3430, %v3431
        %v3433 = vrcp.pop %v3432
        %v3434 = vmul.f32 %v3421, %v3433
        %v3435 = vmul.f32 %v3423, %v3433
        %3436 = vmatprep.subr.mxu0 0.0
        %3437 = vmatpush1.msra.mxu0 %v3184
        %3438 = vmatprep.subr.mxu0 0.0
        %3439 = vmatpush1.msra.mxu0 0.0
        %3440 = vmatprep.subr.mxu0 0.0
        %3441 = vmatpush1.msra.mxu0 0.0
        %3442 = vmatprep.subr.mxu0 0.0
        %3443 = vmatpush1.msra.mxu0 0.0
        %3444 = vmatprep.subr.mxu0 0.0
        %3445 = vmatpush1.msra.mxu0 0.0
        %3446 = vmatprep.subr.mxu0 0.0
        %3447 = vmatpush1.msra.mxu0 0.0
        %3448 = vmatprep.subr.mxu0 0.0
        %3449 = vmatpush1.msra.mxu0 0.0
        %3450 = vmatprep.subr.mxu0 0.0
        %3451 = vmatpush1.msra.mxu0 0.0
        %3452 = vmatprep.subr.mxu0 0.0
        %3453 = vmatpush1.msra.mxu0 0.0
        %3454 = vmatprep.subr.mxu0 0.0
        %3455 = vmatpush1.msra.mxu0 0.0
        %3456 = vmatprep.subr.mxu0 0.0
        %3457 = vmatpush1.msra.mxu0 0.0
        %3458 = vmatprep.subr.mxu0 0.0
        %3459 = vmatpush1.msra.mxu0 0.0
        %3460 = vmatprep.subr.mxu0 0.0
        %3461 = vmatpush1.msra.mxu0 0.0
        %3462 = vmatprep.subr.mxu0 0.0
        %3463 = vmatpush1.msra.mxu0 0.0
        %3464 = vmatprep.subr.mxu0 0.0
        %3465 = vmatpush1.msra.mxu0 0.0
        %3466 = vmatprep.subr.mxu0 0.0
        %3467 = vmatpush1.msra.mxu0 0.0
        %3468 = vmatprep.subr.mxu0 0.0
        %3469 = vmatpush1.msra.mxu0 0.0
        %3470 = vmatprep.subr.mxu0 0.0
        %3471 = vmatpush1.msra.mxu0 0.0
        %3472 = vmatprep.subr.mxu0 0.0
        %3473 = vmatpush1.msra.mxu0 0.0
        %3474 = vmatprep.subr.mxu0 0.0
        %3475 = vmatpush1.msra.mxu0 0.0
        %3476 = vmatprep.subr.mxu0 0.0
        %3477 = vmatpush1.msra.mxu0 0.0
        %3478 = vmatprep.subr.mxu0 0.0
        %3479 = vmatpush1.msra.mxu0 0.0
        %3480 = vmatprep.subr.mxu0 0.0
        %3481 = vmatpush1.msra.mxu0 0.0
        %3482 = vmatprep.subr.mxu0 0.0
        %3483 = vmatpush1.msra.mxu0 0.0
        %3484 = vmatprep.subr.mxu0 0.0
        %3485 = vmatpush1.msra.mxu0 0.0
        %3486 = vmatprep.subr.mxu0 0.0
        %3487 = vmatpush1.msra.mxu0 0.0
        %3488 = vmatprep.subr.mxu0 0.0
        %3489 = vmatpush1.msra.mxu0 0.0
        %3490 = vmatprep.subr.mxu0 0.0
        %3491 = vmatpush1.msra.mxu0 0.0
        %3492 = vmatprep.subr.mxu0 0.0
        %3493 = vmatpush1.msra.mxu0 0.0
        %3494 = vmatprep.subr.mxu0 0.0
        %3495 = vmatpush1.msra.mxu0 0.0
        %3496 = vmatprep.subr.mxu0 0.0
        %3497 = vmatpush1.msra.mxu0 0.0
        %3498 = vmatprep.subr.mxu0 0.0
        %3499 = vmatpush1.msra.mxu0 0.0
        %3500 = vmatprep.mubr.f32.mxu0 0.0
        %3501 = vmatmul.mubr.f32.gmra.mrb[0].mxu0 %v1168
        %v3502 = vpop.f32.mrb[0].mxu0
        %v3503 = vadd.f32 %v1165, %v3502
        %v3504 = vpop.f32.mrb[0].mxu0
        %3505 = vdwg.mxu0
        %v3510 = vrot.slane %v3062, 7
        %v3511 = vsel %vm788, %v3510, %v3061
        %v3512 = vrot.slane %v3063, 6
        %v3513 = vsel %vm791, %v3512, %v3511
        %v3514 = vrot.slane %v3064, 5
        %v3515 = vsel %vm794, %v3514, %v3513
        %v3517 = vmul.f32 %v1243, %v3515
        %v3518 = vadd.f32 %v3503, %v3517
        %3519 = vmatprep.subr.mxu0 0.0
        %3520 = vmatpush1.msra.mxu0 %v3084
        %3521 = vmatprep.subr.mxu0 0.0
        %3522 = vmatpush1.msra.mxu0 0.0
        %3523 = vmatprep.subr.mxu0 0.0
        %3524 = vmatpush1.msra.mxu0 0.0
        %3525 = vmatprep.subr.mxu0 0.0
        %3526 = vmatpush1.msra.mxu0 0.0
        %3527 = vmatprep.subr.mxu0 0.0
        %3528 = vmatpush1.msra.mxu0 0.0
        %3529 = vmatprep.subr.mxu0 0.0
        %3530 = vmatpush1.msra.mxu0 0.0
        %3531 = vmatprep.subr.mxu0 0.0
        %3532 = vmatpush1.msra.mxu0 0.0
        %3533 = vmatprep.subr.mxu0 0.0
        %3534 = vmatpush1.msra.mxu0 0.0
        %3535 = vmatprep.subr.mxu0 0.0
        %3536 = vmatpush1.msra.mxu0 0.0
        %3537 = vmatprep.subr.mxu0 0.0
        %3538 = vmatpush1.msra.mxu0 0.0
        %3539 = vmatprep.subr.mxu0 0.0
        %3540 = vmatpush1.msra.mxu0 0.0
        %3541 = vmatprep.subr.mxu0 0.0
        %3542 = vmatpush1.msra.mxu0 0.0
        %3543 = vmatprep.subr.mxu0 0.0
        %3544 = vmatpush1.msra.mxu0 0.0
        %3545 = vmatprep.subr.mxu0 0.0
        %3546 = vmatpush1.msra.mxu0 0.0
        %3547 = vmatprep.subr.mxu0 0.0
        %3548 = vmatpush1.msra.mxu0 0.0
        %3549 = vmatprep.subr.mxu0 0.0
        %3550 = vmatpush1.msra.mxu0 0.0
        %3551 = vmatprep.subr.mxu0 0.0
        %3552 = vmatpush1.msra.mxu0 0.0
        %3553 = vmatprep.subr.mxu0 0.0
        %3554 = vmatpush1.msra.mxu0 0.0
        %3555 = vmatprep.subr.mxu0 0.0
        %3556 = vmatpush1.msra.mxu0 0.0
        %3557 = vmatprep.subr.mxu0 0.0
        %3558 = vmatpush1.msra.mxu0 0.0
        %3559 = vmatprep.subr.mxu0 0.0
        %3560 = vmatpush1.msra.mxu0 0.0
        %3561 = vmatprep.subr.mxu0 0.0
        %3562 = vmatpush1.msra.mxu0 0.0
        %3563 = vmatprep.subr.mxu0 0.0
        %3564 = vmatpush1.msra.mxu0 0.0
        %3565 = vmatprep.subr.mxu0 0.0
        %3566 = vmatpush1.msra.mxu0 0.0
        %3567 = vmatprep.subr.mxu0 0.0
        %3568 = vmatpush1.msra.mxu0 0.0
        %3569 = vmatprep.subr.mxu0 0.0
        %3570 = vmatpush1.msra.mxu0 0.0
        %3571 = vmatprep.subr.mxu0 0.0
        %3572 = vmatpush1.msra.mxu0 0.0
        %3573 = vmatprep.subr.mxu0 0.0
        %3574 = vmatpush1.msra.mxu0 0.0
        %3575 = vmatprep.subr.mxu0 0.0
        %3576 = vmatpush1.msra.mxu0 0.0
        %3577 = vmatprep.subr.mxu0 0.0
        %3578 = vmatpush1.msra.mxu0 0.0
        %3579 = vmatprep.subr.mxu0 0.0
        %3580 = vmatpush1.msra.mxu0 0.0
        %3581 = vmatprep.subr.mxu0 0.0
        %3582 = vmatpush1.msra.mxu0 0.0
        %3583 = vmatprep.mubr.f32.mxu0 0.0
        %3584 = vmatmul.mubr.f32.gmra.mrb[0].mxu0 %v1264
        %v3585 = vpop.f32.mrb[0].mxu0
        %v3586 = vadd.f32 %v1261, %v3585
        %v3587 = vpop.f32.mrb[0].mxu0
        %3588 = vdwg.mxu0
        %v3593 = vrot.slane %v3058, 7
        %v3594 = vsel %vm788, %v3593, %v3057
        %v3595 = vrot.slane %v3059, 6
        %v3596 = vsel %vm791, %v3595, %v3594
        %v3597 = vrot.slane %v3060, 5
        %v3598 = vsel %vm794, %v3597, %v3596
        %v3600 = vmul.f32 %v1243, %v3598
        %v3601 = vadd.f32 %v3586, %v3600
        %v3603 = vsel %vm1114, %v3518, 0
        %v3606 = vsel %vm1114, %v3409, 0
        %v3609 = vsel %vm1114, %v3410, 0
        %3611 = vmatprep.subr.mxu0 0.0
        %3612 = vmatpush1.xpose.msra.mxu0 %v3606
        %3613 = vmatprep.subr.mxu0 0.0
        %3614 = vmatpush1.xpose.msra.mxu0 %v3609
        %3615 = vmatprep.subr.mxu0 0.0
        %3616 = vmatpush1.xpose.msra.mxu0 0.0
        %3617 = vmatprep.subr.mxu0 0.0
        %3618 = vmatpush1.xpose.msra.mxu0 0.0
        %3619 = vmatprep.subr.mxu0 0.0
        %3620 = vmatpush1.xpose.msra.mxu0 0.0
        %3621 = vmatprep.subr.mxu0 0.0
        %3622 = vmatpush1.xpose.msra.mxu0 0.0
        %3623 = vmatprep.subr.mxu0 0.0
        %3624 = vmatpush1.xpose.msra.mxu0 0.0
        %3625 = vmatprep.subr.mxu0 0.0
        %3626 = vmatpush1.xpose.msra.mxu0 0.0
        %3627 = vmatprep.subr.mxu0 0.0
        %3628 = vmatpush1.xpose.msra.mxu0 0.0
        %3629 = vmatprep.subr.mxu0 0.0
        %3630 = vmatpush1.xpose.msra.mxu0 0.0
        %3631 = vmatprep.subr.mxu0 0.0
        %3632 = vmatpush1.xpose.msra.mxu0 0.0
        %3633 = vmatprep.subr.mxu0 0.0
        %3634 = vmatpush1.xpose.msra.mxu0 0.0
        %3635 = vmatprep.subr.mxu0 0.0
        %3636 = vmatpush1.xpose.msra.mxu0 0.0
        %3637 = vmatprep.subr.mxu0 0.0
        %3638 = vmatpush1.xpose.msra.mxu0 0.0
        %3639 = vmatprep.subr.mxu0 0.0
        %3640 = vmatpush1.xpose.msra.mxu0 0.0
        %3641 = vmatprep.subr.mxu0 0.0
        %3642 = vmatpush1.xpose.msra.mxu0 0.0
        %3643 = vmatprep.subr.mxu0 0.0
        %3644 = vmatpush1.xpose.msra.mxu0 0.0
        %3645 = vmatprep.subr.mxu0 0.0
        %3646 = vmatpush1.xpose.msra.mxu0 0.0
        %3647 = vmatprep.subr.mxu0 0.0
        %3648 = vmatpush1.xpose.msra.mxu0 0.0
        %3649 = vmatprep.subr.mxu0 0.0
        %3650 = vmatpush1.xpose.msra.mxu0 0.0
        %3651 = vmatprep.subr.mxu0 0.0
        %3652 = vmatpush1.xpose.msra.mxu0 0.0
        %3653 = vmatprep.subr.mxu0 0.0
        %3654 = vmatpush1.xpose.msra.mxu0 0.0
        %3655 = vmatprep.subr.mxu0 0.0
        %3656 = vmatpush1.xpose.msra.mxu0 0.0
        %3657 = vmatprep.subr.mxu0 0.0
        %3658 = vmatpush1.xpose.msra.mxu0 0.0
        %3659 = vmatprep.subr.mxu0 0.0
        %3660 = vmatpush1.xpose.msra.mxu0 0.0
        %3661 = vmatprep.subr.mxu0 0.0
        %3662 = vmatpush1.xpose.msra.mxu0 0.0
        %3663 = vmatprep.subr.mxu0 0.0
        %3664 = vmatpush1.xpose.msra.mxu0 0.0
        %3665 = vmatprep.subr.mxu0 0.0
        %3666 = vmatpush1.xpose.msra.mxu0 0.0
        %3667 = vmatprep.subr.mxu0 0.0
        %3668 = vmatpush1.xpose.msra.mxu0 0.0
        %3669 = vmatprep.subr.mxu0 0.0
        %3670 = vmatpush1.xpose.msra.mxu0 0.0
        %3671 = vmatprep.subr.mxu0 0.0
        %3672 = vmatpush1.xpose.msra.mxu0 0.0
        %3673 = vmatprep.subr.mxu0 0.0
        %3674 = vmatpush1.xpose.msra.mxu0 0.0
        %3675 = vmatprep.mubr.f32.mxu0 0.0
        %3676 = vmatmul.mubr.f32.gmra.mrb[0].mxu0 %v3603
        %v3677 = vpop.f32.mrb[0].mxu0
        %v3678 = vadd.f32 0.0, %v3677
        %v3679 = vpop.f32.mrb[0].mxu0
        %3680 = vdwg.mxu0
        %v3682 = vsel %vm1114, %v3601, 0
        %3684 = vmatprep.subr.mxu0 0.0
        %3685 = vmatpush1.msra.mxu0 %v3434
        %3686 = vmatprep.subr.mxu0 0.0
        %3687 = vmatpush1.msra.mxu0 %v3435
        %3688 = vmatprep.subr.mxu0 0.0
        %3689 = vmatpush1.msra.mxu0 0.0
        %3690 = vmatprep.subr.mxu0 0.0
        %3691 = vmatpush1.msra.mxu0 0.0
        %3692 = vmatprep.subr.mxu0 0.0
        %3693 = vmatpush1.msra.mxu0 0.0
        %3694 = vmatprep.subr.mxu0 0.0
        %3695 = vmatpush1.msra.mxu0 0.0
        %3696 = vmatprep.subr.mxu0 0.0
        %3697 = vmatpush1.msra.mxu0 0.0
        %3698 = vmatprep.subr.mxu0 0.0
        %3699 = vmatpush1.msra.mxu0 0.0
        %3700 = vmatprep.subr.mxu0 0.0
        %3701 = vmatpush1.msra.mxu0 0.0
        %3702 = vmatprep.subr.mxu0 0.0
        %3703 = vmatpush1.msra.mxu0 0.0
        %3704 = vmatprep.subr.mxu0 0.0
        %3705 = vmatpush1.msra.mxu0 0.0
        %3706 = vmatprep.subr.mxu0 0.0
        %3707 = vmatpush1.msra.mxu0 0.0
        %3708 = vmatprep.subr.mxu0 0.0
        %3709 = vmatpush1.msra.mxu0 0.0
        %3710 = vmatprep.subr.mxu0 0.0
        %3711 = vmatpush1.msra.mxu0 0.0
        %3712 = vmatprep.subr.mxu0 0.0
        %3713 = vmatpush1.msra.mxu0 0.0
        %3714 = vmatprep.subr.mxu0 0.0
        %3715 = vmatpush1.msra.mxu0 0.0
        %3716 = vmatprep.subr.mxu0 0.0
        %3717 = vmatpush1.msra.mxu0 0.0
        %3718 = vmatprep.subr.mxu0 0.0
        %3719 = vmatpush1.msra.mxu0 0.0
        %3720 = vmatprep.subr.mxu0 0.0
        %3721 = vmatpush1.msra.mxu0 0.0
        %3722 = vmatprep.subr.mxu0 0.0
        %3723 = vmatpush1.msra.mxu0 0.0
        %3724 = vmatprep.subr.mxu0 0.0
        %3725 = vmatpush1.msra.mxu0 0.0
        %3726 = vmatprep.subr.mxu0 0.0
        %3727 = vmatpush1.msra.mxu0 0.0
        %3728 = vmatprep.subr.mxu0 0.0
        %3729 = vmatpush1.msra.mxu0 0.0
        %3730 = vmatprep.subr.mxu0 0.0
        %3731 = vmatpush1.msra.mxu0 0.0
        %3732 = vmatprep.subr.mxu0 0.0
        %3733 = vmatpush1.msra.mxu0 0.0
        %3734 = vmatprep.subr.mxu0 0.0
        %3735 = vmatpush1.msra.mxu0 0.0
        %3736 = vmatprep.subr.mxu0 0.0
        %3737 = vmatpush1.msra.mxu0 0.0
        %3738 = vmatprep.subr.mxu0 0.0
        %3739 = vmatpush1.msra.mxu0 0.0
        %3740 = vmatprep.subr.mxu0 0.0
        %3741 = vmatpush1.msra.mxu0 0.0
        %3742 = vmatprep.subr.mxu0 0.0
        %3743 = vmatpush1.msra.mxu0 0.0
        %3744 = vmatprep.subr.mxu0 0.0
        %3745 = vmatpush1.msra.mxu0 0.0
        %3746 = vmatprep.subr.mxu0 0.0
        %3747 = vmatpush1.msra.mxu0 0.0
        %3748 = vmatprep.mubr.f32.mxu0 0.0
        %3749 = vmatmul.mubr.f32.gmra.mrb[0].mxu0 %v3682
        %v3750 = vpop.f32.mrb[0].mxu0
        %v3751 = vadd.f32 0.0, %v3750
        %v3752 = vpop.f32.mrb[0].mxu0
        %3753 = vdwg.mxu0
        %v3754 = vmul.f32 %v1504, %v3678
        %v3756 = vrot.slane %v3754, 1
        %v3757 = vrot.slane %v3754, 2
        %v3758 = vrot.slane %v3754, 3
        %v3763 = vadd.f32 %v3041, %v3754
        %v3764 = vadd.f32 %v3042, %v3756
        %v3765 = vadd.f32 %v3043, %v3757
        %v3766 = vadd.f32 %v3044, %v3758
        %3767 = vst.msk [vmem:[%s719 + $0x3] sm:$0x1] %vm1519, %v3763
        %3768 = vst.msk [vmem:[%s719 + $0xb] sm:$0x1] %vm1519, %v3764
        %3769 = vst.msk [vmem:[%s719 + $0x13] sm:$0x1] %vm1519, %v3765
        %3770 = vst.msk [vmem:[%s719 + $0x1b] sm:$0x1] %vm1519, %v3766
        %v3771 = vmul.f32 %v1527, %v3751
        %v3773 = vrot.slane %v3771, 1
        %v3774 = vrot.slane %v3771, 2
        %v3775 = vrot.slane %v3771, 3
        %v3780 = vadd.f32 %v3045, %v3771
        %v3781 = vadd.f32 %v3046, %v3773
        %v3782 = vadd.f32 %v3047, %v3774
        %v3783 = vadd.f32 %v3048, %v3775
        %3784 = vst.msk [vmem:[%s1542 + $0x3] sm:$0x1] %vm1519, %v3780
        %3785 = vst.msk [vmem:[%s1542 + $0xb] sm:$0x1] %vm1519, %v3781
        %3786 = vst.msk [vmem:[%s1542 + $0x13] sm:$0x1] %vm1519, %v3782
        %3787 = vst.msk [vmem:[%s1542 + $0x1b] sm:$0x1] %vm1519, %v3783
        %v3788 = vld [vmem:[%s635 + $0x4] sm:$0x1]
        %v3789 = vld [vmem:[%s635 + $0xc] sm:$0x1]
        %v3790 = vld [vmem:[%s635 + $0x14] sm:$0x1]
        %v3791 = vld [vmem:[%s635 + $0x1c] sm:$0x1]
        %v3792 = vld [vmem:[%s753 + $0x4] sm:$0x1]
        %v3793 = vld [vmem:[%s753 + $0xc] sm:$0x1]
        %v3794 = vld [vmem:[%s753 + $0x14] sm:$0x1]
        %v3795 = vld [vmem:[%s753 + $0x1c] sm:$0x1]
        %v3796 = vld [vmem:[%s644 + $0x4] sm:$0x1]
        %v3797 = vld [vmem:[%s644 + $0xc] sm:$0x1]
        %v3798 = vld [vmem:[%s644 + $0x14] sm:$0x1]
        %v3799 = vld [vmem:[%s644 + $0x1c] sm:$0x1]
        %v3800 = vld [vmem:[%s762 + $0x4] sm:$0x1]
        %v3801 = vld [vmem:[%s762 + $0xc] sm:$0x1]
        %v3802 = vld [vmem:[%s762 + $0x14] sm:$0x1]
        %v3803 = vld [vmem:[%s762 + $0x1c] sm:$0x1]
        %v3804 = vld [vmem:[%s653 + $0x4] sm:$0x1]
        %v3805 = vld [vmem:[%s653 + $0xc] sm:$0x1]
        %v3806 = vld [vmem:[%s653 + $0x14] sm:$0x1]
        %v3807 = vld [vmem:[%s653 + $0x1c] sm:$0x1]
        %v3808 = vld [vmem:[%s771 + $0x4] sm:$0x1]
        %v3809 = vld [vmem:[%s771 + $0xc] sm:$0x1]
        %v3810 = vld [vmem:[%s771 + $0x14] sm:$0x1]
        %v3811 = vld [vmem:[%s771 + $0x1c] sm:$0x1]
        %s3812 = scalar_lea.vmem %s724, 16
        %v3813 = vld [vmem:[%s3812] sm:$0xf]
        %s3814 = scalar_lea.vmem %s730, 16
        %v3815 = vld [vmem:[%s3814] sm:$0xf]
        %3817 = vset.pattern.permute.xlu0 0
        %3818 = vperm.xlu0 %3817, %v3813
        %v3819 = vpop.permute.xlu0 %3818
        %v3825 = vrot.slane %v3789, 7
        %v3826 = vsel %vm788, %v3825, %v3788
        %v3827 = vrot.slane %v3790, 6
        %v3828 = vsel %vm791, %v3827, %v3826
        %v3829 = vrot.slane %v3791, 5
        %v3830 = vsel %vm794, %v3829, %v3828
        %v3831 = vsel %vm800, %v3830, 0
        %3833 = vmatprep.subr.mxu0 0.0
        %3834 = vmatpush1.msra.mxu0 %v3831
        %3835 = vmatprep.subr.mxu0 0.0
        %3836 = vmatpush1.msra.mxu0 0.0
        %3837 = vmatprep.subr.mxu0 0.0
        %3838 = vmatpush1.msra.mxu0 0.0
        %3839 = vmatprep.subr.mxu0 0.0
        %3840 = vmatpush1.msra.mxu0 0.0
        %3841 = vmatprep.subr.mxu0 0.0
        %3842 = vmatpush1.msra.mxu0 0.0
        %3843 = vmatprep.subr.mxu0 0.0
        %3844 = vmatpush1.msra.mxu0 0.0
        %3845 = vmatprep.subr.mxu0 0.0
        %3846 = vmatpush1.msra.mxu0 0.0
        %3847 = vmatprep.subr.mxu0 0.0
        %3848 = vmatpush1.msra.mxu0 0.0
        %3849 = vmatprep.subr.mxu0 0.0
        %3850 = vmatpush1.msra.mxu0 0.0
        %3851 = vmatprep.subr.mxu0 0.0
        %3852 = vmatpush1.msra.mxu0 0.0
        %3853 = vmatprep.subr.mxu0 0.0
        %3854 = vmatpush1.msra.mxu0 0.0
        %3855 = vmatprep.subr.mxu0 0.0
        %3856 = vmatpush1.msra.mxu0 0.0
        %3857 = vmatprep.subr.mxu0 0.0
        %3858 = vmatpush1.msra.mxu0 0.0
        %3859 = vmatprep.subr.mxu0 0.0
        %3860 = vmatpush1.msra.mxu0 0.0
        %3861 = vmatprep.subr.mxu0 0.0
        %3862 = vmatpush1.msra.mxu0 0.0
        %3863 = vmatprep.subr.mxu0 0.0
        %3864 = vmatpush1.msra.mxu0 0.0
        %3865 = vmatprep.subr.mxu0 0.0
        %3866 = vmatpush1.msra.mxu0 0.0
        %3867 = vmatprep.subr.mxu0 0.0
        %3868 = vmatpush1.msra.mxu0 0.0
        %3869 = vmatprep.subr.mxu0 0.0
        %3870 = vmatpush1.msra.mxu0 0.0
        %3871 = vmatprep.subr.mxu0 0.0
        %3872 = vmatpush1.msra.mxu0 0.0
        %3873 = vmatprep.subr.mxu0 0.0
        %3874 = vmatpush1.msra.mxu0 0.0
        %3875 = vmatprep.subr.mxu0 0.0
        %3876 = vmatpush1.msra.mxu0 0.0
        %3877 = vmatprep.subr.mxu0 0.0
        %3878 = vmatpush1.msra.mxu0 0.0
        %3879 = vmatprep.subr.mxu0 0.0
        %3880 = vmatpush1.msra.mxu0 0.0
        %3881 = vmatprep.subr.mxu0 0.0
        %3882 = vmatpush1.msra.mxu0 0.0
        %3883 = vmatprep.subr.mxu0 0.0
        %3884 = vmatpush1.msra.mxu0 0.0
        %3885 = vmatprep.subr.mxu0 0.0
        %3886 = vmatpush1.msra.mxu0 0.0
        %3887 = vmatprep.subr.mxu0 0.0
        %3888 = vmatpush1.msra.mxu0 0.0
        %3889 = vmatprep.subr.mxu0 0.0
        %3890 = vmatpush1.msra.mxu0 0.0
        %3891 = vmatprep.subr.mxu0 0.0
        %3892 = vmatpush1.msra.mxu0 0.0
        %3893 = vmatprep.subr.mxu0 0.0
        %3894 = vmatpush1.msra.mxu0 0.0
        %3895 = vmatprep.subr.mxu0 0.0
        %3896 = vmatpush1.msra.mxu0 0.0
        %3897 = vmatprep.mubr.f32.mxu0 0.0
        %3898 = vmatmul.mubr.f32.gmra.mrb[0].mxu0 %v798
        %v3899 = vpop.f32.mrb[0].mxu0
        %v3900 = vadd.f32 %v3819, %v3899
        %v3901 = vpop.f32.mrb[0].mxu0
        %3902 = vdwg.mxu0
        %v3907 = vrot.slane %v3797, 7
        %v3908 = vsel %vm788, %v3907, %v3796
        %v3909 = vrot.slane %v3798, 6
        %v3910 = vsel %vm791, %v3909, %v3908
        %v3911 = vrot.slane %v3799, 5
        %v3912 = vsel %vm794, %v3911, %v3910
        %v3914 = vmul.f32 %v876, %v3912
        %v3915 = vadd.f32 %v3900, %v3914
        %3917 = vset.pattern.permute.xlu0 0
        %3918 = vperm.xlu0 %3917, %v3815
        %v3919 = vpop.permute.xlu0 %3918
        %v3925 = vrot.slane %v3793, 7
        %v3926 = vsel %vm788, %v3925, %v3792
        %v3927 = vrot.slane %v3794, 6
        %v3928 = vsel %vm791, %v3927, %v3926
        %v3929 = vrot.slane %v3795, 5
        %v3930 = vsel %vm794, %v3929, %v3928
        %v3931 = vsel %vm800, %v3930, 0
        %3933 = vmatprep.subr.mxu0 0.0
        %3934 = vmatpush1.msra.mxu0 %v3931
        %3935 = vmatprep.subr.mxu0 0.0
        %3936 = vmatpush1.msra.mxu0 0.0
        %3937 = vmatprep.subr.mxu0 0.0
        %3938 = vmatpush1.msra.mxu0 0.0
        %3939 = vmatprep.subr.mxu0 0.0
        %3940 = vmatpush1.msra.mxu0 0.0
        %3941 = vmatprep.subr.mxu0 0.0
        %3942 = vmatpush1.msra.mxu0 0.0
        %3943 = vmatprep.subr.mxu0 0.0
        %3944 = vmatpush1.msra.mxu0 0.0
        %3945 = vmatprep.subr.mxu0 0.0
        %3946 = vmatpush1.msra.mxu0 0.0
        %3947 = vmatprep.subr.mxu0 0.0
        %3948 = vmatpush1.msra.mxu0 0.0
        %3949 = vmatprep.subr.mxu0 0.0
        %3950 = vmatpush1.msra.mxu0 0.0
        %3951 = vmatprep.subr.mxu0 0.0
        %3952 = vmatpush1.msra.mxu0 0.0
        %3953 = vmatprep.subr.mxu0 0.0
        %3954 = vmatpush1.msra.mxu0 0.0
        %3955 = vmatprep.subr.mxu0 0.0
        %3956 = vmatpush1.msra.mxu0 0.0
        %3957 = vmatprep.subr.mxu0 0.0
        %3958 = vmatpush1.msra.mxu0 0.0
        %3959 = vmatprep.subr.mxu0 0.0
        %3960 = vmatpush1.msra.mxu0 0.0
        %3961 = vmatprep.subr.mxu0 0.0
        %3962 = vmatpush1.msra.mxu0 0.0
        %3963 = vmatprep.subr.mxu0 0.0
        %3964 = vmatpush1.msra.mxu0 0.0
        %3965 = vmatprep.subr.mxu0 0.0
        %3966 = vmatpush1.msra.mxu0 0.0
        %3967 = vmatprep.subr.mxu0 0.0
        %3968 = vmatpush1.msra.mxu0 0.0
        %3969 = vmatprep.subr.mxu0 0.0
        %3970 = vmatpush1.msra.mxu0 0.0
        %3971 = vmatprep.subr.mxu0 0.0
        %3972 = vmatpush1.msra.mxu0 0.0
        %3973 = vmatprep.subr.mxu0 0.0
        %3974 = vmatpush1.msra.mxu0 0.0
        %3975 = vmatprep.subr.mxu0 0.0
        %3976 = vmatpush1.msra.mxu0 0.0
        %3977 = vmatprep.subr.mxu0 0.0
        %3978 = vmatpush1.msra.mxu0 0.0
        %3979 = vmatprep.subr.mxu0 0.0
        %3980 = vmatpush1.msra.mxu0 0.0
        %3981 = vmatprep.subr.mxu0 0.0
        %3982 = vmatpush1.msra.mxu0 0.0
        %3983 = vmatprep.subr.mxu0 0.0
        %3984 = vmatpush1.msra.mxu0 0.0
        %3985 = vmatprep.subr.mxu0 0.0
        %3986 = vmatpush1.msra.mxu0 0.0
        %3987 = vmatprep.subr.mxu0 0.0
        %3988 = vmatpush1.msra.mxu0 0.0
        %3989 = vmatprep.subr.mxu0 0.0
        %3990 = vmatpush1.msra.mxu0 0.0
        %3991 = vmatprep.subr.mxu0 0.0
        %3992 = vmatpush1.msra.mxu0 0.0
        %3993 = vmatprep.subr.mxu0 0.0
        %3994 = vmatpush1.msra.mxu0 0.0
        %3995 = vmatprep.subr.mxu0 0.0
        %3996 = vmatpush1.msra.mxu0 0.0
        %3997 = vmatprep.mubr.f32.mxu0 0.0
        %3998 = vmatmul.mubr.f32.gmra.mrb[0].mxu0 %v907
        %v3999 = vpop.f32.mrb[0].mxu0
        %v4000 = vadd.f32 %v3919, %v3999
        %v4001 = vpop.f32.mrb[0].mxu0
        %4002 = vdwg.mxu0
        %v4007 = vrot.slane %v3801, 7
        %v4008 = vsel %vm788, %v4007, %v3800
        %v4009 = vrot.slane %v3802, 6
        %v4010 = vsel %vm791, %v4009, %v4008
        %v4011 = vrot.slane %v3803, 5
        %v4012 = vsel %vm794, %v4011, %v4010
        %v4014 = vmul.f32 %v876, %v4012
        %v4015 = vadd.f32 %v4000, %v4014
        %4016 = vxpose.xlu0.b32.start [1/16] %v3915, 128
        %4017 = vxpose.xlu0.b32.cont [2/16] 0.0, 128
        %4018 = vxpose.xlu0.b32.cont [3/16] 0.0, 128
        %4019 = vxpose.xlu0.b32.cont [4/16] 0.0, 128
        %4020 = vxpose.xlu0.b32.cont [5/16] 0.0, 128
        %4021 = vxpose.xlu0.b32.cont [6/16] 0.0, 128
        %4022 = vxpose.xlu0.b32.cont [7/16] 0.0, 128
        %4023 = vxpose.xlu0.b32.cont [8/16] 0.0, 128
        %4024 = vxpose.xlu0.b32.cont [9/16] 0.0, 128
        %4025 = vxpose.xlu0.b32.cont [10/16] 0.0, 128
        %4026 = vxpose.xlu0.b32.cont [11/16] 0.0, 128
        %4027 = vxpose.xlu0.b32.cont [12/16] 0.0, 128
        %4028 = vxpose.xlu0.b32.cont [13/16] 0.0, 128
        %4029 = vxpose.xlu0.b32.cont [14/16] 0.0, 128
        %4030 = vxpose.xlu0.b32.cont [15/16] 0.0, 128
        %4031 = vxpose.xlu0.b32.end [16/16] 0.0, 128
        %v4032 = vpop.trf.xlu0
        %v4033 = vpop.trf.xlu0
        %v4034 = vpop.trf.xlu0
        %v4035 = vpop.trf.xlu0
        %v4036 = vpop.trf.xlu0
        %v4037 = vpop.trf.xlu0
        %v4038 = vpop.trf.xlu0
        %v4039 = vpop.trf.xlu0
        %v4040 = vpop.trf.xlu0
        %v4041 = vpop.trf.xlu0
        %v4042 = vpop.trf.xlu0
        %v4043 = vpop.trf.xlu0
        %v4044 = vpop.trf.xlu0
        %v4045 = vpop.trf.xlu0
        %v4046 = vpop.trf.xlu0
        %v4047 = vpop.trf.xlu0
        %v4049 = vsel %vm796, %v4032, 0
        %v4052 = vsel %vm796, %v4033, 0
        %v4055 = vsel %vm800, %v4015, 0
        %4057 = vmatprep.subr.mxu0 0.0
        %4058 = vmatpush1.msra.mxu0 %v4055
        %4059 = vmatprep.subr.mxu0 0.0
        %4060 = vmatpush1.msra.mxu0 0.0
        %4061 = vmatprep.subr.mxu0 0.0
        %4062 = vmatpush1.msra.mxu0 0.0
        %4063 = vmatprep.subr.mxu0 0.0
        %4064 = vmatpush1.msra.mxu0 0.0
        %4065 = vmatprep.subr.mxu0 0.0
        %4066 = vmatpush1.msra.mxu0 0.0
        %4067 = vmatprep.subr.mxu0 0.0
        %4068 = vmatpush1.msra.mxu0 0.0
        %4069 = vmatprep.subr.mxu0 0.0
        %4070 = vmatpush1.msra.mxu0 0.0
        %4071 = vmatprep.subr.mxu0 0.0
        %4072 = vmatpush1.msra.mxu0 0.0
        %4073 = vmatprep.subr.mxu0 0.0
        %4074 = vmatpush1.msra.mxu0 0.0
        %4075 = vmatprep.subr.mxu0 0.0
        %4076 = vmatpush1.msra.mxu0 0.0
        %4077 = vmatprep.subr.mxu0 0.0
        %4078 = vmatpush1.msra.mxu0 0.0
        %4079 = vmatprep.subr.mxu0 0.0
        %4080 = vmatpush1.msra.mxu0 0.0
        %4081 = vmatprep.subr.mxu0 0.0
        %4082 = vmatpush1.msra.mxu0 0.0
        %4083 = vmatprep.subr.mxu0 0.0
        %4084 = vmatpush1.msra.mxu0 0.0
        %4085 = vmatprep.subr.mxu0 0.0
        %4086 = vmatpush1.msra.mxu0 0.0
        %4087 = vmatprep.subr.mxu0 0.0
        %4088 = vmatpush1.msra.mxu0 0.0
        %4089 = vmatprep.subr.mxu0 0.0
        %4090 = vmatpush1.msra.mxu0 0.0
        %4091 = vmatprep.subr.mxu0 0.0
        %4092 = vmatpush1.msra.mxu0 0.0
        %4093 = vmatprep.subr.mxu0 0.0
        %4094 = vmatpush1.msra.mxu0 0.0
        %4095 = vmatprep.subr.mxu0 0.0
        %4096 = vmatpush1.msra.mxu0 0.0
        %4097 = vmatprep.subr.mxu0 0.0
        %4098 = vmatpush1.msra.mxu0 0.0
        %4099 = vmatprep.subr.mxu0 0.0
        %4100 = vmatpush1.msra.mxu0 0.0
        %4101 = vmatprep.subr.mxu0 0.0
        %4102 = vmatpush1.msra.mxu0 0.0
        %4103 = vmatprep.subr.mxu0 0.0
        %4104 = vmatpush1.msra.mxu0 0.0
        %4105 = vmatprep.subr.mxu0 0.0
        %4106 = vmatpush1.msra.mxu0 0.0
        %4107 = vmatprep.subr.mxu0 0.0
        %4108 = vmatpush1.msra.mxu0 0.0
        %4109 = vmatprep.subr.mxu0 0.0
        %4110 = vmatpush1.msra.mxu0 0.0
        %4111 = vmatprep.subr.mxu0 0.0
        %4112 = vmatpush1.msra.mxu0 0.0
        %4113 = vmatprep.subr.mxu0 0.0
        %4114 = vmatpush1.msra.mxu0 0.0
        %4115 = vmatprep.subr.mxu0 0.0
        %4116 = vmatpush1.msra.mxu0 0.0
        %4117 = vmatprep.subr.mxu0 0.0
        %4118 = vmatpush1.msra.mxu0 0.0
        %4119 = vmatprep.subr.mxu0 0.0
        %4120 = vmatpush1.msra.mxu0 0.0
        %4121 = vmatprep.mubr.f32.mxu0 0.0
        %4122 = vmatmul.mubr.f32.gmra.mrb[0].mxu0 %v4049
        %v4123 = vpop.f32.mrb[0].mxu0
        %v4124 = vadd.f32 0.0, %v4123
        %v4125 = vpop.f32.mrb[0].mxu0
        %4126 = vmatprep.mubr.f32.mxu0 0.0
        %4127 = vmatmul.mubr.f32.gmra.mrb[0].mxu0 %v4052
        %v4128 = vpop.f32.mrb[0].mxu0
        %v4129 = vadd.f32 0.0, %v4128
        %v4130 = vpop.f32.mrb[0].mxu0
        %4131 = vdwg.mxu0
        %v4132 = vmul.f32 %v4124, 0.5
        %v4133 = vmul.f32 %v4129, 0.5
        %v4134 = vsel %vm747, %v4132, -65504.0
        %v4135 = vsel %vm748, %v4133, -65504.0
        %v4136 = vsel %vm1114, %v4134, -inf
        %4137 = vmax.xlane.f32.xlu0 %v4136
        %v4138 = vpop.xlane.xlu0 %4137
        %v4139 = vsel %vm1114, %v4135, -inf
        %4140 = vmax.xlane.f32.xlu0 %v4139
        %v4141 = vpop.xlane.xlu0 %4140
        %v4142 = vsub.f32 %v4134, %v4138
        %v4143 = vsub.f32 %v4135, %v4141
        %v4144 = vmul.f32 %v4142, 1.442695
        %v4145 = vpow.pop %v4144
        %v4146 = vmul.f32 %v4143, 1.442695
        %v4147 = vpow.pop %v4146
        %v4148 = vsel %vm1114, %v4145, 0.0
        %4149 = vadd.xlane.f32.xlu0 %v4148
        %v4150 = vpop.xlane.xlu0 %4149
        %v4151 = vsel %vm1114, %v4147, 0.0
        %4152 = vadd.xlane.f32.xlu0 %v4151
        %v4153 = vpop.xlane.xlu0 %4152
        %v4154 = vrcp.pop %v4150
        %v4155 = vrcp.pop %v4153
        %v4156 = vmul.f32 %v4145, %v4154
        %v4157 = vmul.f32 %v4147, %v4155
        %v4158 = vmax.f32 %v4136, %v4139
        %v4159 = vrot.slane %v4158, 4
        %v4160 = vmax.f32 %v4158, %v4159
        %v4161 = vrot.slane %v4160, 2
        %v4162 = vmax.f32 %v4160, %v4161
        %v4163 = vrot.slane %v4162, 1
        %v4164 = vmax.f32 %v4162, %v4163
        %v4165 = vsub.f32 %v4134, %v4164
        %v4166 = vsub.f32 %v4135, %v4164
        %v4167 = vmul.f32 %v4165, 1.442695
        %v4168 = vpow.pop %v4167
        %v4169 = vmul.f32 %v4166, 1.442695
        %v4170 = vpow.pop %v4169
        %v4171 = vsel %vm1114, %v4168, 0.0
        %v4172 = vsel %vm1114, %v4170, 0.0
        %v4173 = vadd.f32 %v4171, %v4172
        %v4174 = vrot.slane %v4173, 4
        %v4175 = vadd.f32 %v4173, %v4174
        %v4176 = vrot.slane %v4175, 2
        %v4177 = vadd.f32 %v4175, %v4176
        %v4178 = vrot.slane %v4177, 1
        %v4179 = vadd.f32 %v4177, %v4178
        %v4180 = vrcp.pop %v4179
        %v4181 = vmul.f32 %v4168, %v4180
        %v4182 = vmul.f32 %v4170, %v4180
        %4183 = vmatprep.subr.mxu0 0.0
        %4184 = vmatpush1.msra.mxu0 %v3931
        %4185 = vmatprep.subr.mxu0 0.0
        %4186 = vmatpush1.msra.mxu0 0.0
        %4187 = vmatprep.subr.mxu0 0.0
        %4188 = vmatpush1.msra.mxu0 0.0
        %4189 = vmatprep.subr.mxu0 0.0
        %4190 = vmatpush1.msra.mxu0 0.0
        %4191 = vmatprep.subr.mxu0 0.0
        %4192 = vmatpush1.msra.mxu0 0.0
        %4193 = vmatprep.subr.mxu0 0.0
        %4194 = vmatpush1.msra.mxu0 0.0
        %4195 = vmatprep.subr.mxu0 0.0
        %4196 = vmatpush1.msra.mxu0 0.0
        %4197 = vmatprep.subr.mxu0 0.0
        %4198 = vmatpush1.msra.mxu0 0.0
        %4199 = vmatprep.subr.mxu0 0.0
        %4200 = vmatpush1.msra.mxu0 0.0
        %4201 = vmatprep.subr.mxu0 0.0
        %4202 = vmatpush1.msra.mxu0 0.0
        %4203 = vmatprep.subr.mxu0 0.0
        %4204 = vmatpush1.msra.mxu0 0.0
        %4205 = vmatprep.subr.mxu0 0.0
        %4206 = vmatpush1.msra.mxu0 0.0
        %4207 = vmatprep.subr.mxu0 0.0
        %4208 = vmatpush1.msra.mxu0 0.0
        %4209 = vmatprep.subr.mxu0 0.0
        %4210 = vmatpush1.msra.mxu0 0.0
        %4211 = vmatprep.subr.mxu0 0.0
        %4212 = vmatpush1.msra.mxu0 0.0
        %4213 = vmatprep.subr.mxu0 0.0
        %4214 = vmatpush1.msra.mxu0 0.0
        %4215 = vmatprep.subr.mxu0 0.0
        %4216 = vmatpush1.msra.mxu0 0.0
        %4217 = vmatprep.subr.mxu0 0.0
        %4218 = vmatpush1.msra.mxu0 0.0
        %4219 = vmatprep.subr.mxu0 0.0
        %4220 = vmatpush1.msra.mxu0 0.0
        %4221 = vmatprep.subr.mxu0 0.0
        %4222 = vmatpush1.msra.mxu0 0.0
        %4223 = vmatprep.subr.mxu0 0.0
        %4224 = vmatpush1.msra.mxu0 0.0
        %4225 = vmatprep.subr.mxu0 0.0
        %4226 = vmatpush1.msra.mxu0 0.0
        %4227 = vmatprep.subr.mxu0 0.0
        %4228 = vmatpush1.msra.mxu0 0.0
        %4229 = vmatprep.subr.mxu0 0.0
        %4230 = vmatpush1.msra.mxu0 0.0
        %4231 = vmatprep.subr.mxu0 0.0
        %4232 = vmatpush1.msra.mxu0 0.0
        %4233 = vmatprep.subr.mxu0 0.0
        %4234 = vmatpush1.msra.mxu0 0.0
        %4235 = vmatprep.subr.mxu0 0.0
        %4236 = vmatpush1.msra.mxu0 0.0
        %4237 = vmatprep.subr.mxu0 0.0
        %4238 = vmatpush1.msra.mxu0 0.0
        %4239 = vmatprep.subr.mxu0 0.0
        %4240 = vmatpush1.msra.mxu0 0.0
        %4241 = vmatprep.subr.mxu0 0.0
        %4242 = vmatpush1.msra.mxu0 0.0
        %4243 = vmatprep.subr.mxu0 0.0
        %4244 = vmatpush1.msra.mxu0 0.0
        %4245 = vmatprep.subr.mxu0 0.0
        %4246 = vmatpush1.msra.mxu0 0.0
        %4247 = vmatprep.mubr.f32.mxu0 0.0
        %4248 = vmatmul.mubr.f32.gmra.mrb[0].mxu0 %v1168
        %v4249 = vpop.f32.mrb[0].mxu0
        %v4250 = vadd.f32 %v1165, %v4249
        %v4251 = vpop.f32.mrb[0].mxu0
        %4252 = vdwg.mxu0
        %v4257 = vrot.slane %v3809, 7
        %v4258 = vsel %vm788, %v4257, %v3808
        %v4259 = vrot.slane %v3810, 6
        %v4260 = vsel %vm791, %v4259, %v4258
        %v4261 = vrot.slane %v3811, 5
        %v4262 = vsel %vm794, %v4261, %v4260
        %v4264 = vmul.f32 %v1243, %v4262
        %v4265 = vadd.f32 %v4250, %v4264
        %4266 = vmatprep.subr.mxu0 0.0
        %4267 = vmatpush1.msra.mxu0 %v3831
        %4268 = vmatprep.subr.mxu0 0.0
        %4269 = vmatpush1.msra.mxu0 0.0
        %4270 = vmatprep.subr.mxu0 0.0
        %4271 = vmatpush1.msra.mxu0 0.0
        %4272 = vmatprep.subr.mxu0 0.0
        %4273 = vmatpush1.msra.mxu0 0.0
        %4274 = vmatprep.subr.mxu0 0.0
        %4275 = vmatpush1.msra.mxu0 0.0
        %4276 = vmatprep.subr.mxu0 0.0
        %4277 = vmatpush1.msra.mxu0 0.0
        %4278 = vmatprep.subr.mxu0 0.0
        %4279 = vmatpush1.msra.mxu0 0.0
        %4280 = vmatprep.subr.mxu0 0.0
        %4281 = vmatpush1.msra.mxu0 0.0
        %4282 = vmatprep.subr.mxu0 0.0
        %4283 = vmatpush1.msra.mxu0 0.0
        %4284 = vmatprep.subr.mxu0 0.0
        %4285 = vmatpush1.msra.mxu0 0.0
        %4286 = vmatprep.subr.mxu0 0.0
        %4287 = vmatpush1.msra.mxu0 0.0
        %4288 = vmatprep.subr.mxu0 0.0
        %4289 = vmatpush1.msra.mxu0 0.0
        %4290 = vmatprep.subr.mxu0 0.0
        %4291 = vmatpush1.msra.mxu0 0.0
        %4292 = vmatprep.subr.mxu0 0.0
        %4293 = vmatpush1.msra.mxu0 0.0
        %4294 = vmatprep.subr.mxu0 0.0
        %4295 = vmatpush1.msra.mxu0 0.0
        %4296 = vmatprep.subr.mxu0 0.0
        %4297 = vmatpush1.msra.mxu0 0.0
        %4298 = vmatprep.subr.mxu0 0.0
        %4299 = vmatpush1.msra.mxu0 0.0
        %4300 = vmatprep.subr.mxu0 0.0
        %4301 = vmatpush1.msra.mxu0 0.0
        %4302 = vmatprep.subr.mxu0 0.0
        %4303 = vmatpush1.msra.mxu0 0.0
        %4304 = vmatprep.subr.mxu0 0.0
        %4305 = vmatpush1.msra.mxu0 0.0
        %4306 = vmatprep.subr.mxu0 0.0
        %4307 = vmatpush1.msra.mxu0 0.0
        %4308 = vmatprep.subr.mxu0 0.0
        %4309 = vmatpush1.msra.mxu0 0.0
        %4310 = vmatprep.subr.mxu0 0.0
        %4311 = vmatpush1.msra.mxu0 0.0
        %4312 = vmatprep.subr.mxu0 0.0
        %4313 = vmatpush1.msra.mxu0 0.0
        %4314 = vmatprep.subr.mxu0 0.0
        %4315 = vmatpush1.msra.mxu0 0.0
        %4316 = vmatprep.subr.mxu0 0.0
        %4317 = vmatpush1.msra.mxu0 0.0
        %4318 = vmatprep.subr.mxu0 0.0
        %4319 = vmatpush1.msra.mxu0 0.0
        %4320 = vmatprep.subr.mxu0 0.0
        %4321 = vmatpush1.msra.mxu0 0.0
        %4322 = vmatprep.subr.mxu0 0.0
        %4323 = vmatpush1.msra.mxu0 0.0
        %4324 = vmatprep.subr.mxu0 0.0
        %4325 = vmatpush1.msra.mxu0 0.0
        %4326 = vmatprep.subr.mxu0 0.0
        %4327 = vmatpush1.msra.mxu0 0.0
        %4328 = vmatprep.subr.mxu0 0.0
        %4329 = vmatpush1.msra.mxu0 0.0
        %4330 = vmatprep.mubr.f32.mxu0 0.0
        %4331 = vmatmul.mubr.f32.gmra.mrb[0].mxu0 %v1264
        %v4332 = vpop.f32.mrb[0].mxu0
        %v4333 = vadd.f32 %v1261, %v4332
        %v4334 = vpop.f32.mrb[0].mxu0
        %4335 = vdwg.mxu0
        %v4340 = vrot.slane %v3805, 7
        %v4341 = vsel %vm788, %v4340, %v3804
        %v4342 = vrot.slane %v3806, 6
        %v4343 = vsel %vm791, %v4342, %v4341
        %v4344 = vrot.slane %v3807, 5
        %v4345 = vsel %vm794, %v4344, %v4343
        %v4347 = vmul.f32 %v1243, %v4345
        %v4348 = vadd.f32 %v4333, %v4347
        %v4350 = vsel %vm1114, %v4265, 0
        %v4353 = vsel %vm1114, %v4156, 0
        %v4356 = vsel %vm1114, %v4157, 0
        %4358 = vmatprep.subr.mxu0 0.0
        %4359 = vmatpush1.xpose.msra.mxu0 %v4353
        %4360 = vmatprep.subr.mxu0 0.0
        %4361 = vmatpush1.xpose.msra.mxu0 %v4356
        %4362 = vmatprep.subr.mxu0 0.0
        %4363 = vmatpush1.xpose.msra.mxu0 0.0
        %4364 = vmatprep.subr.mxu0 0.0
        %4365 = vmatpush1.xpose.msra.mxu0 0.0
        %4366 = vmatprep.subr.mxu0 0.0
        %4367 = vmatpush1.xpose.msra.mxu0 0.0
        %4368 = vmatprep.subr.mxu0 0.0
        %4369 = vmatpush1.xpose.msra.mxu0 0.0
        %4370 = vmatprep.subr.mxu0 0.0
        %4371 = vmatpush1.xpose.msra.mxu0 0.0
        %4372 = vmatprep.subr.mxu0 0.0
        %4373 = vmatpush1.xpose.msra.mxu0 0.0
        %4374 = vmatprep.subr.mxu0 0.0
        %4375 = vmatpush1.xpose.msra.mxu0 0.0
        %4376 = vmatprep.subr.mxu0 0.0
        %4377 = vmatpush1.xpose.msra.mxu0 0.0
        %4378 = vmatprep.subr.mxu0 0.0
        %4379 = vmatpush1.xpose.msra.mxu0 0.0
        %4380 = vmatprep.subr.mxu0 0.0
        %4381 = vmatpush1.xpose.msra.mxu0 0.0
        %4382 = vmatprep.subr.mxu0 0.0
        %4383 = vmatpush1.xpose.msra.mxu0 0.0
        %4384 = vmatprep.subr.mxu0 0.0
        %4385 = vmatpush1.xpose.msra.mxu0 0.0
        %4386 = vmatprep.subr.mxu0 0.0
        %4387 = vmatpush1.xpose.msra.mxu0 0.0
        %4388 = vmatprep.subr.mxu0 0.0
        %4389 = vmatpush1.xpose.msra.mxu0 0.0
        %4390 = vmatprep.subr.mxu0 0.0
        %4391 = vmatpush1.xpose.msra.mxu0 0.0
        %4392 = vmatprep.subr.mxu0 0.0
        %4393 = vmatpush1.xpose.msra.mxu0 0.0
        %4394 = vmatprep.subr.mxu0 0.0
        %4395 = vmatpush1.xpose.msra.mxu0 0.0
        %4396 = vmatprep.subr.mxu0 0.0
        %4397 = vmatpush1.xpose.msra.mxu0 0.0
        %4398 = vmatprep.subr.mxu0 0.0
        %4399 = vmatpush1.xpose.msra.mxu0 0.0
        %4400 = vmatprep.subr.mxu0 0.0
        %4401 = vmatpush1.xpose.msra.mxu0 0.0
        %4402 = vmatprep.subr.mxu0 0.0
        %4403 = vmatpush1.xpose.msra.mxu0 0.0
        %4404 = vmatprep.subr.mxu0 0.0
        %4405 = vmatpush1.xpose.msra.mxu0 0.0
        %4406 = vmatprep.subr.mxu0 0.0
        %4407 = vmatpush1.xpose.msra.mxu0 0.0
        %4408 = vmatprep.subr.mxu0 0.0
        %4409 = vmatpush1.xpose.msra.mxu0 0.0
        %4410 = vmatprep.subr.mxu0 0.0
        %4411 = vmatpush1.xpose.msra.mxu0 0.0
        %4412 = vmatprep.subr.mxu0 0.0
        %4413 = vmatpush1.xpose.msra.mxu0 0.0
        %4414 = vmatprep.subr.mxu0 0.0
        %4415 = vmatpush1.xpose.msra.mxu0 0.0
        %4416 = vmatprep.subr.mxu0 0.0
        %4417 = vmatpush1.xpose.msra.mxu0 0.0
        %4418 = vmatprep.subr.mxu0 0.0
        %4419 = vmatpush1.xpose.msra.mxu0 0.0
        %4420 = vmatprep.subr.mxu0 0.0
        %4421 = vmatpush1.xpose.msra.mxu0 0.0
        %4422 = vmatprep.mubr.f32.mxu0 0.0
        %4423 = vmatmul.mubr.f32.gmra.mrb[0].mxu0 %v4350
        %v4424 = vpop.f32.mrb[0].mxu0
        %v4425 = vadd.f32 0.0, %v4424
        %v4426 = vpop.f32.mrb[0].mxu0
        %4427 = vdwg.mxu0
        %v4429 = vsel %vm1114, %v4348, 0
        %4431 = vmatprep.subr.mxu0 0.0
        %4432 = vmatpush1.msra.mxu0 %v4181
        %4433 = vmatprep.subr.mxu0 0.0
        %4434 = vmatpush1.msra.mxu0 %v4182
        %4435 = vmatprep.subr.mxu0 0.0
        %4436 = vmatpush1.msra.mxu0 0.0
        %4437 = vmatprep.subr.mxu0 0.0
        %4438 = vmatpush1.msra.mxu0 0.0
        %4439 = vmatprep.subr.mxu0 0.0
        %4440 = vmatpush1.msra.mxu0 0.0
        %4441 = vmatprep.subr.mxu0 0.0
        %4442 = vmatpush1.msra.mxu0 0.0
        %4443 = vmatprep.subr.mxu0 0.0
        %4444 = vmatpush1.msra.mxu0 0.0
        %4445 = vmatprep.subr.mxu0 0.0
        %4446 = vmatpush1.msra.mxu0 0.0
        %4447 = vmatprep.subr.mxu0 0.0
        %4448 = vmatpush1.msra.mxu0 0.0
        %4449 = vmatprep.subr.mxu0 0.0
        %4450 = vmatpush1.msra.mxu0 0.0
        %4451 = vmatprep.subr.mxu0 0.0
        %4452 = vmatpush1.msra.mxu0 0.0
        %4453 = vmatprep.subr.mxu0 0.0
        %4454 = vmatpush1.msra.mxu0 0.0
        %4455 = vmatprep.subr.mxu0 0.0
        %4456 = vmatpush1.msra.mxu0 0.0
        %4457 = vmatprep.subr.mxu0 0.0
        %4458 = vmatpush1.msra.mxu0 0.0
        %4459 = vmatprep.subr.mxu0 0.0
        %4460 = vmatpush1.msra.mxu0 0.0
        %4461 = vmatprep.subr.mxu0 0.0
        %4462 = vmatpush1.msra.mxu0 0.0
        %4463 = vmatprep.subr.mxu0 0.0
        %4464 = vmatpush1.msra.mxu0 0.0
        %4465 = vmatprep.subr.mxu0 0.0
        %4466 = vmatpush1.msra.mxu0 0.0
        %4467 = vmatprep.subr.mxu0 0.0
        %4468 = vmatpush1.msra.mxu0 0.0
        %4469 = vmatprep.subr.mxu0 0.0
        %4470 = vmatpush1.msra.mxu0 0.0
        %4471 = vmatprep.subr.mxu0 0.0
        %4472 = vmatpush1.msra.mxu0 0.0
        %4473 = vmatprep.subr.mxu0 0.0
        %4474 = vmatpush1.msra.mxu0 0.0
        %4475 = vmatprep.subr.mxu0 0.0
        %4476 = vmatpush1.msra.mxu0 0.0
        %4477 = vmatprep.subr.mxu0 0.0
        %4478 = vmatpush1.msra.mxu0 0.0
        %4479 = vmatprep.subr.mxu0 0.0
        %4480 = vmatpush1.msra.mxu0 0.0
        %4481 = vmatprep.subr.mxu0 0.0
        %4482 = vmatpush1.msra.mxu0 0.0
        %4483 = vmatprep.subr.mxu0 0.0
        %4484 = vmatpush1.msra.mxu0 0.0
        %4485 = vmatprep.subr.mxu0 0.0
        %4486 = vmatpush1.msra.mxu0 0.0
        %4487 = vmatprep.subr.mxu0 0.0
        %4488 = vmatpush1.msra.mxu0 0.0
        %4489 = vmatprep.subr.mxu0 0.0
        %4490 = vmatpush1.msra.mxu0 0.0
        %4491 = vmatprep.subr.mxu0 0.0
        %4492 = vmatpush1.msra.mxu0 0.0
        %4493 = vmatprep.subr.mxu0 0.0
        %4494 = vmatpush1.msra.mxu0 0.0
        %4495 = vmatprep.mubr.f32.mxu0 0.0
        %4496 = vmatmul.mubr.f32.gmra.mrb[0].mxu0 %v4429
        %v4497 = vpop.f32.mrb[0].mxu0
        %v4498 = vadd.f32 0.0, %v4497
        %v4499 = vpop.f32.mrb[0].mxu0
        %4500 = vdwg.mxu0
        %v4501 = vmul.f32 %v1504, %v4425
        %v4503 = vrot.slane %v4501, 1
        %v4504 = vrot.slane %v4501, 2
        %v4505 = vrot.slane %v4501, 3
        %v4510 = vadd.f32 %v3788, %v4501
        %v4511 = vadd.f32 %v3789, %v4503
        %v4512 = vadd.f32 %v3790, %v4504
        %v4513 = vadd.f32 %v3791, %v4505
        %4514 = vst.msk [vmem:[%s719 + $0x4] sm:$0x1] %vm1519, %v4510
        %4515 = vst.msk [vmem:[%s719 + $0xc] sm:$0x1] %vm1519, %v4511
        %4516 = vst.msk [vmem:[%s719 + $0x14] sm:$0x1] %vm1519, %v4512
        %4517 = vst.msk [vmem:[%s719 + $0x1c] sm:$0x1] %vm1519, %v4513
        %v4518 = vmul.f32 %v1527, %v4498
        %v4520 = vrot.slane %v4518, 1
        %v4521 = vrot.slane %v4518, 2
        %v4522 = vrot.slane %v4518, 3
        %v4527 = vadd.f32 %v3792, %v4518
        %v4528 = vadd.f32 %v3793, %v4520
        %v4529 = vadd.f32 %v3794, %v4521
        %v4530 = vadd.f32 %v3795, %v4522
        %4531 = vst.msk [vmem:[%s1542 + $0x4] sm:$0x1] %vm1519, %v4527
        %4532 = vst.msk [vmem:[%s1542 + $0xc] sm:$0x1] %vm1519, %v4528
        %4533 = vst.msk [vmem:[%s1542 + $0x14] sm:$0x1] %vm1519, %v4529
        %4534 = vst.msk [vmem:[%s1542 + $0x1c] sm:$0x1] %vm1519, %v4530
        %v4535 = vld [vmem:[%s635 + $0x5] sm:$0x1]
        %v4536 = vld [vmem:[%s635 + $0xd] sm:$0x1]
        %v4537 = vld [vmem:[%s635 + $0x15] sm:$0x1]
        %v4538 = vld [vmem:[%s635 + $0x1d] sm:$0x1]
        %v4539 = vld [vmem:[%s753 + $0x5] sm:$0x1]
        %v4540 = vld [vmem:[%s753 + $0xd] sm:$0x1]
        %v4541 = vld [vmem:[%s753 + $0x15] sm:$0x1]
        %v4542 = vld [vmem:[%s753 + $0x1d] sm:$0x1]
        %v4543 = vld [vmem:[%s644 + $0x5] sm:$0x1]
        %v4544 = vld [vmem:[%s644 + $0xd] sm:$0x1]
        %v4545 = vld [vmem:[%s644 + $0x15] sm:$0x1]
        %v4546 = vld [vmem:[%s644 + $0x1d] sm:$0x1]
        %v4547 = vld [vmem:[%s762 + $0x5] sm:$0x1]
        %v4548 = vld [vmem:[%s762 + $0xd] sm:$0x1]
        %v4549 = vld [vmem:[%s762 + $0x15] sm:$0x1]
        %v4550 = vld [vmem:[%s762 + $0x1d] sm:$0x1]
        %v4551 = vld [vmem:[%s653 + $0x5] sm:$0x1]
        %v4552 = vld [vmem:[%s653 + $0xd] sm:$0x1]
        %v4553 = vld [vmem:[%s653 + $0x15] sm:$0x1]
        %v4554 = vld [vmem:[%s653 + $0x1d] sm:$0x1]
        %v4555 = vld [vmem:[%s771 + $0x5] sm:$0x1]
        %v4556 = vld [vmem:[%s771 + $0xd] sm:$0x1]
        %v4557 = vld [vmem:[%s771 + $0x15] sm:$0x1]
        %v4558 = vld [vmem:[%s771 + $0x1d] sm:$0x1]
        %s4559 = scalar_lea.vmem %s724, 20
        %v4560 = vld [vmem:[%s4559] sm:$0xf]
        %s4561 = scalar_lea.vmem %s730, 20
        %v4562 = vld [vmem:[%s4561] sm:$0xf]
        %4564 = vset.pattern.permute.xlu0 0
        %4565 = vperm.xlu0 %4564, %v4560
        %v4566 = vpop.permute.xlu0 %4565
        %v4572 = vrot.slane %v4536, 7
        %v4573 = vsel %vm788, %v4572, %v4535
        %v4574 = vrot.slane %v4537, 6
        %v4575 = vsel %vm791, %v4574, %v4573
        %v4576 = vrot.slane %v4538, 5
        %v4577 = vsel %vm794, %v4576, %v4575
        %v4578 = vsel %vm800, %v4577, 0
        %4580 = vmatprep.subr.mxu0 0.0
        %4581 = vmatpush1.msra.mxu0 %v4578
        %4582 = vmatprep.subr.mxu0 0.0
        %4583 = vmatpush1.msra.mxu0 0.0
        %4584 = vmatprep.subr.mxu0 0.0
        %4585 = vmatpush1.msra.mxu0 0.0
        %4586 = vmatprep.subr.mxu0 0.0
        %4587 = vmatpush1.msra.mxu0 0.0
        %4588 = vmatprep.subr.mxu0 0.0
        %4589 = vmatpush1.msra.mxu0 0.0
        %4590 = vmatprep.subr.mxu0 0.0
        %4591 = vmatpush1.msra.mxu0 0.0
        %4592 = vmatprep.subr.mxu0 0.0
        %4593 = vmatpush1.msra.mxu0 0.0
        %4594 = vmatprep.subr.mxu0 0.0
        %4595 = vmatpush1.msra.mxu0 0.0
        %4596 = vmatprep.subr.mxu0 0.0
        %4597 = vmatpush1.msra.mxu0 0.0
        %4598 = vmatprep.subr.mxu0 0.0
        %4599 = vmatpush1.msra.mxu0 0.0
        %4600 = vmatprep.subr.mxu0 0.0
        %4601 = vmatpush1.msra.mxu0 0.0
        %4602 = vmatprep.subr.mxu0 0.0
        %4603 = vmatpush1.msra.mxu0 0.0
        %4604 = vmatprep.subr.mxu0 0.0
        %4605 = vmatpush1.msra.mxu0 0.0
        %4606 = vmatprep.subr.mxu0 0.0
        %4607 = vmatpush1.msra.mxu0 0.0
        %4608 = vmatprep.subr.mxu0 0.0
        %4609 = vmatpush1.msra.mxu0 0.0
        %4610 = vmatprep.subr.mxu0 0.0
        %4611 = vmatpush1.msra.mxu0 0.0
        %4612 = vmatprep.subr.mxu0 0.0
        %4613 = vmatpush1.msra.mxu0 0.0
        %4614 = vmatprep.subr.mxu0 0.0
        %4615 = vmatpush1.msra.mxu0 0.0
        %4616 = vmatprep.subr.mxu0 0.0
        %4617 = vmatpush1.msra.mxu0 0.0
        %4618 = vmatprep.subr.mxu0 0.0
        %4619 = vmatpush1.msra.mxu0 0.0
        %4620 = vmatprep.subr.mxu0 0.0
        %4621 = vmatpush1.msra.mxu0 0.0
        %4622 = vmatprep.subr.mxu0 0.0
        %4623 = vmatpush1.msra.mxu0 0.0
        %4624 = vmatprep.subr.mxu0 0.0
        %4625 = vmatpush1.msra.mxu0 0.0
        %4626 = vmatprep.subr.mxu0 0.0
        %4627 = vmatpush1.msra.mxu0 0.0
        %4628 = vmatprep.subr.mxu0 0.0
        %4629 = vmatpush1.msra.mxu0 0.0
        %4630 = vmatprep.subr.mxu0 0.0
        %4631 = vmatpush1.msra.mxu0 0.0
        %4632 = vmatprep.subr.mxu0 0.0
        %4633 = vmatpush1.msra.mxu0 0.0
        %4634 = vmatprep.subr.mxu0 0.0
        %4635 = vmatpush1.msra.mxu0 0.0
        %4636 = vmatprep.subr.mxu0 0.0
        %4637 = vmatpush1.msra.mxu0 0.0
        %4638 = vmatprep.subr.mxu0 0.0
        %4639 = vmatpush1.msra.mxu0 0.0
        %4640 = vmatprep.subr.mxu0 0.0
        %4641 = vmatpush1.msra.mxu0 0.0
        %4642 = vmatprep.subr.mxu0 0.0
        %4643 = vmatpush1.msra.mxu0 0.0
        %4644 = vmatprep.mubr.f32.mxu0 0.0
        %4645 = vmatmul.mubr.f32.gmra.mrb[0].mxu0 %v798
        %v4646 = vpop.f32.mrb[0].mxu0
        %v4647 = vadd.f32 %v4566, %v4646
        %v4648 = vpop.f32.mrb[0].mxu0
        %4649 = vdwg.mxu0
        %v4654 = vrot.slane %v4544, 7
        %v4655 = vsel %vm788, %v4654, %v4543
        %v4656 = vrot.slane %v4545, 6
        %v4657 = vsel %vm791, %v4656, %v4655
        %v4658 = vrot.slane %v4546, 5
        %v4659 = vsel %vm794, %v4658, %v4657
        %v4661 = vmul.f32 %v876, %v4659
        %v4662 = vadd.f32 %v4647, %v4661
        %4664 = vset.pattern.permute.xlu0 0
        %4665 = vperm.xlu0 %4664, %v4562
        %v4666 = vpop.permute.xlu0 %4665
        %v4672 = vrot.slane %v4540, 7
        %v4673 = vsel %vm788, %v4672, %v4539
        %v4674 = vrot.slane %v4541, 6
        %v4675 = vsel %vm791, %v4674, %v4673
        %v4676 = vrot.slane %v4542, 5
        %v4677 = vsel %vm794, %v4676, %v4675
        %v4678 = vsel %vm800, %v4677, 0
        %4680 = vmatprep.subr.mxu0 0.0
        %4681 = vmatpush1.msra.mxu0 %v4678
        %4682 = vmatprep.subr.mxu0 0.0
        %4683 = vmatpush1.msra.mxu0 0.0
        %4684 = vmatprep.subr.mxu0 0.0
        %4685 = vmatpush1.msra.mxu0 0.0
        %4686 = vmatprep.subr.mxu0 0.0
        %4687 = vmatpush1.msra.mxu0 0.0
        %4688 = vmatprep.subr.mxu0 0.0
        %4689 = vmatpush1.msra.mxu0 0.0
        %4690 = vmatprep.subr.mxu0 0.0
        %4691 = vmatpush1.msra.mxu0 0.0
        %4692 = vmatprep.subr.mxu0 0.0
        %4693 = vmatpush1.msra.mxu0 0.0
        %4694 = vmatprep.subr.mxu0 0.0
        %4695 = vmatpush1.msra.mxu0 0.0
        %4696 = vmatprep.subr.mxu0 0.0
        %4697 = vmatpush1.msra.mxu0 0.0
        %4698 = vmatprep.subr.mxu0 0.0
        %4699 = vmatpush1.msra.mxu0 0.0
        %4700 = vmatprep.subr.mxu0 0.0
        %4701 = vmatpush1.msra.mxu0 0.0
        %4702 = vmatprep.subr.mxu0 0.0
        %4703 = vmatpush1.msra.mxu0 0.0
        %4704 = vmatprep.subr.mxu0 0.0
        %4705 = vmatpush1.msra.mxu0 0.0
        %4706 = vmatprep.subr.mxu0 0.0
        %4707 = vmatpush1.msra.mxu0 0.0
        %4708 = vmatprep.subr.mxu0 0.0
        %4709 = vmatpush1.msra.mxu0 0.0
        %4710 = vmatprep.subr.mxu0 0.0
        %4711 = vmatpush1.msra.mxu0 0.0
        %4712 = vmatprep.subr.mxu0 0.0
        %4713 = vmatpush1.msra.mxu0 0.0
        %4714 = vmatprep.subr.mxu0 0.0
        %4715 = vmatpush1.msra.mxu0 0.0
        %4716 = vmatprep.subr.mxu0 0.0
        %4717 = vmatpush1.msra.mxu0 0.0
        %4718 = vmatprep.subr.mxu0 0.0
        %4719 = vmatpush1.msra.mxu0 0.0
        %4720 = vmatprep.subr.mxu0 0.0
        %4721 = vmatpush1.msra.mxu0 0.0
        %4722 = vmatprep.subr.mxu0 0.0
        %4723 = vmatpush1.msra.mxu0 0.0
        %4724 = vmatprep.subr.mxu0 0.0
        %4725 = vmatpush1.msra.mxu0 0.0
        %4726 = vmatprep.subr.mxu0 0.0
        %4727 = vmatpush1.msra.mxu0 0.0
        %4728 = vmatprep.subr.mxu0 0.0
        %4729 = vmatpush1.msra.mxu0 0.0
        %4730 = vmatprep.subr.mxu0 0.0
        %4731 = vmatpush1.msra.mxu0 0.0
        %4732 = vmatprep.subr.mxu0 0.0
        %4733 = vmatpush1.msra.mxu0 0.0
        %4734 = vmatprep.subr.mxu0 0.0
        %4735 = vmatpush1.msra.mxu0 0.0
        %4736 = vmatprep.subr.mxu0 0.0
        %4737 = vmatpush1.msra.mxu0 0.0
        %4738 = vmatprep.subr.mxu0 0.0
        %4739 = vmatpush1.msra.mxu0 0.0
        %4740 = vmatprep.subr.mxu0 0.0
        %4741 = vmatpush1.msra.mxu0 0.0
        %4742 = vmatprep.subr.mxu0 0.0
        %4743 = vmatpush1.msra.mxu0 0.0
        %4744 = vmatprep.mubr.f32.mxu0 0.0
        %4745 = vmatmul.mubr.f32.gmra.mrb[0].mxu0 %v907
        %v4746 = vpop.f32.mrb[0].mxu0
        %v4747 = vadd.f32 %v4666, %v4746
        %v4748 = vpop.f32.mrb[0].mxu0
        %4749 = vdwg.mxu0
        %v4754 = vrot.slane %v4548, 7
        %v4755 = vsel %vm788, %v4754, %v4547
        %v4756 = vrot.slane %v4549, 6
        %v4757 = vsel %vm791, %v4756, %v4755
        %v4758 = vrot.slane %v4550, 5
        %v4759 = vsel %vm794, %v4758, %v4757
        %v4761 = vmul.f32 %v876, %v4759
        %v4762 = vadd.f32 %v4747, %v4761
        %4763 = vxpose.xlu0.b32.start [1/16] %v4662, 128
        %4764 = vxpose.xlu0.b32.cont [2/16] 0.0, 128
        %4765 = vxpose.xlu0.b32.cont [3/16] 0.0, 128
        %4766 = vxpose.xlu0.b32.cont [4/16] 0.0, 128
        %4767 = vxpose.xlu0.b32.cont [5/16] 0.0, 128
        %4768 = vxpose.xlu0.b32.cont [6/16] 0.0, 128
        %4769 = vxpose.xlu0.b32.cont [7/16] 0.0, 128
        %4770 = vxpose.xlu0.b32.cont [8/16] 0.0, 128
        %4771 = vxpose.xlu0.b32.cont [9/16] 0.0, 128
        %4772 = vxpose.xlu0.b32.cont [10/16] 0.0, 128
        %4773 = vxpose.xlu0.b32.cont [11/16] 0.0, 128
        %4774 = vxpose.xlu0.b32.cont [12/16] 0.0, 128
        %4775 = vxpose.xlu0.b32.cont [13/16] 0.0, 128
        %4776 = vxpose.xlu0.b32.cont [14/16] 0.0, 128
        %4777 = vxpose.xlu0.b32.cont [15/16] 0.0, 128
        %4778 = vxpose.xlu0.b32.end [16/16] 0.0, 128
        %v4779 = vpop.trf.xlu0
        %v4780 = vpop.trf.xlu0
        %v4781 = vpop.trf.xlu0
        %v4782 = vpop.trf.xlu0
        %v4783 = vpop.trf.xlu0
        %v4784 = vpop.trf.xlu0
        %v4785 = vpop.trf.xlu0
        %v4786 = vpop.trf.xlu0
        %v4787 = vpop.trf.xlu0
        %v4788 = vpop.trf.xlu0
        %v4789 = vpop.trf.xlu0
        %v4790 = vpop.trf.xlu0
        %v4791 = vpop.trf.xlu0
        %v4792 = vpop.trf.xlu0
        %v4793 = vpop.trf.xlu0
        %v4794 = vpop.trf.xlu0
        %v4796 = vsel %vm796, %v4779, 0
        %v4799 = vsel %vm796, %v4780, 0
        %v4802 = vsel %vm800, %v4762, 0
        %4804 = vmatprep.subr.mxu0 0.0
        %4805 = vmatpush1.msra.mxu0 %v4802
        %4806 = vmatprep.subr.mxu0 0.0
        %4807 = vmatpush1.msra.mxu0 0.0
        %4808 = vmatprep.subr.mxu0 0.0
        %4809 = vmatpush1.msra.mxu0 0.0
        %4810 = vmatprep.subr.mxu0 0.0
        %4811 = vmatpush1.msra.mxu0 0.0
        %4812 = vmatprep.subr.mxu0 0.0
        %4813 = vmatpush1.msra.mxu0 0.0
        %4814 = vmatprep.subr.mxu0 0.0
        %4815 = vmatpush1.msra.mxu0 0.0
        %4816 = vmatprep.subr.mxu0 0.0
        %4817 = vmatpush1.msra.mxu0 0.0
        %4818 = vmatprep.subr.mxu0 0.0
        %4819 = vmatpush1.msra.mxu0 0.0
        %4820 = vmatprep.subr.mxu0 0.0
        %4821 = vmatpush1.msra.mxu0 0.0
        %4822 = vmatprep.subr.mxu0 0.0
        %4823 = vmatpush1.msra.mxu0 0.0
        %4824 = vmatprep.subr.mxu0 0.0
        %4825 = vmatpush1.msra.mxu0 0.0
        %4826 = vmatprep.subr.mxu0 0.0
        %4827 = vmatpush1.msra.mxu0 0.0
        %4828 = vmatprep.subr.mxu0 0.0
        %4829 = vmatpush1.msra.mxu0 0.0
        %4830 = vmatprep.subr.mxu0 0.0
        %4831 = vmatpush1.msra.mxu0 0.0
        %4832 = vmatprep.subr.mxu0 0.0
        %4833 = vmatpush1.msra.mxu0 0.0
        %4834 = vmatprep.subr.mxu0 0.0
        %4835 = vmatpush1.msra.mxu0 0.0
        %4836 = vmatprep.subr.mxu0 0.0
        %4837 = vmatpush1.msra.mxu0 0.0
        %4838 = vmatprep.subr.mxu0 0.0
        %4839 = vmatpush1.msra.mxu0 0.0
        %4840 = vmatprep.subr.mxu0 0.0
        %4841 = vmatpush1.msra.mxu0 0.0
        %4842 = vmatprep.subr.mxu0 0.0
        %4843 = vmatpush1.msra.mxu0 0.0
        %4844 = vmatprep.subr.mxu0 0.0
        %4845 = vmatpush1.msra.mxu0 0.0
        %4846 = vmatprep.subr.mxu0 0.0
        %4847 = vmatpush1.msra.mxu0 0.0
        %4848 = vmatprep.subr.mxu0 0.0
        %4849 = vmatpush1.msra.mxu0 0.0
        %4850 = vmatprep.subr.mxu0 0.0
        %4851 = vmatpush1.msra.mxu0 0.0
        %4852 = vmatprep.subr.mxu0 0.0
        %4853 = vmatpush1.msra.mxu0 0.0
        %4854 = vmatprep.subr.mxu0 0.0
        %4855 = vmatpush1.msra.mxu0 0.0
        %4856 = vmatprep.subr.mxu0 0.0
        %4857 = vmatpush1.msra.mxu0 0.0
        %4858 = vmatprep.subr.mxu0 0.0
        %4859 = vmatpush1.msra.mxu0 0.0
        %4860 = vmatprep.subr.mxu0 0.0
        %4861 = vmatpush1.msra.mxu0 0.0
        %4862 = vmatprep.subr.mxu0 0.0
        %4863 = vmatpush1.msra.mxu0 0.0
        %4864 = vmatprep.subr.mxu0 0.0
        %4865 = vmatpush1.msra.mxu0 0.0
        %4866 = vmatprep.subr.mxu0 0.0
        %4867 = vmatpush1.msra.mxu0 0.0
        %4868 = vmatprep.mubr.f32.mxu0 0.0
        %4869 = vmatmul.mubr.f32.gmra.mrb[0].mxu0 %v4796
        %v4870 = vpop.f32.mrb[0].mxu0
        %v4871 = vadd.f32 0.0, %v4870
        %v4872 = vpop.f32.mrb[0].mxu0
        %4873 = vmatprep.mubr.f32.mxu0 0.0
        %4874 = vmatmul.mubr.f32.gmra.mrb[0].mxu0 %v4799
        %v4875 = vpop.f32.mrb[0].mxu0
        %v4876 = vadd.f32 0.0, %v4875
        %v4877 = vpop.f32.mrb[0].mxu0
        %4878 = vdwg.mxu0
        %v4879 = vmul.f32 %v4871, 0.5
        %v4880 = vmul.f32 %v4876, 0.5
        %v4881 = vsel %vm747, %v4879, -65504.0
        %v4882 = vsel %vm748, %v4880, -65504.0
        %v4883 = vsel %vm1114, %v4881, -inf
        %4884 = vmax.xlane.f32.xlu0 %v4883
        %v4885 = vpop.xlane.xlu0 %4884
        %v4886 = vsel %vm1114, %v4882, -inf
        %4887 = vmax.xlane.f32.xlu0 %v4886
        %v4888 = vpop.xlane.xlu0 %4887
        %v4889 = vsub.f32 %v4881, %v4885
        %v4890 = vsub.f32 %v4882, %v4888
        %v4891 = vmul.f32 %v4889, 1.442695
        %v4892 = vpow.pop %v4891
        %v4893 = vmul.f32 %v4890, 1.442695
        %v4894 = vpow.pop %v4893
        %v4895 = vsel %vm1114, %v4892, 0.0
        %4896 = vadd.xlane.f32.xlu0 %v4895
        %v4897 = vpop.xlane.xlu0 %4896
        %v4898 = vsel %vm1114, %v4894, 0.0
        %4899 = vadd.xlane.f32.xlu0 %v4898
        %v4900 = vpop.xlane.xlu0 %4899
        %v4901 = vrcp.pop %v4897
        %v4902 = vrcp.pop %v4900
        %v4903 = vmul.f32 %v4892, %v4901
        %v4904 = vmul.f32 %v4894, %v4902
        %v4905 = vmax.f32 %v4883, %v4886
        %v4906 = vrot.slane %v4905, 4
        %v4907 = vmax.f32 %v4905, %v4906
        %v4908 = vrot.slane %v4907, 2
        %v4909 = vmax.f32 %v4907, %v4908
        %v4910 = vrot.slane %v4909, 1
        %v4911 = vmax.f32 %v4909, %v4910
        %v4912 = vsub.f32 %v4881, %v4911
        %v4913 = vsub.f32 %v4882, %v4911
        %v4914 = vmul.f32 %v4912, 1.442695
        %v4915 = vpow.pop %v4914
        %v4916 = vmul.f32 %v4913, 1.442695
        %v4917 = vpow.pop %v4916
        %v4918 = vsel %vm1114, %v4915, 0.0
        %v4919 = vsel %vm1114, %v4917, 0.0
        %v4920 = vadd.f32 %v4918, %v4919
        %v4921 = vrot.slane %v4920, 4
        %v4922 = vadd.f32 %v4920, %v4921
        %v4923 = vrot.slane %v4922, 2
        %v4924 = vadd.f32 %v4922, %v4923
        %v4925 = vrot.slane %v4924, 1
        %v4926 = vadd.f32 %v4924, %v4925
        %v4927 = vrcp.pop %v4926
        %v4928 = vmul.f32 %v4915, %v4927
        %v4929 = vmul.f32 %v4917, %v4927
        %4930 = vmatprep.subr.mxu0 0.0
        %4931 = vmatpush1.msra.mxu0 %v4678
        %4932 = vmatprep.subr.mxu0 0.0
        %4933 = vmatpush1.msra.mxu0 0.0
        %4934 = vmatprep.subr.mxu0 0.0
        %4935 = vmatpush1.msra.mxu0 0.0
        %4936 = vmatprep.subr.mxu0 0.0
        %4937 = vmatpush1.msra.mxu0 0.0
        %4938 = vmatprep.subr.mxu0 0.0
        %4939 = vmatpush1.msra.mxu0 0.0
        %4940 = vmatprep.subr.mxu0 0.0
        %4941 = vmatpush1.msra.mxu0 0.0
        %4942 = vmatprep.subr.mxu0 0.0
        %4943 = vmatpush1.msra.mxu0 0.0
        %4944 = vmatprep.subr.mxu0 0.0
        %4945 = vmatpush1.msra.mxu0 0.0
        %4946 = vmatprep.subr.mxu0 0.0
        %4947 = vmatpush1.msra.mxu0 0.0
        %4948 = vmatprep.subr.mxu0 0.0
        %4949 = vmatpush1.msra.mxu0 0.0
        %4950 = vmatprep.subr.mxu0 0.0
        %4951 = vmatpush1.msra.mxu0 0.0
        %4952 = vmatprep.subr.mxu0 0.0
        %4953 = vmatpush1.msra.mxu0 0.0
        %4954 = vmatprep.subr.mxu0 0.0
        %4955 = vmatpush1.msra.mxu0 0.0
        %4956 = vmatprep.subr.mxu0 0.0
        %4957 = vmatpush1.msra.mxu0 0.0
        %4958 = vmatprep.subr.mxu0 0.0
        %4959 = vmatpush1.msra.mxu0 0.0
        %4960 = vmatprep.subr.mxu0 0.0
        %4961 = vmatpush1.msra.mxu0 0.0
        %4962 = vmatprep.subr.mxu0 0.0
        %4963 = vmatpush1.msra.mxu0 0.0
        %4964 = vmatprep.subr.mxu0 0.0
        %4965 = vmatpush1.msra.mxu0 0.0
        %4966 = vmatprep.subr.mxu0 0.0
        %4967 = vmatpush1.msra.mxu0 0.0
        %4968 = vmatprep.subr.mxu0 0.0
        %4969 = vmatpush1.msra.mxu0 0.0
        %4970 = vmatprep.subr.mxu0 0.0
        %4971 = vmatpush1.msra.mxu0 0.0
        %4972 = vmatprep.subr.mxu0 0.0
        %4973 = vmatpush1.msra.mxu0 0.0
        %4974 = vmatprep.subr.mxu0 0.0
        %4975 = vmatpush1.msra.mxu0 0.0
        %4976 = vmatprep.subr.mxu0 0.0
        %4977 = vmatpush1.msra.mxu0 0.0
        %4978 = vmatprep.subr.mxu0 0.0
        %4979 = vmatpush1.msra.mxu0 0.0
        %4980 = vmatprep.subr.mxu0 0.0
        %4981 = vmatpush1.msra.mxu0 0.0
        %4982 = vmatprep.subr.mxu0 0.0
        %4983 = vmatpush1.msra.mxu0 0.0
        %4984 = vmatprep.subr.mxu0 0.0
        %4985 = vmatpush1.msra.mxu0 0.0
        %4986 = vmatprep.subr.mxu0 0.0
        %4987 = vmatpush1.msra.mxu0 0.0
        %4988 = vmatprep.subr.mxu0 0.0
        %4989 = vmatpush1.msra.mxu0 0.0
        %4990 = vmatprep.subr.mxu0 0.0
        %4991 = vmatpush1.msra.mxu0 0.0
        %4992 = vmatprep.subr.mxu0 0.0
        %4993 = vmatpush1.msra.mxu0 0.0
        %4994 = vmatprep.mubr.f32.mxu0 0.0
        %4995 = vmatmul.mubr.f32.gmra.mrb[0].mxu0 %v1168
        %v4996 = vpop.f32.mrb[0].mxu0
        %v4997 = vadd.f32 %v1165, %v4996
        %v4998 = vpop.f32.mrb[0].mxu0
        %4999 = vdwg.mxu0
        %v5004 = vrot.slane %v4556, 7
        %v5005 = vsel %vm788, %v5004, %v4555
        %v5006 = vrot.slane %v4557, 6
        %v5007 = vsel %vm791, %v5006, %v5005
        %v5008 = vrot.slane %v4558, 5
        %v5009 = vsel %vm794, %v5008, %v5007
        %v5011 = vmul.f32 %v1243, %v5009
        %v5012 = vadd.f32 %v4997, %v5011
        %5013 = vmatprep.subr.mxu0 0.0
        %5014 = vmatpush1.msra.mxu0 %v4578
        %5015 = vmatprep.subr.mxu0 0.0
        %5016 = vmatpush1.msra.mxu0 0.0
        %5017 = vmatprep.subr.mxu0 0.0
        %5018 = vmatpush1.msra.mxu0 0.0
        %5019 = vmatprep.subr.mxu0 0.0
        %5020 = vmatpush1.msra.mxu0 0.0
        %5021 = vmatprep.subr.mxu0 0.0
        %5022 = vmatpush1.msra.mxu0 0.0
        %5023 = vmatprep.subr.mxu0 0.0
        %5024 = vmatpush1.msra.mxu0 0.0
        %5025 = vmatprep.subr.mxu0 0.0
        %5026 = vmatpush1.msra.mxu0 0.0
        %5027 = vmatprep.subr.mxu0 0.0
        %5028 = vmatpush1.msra.mxu0 0.0
        %5029 = vmatprep.subr.mxu0 0.0
        %5030 = vmatpush1.msra.mxu0 0.0
        %5031 = vmatprep.subr.mxu0 0.0
        %5032 = vmatpush1.msra.mxu0 0.0
        %5033 = vmatprep.subr.mxu0 0.0
        %5034 = vmatpush1.msra.mxu0 0.0
        %5035 = vmatprep.subr.mxu0 0.0
        %5036 = vmatpush1.msra.mxu0 0.0
        %5037 = vmatprep.subr.mxu0 0.0
        %5038 = vmatpush1.msra.mxu0 0.0
        %5039 = vmatprep.subr.mxu0 0.0
        %5040 = vmatpush1.msra.mxu0 0.0
        %5041 = vmatprep.subr.mxu0 0.0
        %5042 = vmatpush1.msra.mxu0 0.0
        %5043 = vmatprep.subr.mxu0 0.0
        %5044 = vmatpush1.msra.mxu0 0.0
        %5045 = vmatprep.subr.mxu0 0.0
        %5046 = vmatpush1.msra.mxu0 0.0
        %5047 = vmatprep.subr.mxu0 0.0
        %5048 = vmatpush1.msra.mxu0 0.0
        %5049 = vmatprep.subr.mxu0 0.0
        %5050 = vmatpush1.msra.mxu0 0.0
        %5051 = vmatprep.subr.mxu0 0.0
        %5052 = vmatpush1.msra.mxu0 0.0
        %5053 = vmatprep.subr.mxu0 0.0
        %5054 = vmatpush1.msra.mxu0 0.0
        %5055 = vmatprep.subr.mxu0 0.0
        %5056 = vmatpush1.msra.mxu0 0.0
        %5057 = vmatprep.subr.mxu0 0.0
        %5058 = vmatpush1.msra.mxu0 0.0
        %5059 = vmatprep.subr.mxu0 0.0
        %5060 = vmatpush1.msra.mxu0 0.0
        %5061 = vmatprep.subr.mxu0 0.0
        %5062 = vmatpush1.msra.mxu0 0.0
        %5063 = vmatprep.subr.mxu0 0.0
        %5064 = vmatpush1.msra.mxu0 0.0
        %5065 = vmatprep.subr.mxu0 0.0
        %5066 = vmatpush1.msra.mxu0 0.0
        %5067 = vmatprep.subr.mxu0 0.0
        %5068 = vmatpush1.msra.mxu0 0.0
        %5069 = vmatprep.subr.mxu0 0.0
        %5070 = vmatpush1.msra.mxu0 0.0
        %5071 = vmatprep.subr.mxu0 0.0
        %5072 = vmatpush1.msra.mxu0 0.0
        %5073 = vmatprep.subr.mxu0 0.0
        %5074 = vmatpush1.msra.mxu0 0.0
        %5075 = vmatprep.subr.mxu0 0.0
        %5076 = vmatpush1.msra.mxu0 0.0
        %5077 = vmatprep.mubr.f32.mxu0 0.0
        %5078 = vmatmul.mubr.f32.gmra.mrb[0].mxu0 %v1264
        %v5079 = vpop.f32.mrb[0].mxu0
        %v5080 = vadd.f32 %v1261, %v5079
        %v5081 = vpop.f32.mrb[0].mxu0
        %5082 = vdwg.mxu0
        %v5087 = vrot.slane %v4552, 7
        %v5088 = vsel %vm788, %v5087, %v4551
        %v5089 = vrot.slane %v4553, 6
        %v5090 = vsel %vm791, %v5089, %v5088
        %v5091 = vrot.slane %v4554, 5
        %v5092 = vsel %vm794, %v5091, %v5090
        %v5094 = vmul.f32 %v1243, %v5092
        %v5095 = vadd.f32 %v5080, %v5094
        %v5097 = vsel %vm1114, %v5012, 0
        %v5100 = vsel %vm1114, %v4903, 0
        %v5103 = vsel %vm1114, %v4904, 0
        %5105 = vmatprep.subr.mxu0 0.0
        %5106 = vmatpush1.xpose.msra.mxu0 %v5100
        %5107 = vmatprep.subr.mxu0 0.0
        %5108 = vmatpush1.xpose.msra.mxu0 %v5103
        %5109 = vmatprep.subr.mxu0 0.0
        %5110 = vmatpush1.xpose.msra.mxu0 0.0
        %5111 = vmatprep.subr.mxu0 0.0
        %5112 = vmatpush1.xpose.msra.mxu0 0.0
        %5113 = vmatprep.subr.mxu0 0.0
        %5114 = vmatpush1.xpose.msra.mxu0 0.0
        %5115 = vmatprep.subr.mxu0 0.0
        %5116 = vmatpush1.xpose.msra.mxu0 0.0
        %5117 = vmatprep.subr.mxu0 0.0
        %5118 = vmatpush1.xpose.msra.mxu0 0.0
        %5119 = vmatprep.subr.mxu0 0.0
        %5120 = vmatpush1.xpose.msra.mxu0 0.0
        %5121 = vmatprep.subr.mxu0 0.0
        %5122 = vmatpush1.xpose.msra.mxu0 0.0
        %5123 = vmatprep.subr.mxu0 0.0
        %5124 = vmatpush1.xpose.msra.mxu0 0.0
        %5125 = vmatprep.subr.mxu0 0.0
        %5126 = vmatpush1.xpose.msra.mxu0 0.0
        %5127 = vmatprep.subr.mxu0 0.0
        %5128 = vmatpush1.xpose.msra.mxu0 0.0
        %5129 = vmatprep.subr.mxu0 0.0
        %5130 = vmatpush1.xpose.msra.mxu0 0.0
        %5131 = vmatprep.subr.mxu0 0.0
        %5132 = vmatpush1.xpose.msra.mxu0 0.0
        %5133 = vmatprep.subr.mxu0 0.0
        %5134 = vmatpush1.xpose.msra.mxu0 0.0
        %5135 = vmatprep.subr.mxu0 0.0
        %5136 = vmatpush1.xpose.msra.mxu0 0.0
        %5137 = vmatprep.subr.mxu0 0.0
        %5138 = vmatpush1.xpose.msra.mxu0 0.0
        %5139 = vmatprep.subr.mxu0 0.0
        %5140 = vmatpush1.xpose.msra.mxu0 0.0
        %5141 = vmatprep.subr.mxu0 0.0
        %5142 = vmatpush1.xpose.msra.mxu0 0.0
        %5143 = vmatprep.subr.mxu0 0.0
        %5144 = vmatpush1.xpose.msra.mxu0 0.0
        %5145 = vmatprep.subr.mxu0 0.0
        %5146 = vmatpush1.xpose.msra.mxu0 0.0
        %5147 = vmatprep.subr.mxu0 0.0
        %5148 = vmatpush1.xpose.msra.mxu0 0.0
        %5149 = vmatprep.subr.mxu0 0.0
        %5150 = vmatpush1.xpose.msra.mxu0 0.0
        %5151 = vmatprep.subr.mxu0 0.0
        %5152 = vmatpush1.xpose.msra.mxu0 0.0
        %5153 = vmatprep.subr.mxu0 0.0
        %5154 = vmatpush1.xpose.msra.mxu0 0.0
        %5155 = vmatprep.subr.mxu0 0.0
        %5156 = vmatpush1.xpose.msra.mxu0 0.0
        %5157 = vmatprep.subr.mxu0 0.0
        %5158 = vmatpush1.xpose.msra.mxu0 0.0
        %5159 = vmatprep.subr.mxu0 0.0
        %5160 = vmatpush1.xpose.msra.mxu0 0.0
        %5161 = vmatprep.subr.mxu0 0.0
        %5162 = vmatpush1.xpose.msra.mxu0 0.0
        %5163 = vmatprep.subr.mxu0 0.0
        %5164 = vmatpush1.xpose.msra.mxu0 0.0
        %5165 = vmatprep.subr.mxu0 0.0
        %5166 = vmatpush1.xpose.msra.mxu0 0.0
        %5167 = vmatprep.subr.mxu0 0.0
        %5168 = vmatpush1.xpose.msra.mxu0 0.0
        %5169 = vmatprep.mubr.f32.mxu0 0.0
        %5170 = vmatmul.mubr.f32.gmra.mrb[0].mxu0 %v5097
        %v5171 = vpop.f32.mrb[0].mxu0
        %v5172 = vadd.f32 0.0, %v5171
        %v5173 = vpop.f32.mrb[0].mxu0
        %5174 = vdwg.mxu0
        %v5176 = vsel %vm1114, %v5095, 0
        %5178 = vmatprep.subr.mxu0 0.0
        %5179 = vmatpush1.msra.mxu0 %v4928
        %5180 = vmatprep.subr.mxu0 0.0
        %5181 = vmatpush1.msra.mxu0 %v4929
        %5182 = vmatprep.subr.mxu0 0.0
        %5183 = vmatpush1.msra.mxu0 0.0
        %5184 = vmatprep.subr.mxu0 0.0
        %5185 = vmatpush1.msra.mxu0 0.0
        %5186 = vmatprep.subr.mxu0 0.0
        %5187 = vmatpush1.msra.mxu0 0.0
        %5188 = vmatprep.subr.mxu0 0.0
        %5189 = vmatpush1.msra.mxu0 0.0
        %5190 = vmatprep.subr.mxu0 0.0
        %5191 = vmatpush1.msra.mxu0 0.0
        %5192 = vmatprep.subr.mxu0 0.0
        %5193 = vmatpush1.msra.mxu0 0.0
        %5194 = vmatprep.subr.mxu0 0.0
        %5195 = vmatpush1.msra.mxu0 0.0
        %5196 = vmatprep.subr.mxu0 0.0
        %5197 = vmatpush1.msra.mxu0 0.0
        %5198 = vmatprep.subr.mxu0 0.0
        %5199 = vmatpush1.msra.mxu0 0.0
        %5200 = vmatprep.subr.mxu0 0.0
        %5201 = vmatpush1.msra.mxu0 0.0
        %5202 = vmatprep.subr.mxu0 0.0
        %5203 = vmatpush1.msra.mxu0 0.0
        %5204 = vmatprep.subr.mxu0 0.0
        %5205 = vmatpush1.msra.mxu0 0.0
        %5206 = vmatprep.subr.mxu0 0.0
        %5207 = vmatpush1.msra.mxu0 0.0
        %5208 = vmatprep.subr.mxu0 0.0
        %5209 = vmatpush1.msra.mxu0 0.0
        %5210 = vmatprep.subr.mxu0 0.0
        %5211 = vmatpush1.msra.mxu0 0.0
        %5212 = vmatprep.subr.mxu0 0.0
        %5213 = vmatpush1.msra.mxu0 0.0
        %5214 = vmatprep.subr.mxu0 0.0
        %5215 = vmatpush1.msra.mxu0 0.0
        %5216 = vmatprep.subr.mxu0 0.0
        %5217 = vmatpush1.msra.mxu0 0.0
        %5218 = vmatprep.subr.mxu0 0.0
        %5219 = vmatpush1.msra.mxu0 0.0
        %5220 = vmatprep.subr.mxu0 0.0
        %5221 = vmatpush1.msra.mxu0 0.0
        %5222 = vmatprep.subr.mxu0 0.0
        %5223 = vmatpush1.msra.mxu0 0.0
        %5224 = vmatprep.subr.mxu0 0.0
        %5225 = vmatpush1.msra.mxu0 0.0
        %5226 = vmatprep.subr.mxu0 0.0
        %5227 = vmatpush1.msra.mxu0 0.0
        %5228 = vmatprep.subr.mxu0 0.0
        %5229 = vmatpush1.msra.mxu0 0.0
        %5230 = vmatprep.subr.mxu0 0.0
        %5231 = vmatpush1.msra.mxu0 0.0
        %5232 = vmatprep.subr.mxu0 0.0
        %5233 = vmatpush1.msra.mxu0 0.0
        %5234 = vmatprep.subr.mxu0 0.0
        %5235 = vmatpush1.msra.mxu0 0.0
        %5236 = vmatprep.subr.mxu0 0.0
        %5237 = vmatpush1.msra.mxu0 0.0
        %5238 = vmatprep.subr.mxu0 0.0
        %5239 = vmatpush1.msra.mxu0 0.0
        %5240 = vmatprep.subr.mxu0 0.0
        %5241 = vmatpush1.msra.mxu0 0.0
        %5242 = vmatprep.mubr.f32.mxu0 0.0
        %5243 = vmatmul.mubr.f32.gmra.mrb[0].mxu0 %v5176
        %v5244 = vpop.f32.mrb[0].mxu0
        %v5245 = vadd.f32 0.0, %v5244
        %v5246 = vpop.f32.mrb[0].mxu0
        %5247 = vdwg.mxu0
        %v5248 = vmul.f32 %v1504, %v5172
        %v5250 = vrot.slane %v5248, 1
        %v5251 = vrot.slane %v5248, 2
        %v5252 = vrot.slane %v5248, 3
        %v5257 = vadd.f32 %v4535, %v5248
        %v5258 = vadd.f32 %v4536, %v5250
        %v5259 = vadd.f32 %v4537, %v5251
        %v5260 = vadd.f32 %v4538, %v5252
        %5261 = vst.msk [vmem:[%s719 + $0x5] sm:$0x1] %vm1519, %v5257
        %5262 = vst.msk [vmem:[%s719 + $0xd] sm:$0x1] %vm1519, %v5258
        %5263 = vst.msk [vmem:[%s719 + $0x15] sm:$0x1] %vm1519, %v5259
        %5264 = vst.msk [vmem:[%s719 + $0x1d] sm:$0x1] %vm1519, %v5260
        %v5265 = vmul.f32 %v1527, %v5245
        %v5267 = vrot.slane %v5265, 1
        %v5268 = vrot.slane %v5265, 2
        %v5269 = vrot.slane %v5265, 3
        %v5274 = vadd.f32 %v4539, %v5265
        %v5275 = vadd.f32 %v4540, %v5267
        %v5276 = vadd.f32 %v4541, %v5268
        %v5277 = vadd.f32 %v4542, %v5269
        %5278 = vst.msk [vmem:[%s1542 + $0x5] sm:$0x1] %vm1519, %v5274
        %5279 = vst.msk [vmem:[%s1542 + $0xd] sm:$0x1] %vm1519, %v5275
        %5280 = vst.msk [vmem:[%s1542 + $0x15] sm:$0x1] %vm1519, %v5276
        %5281 = vst.msk [vmem:[%s1542 + $0x1d] sm:$0x1] %vm1519, %v5277
        %v5282 = vld [vmem:[%s635 + $0x6] sm:$0x1]
        %v5283 = vld [vmem:[%s635 + $0xe] sm:$0x1]
        %v5284 = vld [vmem:[%s635 + $0x16] sm:$0x1]
        %v5285 = vld [vmem:[%s635 + $0x1e] sm:$0x1]
        %v5286 = vld [vmem:[%s753 + $0x6] sm:$0x1]
        %v5287 = vld [vmem:[%s753 + $0xe] sm:$0x1]
        %v5288 = vld [vmem:[%s753 + $0x16] sm:$0x1]
        %v5289 = vld [vmem:[%s753 + $0x1e] sm:$0x1]
        %v5290 = vld [vmem:[%s644 + $0x6] sm:$0x1]
        %v5291 = vld [vmem:[%s644 + $0xe] sm:$0x1]
        %v5292 = vld [vmem:[%s644 + $0x16] sm:$0x1]
        %v5293 = vld [vmem:[%s644 + $0x1e] sm:$0x1]
        %v5294 = vld [vmem:[%s762 + $0x6] sm:$0x1]
        %v5295 = vld [vmem:[%s762 + $0xe] sm:$0x1]
        %v5296 = vld [vmem:[%s762 + $0x16] sm:$0x1]
        %v5297 = vld [vmem:[%s762 + $0x1e] sm:$0x1]
        %v5298 = vld [vmem:[%s653 + $0x6] sm:$0x1]
        %v5299 = vld [vmem:[%s653 + $0xe] sm:$0x1]
        %v5300 = vld [vmem:[%s653 + $0x16] sm:$0x1]
        %v5301 = vld [vmem:[%s653 + $0x1e] sm:$0x1]
        %v5302 = vld [vmem:[%s771 + $0x6] sm:$0x1]
        %v5303 = vld [vmem:[%s771 + $0xe] sm:$0x1]
        %v5304 = vld [vmem:[%s771 + $0x16] sm:$0x1]
        %v5305 = vld [vmem:[%s771 + $0x1e] sm:$0x1]
        %s5306 = scalar_lea.vmem %s724, 24
        %v5307 = vld [vmem:[%s5306] sm:$0xf]
        %s5308 = scalar_lea.vmem %s730, 24
        %v5309 = vld [vmem:[%s5308] sm:$0xf]
        %5311 = vset.pattern.permute.xlu0 0
        %5312 = vperm.xlu0 %5311, %v5307
        %v5313 = vpop.permute.xlu0 %5312
        %v5319 = vrot.slane %v5283, 7
        %v5320 = vsel %vm788, %v5319, %v5282
        %v5321 = vrot.slane %v5284, 6
        %v5322 = vsel %vm791, %v5321, %v5320
        %v5323 = vrot.slane %v5285, 5
        %v5324 = vsel %vm794, %v5323, %v5322
        %v5325 = vsel %vm800, %v5324, 0
        %5327 = vmatprep.subr.mxu0 0.0
        %5328 = vmatpush1.msra.mxu0 %v5325
        %5329 = vmatprep.subr.mxu0 0.0
        %5330 = vmatpush1.msra.mxu0 0.0
        %5331 = vmatprep.subr.mxu0 0.0
        %5332 = vmatpush1.msra.mxu0 0.0
        %5333 = vmatprep.subr.mxu0 0.0
        %5334 = vmatpush1.msra.mxu0 0.0
        %5335 = vmatprep.subr.mxu0 0.0
        %5336 = vmatpush1.msra.mxu0 0.0
        %5337 = vmatprep.subr.mxu0 0.0
        %5338 = vmatpush1.msra.mxu0 0.0
        %5339 = vmatprep.subr.mxu0 0.0
        %5340 = vmatpush1.msra.mxu0 0.0
        %5341 = vmatprep.subr.mxu0 0.0
        %5342 = vmatpush1.msra.mxu0 0.0
        %5343 = vmatprep.subr.mxu0 0.0
        %5344 = vmatpush1.msra.mxu0 0.0
        %5345 = vmatprep.subr.mxu0 0.0
        %5346 = vmatpush1.msra.mxu0 0.0
        %5347 = vmatprep.subr.mxu0 0.0
        %5348 = vmatpush1.msra.mxu0 0.0
        %5349 = vmatprep.subr.mxu0 0.0
        %5350 = vmatpush1.msra.mxu0 0.0
        %5351 = vmatprep.subr.mxu0 0.0
        %5352 = vmatpush1.msra.mxu0 0.0
        %5353 = vmatprep.subr.mxu0 0.0
        %5354 = vmatpush1.msra.mxu0 0.0
        %5355 = vmatprep.subr.mxu0 0.0
        %5356 = vmatpush1.msra.mxu0 0.0
        %5357 = vmatprep.subr.mxu0 0.0
        %5358 = vmatpush1.msra.mxu0 0.0
        %5359 = vmatprep.subr.mxu0 0.0
        %5360 = vmatpush1.msra.mxu0 0.0
        %5361 = vmatprep.subr.mxu0 0.0
        %5362 = vmatpush1.msra.mxu0 0.0
        %5363 = vmatprep.subr.mxu0 0.0
        %5364 = vmatpush1.msra.mxu0 0.0
        %5365 = vmatprep.subr.mxu0 0.0
        %5366 = vmatpush1.msra.mxu0 0.0
        %5367 = vmatprep.subr.mxu0 0.0
        %5368 = vmatpush1.msra.mxu0 0.0
        %5369 = vmatprep.subr.mxu0 0.0
        %5370 = vmatpush1.msra.mxu0 0.0
        %5371 = vmatprep.subr.mxu0 0.0
        %5372 = vmatpush1.msra.mxu0 0.0
        %5373 = vmatprep.subr.mxu0 0.0
        %5374 = vmatpush1.msra.mxu0 0.0
        %5375 = vmatprep.subr.mxu0 0.0
        %5376 = vmatpush1.msra.mxu0 0.0
        %5377 = vmatprep.subr.mxu0 0.0
        %5378 = vmatpush1.msra.mxu0 0.0
        %5379 = vmatprep.subr.mxu0 0.0
        %5380 = vmatpush1.msra.mxu0 0.0
        %5381 = vmatprep.subr.mxu0 0.0
        %5382 = vmatpush1.msra.mxu0 0.0
        %5383 = vmatprep.subr.mxu0 0.0
        %5384 = vmatpush1.msra.mxu0 0.0
        %5385 = vmatprep.subr.mxu0 0.0
        %5386 = vmatpush1.msra.mxu0 0.0
        %5387 = vmatprep.subr.mxu0 0.0
        %5388 = vmatpush1.msra.mxu0 0.0
        %5389 = vmatprep.subr.mxu0 0.0
        %5390 = vmatpush1.msra.mxu0 0.0
        %5391 = vmatprep.mubr.f32.mxu0 0.0
        %5392 = vmatmul.mubr.f32.gmra.mrb[0].mxu0 %v798
        %v5393 = vpop.f32.mrb[0].mxu0
        %v5394 = vadd.f32 %v5313, %v5393
        %v5395 = vpop.f32.mrb[0].mxu0
        %5396 = vdwg.mxu0
        %v5401 = vrot.slane %v5291, 7
        %v5402 = vsel %vm788, %v5401, %v5290
        %v5403 = vrot.slane %v5292, 6
        %v5404 = vsel %vm791, %v5403, %v5402
        %v5405 = vrot.slane %v5293, 5
        %v5406 = vsel %vm794, %v5405, %v5404
        %v5408 = vmul.f32 %v876, %v5406
        %v5409 = vadd.f32 %v5394, %v5408
        %5411 = vset.pattern.permute.xlu0 0
        %5412 = vperm.xlu0 %5411, %v5309
        %v5413 = vpop.permute.xlu0 %5412
        %v5419 = vrot.slane %v5287, 7
        %v5420 = vsel %vm788, %v5419, %v5286
        %v5421 = vrot.slane %v5288, 6
        %v5422 = vsel %vm791, %v5421, %v5420
        %v5423 = vrot.slane %v5289, 5
        %v5424 = vsel %vm794, %v5423, %v5422
        %v5425 = vsel %vm800, %v5424, 0
        %5427 = vmatprep.subr.mxu0 0.0
        %5428 = vmatpush1.msra.mxu0 %v5425
        %5429 = vmatprep.subr.mxu0 0.0
        %5430 = vmatpush1.msra.mxu0 0.0
        %5431 = vmatprep.subr.mxu0 0.0
        %5432 = vmatpush1.msra.mxu0 0.0
        %5433 = vmatprep.subr.mxu0 0.0
        %5434 = vmatpush1.msra.mxu0 0.0
        %5435 = vmatprep.subr.mxu0 0.0
        %5436 = vmatpush1.msra.mxu0 0.0
        %5437 = vmatprep.subr.mxu0 0.0
        %5438 = vmatpush1.msra.mxu0 0.0
        %5439 = vmatprep.subr.mxu0 0.0
        %5440 = vmatpush1.msra.mxu0 0.0
        %5441 = vmatprep.subr.mxu0 0.0
        %5442 = vmatpush1.msra.mxu0 0.0
        %5443 = vmatprep.subr.mxu0 0.0
        %5444 = vmatpush1.msra.mxu0 0.0
        %5445 = vmatprep.subr.mxu0 0.0
        %5446 = vmatpush1.msra.mxu0 0.0
        %5447 = vmatprep.subr.mxu0 0.0
        %5448 = vmatpush1.msra.mxu0 0.0
        %5449 = vmatprep.subr.mxu0 0.0
        %5450 = vmatpush1.msra.mxu0 0.0
        %5451 = vmatprep.subr.mxu0 0.0
        %5452 = vmatpush1.msra.mxu0 0.0
        %5453 = vmatprep.subr.mxu0 0.0
        %5454 = vmatpush1.msra.mxu0 0.0
        %5455 = vmatprep.subr.mxu0 0.0
        %5456 = vmatpush1.msra.mxu0 0.0
        %5457 = vmatprep.subr.mxu0 0.0
        %5458 = vmatpush1.msra.mxu0 0.0
        %5459 = vmatprep.subr.mxu0 0.0
        %5460 = vmatpush1.msra.mxu0 0.0
        %5461 = vmatprep.subr.mxu0 0.0
        %5462 = vmatpush1.msra.mxu0 0.0
        %5463 = vmatprep.subr.mxu0 0.0
        %5464 = vmatpush1.msra.mxu0 0.0
        %5465 = vmatprep.subr.mxu0 0.0
        %5466 = vmatpush1.msra.mxu0 0.0
        %5467 = vmatprep.subr.mxu0 0.0
        %5468 = vmatpush1.msra.mxu0 0.0
        %5469 = vmatprep.subr.mxu0 0.0
        %5470 = vmatpush1.msra.mxu0 0.0
        %5471 = vmatprep.subr.mxu0 0.0
        %5472 = vmatpush1.msra.mxu0 0.0
        %5473 = vmatprep.subr.mxu0 0.0
        %5474 = vmatpush1.msra.mxu0 0.0
        %5475 = vmatprep.subr.mxu0 0.0
        %5476 = vmatpush1.msra.mxu0 0.0
        %5477 = vmatprep.subr.mxu0 0.0
        %5478 = vmatpush1.msra.mxu0 0.0
        %5479 = vmatprep.subr.mxu0 0.0
        %5480 = vmatpush1.msra.mxu0 0.0
        %5481 = vmatprep.subr.mxu0 0.0
        %5482 = vmatpush1.msra.mxu0 0.0
        %5483 = vmatprep.subr.mxu0 0.0
        %5484 = vmatpush1.msra.mxu0 0.0
        %5485 = vmatprep.subr.mxu0 0.0
        %5486 = vmatpush1.msra.mxu0 0.0
        %5487 = vmatprep.subr.mxu0 0.0
        %5488 = vmatpush1.msra.mxu0 0.0
        %5489 = vmatprep.subr.mxu0 0.0
        %5490 = vmatpush1.msra.mxu0 0.0
        %5491 = vmatprep.mubr.f32.mxu0 0.0
        %5492 = vmatmul.mubr.f32.gmra.mrb[0].mxu0 %v907
        %v5493 = vpop.f32.mrb[0].mxu0
        %v5494 = vadd.f32 %v5413, %v5493
        %v5495 = vpop.f32.mrb[0].mxu0
        %5496 = vdwg.mxu0
        %v5501 = vrot.slane %v5295, 7
        %v5502 = vsel %vm788, %v5501, %v5294
        %v5503 = vrot.slane %v5296, 6
        %v5504 = vsel %vm791, %v5503, %v5502
        %v5505 = vrot.slane %v5297, 5
        %v5506 = vsel %vm794, %v5505, %v5504
        %v5508 = vmul.f32 %v876, %v5506
        %v5509 = vadd.f32 %v5494, %v5508
        %5510 = vxpose.xlu0.b32.start [1/16] %v5409, 128
        %5511 = vxpose.xlu0.b32.cont [2/16] 0.0, 128
        %5512 = vxpose.xlu0.b32.cont [3/16] 0.0, 128
        %5513 = vxpose.xlu0.b32.cont [4/16] 0.0, 128
        %5514 = vxpose.xlu0.b32.cont [5/16] 0.0, 128
        %5515 = vxpose.xlu0.b32.cont [6/16] 0.0, 128
        %5516 = vxpose.xlu0.b32.cont [7/16] 0.0, 128
        %5517 = vxpose.xlu0.b32.cont [8/16] 0.0, 128
        %5518 = vxpose.xlu0.b32.cont [9/16] 0.0, 128
        %5519 = vxpose.xlu0.b32.cont [10/16] 0.0, 128
        %5520 = vxpose.xlu0.b32.cont [11/16] 0.0, 128
        %5521 = vxpose.xlu0.b32.cont [12/16] 0.0, 128
        %5522 = vxpose.xlu0.b32.cont [13/16] 0.0, 128
        %5523 = vxpose.xlu0.b32.cont [14/16] 0.0, 128
        %5524 = vxpose.xlu0.b32.cont [15/16] 0.0, 128
        %5525 = vxpose.xlu0.b32.end [16/16] 0.0, 128
        %v5526 = vpop.trf.xlu0
        %v5527 = vpop.trf.xlu0
        %v5528 = vpop.trf.xlu0
        %v5529 = vpop.trf.xlu0
        %v5530 = vpop.trf.xlu0
        %v5531 = vpop.trf.xlu0
        %v5532 = vpop.trf.xlu0
        %v5533 = vpop.trf.xlu0
        %v5534 = vpop.trf.xlu0
        %v5535 = vpop.trf.xlu0
        %v5536 = vpop.trf.xlu0
        %v5537 = vpop.trf.xlu0
        %v5538 = vpop.trf.xlu0
        %v5539 = vpop.trf.xlu0
        %v5540 = vpop.trf.xlu0
        %v5541 = vpop.trf.xlu0
        %v5543 = vsel %vm796, %v5526, 0
        %v5546 = vsel %vm796, %v5527, 0
        %v5549 = vsel %vm800, %v5509, 0
        %5551 = vmatprep.subr.mxu0 0.0
        %5552 = vmatpush1.msra.mxu0 %v5549
        %5553 = vmatprep.subr.mxu0 0.0
        %5554 = vmatpush1.msra.mxu0 0.0
        %5555 = vmatprep.subr.mxu0 0.0
        %5556 = vmatpush1.msra.mxu0 0.0
        %5557 = vmatprep.subr.mxu0 0.0
        %5558 = vmatpush1.msra.mxu0 0.0
        %5559 = vmatprep.subr.mxu0 0.0
        %5560 = vmatpush1.msra.mxu0 0.0
        %5561 = vmatprep.subr.mxu0 0.0
        %5562 = vmatpush1.msra.mxu0 0.0
        %5563 = vmatprep.subr.mxu0 0.0
        %5564 = vmatpush1.msra.mxu0 0.0
        %5565 = vmatprep.subr.mxu0 0.0
        %5566 = vmatpush1.msra.mxu0 0.0
        %5567 = vmatprep.subr.mxu0 0.0
        %5568 = vmatpush1.msra.mxu0 0.0
        %5569 = vmatprep.subr.mxu0 0.0
        %5570 = vmatpush1.msra.mxu0 0.0
        %5571 = vmatprep.subr.mxu0 0.0
        %5572 = vmatpush1.msra.mxu0 0.0
        %5573 = vmatprep.subr.mxu0 0.0
        %5574 = vmatpush1.msra.mxu0 0.0
        %5575 = vmatprep.subr.mxu0 0.0
        %5576 = vmatpush1.msra.mxu0 0.0
        %5577 = vmatprep.subr.mxu0 0.0
        %5578 = vmatpush1.msra.mxu0 0.0
        %5579 = vmatprep.subr.mxu0 0.0
        %5580 = vmatpush1.msra.mxu0 0.0
        %5581 = vmatprep.subr.mxu0 0.0
        %5582 = vmatpush1.msra.mxu0 0.0
        %5583 = vmatprep.subr.mxu0 0.0
        %5584 = vmatpush1.msra.mxu0 0.0
        %5585 = vmatprep.subr.mxu0 0.0
        %5586 = vmatpush1.msra.mxu0 0.0
        %5587 = vmatprep.subr.mxu0 0.0
        %5588 = vmatpush1.msra.mxu0 0.0
        %5589 = vmatprep.subr.mxu0 0.0
        %5590 = vmatpush1.msra.mxu0 0.0
        %5591 = vmatprep.subr.mxu0 0.0
        %5592 = vmatpush1.msra.mxu0 0.0
        %5593 = vmatprep.subr.mxu0 0.0
        %5594 = vmatpush1.msra.mxu0 0.0
        %5595 = vmatprep.subr.mxu0 0.0
        %5596 = vmatpush1.msra.mxu0 0.0
        %5597 = vmatprep.subr.mxu0 0.0
        %5598 = vmatpush1.msra.mxu0 0.0
        %5599 = vmatprep.subr.mxu0 0.0
        %5600 = vmatpush1.msra.mxu0 0.0
        %5601 = vmatprep.subr.mxu0 0.0
        %5602 = vmatpush1.msra.mxu0 0.0
        %5603 = vmatprep.subr.mxu0 0.0
        %5604 = vmatpush1.msra.mxu0 0.0
        %5605 = vmatprep.subr.mxu0 0.0
        %5606 = vmatpush1.msra.mxu0 0.0
        %5607 = vmatprep.subr.mxu0 0.0
        %5608 = vmatpush1.msra.mxu0 0.0
        %5609 = vmatprep.subr.mxu0 0.0
        %5610 = vmatpush1.msra.mxu0 0.0
        %5611 = vmatprep.subr.mxu0 0.0
        %5612 = vmatpush1.msra.mxu0 0.0
        %5613 = vmatprep.subr.mxu0 0.0
        %5614 = vmatpush1.msra.mxu0 0.0
        %5615 = vmatprep.mubr.f32.mxu0 0.0
        %5616 = vmatmul.mubr.f32.gmra.mrb[0].mxu0 %v5543
        %v5617 = vpop.f32.mrb[0].mxu0
        %v5618 = vadd.f32 0.0, %v5617
        %v5619 = vpop.f32.mrb[0].mxu0
        %5620 = vmatprep.mubr.f32.mxu0 0.0
        %5621 = vmatmul.mubr.f32.gmra.mrb[0].mxu0 %v5546
        %v5622 = vpop.f32.mrb[0].mxu0
        %v5623 = vadd.f32 0.0, %v5622
        %v5624 = vpop.f32.mrb[0].mxu0
        %5625 = vdwg.mxu0
        %v5626 = vmul.f32 %v5618, 0.5
        %v5627 = vmul.f32 %v5623, 0.5
        %v5628 = vsel %vm747, %v5626, -65504.0
        %v5629 = vsel %vm748, %v5627, -65504.0
        %v5630 = vsel %vm1114, %v5628, -inf
        %5631 = vmax.xlane.f32.xlu0 %v5630
        %v5632 = vpop.xlane.xlu0 %5631
        %v5633 = vsel %vm1114, %v5629, -inf
        %5634 = vmax.xlane.f32.xlu0 %v5633
        %v5635 = vpop.xlane.xlu0 %5634
        %v5636 = vsub.f32 %v5628, %v5632
        %v5637 = vsub.f32 %v5629, %v5635
        %v5638 = vmul.f32 %v5636, 1.442695
        %v5639 = vpow.pop %v5638
        %v5640 = vmul.f32 %v5637, 1.442695
        %v5641 = vpow.pop %v5640
        %v5642 = vsel %vm1114, %v5639, 0.0
        %5643 = vadd.xlane.f32.xlu0 %v5642
        %v5644 = vpop.xlane.xlu0 %5643
        %v5645 = vsel %vm1114, %v5641, 0.0
        %5646 = vadd.xlane.f32.xlu0 %v5645
        %v5647 = vpop.xlane.xlu0 %5646
        %v5648 = vrcp.pop %v5644
        %v5649 = vrcp.pop %v5647
        %v5650 = vmul.f32 %v5639, %v5648
        %v5651 = vmul.f32 %v5641, %v5649
        %v5652 = vmax.f32 %v5630, %v5633
        %v5653 = vrot.slane %v5652, 4
        %v5654 = vmax.f32 %v5652, %v5653
        %v5655 = vrot.slane %v5654, 2
        %v5656 = vmax.f32 %v5654, %v5655
        %v5657 = vrot.slane %v5656, 1
        %v5658 = vmax.f32 %v5656, %v5657
        %v5659 = vsub.f32 %v5628, %v5658
        %v5660 = vsub.f32 %v5629, %v5658
        %v5661 = vmul.f32 %v5659, 1.442695
        %v5662 = vpow.pop %v5661
        %v5663 = vmul.f32 %v5660, 1.442695
        %v5664 = vpow.pop %v5663
        %v5665 = vsel %vm1114, %v5662, 0.0
        %v5666 = vsel %vm1114, %v5664, 0.0
        %v5667 = vadd.f32 %v5665, %v5666
        %v5668 = vrot.slane %v5667, 4
        %v5669 = vadd.f32 %v5667, %v5668
        %v5670 = vrot.slane %v5669, 2
        %v5671 = vadd.f32 %v5669, %v5670
        %v5672 = vrot.slane %v5671, 1
        %v5673 = vadd.f32 %v5671, %v5672
        %v5674 = vrcp.pop %v5673
        %v5675 = vmul.f32 %v5662, %v5674
        %v5676 = vmul.f32 %v5664, %v5674
        %5677 = vmatprep.subr.mxu0 0.0
        %5678 = vmatpush1.msra.mxu0 %v5425
        %5679 = vmatprep.subr.mxu0 0.0
        %5680 = vmatpush1.msra.mxu0 0.0
        %5681 = vmatprep.subr.mxu0 0.0
        %5682 = vmatpush1.msra.mxu0 0.0
        %5683 = vmatprep.subr.mxu0 0.0
        %5684 = vmatpush1.msra.mxu0 0.0
        %5685 = vmatprep.subr.mxu0 0.0
        %5686 = vmatpush1.msra.mxu0 0.0
        %5687 = vmatprep.subr.mxu0 0.0
        %5688 = vmatpush1.msra.mxu0 0.0
        %5689 = vmatprep.subr.mxu0 0.0
        %5690 = vmatpush1.msra.mxu0 0.0
        %5691 = vmatprep.subr.mxu0 0.0
        %5692 = vmatpush1.msra.mxu0 0.0
        %5693 = vmatprep.subr.mxu0 0.0
        %5694 = vmatpush1.msra.mxu0 0.0
        %5695 = vmatprep.subr.mxu0 0.0
        %5696 = vmatpush1.msra.mxu0 0.0
        %5697 = vmatprep.subr.mxu0 0.0
        %5698 = vmatpush1.msra.mxu0 0.0
        %5699 = vmatprep.subr.mxu0 0.0
        %5700 = vmatpush1.msra.mxu0 0.0
        %5701 = vmatprep.subr.mxu0 0.0
        %5702 = vmatpush1.msra.mxu0 0.0
        %5703 = vmatprep.subr.mxu0 0.0
        %5704 = vmatpush1.msra.mxu0 0.0
        %5705 = vmatprep.subr.mxu0 0.0
        %5706 = vmatpush1.msra.mxu0 0.0
        %5707 = vmatprep.subr.mxu0 0.0
        %5708 = vmatpush1.msra.mxu0 0.0
        %5709 = vmatprep.subr.mxu0 0.0
        %5710 = vmatpush1.msra.mxu0 0.0
        %5711 = vmatprep.subr.mxu0 0.0
        %5712 = vmatpush1.msra.mxu0 0.0
        %5713 = vmatprep.subr.mxu0 0.0
        %5714 = vmatpush1.msra.mxu0 0.0
        %5715 = vmatprep.subr.mxu0 0.0
        %5716 = vmatpush1.msra.mxu0 0.0
        %5717 = vmatprep.subr.mxu0 0.0
        %5718 = vmatpush1.msra.mxu0 0.0
        %5719 = vmatprep.subr.mxu0 0.0
        %5720 = vmatpush1.msra.mxu0 0.0
        %5721 = vmatprep.subr.mxu0 0.0
        %5722 = vmatpush1.msra.mxu0 0.0
        %5723 = vmatprep.subr.mxu0 0.0
        %5724 = vmatpush1.msra.mxu0 0.0
        %5725 = vmatprep.subr.mxu0 0.0
        %5726 = vmatpush1.msra.mxu0 0.0
        %5727 = vmatprep.subr.mxu0 0.0
        %5728 = vmatpush1.msra.mxu0 0.0
        %5729 = vmatprep.subr.mxu0 0.0
        %5730 = vmatpush1.msra.mxu0 0.0
        %5731 = vmatprep.subr.mxu0 0.0
        %5732 = vmatpush1.msra.mxu0 0.0
        %5733 = vmatprep.subr.mxu0 0.0
        %5734 = vmatpush1.msra.mxu0 0.0
        %5735 = vmatprep.subr.mxu0 0.0
        %5736 = vmatpush1.msra.mxu0 0.0
        %5737 = vmatprep.subr.mxu0 0.0
        %5738 = vmatpush1.msra.mxu0 0.0
        %5739 = vmatprep.subr.mxu0 0.0
        %5740 = vmatpush1.msra.mxu0 0.0
        %5741 = vmatprep.mubr.f32.mxu0 0.0
        %5742 = vmatmul.mubr.f32.gmra.mrb[0].mxu0 %v1168
        %v5743 = vpop.f32.mrb[0].mxu0
        %v5744 = vadd.f32 %v1165, %v5743
        %v5745 = vpop.f32.mrb[0].mxu0
        %5746 = vdwg.mxu0
        %v5751 = vrot.slane %v5303, 7
        %v5752 = vsel %vm788, %v5751, %v5302
        %v5753 = vrot.slane %v5304, 6
        %v5754 = vsel %vm791, %v5753, %v5752
        %v5755 = vrot.slane %v5305, 5
        %v5756 = vsel %vm794, %v5755, %v5754
        %v5758 = vmul.f32 %v1243, %v5756
        %v5759 = vadd.f32 %v5744, %v5758
        %5760 = vmatprep.subr.mxu0 0.0
        %5761 = vmatpush1.msra.mxu0 %v5325
        %5762 = vmatprep.subr.mxu0 0.0
        %5763 = vmatpush1.msra.mxu0 0.0
        %5764 = vmatprep.subr.mxu0 0.0
        %5765 = vmatpush1.msra.mxu0 0.0
        %5766 = vmatprep.subr.mxu0 0.0
        %5767 = vmatpush1.msra.mxu0 0.0
        %5768 = vmatprep.subr.mxu0 0.0
        %5769 = vmatpush1.msra.mxu0 0.0
        %5770 = vmatprep.subr.mxu0 0.0
        %5771 = vmatpush1.msra.mxu0 0.0
        %5772 = vmatprep.subr.mxu0 0.0
        %5773 = vmatpush1.msra.mxu0 0.0
        %5774 = vmatprep.subr.mxu0 0.0
        %5775 = vmatpush1.msra.mxu0 0.0
        %5776 = vmatprep.subr.mxu0 0.0
        %5777 = vmatpush1.msra.mxu0 0.0
        %5778 = vmatprep.subr.mxu0 0.0
        %5779 = vmatpush1.msra.mxu0 0.0
        %5780 = vmatprep.subr.mxu0 0.0
        %5781 = vmatpush1.msra.mxu0 0.0
        %5782 = vmatprep.subr.mxu0 0.0
        %5783 = vmatpush1.msra.mxu0 0.0
        %5784 = vmatprep.subr.mxu0 0.0
        %5785 = vmatpush1.msra.mxu0 0.0
        %5786 = vmatprep.subr.mxu0 0.0
        %5787 = vmatpush1.msra.mxu0 0.0
        %5788 = vmatprep.subr.mxu0 0.0
        %5789 = vmatpush1.msra.mxu0 0.0
        %5790 = vmatprep.subr.mxu0 0.0
        %5791 = vmatpush1.msra.mxu0 0.0
        %5792 = vmatprep.subr.mxu0 0.0
        %5793 = vmatpush1.msra.mxu0 0.0
        %5794 = vmatprep.subr.mxu0 0.0
        %5795 = vmatpush1.msra.mxu0 0.0
        %5796 = vmatprep.subr.mxu0 0.0
        %5797 = vmatpush1.msra.mxu0 0.0
        %5798 = vmatprep.subr.mxu0 0.0
        %5799 = vmatpush1.msra.mxu0 0.0
        %5800 = vmatprep.subr.mxu0 0.0
        %5801 = vmatpush1.msra.mxu0 0.0
        %5802 = vmatprep.subr.mxu0 0.0
        %5803 = vmatpush1.msra.mxu0 0.0
        %5804 = vmatprep.subr.mxu0 0.0
        %5805 = vmatpush1.msra.mxu0 0.0
        %5806 = vmatprep.subr.mxu0 0.0
        %5807 = vmatpush1.msra.mxu0 0.0
        %5808 = vmatprep.subr.mxu0 0.0
        %5809 = vmatpush1.msra.mxu0 0.0
        %5810 = vmatprep.subr.mxu0 0.0
        %5811 = vmatpush1.msra.mxu0 0.0
        %5812 = vmatprep.subr.mxu0 0.0
        %5813 = vmatpush1.msra.mxu0 0.0
        %5814 = vmatprep.subr.mxu0 0.0
        %5815 = vmatpush1.msra.mxu0 0.0
        %5816 = vmatprep.subr.mxu0 0.0
        %5817 = vmatpush1.msra.mxu0 0.0
        %5818 = vmatprep.subr.mxu0 0.0
        %5819 = vmatpush1.msra.mxu0 0.0
        %5820 = vmatprep.subr.mxu0 0.0
        %5821 = vmatpush1.msra.mxu0 0.0
        %5822 = vmatprep.subr.mxu0 0.0
        %5823 = vmatpush1.msra.mxu0 0.0
        %5824 = vmatprep.mubr.f32.mxu0 0.0
        %5825 = vmatmul.mubr.f32.gmra.mrb[0].mxu0 %v1264
        %v5826 = vpop.f32.mrb[0].mxu0
        %v5827 = vadd.f32 %v1261, %v5826
        %v5828 = vpop.f32.mrb[0].mxu0
        %5829 = vdwg.mxu0
        %v5834 = vrot.slane %v5299, 7
        %v5835 = vsel %vm788, %v5834, %v5298
        %v5836 = vrot.slane %v5300, 6
        %v5837 = vsel %vm791, %v5836, %v5835
        %v5838 = vrot.slane %v5301, 5
        %v5839 = vsel %vm794, %v5838, %v5837
        %v5841 = vmul.f32 %v1243, %v5839
        %v5842 = vadd.f32 %v5827, %v5841
        %v5844 = vsel %vm1114, %v5759, 0
        %v5847 = vsel %vm1114, %v5650, 0
        %v5850 = vsel %vm1114, %v5651, 0
        %5852 = vmatprep.subr.mxu0 0.0
        %5853 = vmatpush1.xpose.msra.mxu0 %v5847
        %5854 = vmatprep.subr.mxu0 0.0
        %5855 = vmatpush1.xpose.msra.mxu0 %v5850
        %5856 = vmatprep.subr.mxu0 0.0
        %5857 = vmatpush1.xpose.msra.mxu0 0.0
        %5858 = vmatprep.subr.mxu0 0.0
        %5859 = vmatpush1.xpose.msra.mxu0 0.0
        %5860 = vmatprep.subr.mxu0 0.0
        %5861 = vmatpush1.xpose.msra.mxu0 0.0
        %5862 = vmatprep.subr.mxu0 0.0
        %5863 = vmatpush1.xpose.msra.mxu0 0.0
        %5864 = vmatprep.subr.mxu0 0.0
        %5865 = vmatpush1.xpose.msra.mxu0 0.0
        %5866 = vmatprep.subr.mxu0 0.0
        %5867 = vmatpush1.xpose.msra.mxu0 0.0
        %5868 = vmatprep.subr.mxu0 0.0
        %5869 = vmatpush1.xpose.msra.mxu0 0.0
        %5870 = vmatprep.subr.mxu0 0.0
        %5871 = vmatpush1.xpose.msra.mxu0 0.0
        %5872 = vmatprep.subr.mxu0 0.0
        %5873 = vmatpush1.xpose.msra.mxu0 0.0
        %5874 = vmatprep.subr.mxu0 0.0
        %5875 = vmatpush1.xpose.msra.mxu0 0.0
        %5876 = vmatprep.subr.mxu0 0.0
        %5877 = vmatpush1.xpose.msra.mxu0 0.0
        %5878 = vmatprep.subr.mxu0 0.0
        %5879 = vmatpush1.xpose.msra.mxu0 0.0
        %5880 = vmatprep.subr.mxu0 0.0
        %5881 = vmatpush1.xpose.msra.mxu0 0.0
        %5882 = vmatprep.subr.mxu0 0.0
        %5883 = vmatpush1.xpose.msra.mxu0 0.0
        %5884 = vmatprep.subr.mxu0 0.0
        %5885 = vmatpush1.xpose.msra.mxu0 0.0
        %5886 = vmatprep.subr.mxu0 0.0
        %5887 = vmatpush1.xpose.msra.mxu0 0.0
        %5888 = vmatprep.subr.mxu0 0.0
        %5889 = vmatpush1.xpose.msra.mxu0 0.0
        %5890 = vmatprep.subr.mxu0 0.0
        %5891 = vmatpush1.xpose.msra.mxu0 0.0
        %5892 = vmatprep.subr.mxu0 0.0
        %5893 = vmatpush1.xpose.msra.mxu0 0.0
        %5894 = vmatprep.subr.mxu0 0.0
        %5895 = vmatpush1.xpose.msra.mxu0 0.0
        %5896 = vmatprep.subr.mxu0 0.0
        %5897 = vmatpush1.xpose.msra.mxu0 0.0
        %5898 = vmatprep.subr.mxu0 0.0
        %5899 = vmatpush1.xpose.msra.mxu0 0.0
        %5900 = vmatprep.subr.mxu0 0.0
        %5901 = vmatpush1.xpose.msra.mxu0 0.0
        %5902 = vmatprep.subr.mxu0 0.0
        %5903 = vmatpush1.xpose.msra.mxu0 0.0
        %5904 = vmatprep.subr.mxu0 0.0
        %5905 = vmatpush1.xpose.msra.mxu0 0.0
        %5906 = vmatprep.subr.mxu0 0.0
        %5907 = vmatpush1.xpose.msra.mxu0 0.0
        %5908 = vmatprep.subr.mxu0 0.0
        %5909 = vmatpush1.xpose.msra.mxu0 0.0
        %5910 = vmatprep.subr.mxu0 0.0
        %5911 = vmatpush1.xpose.msra.mxu0 0.0
        %5912 = vmatprep.subr.mxu0 0.0
        %5913 = vmatpush1.xpose.msra.mxu0 0.0
        %5914 = vmatprep.subr.mxu0 0.0
        %5915 = vmatpush1.xpose.msra.mxu0 0.0
        %5916 = vmatprep.mubr.f32.mxu0 0.0
        %5917 = vmatmul.mubr.f32.gmra.mrb[0].mxu0 %v5844
        %v5918 = vpop.f32.mrb[0].mxu0
        %v5919 = vadd.f32 0.0, %v5918
        %v5920 = vpop.f32.mrb[0].mxu0
        %5921 = vdwg.mxu0
        %v5923 = vsel %vm1114, %v5842, 0
        %5925 = vmatprep.subr.mxu0 0.0
        %5926 = vmatpush1.msra.mxu0 %v5675
        %5927 = vmatprep.subr.mxu0 0.0
        %5928 = vmatpush1.msra.mxu0 %v5676
        %5929 = vmatprep.subr.mxu0 0.0
        %5930 = vmatpush1.msra.mxu0 0.0
        %5931 = vmatprep.subr.mxu0 0.0
        %5932 = vmatpush1.msra.mxu0 0.0
        %5933 = vmatprep.subr.mxu0 0.0
        %5934 = vmatpush1.msra.mxu0 0.0
        %5935 = vmatprep.subr.mxu0 0.0
        %5936 = vmatpush1.msra.mxu0 0.0
        %5937 = vmatprep.subr.mxu0 0.0
        %5938 = vmatpush1.msra.mxu0 0.0
        %5939 = vmatprep.subr.mxu0 0.0
        %5940 = vmatpush1.msra.mxu0 0.0
        %5941 = vmatprep.subr.mxu0 0.0
        %5942 = vmatpush1.msra.mxu0 0.0
        %5943 = vmatprep.subr.mxu0 0.0
        %5944 = vmatpush1.msra.mxu0 0.0
        %5945 = vmatprep.subr.mxu0 0.0
        %5946 = vmatpush1.msra.mxu0 0.0
        %5947 = vmatprep.subr.mxu0 0.0
        %5948 = vmatpush1.msra.mxu0 0.0
        %5949 = vmatprep.subr.mxu0 0.0
        %5950 = vmatpush1.msra.mxu0 0.0
        %5951 = vmatprep.subr.mxu0 0.0
        %5952 = vmatpush1.msra.mxu0 0.0
        %5953 = vmatprep.subr.mxu0 0.0
        %5954 = vmatpush1.msra.mxu0 0.0
        %5955 = vmatprep.subr.mxu0 0.0
        %5956 = vmatpush1.msra.mxu0 0.0
        %5957 = vmatprep.subr.mxu0 0.0
        %5958 = vmatpush1.msra.mxu0 0.0
        %5959 = vmatprep.subr.mxu0 0.0
        %5960 = vmatpush1.msra.mxu0 0.0
        %5961 = vmatprep.subr.mxu0 0.0
        %5962 = vmatpush1.msra.mxu0 0.0
        %5963 = vmatprep.subr.mxu0 0.0
        %5964 = vmatpush1.msra.mxu0 0.0
        %5965 = vmatprep.subr.mxu0 0.0
        %5966 = vmatpush1.msra.mxu0 0.0
        %5967 = vmatprep.subr.mxu0 0.0
        %5968 = vmatpush1.msra.mxu0 0.0
        %5969 = vmatprep.subr.mxu0 0.0
        %5970 = vmatpush1.msra.mxu0 0.0
        %5971 = vmatprep.subr.mxu0 0.0
        %5972 = vmatpush1.msra.mxu0 0.0
        %5973 = vmatprep.subr.mxu0 0.0
        %5974 = vmatpush1.msra.mxu0 0.0
        %5975 = vmatprep.subr.mxu0 0.0
        %5976 = vmatpush1.msra.mxu0 0.0
        %5977 = vmatprep.subr.mxu0 0.0
        %5978 = vmatpush1.msra.mxu0 0.0
        %5979 = vmatprep.subr.mxu0 0.0
        %5980 = vmatpush1.msra.mxu0 0.0
        %5981 = vmatprep.subr.mxu0 0.0
        %5982 = vmatpush1.msra.mxu0 0.0
        %5983 = vmatprep.subr.mxu0 0.0
        %5984 = vmatpush1.msra.mxu0 0.0
        %5985 = vmatprep.subr.mxu0 0.0
        %5986 = vmatpush1.msra.mxu0 0.0
        %5987 = vmatprep.subr.mxu0 0.0
        %5988 = vmatpush1.msra.mxu0 0.0
        %5989 = vmatprep.mubr.f32.mxu0 0.0
        %5990 = vmatmul.mubr.f32.gmra.mrb[0].mxu0 %v5923
        %v5991 = vpop.f32.mrb[0].mxu0
        %v5992 = vadd.f32 0.0, %v5991
        %v5993 = vpop.f32.mrb[0].mxu0
        %5994 = vdwg.mxu0
        %v5995 = vmul.f32 %v1504, %v5919
        %v5997 = vrot.slane %v5995, 1
        %v5998 = vrot.slane %v5995, 2
        %v5999 = vrot.slane %v5995, 3
        %v6004 = vadd.f32 %v5282, %v5995
        %v6005 = vadd.f32 %v5283, %v5997
        %v6006 = vadd.f32 %v5284, %v5998
        %v6007 = vadd.f32 %v5285, %v5999
        %6008 = vst.msk [vmem:[%s719 + $0x6] sm:$0x1] %vm1519, %v6004
        %6009 = vst.msk [vmem:[%s719 + $0xe] sm:$0x1] %vm1519, %v6005
        %6010 = vst.msk [vmem:[%s719 + $0x16] sm:$0x1] %vm1519, %v6006
        %6011 = vst.msk [vmem:[%s719 + $0x1e] sm:$0x1] %vm1519, %v6007
        %v6012 = vmul.f32 %v1527, %v5992
        %v6014 = vrot.slane %v6012, 1
        %v6015 = vrot.slane %v6012, 2
        %v6016 = vrot.slane %v6012, 3
        %v6021 = vadd.f32 %v5286, %v6012
        %v6022 = vadd.f32 %v5287, %v6014
        %v6023 = vadd.f32 %v5288, %v6015
        %v6024 = vadd.f32 %v5289, %v6016
        %6025 = vst.msk [vmem:[%s1542 + $0x6] sm:$0x1] %vm1519, %v6021
        %6026 = vst.msk [vmem:[%s1542 + $0xe] sm:$0x1] %vm1519, %v6022
        %6027 = vst.msk [vmem:[%s1542 + $0x16] sm:$0x1] %vm1519, %v6023
        %6028 = vst.msk [vmem:[%s1542 + $0x1e] sm:$0x1] %vm1519, %v6024
        %v6029 = vld [vmem:[%s635 + $0x7] sm:$0x1]
        %v6030 = vld [vmem:[%s635 + $0xf] sm:$0x1]
        %v6031 = vld [vmem:[%s635 + $0x17] sm:$0x1]
        %v6032 = vld [vmem:[%s635 + $0x1f] sm:$0x1]
        %v6033 = vld [vmem:[%s753 + $0x7] sm:$0x1]
        %v6034 = vld [vmem:[%s753 + $0xf] sm:$0x1]
        %v6035 = vld [vmem:[%s753 + $0x17] sm:$0x1]
        %v6036 = vld [vmem:[%s753 + $0x1f] sm:$0x1]
        %v6037 = vld [vmem:[%s644 + $0x7] sm:$0x1]
        %v6038 = vld [vmem:[%s644 + $0xf] sm:$0x1]
        %v6039 = vld [vmem:[%s644 + $0x17] sm:$0x1]
        %v6040 = vld [vmem:[%s644 + $0x1f] sm:$0x1]
        %v6041 = vld [vmem:[%s762 + $0x7] sm:$0x1]
        %v6042 = vld [vmem:[%s762 + $0xf] sm:$0x1]
        %v6043 = vld [vmem:[%s762 + $0x17] sm:$0x1]
        %v6044 = vld [vmem:[%s762 + $0x1f] sm:$0x1]
        %v6045 = vld [vmem:[%s653 + $0x7] sm:$0x1]
        %v6046 = vld [vmem:[%s653 + $0xf] sm:$0x1]
        %v6047 = vld [vmem:[%s653 + $0x17] sm:$0x1]
        %v6048 = vld [vmem:[%s653 + $0x1f] sm:$0x1]
        %v6049 = vld [vmem:[%s771 + $0x7] sm:$0x1]
        %v6050 = vld [vmem:[%s771 + $0xf] sm:$0x1]
        %v6051 = vld [vmem:[%s771 + $0x17] sm:$0x1]
        %v6052 = vld [vmem:[%s771 + $0x1f] sm:$0x1]
        %s6053 = scalar_lea.vmem %s724, 28
        %v6054 = vld [vmem:[%s6053] sm:$0xf]
        %s6055 = scalar_lea.vmem %s730, 28
        %v6056 = vld [vmem:[%s6055] sm:$0xf]
        %6058 = vset.pattern.permute.xlu0 0
        %6059 = vperm.xlu0 %6058, %v6054
        %v6060 = vpop.permute.xlu0 %6059
        %v6066 = vrot.slane %v6030, 7
        %v6067 = vsel %vm788, %v6066, %v6029
        %v6068 = vrot.slane %v6031, 6
        %v6069 = vsel %vm791, %v6068, %v6067
        %v6070 = vrot.slane %v6032, 5
        %v6071 = vsel %vm794, %v6070, %v6069
        %v6072 = vsel %vm800, %v6071, 0
        %6074 = vmatprep.subr.mxu0 0.0
        %6075 = vmatpush1.msra.mxu0 %v6072
        %6076 = vmatprep.subr.mxu0 0.0
        %6077 = vmatpush1.msra.mxu0 0.0
        %6078 = vmatprep.subr.mxu0 0.0
        %6079 = vmatpush1.msra.mxu0 0.0
        %6080 = vmatprep.subr.mxu0 0.0
        %6081 = vmatpush1.msra.mxu0 0.0
        %6082 = vmatprep.subr.mxu0 0.0
        %6083 = vmatpush1.msra.mxu0 0.0
        %6084 = vmatprep.subr.mxu0 0.0
        %6085 = vmatpush1.msra.mxu0 0.0
        %6086 = vmatprep.subr.mxu0 0.0
        %6087 = vmatpush1.msra.mxu0 0.0
        %6088 = vmatprep.subr.mxu0 0.0
        %6089 = vmatpush1.msra.mxu0 0.0
        %6090 = vmatprep.subr.mxu0 0.0
        %6091 = vmatpush1.msra.mxu0 0.0
        %6092 = vmatprep.subr.mxu0 0.0
        %6093 = vmatpush1.msra.mxu0 0.0
        %6094 = vmatprep.subr.mxu0 0.0
        %6095 = vmatpush1.msra.mxu0 0.0
        %6096 = vmatprep.subr.mxu0 0.0
        %6097 = vmatpush1.msra.mxu0 0.0
        %6098 = vmatprep.subr.mxu0 0.0
        %6099 = vmatpush1.msra.mxu0 0.0
        %6100 = vmatprep.subr.mxu0 0.0
        %6101 = vmatpush1.msra.mxu0 0.0
        %6102 = vmatprep.subr.mxu0 0.0
        %6103 = vmatpush1.msra.mxu0 0.0
        %6104 = vmatprep.subr.mxu0 0.0
        %6105 = vmatpush1.msra.mxu0 0.0
        %6106 = vmatprep.subr.mxu0 0.0
        %6107 = vmatpush1.msra.mxu0 0.0
        %6108 = vmatprep.subr.mxu0 0.0
        %6109 = vmatpush1.msra.mxu0 0.0
        %6110 = vmatprep.subr.mxu0 0.0
        %6111 = vmatpush1.msra.mxu0 0.0
        %6112 = vmatprep.subr.mxu0 0.0
        %6113 = vmatpush1.msra.mxu0 0.0
        %6114 = vmatprep.subr.mxu0 0.0
        %6115 = vmatpush1.msra.mxu0 0.0
        %6116 = vmatprep.subr.mxu0 0.0
        %6117 = vmatpush1.msra.mxu0 0.0
        %6118 = vmatprep.subr.mxu0 0.0
        %6119 = vmatpush1.msra.mxu0 0.0
        %6120 = vmatprep.subr.mxu0 0.0
        %6121 = vmatpush1.msra.mxu0 0.0
        %6122 = vmatprep.subr.mxu0 0.0
        %6123 = vmatpush1.msra.mxu0 0.0
        %6124 = vmatprep.subr.mxu0 0.0
        %6125 = vmatpush1.msra.mxu0 0.0
        %6126 = vmatprep.subr.mxu0 0.0
        %6127 = vmatpush1.msra.mxu0 0.0
        %6128 = vmatprep.subr.mxu0 0.0
        %6129 = vmatpush1.msra.mxu0 0.0
        %6130 = vmatprep.subr.mxu0 0.0
        %6131 = vmatpush1.msra.mxu0 0.0
        %6132 = vmatprep.subr.mxu0 0.0
        %6133 = vmatpush1.msra.mxu0 0.0
        %6134 = vmatprep.subr.mxu0 0.0
        %6135 = vmatpush1.msra.mxu0 0.0
        %6136 = vmatprep.subr.mxu0 0.0
        %6137 = vmatpush1.msra.mxu0 0.0
        %6138 = vmatprep.mubr.f32.mxu0 0.0
        %6139 = vmatmul.mubr.f32.gmra.mrb[0].mxu0 %v798
        %v6140 = vpop.f32.mrb[0].mxu0
        %v6141 = vadd.f32 %v6060, %v6140
        %v6142 = vpop.f32.mrb[0].mxu0
        %6143 = vdwg.mxu0
        %v6148 = vrot.slane %v6038, 7
        %v6149 = vsel %vm788, %v6148, %v6037
        %v6150 = vrot.slane %v6039, 6
        %v6151 = vsel %vm791, %v6150, %v6149
        %v6152 = vrot.slane %v6040, 5
        %v6153 = vsel %vm794, %v6152, %v6151
        %v6155 = vmul.f32 %v876, %v6153
        %v6156 = vadd.f32 %v6141, %v6155
        %6158 = vset.pattern.permute.xlu0 0
        %6159 = vperm.xlu0 %6158, %v6056
        %v6160 = vpop.permute.xlu0 %6159
        %v6166 = vrot.slane %v6034, 7
        %v6167 = vsel %vm788, %v6166, %v6033
        %v6168 = vrot.slane %v6035, 6
        %v6169 = vsel %vm791, %v6168, %v6167
        %v6170 = vrot.slane %v6036, 5
        %v6171 = vsel %vm794, %v6170, %v6169
        %v6172 = vsel %vm800, %v6171, 0
        %6174 = vmatprep.subr.mxu0 0.0
        %6175 = vmatpush1.msra.mxu0 %v6172
        %6176 = vmatprep.subr.mxu0 0.0
        %6177 = vmatpush1.msra.mxu0 0.0
        %6178 = vmatprep.subr.mxu0 0.0
        %6179 = vmatpush1.msra.mxu0 0.0
        %6180 = vmatprep.subr.mxu0 0.0
        %6181 = vmatpush1.msra.mxu0 0.0
        %6182 = vmatprep.subr.mxu0 0.0
        %6183 = vmatpush1.msra.mxu0 0.0
        %6184 = vmatprep.subr.mxu0 0.0
        %6185 = vmatpush1.msra.mxu0 0.0
        %6186 = vmatprep.subr.mxu0 0.0
        %6187 = vmatpush1.msra.mxu0 0.0
        %6188 = vmatprep.subr.mxu0 0.0
        %6189 = vmatpush1.msra.mxu0 0.0
        %6190 = vmatprep.subr.mxu0 0.0
        %6191 = vmatpush1.msra.mxu0 0.0
        %6192 = vmatprep.subr.mxu0 0.0
        %6193 = vmatpush1.msra.mxu0 0.0
        %6194 = vmatprep.subr.mxu0 0.0
        %6195 = vmatpush1.msra.mxu0 0.0
        %6196 = vmatprep.subr.mxu0 0.0
        %6197 = vmatpush1.msra.mxu0 0.0
        %6198 = vmatprep.subr.mxu0 0.0
        %6199 = vmatpush1.msra.mxu0 0.0
        %6200 = vmatprep.subr.mxu0 0.0
        %6201 = vmatpush1.msra.mxu0 0.0
        %6202 = vmatprep.subr.mxu0 0.0
        %6203 = vmatpush1.msra.mxu0 0.0
        %6204 = vmatprep.subr.mxu0 0.0
        %6205 = vmatpush1.msra.mxu0 0.0
        %6206 = vmatprep.subr.mxu0 0.0
        %6207 = vmatpush1.msra.mxu0 0.0
        %6208 = vmatprep.subr.mxu0 0.0
        %6209 = vmatpush1.msra.mxu0 0.0
        %6210 = vmatprep.subr.mxu0 0.0
        %6211 = vmatpush1.msra.mxu0 0.0
        %6212 = vmatprep.subr.mxu0 0.0
        %6213 = vmatpush1.msra.mxu0 0.0
        %6214 = vmatprep.subr.mxu0 0.0
        %6215 = vmatpush1.msra.mxu0 0.0
        %6216 = vmatprep.subr.mxu0 0.0
        %6217 = vmatpush1.msra.mxu0 0.0
        %6218 = vmatprep.subr.mxu0 0.0
        %6219 = vmatpush1.msra.mxu0 0.0
        %6220 = vmatprep.subr.mxu0 0.0
        %6221 = vmatpush1.msra.mxu0 0.0
        %6222 = vmatprep.subr.mxu0 0.0
        %6223 = vmatpush1.msra.mxu0 0.0
        %6224 = vmatprep.subr.mxu0 0.0
        %6225 = vmatpush1.msra.mxu0 0.0
        %6226 = vmatprep.subr.mxu0 0.0
        %6227 = vmatpush1.msra.mxu0 0.0
        %6228 = vmatprep.subr.mxu0 0.0
        %6229 = vmatpush1.msra.mxu0 0.0
        %6230 = vmatprep.subr.mxu0 0.0
        %6231 = vmatpush1.msra.mxu0 0.0
        %6232 = vmatprep.subr.mxu0 0.0
        %6233 = vmatpush1.msra.mxu0 0.0
        %6234 = vmatprep.subr.mxu0 0.0
        %6235 = vmatpush1.msra.mxu0 0.0
        %6236 = vmatprep.subr.mxu0 0.0
        %6237 = vmatpush1.msra.mxu0 0.0
        %6238 = vmatprep.mubr.f32.mxu0 0.0
        %6239 = vmatmul.mubr.f32.gmra.mrb[0].mxu0 %v907
        %v6240 = vpop.f32.mrb[0].mxu0
        %v6241 = vadd.f32 %v6160, %v6240
        %v6242 = vpop.f32.mrb[0].mxu0
        %6243 = vdwg.mxu0
        %v6248 = vrot.slane %v6042, 7
        %v6249 = vsel %vm788, %v6248, %v6041
        %v6250 = vrot.slane %v6043, 6
        %v6251 = vsel %vm791, %v6250, %v6249
        %v6252 = vrot.slane %v6044, 5
        %v6253 = vsel %vm794, %v6252, %v6251
        %v6255 = vmul.f32 %v876, %v6253
        %v6256 = vadd.f32 %v6241, %v6255
        %6257 = vxpose.xlu0.b32.start [1/16] %v6156, 128
        %6258 = vxpose.xlu0.b32.cont [2/16] 0.0, 128
        %6259 = vxpose.xlu0.b32.cont [3/16] 0.0, 128
        %6260 = vxpose.xlu0.b32.cont [4/16] 0.0, 128
        %6261 = vxpose.xlu0.b32.cont [5/16] 0.0, 128
        %6262 = vxpose.xlu0.b32.cont [6/16] 0.0, 128
        %6263 = vxpose.xlu0.b32.cont [7/16] 0.0, 128
        %6264 = vxpose.xlu0.b32.cont [8/16] 0.0, 128
        %6265 = vxpose.xlu0.b32.cont [9/16] 0.0, 128
        %6266 = vxpose.xlu0.b32.cont [10/16] 0.0, 128
        %6267 = vxpose.xlu0.b32.cont [11/16] 0.0, 128
        %6268 = vxpose.xlu0.b32.cont [12/16] 0.0, 128
        %6269 = vxpose.xlu0.b32.cont [13/16] 0.0, 128
        %6270 = vxpose.xlu0.b32.cont [14/16] 0.0, 128
        %6271 = vxpose.xlu0.b32.cont [15/16] 0.0, 128
        %6272 = vxpose.xlu0.b32.end [16/16] 0.0, 128
        %v6273 = vpop.trf.xlu0
        %v6274 = vpop.trf.xlu0
        %v6275 = vpop.trf.xlu0
        %v6276 = vpop.trf.xlu0
        %v6277 = vpop.trf.xlu0
        %v6278 = vpop.trf.xlu0
        %v6279 = vpop.trf.xlu0
        %v6280 = vpop.trf.xlu0
        %v6281 = vpop.trf.xlu0
        %v6282 = vpop.trf.xlu0
        %v6283 = vpop.trf.xlu0
        %v6284 = vpop.trf.xlu0
        %v6285 = vpop.trf.xlu0
        %v6286 = vpop.trf.xlu0
        %v6287 = vpop.trf.xlu0
        %v6288 = vpop.trf.xlu0
        %v6290 = vsel %vm796, %v6273, 0
        %v6293 = vsel %vm796, %v6274, 0
        %v6296 = vsel %vm800, %v6256, 0
        %6298 = vmatprep.subr.mxu0 0.0
        %6299 = vmatpush1.msra.mxu0 %v6296
        %6300 = vmatprep.subr.mxu0 0.0
        %6301 = vmatpush1.msra.mxu0 0.0
        %6302 = vmatprep.subr.mxu0 0.0
        %6303 = vmatpush1.msra.mxu0 0.0
        %6304 = vmatprep.subr.mxu0 0.0
        %6305 = vmatpush1.msra.mxu0 0.0
        %6306 = vmatprep.subr.mxu0 0.0
        %6307 = vmatpush1.msra.mxu0 0.0
        %6308 = vmatprep.subr.mxu0 0.0
        %6309 = vmatpush1.msra.mxu0 0.0
        %6310 = vmatprep.subr.mxu0 0.0
        %6311 = vmatpush1.msra.mxu0 0.0
        %6312 = vmatprep.subr.mxu0 0.0
        %6313 = vmatpush1.msra.mxu0 0.0
        %6314 = vmatprep.subr.mxu0 0.0
        %6315 = vmatpush1.msra.mxu0 0.0
        %6316 = vmatprep.subr.mxu0 0.0
        %6317 = vmatpush1.msra.mxu0 0.0
        %6318 = vmatprep.subr.mxu0 0.0
        %6319 = vmatpush1.msra.mxu0 0.0
        %6320 = vmatprep.subr.mxu0 0.0
        %6321 = vmatpush1.msra.mxu0 0.0
        %6322 = vmatprep.subr.mxu0 0.0
        %6323 = vmatpush1.msra.mxu0 0.0
        %6324 = vmatprep.subr.mxu0 0.0
        %6325 = vmatpush1.msra.mxu0 0.0
        %6326 = vmatprep.subr.mxu0 0.0
        %6327 = vmatpush1.msra.mxu0 0.0
        %6328 = vmatprep.subr.mxu0 0.0
        %6329 = vmatpush1.msra.mxu0 0.0
        %6330 = vmatprep.subr.mxu0 0.0
        %6331 = vmatpush1.msra.mxu0 0.0
        %6332 = vmatprep.subr.mxu0 0.0
        %6333 = vmatpush1.msra.mxu0 0.0
        %6334 = vmatprep.subr.mxu0 0.0
        %6335 = vmatpush1.msra.mxu0 0.0
        %6336 = vmatprep.subr.mxu0 0.0
        %6337 = vmatpush1.msra.mxu0 0.0
        %6338 = vmatprep.subr.mxu0 0.0
        %6339 = vmatpush1.msra.mxu0 0.0
        %6340 = vmatprep.subr.mxu0 0.0
        %6341 = vmatpush1.msra.mxu0 0.0
        %6342 = vmatprep.subr.mxu0 0.0
        %6343 = vmatpush1.msra.mxu0 0.0
        %6344 = vmatprep.subr.mxu0 0.0
        %6345 = vmatpush1.msra.mxu0 0.0
        %6346 = vmatprep.subr.mxu0 0.0
        %6347 = vmatpush1.msra.mxu0 0.0
        %6348 = vmatprep.subr.mxu0 0.0
        %6349 = vmatpush1.msra.mxu0 0.0
        %6350 = vmatprep.subr.mxu0 0.0
        %6351 = vmatpush1.msra.mxu0 0.0
        %6352 = vmatprep.subr.mxu0 0.0
        %6353 = vmatpush1.msra.mxu0 0.0
        %6354 = vmatprep.subr.mxu0 0.0
        %6355 = vmatpush1.msra.mxu0 0.0
        %6356 = vmatprep.subr.mxu0 0.0
        %6357 = vmatpush1.msra.mxu0 0.0
        %6358 = vmatprep.subr.mxu0 0.0
        %6359 = vmatpush1.msra.mxu0 0.0
        %6360 = vmatprep.subr.mxu0 0.0
        %6361 = vmatpush1.msra.mxu0 0.0
        %6362 = vmatprep.mubr.f32.mxu0 0.0
        %6363 = vmatmul.mubr.f32.gmra.mrb[0].mxu0 %v6290
        %v6364 = vpop.f32.mrb[0].mxu0
        %v6365 = vadd.f32 0.0, %v6364
        %v6366 = vpop.f32.mrb[0].mxu0
        %6367 = vmatprep.mubr.f32.mxu0 0.0
        %6368 = vmatmul.mubr.f32.gmra.mrb[0].mxu0 %v6293
        %v6369 = vpop.f32.mrb[0].mxu0
        %v6370 = vadd.f32 0.0, %v6369
        %v6371 = vpop.f32.mrb[0].mxu0
        %6372 = vdwg.mxu0
        %v6373 = vmul.f32 %v6365, 0.5
        %v6374 = vmul.f32 %v6370, 0.5
        %v6375 = vsel %vm747, %v6373, -65504.0
        %v6376 = vsel %vm748, %v6374, -65504.0
        %v6377 = vsel %vm1114, %v6375, -inf
        %6378 = vmax.xlane.f32.xlu0 %v6377
        %v6379 = vpop.xlane.xlu0 %6378
        %v6380 = vsel %vm1114, %v6376, -inf
        %6381 = vmax.xlane.f32.xlu0 %v6380
        %v6382 = vpop.xlane.xlu0 %6381
        %v6383 = vsub.f32 %v6375, %v6379
        %v6384 = vsub.f32 %v6376, %v6382
        %v6385 = vmul.f32 %v6383, 1.442695
        %v6386 = vpow.pop %v6385
        %v6387 = vmul.f32 %v6384, 1.442695
        %v6388 = vpow.pop %v6387
        %v6389 = vsel %vm1114, %v6386, 0.0
        %6390 = vadd.xlane.f32.xlu0 %v6389
        %v6391 = vpop.xlane.xlu0 %6390
        %v6392 = vsel %vm1114, %v6388, 0.0
        %6393 = vadd.xlane.f32.xlu0 %v6392
        %v6394 = vpop.xlane.xlu0 %6393
        %v6395 = vrcp.pop %v6391
        %v6396 = vrcp.pop %v6394
        %v6397 = vmul.f32 %v6386, %v6395
        %v6398 = vmul.f32 %v6388, %v6396
        %v6399 = vmax.f32 %v6377, %v6380
        %v6400 = vrot.slane %v6399, 4
        %v6401 = vmax.f32 %v6399, %v6400
        %v6402 = vrot.slane %v6401, 2
        %v6403 = vmax.f32 %v6401, %v6402
        %v6404 = vrot.slane %v6403, 1
        %v6405 = vmax.f32 %v6403, %v6404
        %v6406 = vsub.f32 %v6375, %v6405
        %v6407 = vsub.f32 %v6376, %v6405
        %v6408 = vmul.f32 %v6406, 1.442695
        %v6409 = vpow.pop %v6408
        %v6410 = vmul.f32 %v6407, 1.442695
        %v6411 = vpow.pop %v6410
        %v6412 = vsel %vm1114, %v6409, 0.0
        %v6413 = vsel %vm1114, %v6411, 0.0
        %v6414 = vadd.f32 %v6412, %v6413
        %v6415 = vrot.slane %v6414, 4
        %v6416 = vadd.f32 %v6414, %v6415
        %v6417 = vrot.slane %v6416, 2
        %v6418 = vadd.f32 %v6416, %v6417
        %v6419 = vrot.slane %v6418, 1
        %v6420 = vadd.f32 %v6418, %v6419
        %v6421 = vrcp.pop %v6420
        %v6422 = vmul.f32 %v6409, %v6421
        %v6423 = vmul.f32 %v6411, %v6421
        %6424 = vmatprep.subr.mxu0 0.0
        %6425 = vmatpush1.msra.mxu0 %v6172
        %6426 = vmatprep.subr.mxu0 0.0
        %6427 = vmatpush1.msra.mxu0 0.0
        %6428 = vmatprep.subr.mxu0 0.0
        %6429 = vmatpush1.msra.mxu0 0.0
        %6430 = vmatprep.subr.mxu0 0.0
        %6431 = vmatpush1.msra.mxu0 0.0
        %6432 = vmatprep.subr.mxu0 0.0
        %6433 = vmatpush1.msra.mxu0 0.0
        %6434 = vmatprep.subr.mxu0 0.0
        %6435 = vmatpush1.msra.mxu0 0.0
        %6436 = vmatprep.subr.mxu0 0.0
        %6437 = vmatpush1.msra.mxu0 0.0
        %6438 = vmatprep.subr.mxu0 0.0
        %6439 = vmatpush1.msra.mxu0 0.0
        %6440 = vmatprep.subr.mxu0 0.0
        %6441 = vmatpush1.msra.mxu0 0.0
        %6442 = vmatprep.subr.mxu0 0.0
        %6443 = vmatpush1.msra.mxu0 0.0
        %6444 = vmatprep.subr.mxu0 0.0
        %6445 = vmatpush1.msra.mxu0 0.0
        %6446 = vmatprep.subr.mxu0 0.0
        %6447 = vmatpush1.msra.mxu0 0.0
        %6448 = vmatprep.subr.mxu0 0.0
        %6449 = vmatpush1.msra.mxu0 0.0
        %6450 = vmatprep.subr.mxu0 0.0
        %6451 = vmatpush1.msra.mxu0 0.0
        %6452 = vmatprep.subr.mxu0 0.0
        %6453 = vmatpush1.msra.mxu0 0.0
        %6454 = vmatprep.subr.mxu0 0.0
        %6455 = vmatpush1.msra.mxu0 0.0
        %6456 = vmatprep.subr.mxu0 0.0
        %6457 = vmatpush1.msra.mxu0 0.0
        %6458 = vmatprep.subr.mxu0 0.0
        %6459 = vmatpush1.msra.mxu0 0.0
        %6460 = vmatprep.subr.mxu0 0.0
        %6461 = vmatpush1.msra.mxu0 0.0
        %6462 = vmatprep.subr.mxu0 0.0
        %6463 = vmatpush1.msra.mxu0 0.0
        %6464 = vmatprep.subr.mxu0 0.0
        %6465 = vmatpush1.msra.mxu0 0.0
        %6466 = vmatprep.subr.mxu0 0.0
        %6467 = vmatpush1.msra.mxu0 0.0
        %6468 = vmatprep.subr.mxu0 0.0
        %6469 = vmatpush1.msra.mxu0 0.0
        %6470 = vmatprep.subr.mxu0 0.0
        %6471 = vmatpush1.msra.mxu0 0.0
        %6472 = vmatprep.subr.mxu0 0.0
        %6473 = vmatpush1.msra.mxu0 0.0
        %6474 = vmatprep.subr.mxu0 0.0
        %6475 = vmatpush1.msra.mxu0 0.0
        %6476 = vmatprep.subr.mxu0 0.0
        %6477 = vmatpush1.msra.mxu0 0.0
        %6478 = vmatprep.subr.mxu0 0.0
        %6479 = vmatpush1.msra.mxu0 0.0
        %6480 = vmatprep.subr.mxu0 0.0
        %6481 = vmatpush1.msra.mxu0 0.0
        %6482 = vmatprep.subr.mxu0 0.0
        %6483 = vmatpush1.msra.mxu0 0.0
        %6484 = vmatprep.subr.mxu0 0.0
        %6485 = vmatpush1.msra.mxu0 0.0
        %6486 = vmatprep.subr.mxu0 0.0
        %6487 = vmatpush1.msra.mxu0 0.0
        %6488 = vmatprep.mubr.f32.mxu0 0.0
        %6489 = vmatmul.mubr.f32.gmra.mrb[0].mxu0 %v1168
        %v6490 = vpop.f32.mrb[0].mxu0
        %v6491 = vadd.f32 %v1165, %v6490
        %v6492 = vpop.f32.mrb[0].mxu0
        %6493 = vdwg.mxu0
        %v6498 = vrot.slane %v6050, 7
        %v6499 = vsel %vm788, %v6498, %v6049
        %v6500 = vrot.slane %v6051, 6
        %v6501 = vsel %vm791, %v6500, %v6499
        %v6502 = vrot.slane %v6052, 5
        %v6503 = vsel %vm794, %v6502, %v6501
        %v6505 = vmul.f32 %v1243, %v6503
        %v6506 = vadd.f32 %v6491, %v6505
        %6507 = vmatprep.subr.mxu0 0.0
        %6508 = vmatpush1.msra.mxu0 %v6072
        %6509 = vmatprep.subr.mxu0 0.0
        %6510 = vmatpush1.msra.mxu0 0.0
        %6511 = vmatprep.subr.mxu0 0.0
        %6512 = vmatpush1.msra.mxu0 0.0
        %6513 = vmatprep.subr.mxu0 0.0
        %6514 = vmatpush1.msra.mxu0 0.0
        %6515 = vmatprep.subr.mxu0 0.0
        %6516 = vmatpush1.msra.mxu0 0.0
        %6517 = vmatprep.subr.mxu0 0.0
        %6518 = vmatpush1.msra.mxu0 0.0
        %6519 = vmatprep.subr.mxu0 0.0
        %6520 = vmatpush1.msra.mxu0 0.0
        %6521 = vmatprep.subr.mxu0 0.0
        %6522 = vmatpush1.msra.mxu0 0.0
        %6523 = vmatprep.subr.mxu0 0.0
        %6524 = vmatpush1.msra.mxu0 0.0
        %6525 = vmatprep.subr.mxu0 0.0
        %6526 = vmatpush1.msra.mxu0 0.0
        %6527 = vmatprep.subr.mxu0 0.0
        %6528 = vmatpush1.msra.mxu0 0.0
        %6529 = vmatprep.subr.mxu0 0.0
        %6530 = vmatpush1.msra.mxu0 0.0
        %6531 = vmatprep.subr.mxu0 0.0
        %6532 = vmatpush1.msra.mxu0 0.0
        %6533 = vmatprep.subr.mxu0 0.0
        %6534 = vmatpush1.msra.mxu0 0.0
        %6535 = vmatprep.subr.mxu0 0.0
        %6536 = vmatpush1.msra.mxu0 0.0
        %6537 = vmatprep.subr.mxu0 0.0
        %6538 = vmatpush1.msra.mxu0 0.0
        %6539 = vmatprep.subr.mxu0 0.0
        %6540 = vmatpush1.msra.mxu0 0.0
        %6541 = vmatprep.subr.mxu0 0.0
        %6542 = vmatpush1.msra.mxu0 0.0
        %6543 = vmatprep.subr.mxu0 0.0
        %6544 = vmatpush1.msra.mxu0 0.0
        %6545 = vmatprep.subr.mxu0 0.0
        %6546 = vmatpush1.msra.mxu0 0.0
        %6547 = vmatprep.subr.mxu0 0.0
        %6548 = vmatpush1.msra.mxu0 0.0
        %6549 = vmatprep.subr.mxu0 0.0
        %6550 = vmatpush1.msra.mxu0 0.0
        %6551 = vmatprep.subr.mxu0 0.0
        %6552 = vmatpush1.msra.mxu0 0.0
        %6553 = vmatprep.subr.mxu0 0.0
        %6554 = vmatpush1.msra.mxu0 0.0
        %6555 = vmatprep.subr.mxu0 0.0
        %6556 = vmatpush1.msra.mxu0 0.0
        %6557 = vmatprep.subr.mxu0 0.0
        %6558 = vmatpush1.msra.mxu0 0.0
        %6559 = vmatprep.subr.mxu0 0.0
        %6560 = vmatpush1.msra.mxu0 0.0
        %6561 = vmatprep.subr.mxu0 0.0
        %6562 = vmatpush1.msra.mxu0 0.0
        %6563 = vmatprep.subr.mxu0 0.0
        %6564 = vmatpush1.msra.mxu0 0.0
        %6565 = vmatprep.subr.mxu0 0.0
        %6566 = vmatpush1.msra.mxu0 0.0
        %6567 = vmatprep.subr.mxu0 0.0
        %6568 = vmatpush1.msra.mxu0 0.0
        %6569 = vmatprep.subr.mxu0 0.0
        %6570 = vmatpush1.msra.mxu0 0.0
        %6571 = vmatprep.mubr.f32.mxu0 0.0
        %6572 = vmatmul.mubr.f32.gmra.mrb[0].mxu0 %v1264
        %v6573 = vpop.f32.mrb[0].mxu0
        %v6574 = vadd.f32 %v1261, %v6573
        %v6575 = vpop.f32.mrb[0].mxu0
        %6576 = vdwg.mxu0
        %v6581 = vrot.slane %v6046, 7
        %v6582 = vsel %vm788, %v6581, %v6045
        %v6583 = vrot.slane %v6047, 6
        %v6584 = vsel %vm791, %v6583, %v6582
        %v6585 = vrot.slane %v6048, 5
        %v6586 = vsel %vm794, %v6585, %v6584
        %v6588 = vmul.f32 %v1243, %v6586
        %v6589 = vadd.f32 %v6574, %v6588
        %v6591 = vsel %vm1114, %v6506, 0
        %v6594 = vsel %vm1114, %v6397, 0
        %v6597 = vsel %vm1114, %v6398, 0
        %6599 = vmatprep.subr.mxu0 0.0
        %6600 = vmatpush1.xpose.msra.mxu0 %v6594
        %6601 = vmatprep.subr.mxu0 0.0
        %6602 = vmatpush1.xpose.msra.mxu0 %v6597
        %6603 = vmatprep.subr.mxu0 0.0
        %6604 = vmatpush1.xpose.msra.mxu0 0.0
        %6605 = vmatprep.subr.mxu0 0.0
        %6606 = vmatpush1.xpose.msra.mxu0 0.0
        %6607 = vmatprep.subr.mxu0 0.0
        %6608 = vmatpush1.xpose.msra.mxu0 0.0
        %6609 = vmatprep.subr.mxu0 0.0
        %6610 = vmatpush1.xpose.msra.mxu0 0.0
        %6611 = vmatprep.subr.mxu0 0.0
        %6612 = vmatpush1.xpose.msra.mxu0 0.0
        %6613 = vmatprep.subr.mxu0 0.0
        %6614 = vmatpush1.xpose.msra.mxu0 0.0
        %6615 = vmatprep.subr.mxu0 0.0
        %6616 = vmatpush1.xpose.msra.mxu0 0.0
        %6617 = vmatprep.subr.mxu0 0.0
        %6618 = vmatpush1.xpose.msra.mxu0 0.0
        %6619 = vmatprep.subr.mxu0 0.0
        %6620 = vmatpush1.xpose.msra.mxu0 0.0
        %6621 = vmatprep.subr.mxu0 0.0
        %6622 = vmatpush1.xpose.msra.mxu0 0.0
        %6623 = vmatprep.subr.mxu0 0.0
        %6624 = vmatpush1.xpose.msra.mxu0 0.0
        %6625 = vmatprep.subr.mxu0 0.0
        %6626 = vmatpush1.xpose.msra.mxu0 0.0
        %6627 = vmatprep.subr.mxu0 0.0
        %6628 = vmatpush1.xpose.msra.mxu0 0.0
        %6629 = vmatprep.subr.mxu0 0.0
        %6630 = vmatpush1.xpose.msra.mxu0 0.0
        %6631 = vmatprep.subr.mxu0 0.0
        %6632 = vmatpush1.xpose.msra.mxu0 0.0
        %6633 = vmatprep.subr.mxu0 0.0
        %6634 = vmatpush1.xpose.msra.mxu0 0.0
        %6635 = vmatprep.subr.mxu0 0.0
        %6636 = vmatpush1.xpose.msra.mxu0 0.0
        %6637 = vmatprep.subr.mxu0 0.0
        %6638 = vmatpush1.xpose.msra.mxu0 0.0
        %6639 = vmatprep.subr.mxu0 0.0
        %6640 = vmatpush1.xpose.msra.mxu0 0.0
        %6641 = vmatprep.subr.mxu0 0.0
        %6642 = vmatpush1.xpose.msra.mxu0 0.0
        %6643 = vmatprep.subr.mxu0 0.0
        %6644 = vmatpush1.xpose.msra.mxu0 0.0
        %6645 = vmatprep.subr.mxu0 0.0
        %6646 = vmatpush1.xpose.msra.mxu0 0.0
        %6647 = vmatprep.subr.mxu0 0.0
        %6648 = vmatpush1.xpose.msra.mxu0 0.0
        %6649 = vmatprep.subr.mxu0 0.0
        %6650 = vmatpush1.xpose.msra.mxu0 0.0
        %6651 = vmatprep.subr.mxu0 0.0
        %6652 = vmatpush1.xpose.msra.mxu0 0.0
        %6653 = vmatprep.subr.mxu0 0.0
        %6654 = vmatpush1.xpose.msra.mxu0 0.0
        %6655 = vmatprep.subr.mxu0 0.0
        %6656 = vmatpush1.xpose.msra.mxu0 0.0
        %6657 = vmatprep.subr.mxu0 0.0
        %6658 = vmatpush1.xpose.msra.mxu0 0.0
        %6659 = vmatprep.subr.mxu0 0.0
        %6660 = vmatpush1.xpose.msra.mxu0 0.0
        %6661 = vmatprep.subr.mxu0 0.0
        %6662 = vmatpush1.xpose.msra.mxu0 0.0
        %6663 = vmatprep.mubr.f32.mxu0 0.0
        %6664 = vmatmul.mubr.f32.gmra.mrb[0].mxu0 %v6591
        %v6665 = vpop.f32.mrb[0].mxu0
        %v6666 = vadd.f32 0.0, %v6665
        %v6667 = vpop.f32.mrb[0].mxu0
        %6668 = vdwg.mxu0
        %v6670 = vsel %vm1114, %v6589, 0
        %6672 = vmatprep.subr.mxu0 0.0
        %6673 = vmatpush1.msra.mxu0 %v6422
        %6674 = vmatprep.subr.mxu0 0.0
        %6675 = vmatpush1.msra.mxu0 %v6423
        %6676 = vmatprep.subr.mxu0 0.0
        %6677 = vmatpush1.msra.mxu0 0.0
        %6678 = vmatprep.subr.mxu0 0.0
        %6679 = vmatpush1.msra.mxu0 0.0
        %6680 = vmatprep.subr.mxu0 0.0
        %6681 = vmatpush1.msra.mxu0 0.0
        %6682 = vmatprep.subr.mxu0 0.0
        %6683 = vmatpush1.msra.mxu0 0.0
        %6684 = vmatprep.subr.mxu0 0.0
        %6685 = vmatpush1.msra.mxu0 0.0
        %6686 = vmatprep.subr.mxu0 0.0
        %6687 = vmatpush1.msra.mxu0 0.0
        %6688 = vmatprep.subr.mxu0 0.0
        %6689 = vmatpush1.msra.mxu0 0.0
        %6690 = vmatprep.subr.mxu0 0.0
        %6691 = vmatpush1.msra.mxu0 0.0
        %6692 = vmatprep.subr.mxu0 0.0
        %6693 = vmatpush1.msra.mxu0 0.0
        %6694 = vmatprep.subr.mxu0 0.0
        %6695 = vmatpush1.msra.mxu0 0.0
        %6696 = vmatprep.subr.mxu0 0.0
        %6697 = vmatpush1.msra.mxu0 0.0
        %6698 = vmatprep.subr.mxu0 0.0
        %6699 = vmatpush1.msra.mxu0 0.0
        %6700 = vmatprep.subr.mxu0 0.0
        %6701 = vmatpush1.msra.mxu0 0.0
        %6702 = vmatprep.subr.mxu0 0.0
        %6703 = vmatpush1.msra.mxu0 0.0
        %6704 = vmatprep.subr.mxu0 0.0
        %6705 = vmatpush1.msra.mxu0 0.0
        %6706 = vmatprep.subr.mxu0 0.0
        %6707 = vmatpush1.msra.mxu0 0.0
        %6708 = vmatprep.subr.mxu0 0.0
        %6709 = vmatpush1.msra.mxu0 0.0
        %6710 = vmatprep.subr.mxu0 0.0
        %6711 = vmatpush1.msra.mxu0 0.0
        %6712 = vmatprep.subr.mxu0 0.0
        %6713 = vmatpush1.msra.mxu0 0.0
        %6714 = vmatprep.subr.mxu0 0.0
        %6715 = vmatpush1.msra.mxu0 0.0
        %6716 = vmatprep.subr.mxu0 0.0
        %6717 = vmatpush1.msra.mxu0 0.0
        %6718 = vmatprep.subr.mxu0 0.0
        %6719 = vmatpush1.msra.mxu0 0.0
        %6720 = vmatprep.subr.mxu0 0.0
        %6721 = vmatpush1.msra.mxu0 0.0
        %6722 = vmatprep.subr.mxu0 0.0
        %6723 = vmatpush1.msra.mxu0 0.0
        %6724 = vmatprep.subr.mxu0 0.0
        %6725 = vmatpush1.msra.mxu0 0.0
        %6726 = vmatprep.subr.mxu0 0.0
        %6727 = vmatpush1.msra.mxu0 0.0
        %6728 = vmatprep.subr.mxu0 0.0
        %6729 = vmatpush1.msra.mxu0 0.0
        %6730 = vmatprep.subr.mxu0 0.0
        %6731 = vmatpush1.msra.mxu0 0.0
        %6732 = vmatprep.subr.mxu0 0.0
        %6733 = vmatpush1.msra.mxu0 0.0
        %6734 = vmatprep.subr.mxu0 0.0
        %6735 = vmatpush1.msra.mxu0 0.0
        %6736 = vmatprep.mubr.f32.mxu0 0.0
        %6737 = vmatmul.mubr.f32.gmra.mrb[0].mxu0 %v6670
        %v6738 = vpop.f32.mrb[0].mxu0
        %v6739 = vadd.f32 0.0, %v6738
        %v6740 = vpop.f32.mrb[0].mxu0
        %6741 = vdwg.mxu0
        %v6742 = vmul.f32 %v1504, %v6666
        %v6744 = vrot.slane %v6742, 1
        %v6745 = vrot.slane %v6742, 2
        %v6746 = vrot.slane %v6742, 3
        %v6751 = vadd.f32 %v6029, %v6742
        %v6752 = vadd.f32 %v6030, %v6744
        %v6753 = vadd.f32 %v6031, %v6745
        %v6754 = vadd.f32 %v6032, %v6746
        %6755 = vst.msk [vmem:[%s719 + $0x7] sm:$0x1] %vm1519, %v6751
        %6756 = vst.msk [vmem:[%s719 + $0xf] sm:$0x1] %vm1519, %v6752
        %6757 = vst.msk [vmem:[%s719 + $0x17] sm:$0x1] %vm1519, %v6753
        %6758 = vst.msk [vmem:[%s719 + $0x1f] sm:$0x1] %vm1519, %v6754
        %v6759 = vmul.f32 %v1527, %v6739
        %v6761 = vrot.slane %v6759, 1
        %v6762 = vrot.slane %v6759, 2
        %v6763 = vrot.slane %v6759, 3
        %v6768 = vadd.f32 %v6033, %v6759
        %v6769 = vadd.f32 %v6034, %v6761
        %v6770 = vadd.f32 %v6035, %v6762
        %v6771 = vadd.f32 %v6036, %v6763
        %6772 = vst.msk [vmem:[%s1542 + $0x7] sm:$0x1] %vm1519, %v6768
        %6773 = vst.msk [vmem:[%s1542 + $0xf] sm:$0x1] %vm1519, %v6769
        %6774 = vst.msk [vmem:[%s1542 + $0x17] sm:$0x1] %vm1519, %v6770
        %6775 = vst.msk [vmem:[%s1542 + $0x1f] sm:$0x1] %vm1519, %v6771
        %s6776 = sand.u32 %s403, 1
        %s6777 = scalar_lea.sflag [#allocation4], %s6776
        %s6778 = sand.u32 %s403, 1
        %s6779 = smul.addr %s6778, 64
        %s6780 = scalar_lea.vmem [#allocation8], %s6779
        // Predicated region
        $region93: #{tpu_custom_call.1} parent=79 // pred_check
          %p6781 = pneg %p413
        $region94: #{tpu_custom_call.1} parent=79 // pred_check_branch
          %6783 = sbr.rel (%p6781) target = $region96
        $region95: #{tpu_custom_call.1} parent=79 // pred_region
          #allocation16 [shape = 'u32[6]{0}', space=smem, size = 0x18, scoped, tag = 'DMA stride descriptor']
          %s6785 = ssub.s32 1024, 1024
          %6786 = vsyncadd %s6777, %s6785
          %s6787 = smul.addr %s39, 4
          %s6788 = sadd.s32 %s40, %s6787
          %s6789 = smul.addr %s6788, 128
          %s6790 = scalar_lea.hbm %s15, %s6789
          %s6792 = sshll.u32 1, 14
          %s6793 = sxor.u32 4294967295, %s6792
          %s6796 = sshll.u32 7, 18
          %s6797 = sxor.u32 4294967295, %s6796
          %s6798 = sand.u32 0, %s6797
          %s6800 = sor.u32 %s6798, 0
          %s6802 = sshll.u32 3, 24
          %s6803 = sxor.u32 4294967295, %s6802
          %s6804 = sand.u32 %s6800, %s6803
          %s6806 = sor.u32 %s6804, 0
          %s6807 = sshll.u32 %s6780, 4
          %s6808 = int_to_ptr.vmem [resolvable:$true] %s6807
          %6814 = sst [smem:[#allocation16]] 512
          %s6815 = scalar_lea.smem [#allocation16], 1
          %6816 = sst [smem:[%s6815]] 1024
          %s6817 = scalar_lea.smem [#allocation16], 2
          %6818 = sst [smem:[%s6817]] 4
          %s6819 = scalar_lea.smem [#allocation16], 3
          %6820 = sst [smem:[%s6819]] 128
          %s6821 = scalar_lea.smem [#allocation16], 4
          %6822 = sst [smem:[%s6821]] 128
          %s6823 = scalar_lea.smem [#allocation16], 5
          %6824 = sst [smem:[%s6823]] 8
          %6826 = dma.general %s6808, 1024, %s6790, %s6777, [#allocation15], [#allocation16], %s6806, 0
        $region96: #{tpu_custom_call.1} parent=79 // pred_fallthru
          _
      $region80: #{tpu_custom_call.1} parent=5 // pred_fallthru
        _
      %p6827 = scmp.le.s32.totalorder 2, %s30
      // Predicated region
      $region97: #{tpu_custom_call.1} parent=5 // pred_check
        %p6828 = pneg %p6827
      $region98: #{tpu_custom_call.1} parent=5 // pred_check_branch
        %6830 = sbr.rel (%p6828) target = $region100
      $region99: #{tpu_custom_call.1} parent=5 // pred_region
        %s6831 = ssub.s32 %s30, 2
        // Predicated region
        $region101: #{tpu_custom_call.1} parent=99 // pred_check
          %p6832 = pneg %p419
        $region102: #{tpu_custom_call.1} parent=99 // pred_check_branch
          %6834 = sbr.rel (%p6832) target = $region104
        $region103: #{tpu_custom_call.1} parent=99 // pred_region
          %s6835 = sand.u32 %s404, 1
          %s6836 = scalar_lea.sflag [#allocation4], %s6835
          %s6837 = sand.u32 %s404, 1
          %s6838 = smul.addr %s6837, 64
          %s6839 = scalar_lea.vmem [#allocation8], %s6838
          %6840 = dma.done %s6836, 1024
        $region104: #{tpu_custom_call.1} parent=99 // pred_fallthru
          _
      $region100: #{tpu_custom_call.1} parent=5 // pred_fallthru
        _
    $region6: #{tpu_custom_call.1} parent=1 // loop_footer
      %s34 = sadd.s32 1, %s30
    $region7: #{tpu_custom_call.1} parent=1 // loop_footer_branch
      %29 = sbr.rel target = $region3
    $region8: #{tpu_custom_call.1} parent=1 // loop_exit
      _
    %6841 = vsyncpa [#allocation3], 1
    %s6842 = scalar_lea.sflag [#allocation3], 1
    %6843 = vsyncpa %s6842, 1
    %6844 = vsyncpa [#allocation6], 1
    %s6845 = scalar_lea.sflag [#allocation6], 1
    %6846 = vsyncpa %s6845, 1
    %6847 = vsyncpa [#allocation4], 1
    %s6848 = scalar_lea.sflag [#allocation4], 1
    %6849 = vsyncpa %s6848, 1

</llo_original>
